<compile_context>
chip_gen: v6e
topology: v6e:2x2x1
jax: 0.10.0
libtpu: 0.0.40
codegen_flags: <defaults>
</compile_context>

<pallas_src>
import functools
import math

import jax
import jax.numpy as jnp
from jax import lax
from jax.experimental import pallas as pl
from jax.experimental.pallas import tpu as pltpu


def _sigmoid_eup(x):
    """sigmoid(x) = 1/(1+exp(-x)) with exp + approx reciprocal on the EUP.

    VALU is the saturated slot (7x7 tap loop); exp and the reciprocal seed issue
    on the otherwise-idle EUP slot.  One Newton step (2 VALU ops per vreg)
    restores ~f32 accuracy of the division.  The clamp avoids inf for very
    negative inputs (sigmoid there is ~0 anyway).
    """
    e = jnp.exp(-jnp.maximum(x, -60.0))
    d = 1.0 + e
    r = pl.reciprocal(d, approx=True)
    return r * (2.0 - d * r)


def _cbam_kernel(x_ref, w1_ref, b1_ref, w2_ref, b2_ref, wsp_ref, sum_ref, rep_ref,
                 o_ref, ypad_ref, *, Bt, H, W, C):
    KH = KW = 7
    WC = W * C
    WCP = (W + 8) * C          # padded lane width: 4 pad pixels each side
    ROW0 = 8                   # first valid row per image  -> 8-aligned staging store
    LANE0 = 4 * C              # first valid lane           -> 128-aligned for C=32

    # ---- zero only the halo the 7x7 taps read (interior overwritten below).
    # Re-zeroed every grid step so the batch axis can safely stay "parallel".
    ypad_ref[:, 0:ROW0, :] = jnp.zeros((Bt, ROW0, WCP), jnp.float32)
    ypad_ref[:, ROW0 + H:ROW0 + H + ROW0, :] = jnp.zeros((Bt, ROW0, WCP), jnp.float32)
    ypad_ref[:, ROW0:ROW0 + H, 0:LANE0] = jnp.zeros((Bt, H, LANE0), jnp.float32)
    ypad_ref[:, ROW0:ROW0 + H, LANE0 + WC:LANE0 + WC + LANE0] = (
        jnp.zeros((Bt, H, LANE0), jnp.float32))

    # ---- channel attention: 1x1-conv MLP as block-diagonal matmuls, all Bt
    # images at once (M = Bt*H rows -> good MXU row utilisation).
    xd = x_ref[...]                                                      # [Bt*H, WC]
    h1 = jnp.dot(xd, w1_ref[...], preferred_element_type=jnp.float32) + b1_ref[...]
    h1 = jnp.maximum(h1, 0.0)                                            # ReLU
    logits = jnp.dot(h1, w2_ref[...], preferred_element_type=jnp.float32) + b2_ref[...]
    y = _sigmoid_eup(logits) * xd                                        # [Bt*H, WC]

    # ---- stage y into the padded scratch: one aligned block store per image.
    for b in range(Bt):
        ypad_ref[b, ROW0:ROW0 + H, LANE0:LANE0 + WC] = y[b * H:(b + 1) * H, :]

    # ---- spatial attention: 7x7 conv (C -> 1), one image per loop iteration so
    # acc (8 vregs) + the hoisted column slab (~12 vregs) bound vreg pressure.
    @pl.loop(0, Bt)
    def _(b):
        ypad_b = ypad_ref.at[b]                                          # [H+16, WCP]
        acc = jnp.zeros((H, WC), jnp.float32)
        for j in range(KW):
            # one lane shift per j (hoisted), instead of one per tap
            lane_j = (j + 1) * C
            col_slab = ypad_b[ROW0 - 3:ROW0 + H + 3, lane_j:lane_j + WC]  # [H+6, WC]
            wsp_j = wsp_ref[j * KH:(j + 1) * KH, :]                       # [7, WC]
            for i in range(KH):
                # i shift = cheap sublane slice of the hoisted slab
                acc = acc + col_slab[i:i + H, :] * wsp_j[i:i + 1, :]

        # per-pixel channel sum + in-group broadcast via the rank-C factored
        # group-sum on the otherwise-idle MXU; bf16 hi/lo splits keep accuracy
        # independent of the MXU f32 pass count.
        acc_hi = acc.astype(jnp.bfloat16).astype(jnp.float32)
        acc_lo = acc - acc_hi
        s_small = (jnp.dot(acc_hi, sum_ref[...], preferred_element_type=jnp.float32)
                   + jnp.dot(acc_lo, sum_ref[...], preferred_element_type=jnp.float32))
        s_hi = s_small.astype(jnp.bfloat16).astype(jnp.float32)
        s_lo = s_small - s_hi
        s_rep = (jnp.dot(s_hi, rep_ref[...], preferred_element_type=jnp.float32)
                 + jnp.dot(s_lo, rep_ref[...], preferred_element_type=jnp.float32))

        y_b = ypad_b[ROW0:ROW0 + H, LANE0:LANE0 + WC]                     # cheap VMEM reload
        row = pl.multiple_of(b * H, H)
        o_ref[pl.ds(row, H), :] = _sigmoid_eup(s_rep) * y_b               # lane-dense store


def cbam_forward_nhwc(x_nhwc, kernel_params, bt_target=8):
    """x_nhwc: [B, H, W, C] float32 (TPU-native layout). Returns [B, H, W, C].

    Keeping activations in NHWC means the only layout op outside the kernel is a
    free minor-dim-merging reshape (no extra HBM round trip).
    bt_target: images per grid step (8 fills the v5e MXU; use 16 on v6e/v7x).
    """
    w1, b1, w2, b2, wsp_ji = kernel_params        # [C,mid],[1,mid],[mid,C],[1,C],[49,C]
    B, H, W, C = x_nhwc.shape
    mid = w1.shape[1]
    WC = W * C
    assert H % 8 == 0 and WC % 128 == 0 and (4 * C) % 128 == 0, \
        "kernel assumes 8-aligned H and 128-aligned lane widths (C multiple of 32)"

    Bt = math.gcd(B, bt_target)                   # exact grid, no padding needed

    x_dense = x_nhwc.reshape(B * H, WC)           # free reshape (merge minor dims)

    # block-diagonal / pre-tiled parameters so the kernel stays lane-dense
    eye_w = jnp.eye(W, dtype=jnp.float32)
    w1_big = jnp.kron(eye_w, w1)                                 # [W*C, W*mid]
    w2_big = jnp.kron(eye_w, w2)                                 # [W*mid, W*C]
    b1_big = jnp.tile(b1, (1, W))                                # [1, W*mid]
    b2_big = jnp.tile(b2, (1, W))                                # [1, W*C]
    wsp_t = jnp.tile(wsp_ji, (1, W))                             # [49, W*C] (j-major rows)
    # rank-C factorization of the group-sum (replaces the dense [WC,WC] matrix)
    sum_mat = jnp.kron(eye_w, jnp.ones((C, 1), jnp.float32))     # [W*C, W]
    rep_mat = jnp.kron(eye_w, jnp.ones((1, C), jnp.float32))     # [W, W*C]

    kernel = functools.partial(_cbam_kernel, Bt=Bt, H=H, W=W, C=C)
    grid_spec = pltpu.PrefetchScalarGridSpec(
        num_scalar_prefetch=0,
        grid=(B // Bt,),
        in_specs=[
            pl.BlockSpec((Bt * H, WC), lambda g: (g, 0)),        # x rows
            pl.BlockSpec((WC, W * mid), lambda g: (0, 0)),       # w1_big
            pl.BlockSpec((1, W * mid), lambda g: (0, 0)),        # b1_big
            pl.BlockSpec((W * mid, WC), lambda g: (0, 0)),       # w2_big
            pl.BlockSpec((1, WC), lambda g: (0, 0)),             # b2_big
            pl.BlockSpec((49, WC), lambda g: (0, 0)),            # 7x7 taps (pre-tiled)
            pl.BlockSpec((WC, W), lambda g: (0, 0)),             # channel-sum factor S
            pl.BlockSpec((W, WC), lambda g: (0, 0)),             # broadcast factor R
        ],
        out_specs=pl.BlockSpec((Bt * H, WC), lambda g: (g, 0)),
        scratch_shapes=[pltpu.VMEM((Bt, H + 16, (W + 8) * C), jnp.float32)],
    )
    out_dense = pl.pallas_call(
        kernel,
        out_shape=jax.ShapeDtypeStruct((B * H, WC), jnp.float32),
        grid_spec=grid_spec,
        compiler_params=pltpu.CompilerParams(
            dimension_semantics=("parallel",),    # batch blocks are independent
            vmem_limit_bytes=8 * 1024 * 1024,     # actual footprint ~2-4 MiB
        ),
    )(x_dense, w1_big, b1_big, w2_big, b2_big, wsp_t, sum_mat, rep_mat)
    return out_dense.reshape(B, H, W, C)


def cbam_forward_nchw(x_nchw, kernel_params, bt_target=8):
    """NCHW (PyTorch-layout) convenience wrapper for the test harness.

    In a real model, keep activations NHWC and call cbam_forward_nhwc directly —
    these two transposes are the only HBM round trips outside the kernel.
    """
    y = cbam_forward_nhwc(jnp.transpose(x_nchw, (0, 2, 3, 1)), kernel_params, bt_target)
    return jnp.transpose(y, (0, 3, 1, 2))


def init_params(key, C, reduction=16):
    """Deterministic synthetic parameters matching CBAMBlock.__init__ shapes."""
    mid = C // reduction
    k1, k2, k3, k4, k5 = jax.random.split(key, 5)
    wt1 = jax.random.normal(k1, (mid, C, 1, 1), jnp.float32) * 0.2   # Conv2d(C, mid, 1)
    bt1 = jax.random.normal(k2, (mid,), jnp.float32) * 0.1
    wt2 = jax.random.normal(k3, (C, mid, 1, 1), jnp.float32) * 0.2   # Conv2d(mid, C, 1)
    bt2 = jax.random.normal(k4, (C,), jnp.float32) * 0.1
    wts = jax.random.normal(k5, (1, C, 7, 7), jnp.float32) * 0.05    # Conv2d(C, 1, 7, bias=False)

    # kernel-layout parameters
    w1 = wt1[:, :, 0, 0].T                                   # [C, mid]
    b1 = bt1.reshape(1, mid)
    w2 = wt2[:, :, 0, 0].T                                   # [mid, C]
    b2 = bt2.reshape(1, C)
    # 7x7 taps in j-major order: row j*7+i holds wts[0, :, i, j]
    wsp_ji = jnp.transpose(wts[0], (2, 1, 0)).reshape(49, C)
    return (wt1, bt1, wt2, bt2, wts), (w1, b1, w2, b2, wsp_ji)


def cbam_reference(x, torch_params):
    """Pure-JAX reference reproducing the PyTorch forward (NCHW)."""
    wt1, bt1, wt2, bt2, wts = torch_params
    conv = functools.partial(
        lax.conv_general_dilated,
        window_strides=(1, 1),
        dimension_numbers=('NCHW', 'OIHW', 'NCHW'),
        precision=lax.Precision.HIGHEST)
    h = conv(x, wt1, padding=[(0, 0), (0, 0)]) + bt1[None, :, None, None]
    h = jnp.maximum(h, 0.0)
    ca = jax.nn.sigmoid(conv(h, wt2, padding=[(0, 0), (0, 0)]) + bt2[None, :, None, None])
    y = ca * x
    s = conv(y, wts, padding=[(3, 3), (3, 3)])
    return jax.nn.sigmoid(s) * y


if __name__ == "__main__":
    key = jax.random.PRNGKey(0)
    kx, kp = jax.random.split(key)

    # channel must be >= reduction (=16) so channel // reduction >= 1
    B, C, H, W = 2, 32, 16, 16
    x = jax.random.normal(kx, (B, C, H, W), jnp.float32)
    torch_params, kernel_params = init_params(kp, C, reduction=16)

    out = jax.block_until_ready(cbam_forward_nchw(x, kernel_params))
    assert out.shape == (B, C, H, W)

    ref = cbam_reference(x, torch_params)
    max_err = float(jnp.max(jnp.abs(out - ref)))
    if not max_err < 1e-3:
        raise AssertionError(f"kernel/reference mismatch: max abs err {max_err}")

    print("KERNEL_OK")
</pallas_src>

<mosaic_0001>
module attributes {stable_mosaic.version = 11 : i64} {
  func.func @_cbam_kernel(%arg0: i32, %arg1: memref<32x512xf32, #tpu.memory_space<vmem>>, %arg2: memref<512x32xf32, #tpu.memory_space<vmem>>, %arg3: memref<1x32xf32, #tpu.memory_space<vmem>>, %arg4: memref<32x512xf32, #tpu.memory_space<vmem>>, %arg5: memref<1x512xf32, #tpu.memory_space<vmem>>, %arg6: memref<49x512xf32, #tpu.memory_space<vmem>>, %arg7: memref<512x16xf32, #tpu.memory_space<vmem>>, %arg8: memref<16x512xf32, #tpu.memory_space<vmem>>, %arg9: memref<32x512xf32, #tpu.memory_space<vmem>>, %arg10: memref<2x32x768xf32, #tpu.memory_space<vmem>>) attributes {dimension_semantics = [#tpu.dimension_semantics<parallel>], iteration_bounds = array<i64: 1>, scalar_prefetch = 0 : i64, scratch_operands = 1 : i64, tpu.core_type = #tpu.core_type<tc>, window_params = [{transform_indices = @transform_0, window_bounds = array<i64: 32, 512>}, {pipeline_mode = #tpu.pipeline_mode<synchronous>, transform_indices = @transform_1, window_bounds = array<i64: 512, 32>}, {pipeline_mode = #tpu.pipeline_mode<synchronous>, transform_indices = @transform_2, window_bounds = array<i64: 1, 32>}, {pipeline_mode = #tpu.pipeline_mode<synchronous>, transform_indices = @transform_3, window_bounds = array<i64: 32, 512>}, {pipeline_mode = #tpu.pipeline_mode<synchronous>, transform_indices = @transform_4, window_bounds = array<i64: 1, 512>}, {pipeline_mode = #tpu.pipeline_mode<synchronous>, transform_indices = @transform_5, window_bounds = array<i64: 49, 512>}, {pipeline_mode = #tpu.pipeline_mode<synchronous>, transform_indices = @transform_6, window_bounds = array<i64: 512, 16>}, {pipeline_mode = #tpu.pipeline_mode<synchronous>, transform_indices = @transform_7, window_bounds = array<i64: 16, 512>}, {transform_indices = @transform_8, window_bounds = array<i64: 32, 512>}]} {
    %cst = arith.constant 0.000000e+00 : f32
    %0 = vector.broadcast %cst : f32 to vector<2x8x768xf32>
    %c0 = arith.constant 0 : index
    %c0_0 = arith.constant 0 : index
    %c0_1 = arith.constant 0 : index
    %1 = vector.load %arg10[%c0, %c0_0, %c0_1] : memref<2x32x768xf32, #tpu.memory_space<vmem>>, vector<2x8x768xf32>
    tpu.vector_store %arg10[%c0, %c0_0, %c0_1], %0 {strides = array<i32>} : memref<2x32x768xf32, #tpu.memory_space<vmem>>, vector<2x8x768xf32>,
    %cst_2 = arith.constant 0.000000e+00 : f32
    %2 = vector.broadcast %cst_2 : f32 to vector<2x8x768xf32>
    %c0_3 = arith.constant 0 : index
    %c24 = arith.constant 24 : index
    %c0_4 = arith.constant 0 : index
    %3 = vector.load %arg10[%c0_3, %c24, %c0_4] : memref<2x32x768xf32, #tpu.memory_space<vmem>>, vector<2x8x768xf32>
    tpu.vector_store %arg10[%c0_3, %c24, %c0_4], %2 {strides = array<i32>} : memref<2x32x768xf32, #tpu.memory_space<vmem>>, vector<2x8x768xf32>,
    %cst_5 = arith.constant 0.000000e+00 : f32
    %4 = vector.broadcast %cst_5 : f32 to vector<2x16x128xf32>
    %c0_6 = arith.constant 0 : index
    %c8 = arith.constant 8 : index
    %c0_7 = arith.constant 0 : index
    %5 = vector.load %arg10[%c0_6, %c8, %c0_7] : memref<2x32x768xf32, #tpu.memory_space<vmem>>, vector<2x16x128xf32>
    tpu.vector_store %arg10[%c0_6, %c8, %c0_7], %4 {strides = array<i32>} : memref<2x32x768xf32, #tpu.memory_space<vmem>>, vector<2x16x128xf32>,
    %cst_8 = arith.constant 0.000000e+00 : f32
    %6 = vector.broadcast %cst_8 : f32 to vector<2x16x128xf32>
    %c0_9 = arith.constant 0 : index
    %c8_10 = arith.constant 8 : index
    %c640 = arith.constant 640 : index
    %7 = vector.load %arg10[%c0_9, %c8_10, %c640] : memref<2x32x768xf32, #tpu.memory_space<vmem>>, vector<2x16x128xf32>
    tpu.vector_store %arg10[%c0_9, %c8_10, %c640], %6 {strides = array<i32>} : memref<2x32x768xf32, #tpu.memory_space<vmem>>, vector<2x16x128xf32>,
    %c0_11 = arith.constant 0 : index
    %c0_12 = arith.constant 0 : index
    %8 = vector.load %arg1[%c0_11, %c0_12] : memref<32x512xf32, #tpu.memory_space<vmem>>, vector<32x512xf32>
    %c0_13 = arith.constant 0 : index
    %c0_14 = arith.constant 0 : index
    %9 = vector.load %arg2[%c0_13, %c0_14] : memref<512x32xf32, #tpu.memory_space<vmem>>, vector<512x32xf32>
    %cst_15 = arith.constant dense<0.000000e+00> : vector<32x32xf32>
    %10 = tpu.matmul %8, %9, %cst_15 {dimension_numbers = #tpu.dot_dimension_numbers<[1], [0], [0], [1], [0, 0, 1, 1], [], []>} : vector<32x512xf32>, vector<512x32xf32>, vector<32x32xf32> -> vector<32x32xf32>
    %c0_16 = arith.constant 0 : index
    %c0_17 = arith.constant 0 : index
    %11 = vector.load %arg3[%c0_16, %c0_17] : memref<1x32xf32, #tpu.memory_space<vmem>>, vector<1x32xf32>
    %12 = vector.broadcast %11 : vector<1x32xf32> to vector<32x32xf32>
    %13 = arith.addf %10, %12 : vector<32x32xf32>
    %cst_18 = arith.constant 0.000000e+00 : f32
    %14 = vector.broadcast %cst_18 : f32 to vector<32x32xf32>
    %15 = arith.maximumf %13, %14 : vector<32x32xf32>
    %c0_19 = arith.constant 0 : index
    %c0_20 = arith.constant 0 : index
    %16 = vector.load %arg4[%c0_19, %c0_20] : memref<32x512xf32, #tpu.memory_space<vmem>>, vector<32x512xf32>
    %cst_21 = arith.constant dense<0.000000e+00> : vector<32x512xf32>
    %17 = tpu.matmul %15, %16, %cst_21 {dimension_numbers = #tpu.dot_dimension_numbers<[1], [0], [0], [1], [0, 0, 1, 1], [], []>} : vector<32x32xf32>, vector<32x512xf32>, vector<32x512xf32> -> vector<32x512xf32>
    %c0_22 = arith.constant 0 : index
    %c0_23 = arith.constant 0 : index
    %18 = vector.load %arg5[%c0_22, %c0_23] : memref<1x512xf32, #tpu.memory_space<vmem>>, vector<1x512xf32>
    %19 = vector.broadcast %18 : vector<1x512xf32> to vector<32x512xf32>
    %20 = arith.addf %17, %19 : vector<32x512xf32>
    %cst_24 = arith.constant -6.000000e+01 : f32
    %21 = vector.broadcast %cst_24 : f32 to vector<32x512xf32>
    %22 = arith.maximumf %20, %21 : vector<32x512xf32>
    %cst_25 = arith.constant 0.000000e+00 : f32
    %23 = vector.broadcast %cst_25 : f32 to vector<32x512xf32>
    %24 = arith.subf %23, %22 : vector<32x512xf32>
    %25 = math.exp %24 : vector<32x512xf32>
    %cst_26 = arith.constant 1.000000e+00 : f32
    %26 = vector.broadcast %cst_26 : f32 to vector<32x512xf32>
    %27 = arith.addf %26, %25 : vector<32x512xf32>
    %28 = tpu.reciprocal %27 {approx = true} : vector<32x512xf32> -> vector<32x512xf32>
    %29 = arith.mulf %27, %28 : vector<32x512xf32>
    %cst_27 = arith.constant 2.000000e+00 : f32
    %30 = vector.broadcast %cst_27 : f32 to vector<32x512xf32>
    %31 = arith.subf %30, %29 : vector<32x512xf32>
    %32 = arith.mulf %28, %31 : vector<32x512xf32>
    %33 = arith.mulf %32, %8 : vector<32x512xf32>
    %34 = vector.extract_strided_slice %33 {offsets = [0, 0], sizes = [16, 512], strides = [1, 1]} : vector<32x512xf32> to vector<16x512xf32>
    %c0_28 = arith.constant 0 : index
    %c8_29 = arith.constant 8 : index
    %c128 = arith.constant 128 : index
    %35 = vector.load %arg10[%c0_28, %c8_29, %c128] : memref<2x32x768xf32, #tpu.memory_space<vmem>>, vector<1x16x512xf32>
    %36 = vector.shape_cast %35 : vector<1x16x512xf32> to vector<16x512xf32>
    %37 = vector.shape_cast %34 : vector<16x512xf32> to vector<1x16x512xf32>
    tpu.vector_store %arg10[%c0_28, %c8_29, %c128], %37 {strides = array<i32>} : memref<2x32x768xf32, #tpu.memory_space<vmem>>, vector<1x16x512xf32>,
    %38 = vector.extract_strided_slice %33 {offsets = [16, 0], sizes = [16, 512], strides = [1, 1]} : vector<32x512xf32> to vector<16x512xf32>
    %c1 = arith.constant 1 : index
    %c8_30 = arith.constant 8 : index
    %c128_31 = arith.constant 128 : index
    %39 = vector.load %arg10[%c1, %c8_30, %c128_31] : memref<2x32x768xf32, #tpu.memory_space<vmem>>, vector<1x16x512xf32>
    %40 = vector.shape_cast %39 : vector<1x16x512xf32> to vector<16x512xf32>
    %41 = vector.shape_cast %38 : vector<16x512xf32> to vector<1x16x512xf32>
    tpu.vector_store %arg10[%c1, %c8_30, %c128_31], %41 {strides = array<i32>} : memref<2x32x768xf32, #tpu.memory_space<vmem>>, vector<1x16x512xf32>,
    %c0_i32 = arith.constant 0 : i32
    %c2_i32 = arith.constant 2 : i32
    %42 = arith.addi %c0_i32, %c2_i32 : i32
    %c1_i32 = arith.constant 1 : i32
    scf.for %arg11 = %c0_i32 to %42 step %c1_i32  : i32 {
      %c1_i32_33 = arith.constant 1 : i32
      %43 = arith.muli %arg11, %c1_i32_33 : i32
      %c0_i32_34 = arith.constant 0 : i32
      %44 = arith.addi %c0_i32_34, %43 : i32
      %cst_35 = arith.constant 0.000000e+00 : f32
      %45 = vector.broadcast %cst_35 : f32 to vector<16x512xf32>
      %c0_i32_36 = arith.constant 0 : i32
      %c0_i32_37 = arith.constant 0 : i32
      %46 = tpu.memref_slice %arg10[%44, %c0_i32_36, %c0_i32_37] : memref<2x32x768xf32, #tpu.memory_space<vmem>> -> memref<1x32x768xf32, #tpu.memory_space<vmem>>
      %47 = tpu.memref_squeeze %46 : memref<1x32x768xf32, #tpu.memory_space<vmem>> -> memref<32x768xf32, #tpu.memory_space<vmem>>
      %c5 = arith.constant 5 : index
      %c32 = arith.constant 32 : index
      %48 = vector.load %47[%c5, %c32] : memref<32x768xf32, #tpu.memory_space<vmem>>, vector<22x512xf32>
      %c0_38 = arith.constant 0 : index
      %c0_39 = arith.constant 0 : index
      %49 = vector.load %arg6[%c0_38, %c0_39] : memref<49x512xf32, #tpu.memory_space<vmem>>, vector<7x512xf32>
      %50 = vector.extract_strided_slice %48 {offsets = [0, 0], sizes = [16, 512], strides = [1, 1]} : vector<22x512xf32> to vector<16x512xf32>
      %51 = vector.extract_strided_slice %49 {offsets = [0, 0], sizes = [1, 512], strides = [1, 1]} : vector<7x512xf32> to vector<1x512xf32>
      %52 = vector.broadcast %51 : vector<1x512xf32> to vector<16x512xf32>
      %53 = arith.mulf %50, %52 : vector<16x512xf32>
      %54 = arith.addf %45, %53 : vector<16x512xf32>
      %55 = vector.extract_strided_slice %48 {offsets = [1, 0], sizes = [16, 512], strides = [1, 1]} : vector<22x512xf32> to vector<16x512xf32>
      %56 = vector.extract_strided_slice %49 {offsets = [1, 0], sizes = [1, 512], strides = [1, 1]} : vector<7x512xf32> to vector<1x512xf32>
      %57 = vector.broadcast %56 : vector<1x512xf32> to vector<16x512xf32>
      %58 = arith.mulf %55, %57 : vector<16x512xf32>
      %59 = arith.addf %54, %58 : vector<16x512xf32>
      %60 = vector.extract_strided_slice %48 {offsets = [2, 0], sizes = [16, 512], strides = [1, 1]} : vector<22x512xf32> to vector<16x512xf32>
      %61 = vector.extract_strided_slice %49 {offsets = [2, 0], sizes = [1, 512], strides = [1, 1]} : vector<7x512xf32> to vector<1x512xf32>
      %62 = vector.broadcast %61 : vector<1x512xf32> to vector<16x512xf32>
      %63 = arith.mulf %60, %62 : vector<16x512xf32>
      %64 = arith.addf %59, %63 : vector<16x512xf32>
      %65 = vector.extract_strided_slice %48 {offsets = [3, 0], sizes = [16, 512], strides = [1, 1]} : vector<22x512xf32> to vector<16x512xf32>
      %66 = vector.extract_strided_slice %49 {offsets = [3, 0], sizes = [1, 512], strides = [1, 1]} : vector<7x512xf32> to vector<1x512xf32>
      %67 = vector.broadcast %66 : vector<1x512xf32> to vector<16x512xf32>
      %68 = arith.mulf %65, %67 : vector<16x512xf32>
      %69 = arith.addf %64, %68 : vector<16x512xf32>
      %70 = vector.extract_strided_slice %48 {offsets = [4, 0], sizes = [16, 512], strides = [1, 1]} : vector<22x512xf32> to vector<16x512xf32>
      %71 = vector.extract_strided_slice %49 {offsets = [4, 0], sizes = [1, 512], strides = [1, 1]} : vector<7x512xf32> to vector<1x512xf32>
      %72 = vector.broadcast %71 : vector<1x512xf32> to vector<16x512xf32>
      %73 = arith.mulf %70, %72 : vector<16x512xf32>
      %74 = arith.addf %69, %73 : vector<16x512xf32>
      %75 = vector.extract_strided_slice %48 {offsets = [5, 0], sizes = [16, 512], strides = [1, 1]} : vector<22x512xf32> to vector<16x512xf32>
      %76 = vector.extract_strided_slice %49 {offsets = [5, 0], sizes = [1, 512], strides = [1, 1]} : vector<7x512xf32> to vector<1x512xf32>
      %77 = vector.broadcast %76 : vector<1x512xf32> to vector<16x512xf32>
      %78 = arith.mulf %75, %77 : vector<16x512xf32>
      %79 = arith.addf %74, %78 : vector<16x512xf32>
      %80 = vector.extract_strided_slice %48 {offsets = [6, 0], sizes = [16, 512], strides = [1, 1]} : vector<22x512xf32> to vector<16x512xf32>
      %81 = vector.extract_strided_slice %49 {offsets = [6, 0], sizes = [1, 512], strides = [1, 1]} : vector<7x512xf32> to vector<1x512xf32>
      %82 = vector.broadcast %81 : vector<1x512xf32> to vector<16x512xf32>
      %83 = arith.mulf %80, %82 : vector<16x512xf32>
      %84 = arith.addf %79, %83 : vector<16x512xf32>
      %c0_i32_40 = arith.constant 0 : i32
      %c0_i32_41 = arith.constant 0 : i32
      %85 = tpu.memref_slice %arg10[%44, %c0_i32_40, %c0_i32_41] : memref<2x32x768xf32, #tpu.memory_space<vmem>> -> memref<1x32x768xf32, #tpu.memory_space<vmem>>
      %86 = tpu.memref_squeeze %85 : memref<1x32x768xf32, #tpu.memory_space<vmem>> -> memref<32x768xf32, #tpu.memory_space<vmem>>
      %c5_42 = arith.constant 5 : index
      %c64 = arith.constant 64 : index
      %87 = vector.load %86[%c5_42, %c64] : memref<32x768xf32, #tpu.memory_space<vmem>>, vector<22x512xf32>
      %c7 = arith.constant 7 : index
      %c0_43 = arith.constant 0 : index
      %88 = vector.load %arg6[%c7, %c0_43] : memref<49x512xf32, #tpu.memory_space<vmem>>, vector<7x512xf32>
      %89 = vector.extract_strided_slice %87 {offsets = [0, 0], sizes = [16, 512], strides = [1, 1]} : vector<22x512xf32> to vector<16x512xf32>
      %90 = vector.extract_strided_slice %88 {offsets = [0, 0], sizes = [1, 512], strides = [1, 1]} : vector<7x512xf32> to vector<1x512xf32>
      %91 = vector.broadcast %90 : vector<1x512xf32> to vector<16x512xf32>
      %92 = arith.mulf %89, %91 : vector<16x512xf32>
      %93 = arith.addf %84, %92 : vector<16x512xf32>
      %94 = vector.extract_strided_slice %87 {offsets = [1, 0], sizes = [16, 512], strides = [1, 1]} : vector<22x512xf32> to vector<16x512xf32>
      %95 = vector.extract_strided_slice %88 {offsets = [1, 0], sizes = [1, 512], strides = [1, 1]} : vector<7x512xf32> to vector<1x512xf32>
      %96 = vector.broadcast %95 : vector<1x512xf32> to vector<16x512xf32>
      %97 = arith.mulf %94, %96 : vector<16x512xf32>
      %98 = arith.addf %93, %97 : vector<16x512xf32>
      %99 = vector.extract_strided_slice %87 {offsets = [2, 0], sizes = [16, 512], strides = [1, 1]} : vector<22x512xf32> to vector<16x512xf32>
      %100 = vector.extract_strided_slice %88 {offsets = [2, 0], sizes = [1, 512], strides = [1, 1]} : vector<7x512xf32> to vector<1x512xf32>
      %101 = vector.broadcast %100 : vector<1x512xf32> to vector<16x512xf32>
      %102 = arith.mulf %99, %101 : vector<16x512xf32>
      %103 = arith.addf %98, %102 : vector<16x512xf32>
      %104 = vector.extract_strided_slice %87 {offsets = [3, 0], sizes = [16, 512], strides = [1, 1]} : vector<22x512xf32> to vector<16x512xf32>
      %105 = vector.extract_strided_slice %88 {offsets = [3, 0], sizes = [1, 512], strides = [1, 1]} : vector<7x512xf32> to vector<1x512xf32>
      %106 = vector.broadcast %105 : vector<1x512xf32> to vector<16x512xf32>
      %107 = arith.mulf %104, %106 : vector<16x512xf32>
      %108 = arith.addf %103, %107 : vector<16x512xf32>
      %109 = vector.extract_strided_slice %87 {offsets = [4, 0], sizes = [16, 512], strides = [1, 1]} : vector<22x512xf32> to vector<16x512xf32>
      %110 = vector.extract_strided_slice %88 {offsets = [4, 0], sizes = [1, 512], strides = [1, 1]} : vector<7x512xf32> to vector<1x512xf32>
      %111 = vector.broadcast %110 : vector<1x512xf32> to vector<16x512xf32>
      %112 = arith.mulf %109, %111 : vector<16x512xf32>
      %113 = arith.addf %108, %112 : vector<16x512xf32>
      %114 = vector.extract_strided_slice %87 {offsets = [5, 0], sizes = [16, 512], strides = [1, 1]} : vector<22x512xf32> to vector<16x512xf32>
      %115 = vector.extract_strided_slice %88 {offsets = [5, 0], sizes = [1, 512], strides = [1, 1]} : vector<7x512xf32> to vector<1x512xf32>
      %116 = vector.broadcast %115 : vector<1x512xf32> to vector<16x512xf32>
      %117 = arith.mulf %114, %116 : vector<16x512xf32>
      %118 = arith.addf %113, %117 : vector<16x512xf32>
      %119 = vector.extract_strided_slice %87 {offsets = [6, 0], sizes = [16, 512], strides = [1, 1]} : vector<22x512xf32> to vector<16x512xf32>
      %120 = vector.extract_strided_slice %88 {offsets = [6, 0], sizes = [1, 512], strides = [1, 1]} : vector<7x512xf32> to vector<1x512xf32>
      %121 = vector.broadcast %120 : vector<1x512xf32> to vector<16x512xf32>
      %122 = arith.mulf %119, %121 : vector<16x512xf32>
      %123 = arith.addf %118, %122 : vector<16x512xf32>
      %c0_i32_44 = arith.constant 0 : i32
      %c0_i32_45 = arith.constant 0 : i32
      %124 = tpu.memref_slice %arg10[%44, %c0_i32_44, %c0_i32_45] : memref<2x32x768xf32, #tpu.memory_space<vmem>> -> memref<1x32x768xf32, #tpu.memory_space<vmem>>
      %125 = tpu.memref_squeeze %124 : memref<1x32x768xf32, #tpu.memory_space<vmem>> -> memref<32x768xf32, #tpu.memory_space<vmem>>
      %c5_46 = arith.constant 5 : index
      %c96 = arith.constant 96 : index
      %126 = vector.load %125[%c5_46, %c96] : memref<32x768xf32, #tpu.memory_space<vmem>>, vector<22x512xf32>
      %c14 = arith.constant 14 : index
      %c0_47 = arith.constant 0 : index
      %127 = vector.load %arg6[%c14, %c0_47] : memref<49x512xf32, #tpu.memory_space<vmem>>, vector<7x512xf32>
      %128 = vector.extract_strided_slice %126 {offsets = [0, 0], sizes = [16, 512], strides = [1, 1]} : vector<22x512xf32> to vector<16x512xf32>
      %129 = vector.extract_strided_slice %127 {offsets = [0, 0], sizes = [1, 512], strides = [1, 1]} : vector<7x512xf32> to vector<1x512xf32>
      %130 = vector.broadcast %129 : vector<1x512xf32> to vector<16x512xf32>
      %131 = arith.mulf %128, %130 : vector<16x512xf32>
      %132 = arith.addf %123, %131 : vector<16x512xf32>
      %133 = vector.extract_strided_slice %126 {offsets = [1, 0], sizes = [16, 512], strides = [1, 1]} : vector<22x512xf32> to vector<16x512xf32>
      %134 = vector.extract_strided_slice %127 {offsets = [1, 0], sizes = [1, 512], strides = [1, 1]} : vector<7x512xf32> to vector<1x512xf32>
      %135 = vector.broadcast %134 : vector<1x512xf32> to vector<16x512xf32>
      %136 = arith.mulf %133, %135 : vector<16x512xf32>
      %137 = arith.addf %132, %136 : vector<16x512xf32>
      %138 = vector.extract_strided_slice %126 {offsets = [2, 0], sizes = [16, 512], strides = [1, 1]} : vector<22x512xf32> to vector<16x512xf32>
      %139 = vector.extract_strided_slice %127 {offsets = [2, 0], sizes = [1, 512], strides = [1, 1]} : vector<7x512xf32> to vector<1x512xf32>
      %140 = vector.broadcast %139 : vector<1x512xf32> to vector<16x512xf32>
      %141 = arith.mulf %138, %140 : vector<16x512xf32>
      %142 = arith.addf %137, %141 : vector<16x512xf32>
      %143 = vector.extract_strided_slice %126 {offsets = [3, 0], sizes = [16, 512], strides = [1, 1]} : vector<22x512xf32> to vector<16x512xf32>
      %144 = vector.extract_strided_slice %127 {offsets = [3, 0], sizes = [1, 512], strides = [1, 1]} : vector<7x512xf32> to vector<1x512xf32>
      %145 = vector.broadcast %144 : vector<1x512xf32> to vector<16x512xf32>
      %146 = arith.mulf %143, %145 : vector<16x512xf32>
      %147 = arith.addf %142, %146 : vector<16x512xf32>
      %148 = vector.extract_strided_slice %126 {offsets = [4, 0], sizes = [16, 512], strides = [1, 1]} : vector<22x512xf32> to vector<16x512xf32>
      %149 = vector.extract_strided_slice %127 {offsets = [4, 0], sizes = [1, 512], strides = [1, 1]} : vector<7x512xf32> to vector<1x512xf32>
      %150 = vector.broadcast %149 : vector<1x512xf32> to vector<16x512xf32>
      %151 = arith.mulf %148, %150 : vector<16x512xf32>
      %152 = arith.addf %147, %151 : vector<16x512xf32>
      %153 = vector.extract_strided_slice %126 {offsets = [5, 0], sizes = [16, 512], strides = [1, 1]} : vector<22x512xf32> to vector<16x512xf32>
      %154 = vector.extract_strided_slice %127 {offsets = [5, 0], sizes = [1, 512], strides = [1, 1]} : vector<7x512xf32> to vector<1x512xf32>
      %155 = vector.broadcast %154 : vector<1x512xf32> to vector<16x512xf32>
      %156 = arith.mulf %153, %155 : vector<16x512xf32>
      %157 = arith.addf %152, %156 : vector<16x512xf32>
      %158 = vector.extract_strided_slice %126 {offsets = [6, 0], sizes = [16, 512], strides = [1, 1]} : vector<22x512xf32> to vector<16x512xf32>
      %159 = vector.extract_strided_slice %127 {offsets = [6, 0], sizes = [1, 512], strides = [1, 1]} : vector<7x512xf32> to vector<1x512xf32>
      %160 = vector.broadcast %159 : vector<1x512xf32> to vector<16x512xf32>
      %161 = arith.mulf %158, %160 : vector<16x512xf32>
      %162 = arith.addf %157, %161 : vector<16x512xf32>
      %c0_i32_48 = arith.constant 0 : i32
      %c0_i32_49 = arith.constant 0 : i32
      %163 = tpu.memref_slice %arg10[%44, %c0_i32_48, %c0_i32_49] : memref<2x32x768xf32, #tpu.memory_space<vmem>> -> memref<1x32x768xf32, #tpu.memory_space<vmem>>
      %164 = tpu.memref_squeeze %163 : memref<1x32x768xf32, #tpu.memory_space<vmem>> -> memref<32x768xf32, #tpu.memory_space<vmem>>
      %c5_50 = arith.constant 5 : index
      %c128_51 = arith.constant 128 : index
      %165 = vector.load %164[%c5_50, %c128_51] : memref<32x768xf32, #tpu.memory_space<vmem>>, vector<22x512xf32>
      %c21 = arith.constant 21 : index
      %c0_52 = arith.constant 0 : index
      %166 = vector.load %arg6[%c21, %c0_52] : memref<49x512xf32, #tpu.memory_space<vmem>>, vector<7x512xf32>
      %167 = vector.extract_strided_slice %165 {offsets = [0, 0], sizes = [16, 512], strides = [1, 1]} : vector<22x512xf32> to vector<16x512xf32>
      %168 = vector.extract_strided_slice %166 {offsets = [0, 0], sizes = [1, 512], strides = [1, 1]} : vector<7x512xf32> to vector<1x512xf32>
      %169 = vector.broadcast %168 : vector<1x512xf32> to vector<16x512xf32>
      %170 = arith.mulf %167, %169 : vector<16x512xf32>
      %171 = arith.addf %162, %170 : vector<16x512xf32>
      %172 = vector.extract_strided_slice %165 {offsets = [1, 0], sizes = [16, 512], strides = [1, 1]} : vector<22x512xf32> to vector<16x512xf32>
      %173 = vector.extract_strided_slice %166 {offsets = [1, 0], sizes = [1, 512], strides = [1, 1]} : vector<7x512xf32> to vector<1x512xf32>
      %174 = vector.broadcast %173 : vector<1x512xf32> to vector<16x512xf32>
      %175 = arith.mulf %172, %174 : vector<16x512xf32>
      %176 = arith.addf %171, %175 : vector<16x512xf32>
      %177 = vector.extract_strided_slice %165 {offsets = [2, 0], sizes = [16, 512], strides = [1, 1]} : vector<22x512xf32> to vector<16x512xf32>
      %178 = vector.extract_strided_slice %166 {offsets = [2, 0], sizes = [1, 512], strides = [1, 1]} : vector<7x512xf32> to vector<1x512xf32>
      %179 = vector.broadcast %178 : vector<1x512xf32> to vector<16x512xf32>
      %180 = arith.mulf %177, %179 : vector<16x512xf32>
      %181 = arith.addf %176, %180 : vector<16x512xf32>
      %182 = vector.extract_strided_slice %165 {offsets = [3, 0], sizes = [16, 512], strides = [1, 1]} : vector<22x512xf32> to vector<16x512xf32>
      %183 = vector.extract_strided_slice %166 {offsets = [3, 0], sizes = [1, 512], strides = [1, 1]} : vector<7x512xf32> to vector<1x512xf32>
      %184 = vector.broadcast %183 : vector<1x512xf32> to vector<16x512xf32>
      %185 = arith.mulf %182, %184 : vector<16x512xf32>
      %186 = arith.addf %181, %185 : vector<16x512xf32>
      %187 = vector.extract_strided_slice %165 {offsets = [4, 0], sizes = [16, 512], strides = [1, 1]} : vector<22x512xf32> to vector<16x512xf32>
      %188 = vector.extract_strided_slice %166 {offsets = [4, 0], sizes = [1, 512], strides = [1, 1]} : vector<7x512xf32> to vector<1x512xf32>
      %189 = vector.broadcast %188 : vector<1x512xf32> to vector<16x512xf32>
      %190 = arith.mulf %187, %189 : vector<16x512xf32>
      %191 = arith.addf %186, %190 : vector<16x512xf32>
      %192 = vector.extract_strided_slice %165 {offsets = [5, 0], sizes = [16, 512], strides = [1, 1]} : vector<22x512xf32> to vector<16x512xf32>
      %193 = vector.extract_strided_slice %166 {offsets = [5, 0], sizes = [1, 512], strides = [1, 1]} : vector<7x512xf32> to vector<1x512xf32>
      %194 = vector.broadcast %193 : vector<1x512xf32> to vector<16x512xf32>
      %195 = arith.mulf %192, %194 : vector<16x512xf32>
      %196 = arith.addf %191, %195 : vector<16x512xf32>
      %197 = vector.extract_strided_slice %165 {offsets = [6, 0], sizes = [16, 512], strides = [1, 1]} : vector<22x512xf32> to vector<16x512xf32>
      %198 = vector.extract_strided_slice %166 {offsets = [6, 0], sizes = [1, 512], strides = [1, 1]} : vector<7x512xf32> to vector<1x512xf32>
      %199 = vector.broadcast %198 : vector<1x512xf32> to vector<16x512xf32>
      %200 = arith.mulf %197, %199 : vector<16x512xf32>
      %201 = arith.addf %196, %200 : vector<16x512xf32>
      %c0_i32_53 = arith.constant 0 : i32
      %c0_i32_54 = arith.constant 0 : i32
      %202 = tpu.memref_slice %arg10[%44, %c0_i32_53, %c0_i32_54] : memref<2x32x768xf32, #tpu.memory_space<vmem>> -> memref<1x32x768xf32, #tpu.memory_space<vmem>>
      %203 = tpu.memref_squeeze %202 : memref<1x32x768xf32, #tpu.memory_space<vmem>> -> memref<32x768xf32, #tpu.memory_space<vmem>>
      %c5_55 = arith.constant 5 : index
      %c160 = arith.constant 160 : index
      %204 = vector.load %203[%c5_55, %c160] : memref<32x768xf32, #tpu.memory_space<vmem>>, vector<22x512xf32>
      %c28 = arith.constant 28 : index
      %c0_56 = arith.constant 0 : index
      %205 = vector.load %arg6[%c28, %c0_56] : memref<49x512xf32, #tpu.memory_space<vmem>>, vector<7x512xf32>
      %206 = vector.extract_strided_slice %204 {offsets = [0, 0], sizes = [16, 512], strides = [1, 1]} : vector<22x512xf32> to vector<16x512xf32>
      %207 = vector.extract_strided_slice %205 {offsets = [0, 0], sizes = [1, 512], strides = [1, 1]} : vector<7x512xf32> to vector<1x512xf32>
      %208 = vector.broadcast %207 : vector<1x512xf32> to vector<16x512xf32>
      %209 = arith.mulf %206, %208 : vector<16x512xf32>
      %210 = arith.addf %201, %209 : vector<16x512xf32>
      %211 = vector.extract_strided_slice %204 {offsets = [1, 0], sizes = [16, 512], strides = [1, 1]} : vector<22x512xf32> to vector<16x512xf32>
      %212 = vector.extract_strided_slice %205 {offsets = [1, 0], sizes = [1, 512], strides = [1, 1]} : vector<7x512xf32> to vector<1x512xf32>
      %213 = vector.broadcast %212 : vector<1x512xf32> to vector<16x512xf32>
      %214 = arith.mulf %211, %213 : vector<16x512xf32>
      %215 = arith.addf %210, %214 : vector<16x512xf32>
      %216 = vector.extract_strided_slice %204 {offsets = [2, 0], sizes = [16, 512], strides = [1, 1]} : vector<22x512xf32> to vector<16x512xf32>
      %217 = vector.extract_strided_slice %205 {offsets = [2, 0], sizes = [1, 512], strides = [1, 1]} : vector<7x512xf32> to vector<1x512xf32>
      %218 = vector.broadcast %217 : vector<1x512xf32> to vector<16x512xf32>
      %219 = arith.mulf %216, %218 : vector<16x512xf32>
      %220 = arith.addf %215, %219 : vector<16x512xf32>
      %221 = vector.extract_strided_slice %204 {offsets = [3, 0], sizes = [16, 512], strides = [1, 1]} : vector<22x512xf32> to vector<16x512xf32>
      %222 = vector.extract_strided_slice %205 {offsets = [3, 0], sizes = [1, 512], strides = [1, 1]} : vector<7x512xf32> to vector<1x512xf32>
      %223 = vector.broadcast %222 : vector<1x512xf32> to vector<16x512xf32>
      %224 = arith.mulf %221, %223 : vector<16x512xf32>
      %225 = arith.addf %220, %224 : vector<16x512xf32>
      %226 = vector.extract_strided_slice %204 {offsets = [4, 0], sizes = [16, 512], strides = [1, 1]} : vector<22x512xf32> to vector<16x512xf32>
      %227 = vector.extract_strided_slice %205 {offsets = [4, 0], sizes = [1, 512], strides = [1, 1]} : vector<7x512xf32> to vector<1x512xf32>
      %228 = vector.broadcast %227 : vector<1x512xf32> to vector<16x512xf32>
      %229 = arith.mulf %226, %228 : vector<16x512xf32>
      %230 = arith.addf %225, %229 : vector<16x512xf32>
      %231 = vector.extract_strided_slice %204 {offsets = [5, 0], sizes = [16, 512], strides = [1, 1]} : vector<22x512xf32> to vector<16x512xf32>
      %232 = vector.extract_strided_slice %205 {offsets = [5, 0], sizes = [1, 512], strides = [1, 1]} : vector<7x512xf32> to vector<1x512xf32>
      %233 = vector.broadcast %232 : vector<1x512xf32> to vector<16x512xf32>
      %234 = arith.mulf %231, %233 : vector<16x512xf32>
      %235 = arith.addf %230, %234 : vector<16x512xf32>
      %236 = vector.extract_strided_slice %204 {offsets = [6, 0], sizes = [16, 512], strides = [1, 1]} : vector<22x512xf32> to vector<16x512xf32>
      %237 = vector.extract_strided_slice %205 {offsets = [6, 0], sizes = [1, 512], strides = [1, 1]} : vector<7x512xf32> to vector<1x512xf32>
      %238 = vector.broadcast %237 : vector<1x512xf32> to vector<16x512xf32>
      %239 = arith.mulf %236, %238 : vector<16x512xf32>
      %240 = arith.addf %235, %239 : vector<16x512xf32>
      %c0_i32_57 = arith.constant 0 : i32
      %c0_i32_58 = arith.constant 0 : i32
      %241 = tpu.memref_slice %arg10[%44, %c0_i32_57, %c0_i32_58] : memref<2x32x768xf32, #tpu.memory_space<vmem>> -> memref<1x32x768xf32, #tpu.memory_space<vmem>>
      %242 = tpu.memref_squeeze %241 : memref<1x32x768xf32, #tpu.memory_space<vmem>> -> memref<32x768xf32, #tpu.memory_space<vmem>>
      %c5_59 = arith.constant 5 : index
      %c192 = arith.constant 192 : index
      %243 = vector.load %242[%c5_59, %c192] : memref<32x768xf32, #tpu.memory_space<vmem>>, vector<22x512xf32>
      %c35 = arith.constant 35 : index
      %c0_60 = arith.constant 0 : index
      %244 = vector.load %arg6[%c35, %c0_60] : memref<49x512xf32, #tpu.memory_space<vmem>>, vector<7x512xf32>
      %245 = vector.extract_strided_slice %243 {offsets = [0, 0], sizes = [16, 512], strides = [1, 1]} : vector<22x512xf32> to vector<16x512xf32>
      %246 = vector.extract_strided_slice %244 {offsets = [0, 0], sizes = [1, 512], strides = [1, 1]} : vector<7x512xf32> to vector<1x512xf32>
      %247 = vector.broadcast %246 : vector<1x512xf32> to vector<16x512xf32>
      %248 = arith.mulf %245, %247 : vector<16x512xf32>
      %249 = arith.addf %240, %248 : vector<16x512xf32>
      %250 = vector.extract_strided_slice %243 {offsets = [1, 0], sizes = [16, 512], strides = [1, 1]} : vector<22x512xf32> to vector<16x512xf32>
      %251 = vector.extract_strided_slice %244 {offsets = [1, 0], sizes = [1, 512], strides = [1, 1]} : vector<7x512xf32> to vector<1x512xf32>
      %252 = vector.broadcast %251 : vector<1x512xf32> to vector<16x512xf32>
      %253 = arith.mulf %250, %252 : vector<16x512xf32>
      %254 = arith.addf %249, %253 : vector<16x512xf32>
      %255 = vector.extract_strided_slice %243 {offsets = [2, 0], sizes = [16, 512], strides = [1, 1]} : vector<22x512xf32> to vector<16x512xf32>
      %256 = vector.extract_strided_slice %244 {offsets = [2, 0], sizes = [1, 512], strides = [1, 1]} : vector<7x512xf32> to vector<1x512xf32>
      %257 = vector.broadcast %256 : vector<1x512xf32> to vector<16x512xf32>
      %258 = arith.mulf %255, %257 : vector<16x512xf32>
      %259 = arith.addf %254, %258 : vector<16x512xf32>
      %260 = vector.extract_strided_slice %243 {offsets = [3, 0], sizes = [16, 512], strides = [1, 1]} : vector<22x512xf32> to vector<16x512xf32>
      %261 = vector.extract_strided_slice %244 {offsets = [3, 0], sizes = [1, 512], strides = [1, 1]} : vector<7x512xf32> to vector<1x512xf32>
      %262 = vector.broadcast %261 : vector<1x512xf32> to vector<16x512xf32>
      %263 = arith.mulf %260, %262 : vector<16x512xf32>
      %264 = arith.addf %259, %263 : vector<16x512xf32>
      %265 = vector.extract_strided_slice %243 {offsets = [4, 0], sizes = [16, 512], strides = [1, 1]} : vector<22x512xf32> to vector<16x512xf32>
      %266 = vector.extract_strided_slice %244 {offsets = [4, 0], sizes = [1, 512], strides = [1, 1]} : vector<7x512xf32> to vector<1x512xf32>
      %267 = vector.broadcast %266 : vector<1x512xf32> to vector<16x512xf32>
      %268 = arith.mulf %265, %267 : vector<16x512xf32>
      %269 = arith.addf %264, %268 : vector<16x512xf32>
      %270 = vector.extract_strided_slice %243 {offsets = [5, 0], sizes = [16, 512], strides = [1, 1]} : vector<22x512xf32> to vector<16x512xf32>
      %271 = vector.extract_strided_slice %244 {offsets = [5, 0], sizes = [1, 512], strides = [1, 1]} : vector<7x512xf32> to vector<1x512xf32>
      %272 = vector.broadcast %271 : vector<1x512xf32> to vector<16x512xf32>
      %273 = arith.mulf %270, %272 : vector<16x512xf32>
      %274 = arith.addf %269, %273 : vector<16x512xf32>
      %275 = vector.extract_strided_slice %243 {offsets = [6, 0], sizes = [16, 512], strides = [1, 1]} : vector<22x512xf32> to vector<16x512xf32>
      %276 = vector.extract_strided_slice %244 {offsets = [6, 0], sizes = [1, 512], strides = [1, 1]} : vector<7x512xf32> to vector<1x512xf32>
      %277 = vector.broadcast %276 : vector<1x512xf32> to vector<16x512xf32>
      %278 = arith.mulf %275, %277 : vector<16x512xf32>
      %279 = arith.addf %274, %278 : vector<16x512xf32>
      %c0_i32_61 = arith.constant 0 : i32
      %c0_i32_62 = arith.constant 0 : i32
      %280 = tpu.memref_slice %arg10[%44, %c0_i32_61, %c0_i32_62] : memref<2x32x768xf32, #tpu.memory_space<vmem>> -> memref<1x32x768xf32, #tpu.memory_space<vmem>>
      %281 = tpu.memref_squeeze %280 : memref<1x32x768xf32, #tpu.memory_space<vmem>> -> memref<32x768xf32, #tpu.memory_space<vmem>>
      %c5_63 = arith.constant 5 : index
      %c224 = arith.constant 224 : index
      %282 = vector.load %281[%c5_63, %c224] : memref<32x768xf32, #tpu.memory_space<vmem>>, vector<22x512xf32>
      %c42 = arith.constant 42 : index
      %c0_64 = arith.constant 0 : index
      %283 = vector.load %arg6[%c42, %c0_64] : memref<49x512xf32, #tpu.memory_space<vmem>>, vector<7x512xf32>
      %284 = vector.extract_strided_slice %282 {offsets = [0, 0], sizes = [16, 512], strides = [1, 1]} : vector<22x512xf32> to vector<16x512xf32>
      %285 = vector.extract_strided_slice %283 {offsets = [0, 0], sizes = [1, 512], strides = [1, 1]} : vector<7x512xf32> to vector<1x512xf32>
      %286 = vector.broadcast %285 : vector<1x512xf32> to vector<16x512xf32>
      %287 = arith.mulf %284, %286 : vector<16x512xf32>
      %288 = arith.addf %279, %287 : vector<16x512xf32>
      %289 = vector.extract_strided_slice %282 {offsets = [1, 0], sizes = [16, 512], strides = [1, 1]} : vector<22x512xf32> to vector<16x512xf32>
      %290 = vector.extract_strided_slice %283 {offsets = [1, 0], sizes = [1, 512], strides = [1, 1]} : vector<7x512xf32> to vector<1x512xf32>
      %291 = vector.broadcast %290 : vector<1x512xf32> to vector<16x512xf32>
      %292 = arith.mulf %289, %291 : vector<16x512xf32>
      %293 = arith.addf %288, %292 : vector<16x512xf32>
      %294 = vector.extract_strided_slice %282 {offsets = [2, 0], sizes = [16, 512], strides = [1, 1]} : vector<22x512xf32> to vector<16x512xf32>
      %295 = vector.extract_strided_slice %283 {offsets = [2, 0], sizes = [1, 512], strides = [1, 1]} : vector<7x512xf32> to vector<1x512xf32>
      %296 = vector.broadcast %295 : vector<1x512xf32> to vector<16x512xf32>
      %297 = arith.mulf %294, %296 : vector<16x512xf32>
      %298 = arith.addf %293, %297 : vector<16x512xf32>
      %299 = vector.extract_strided_slice %282 {offsets = [3, 0], sizes = [16, 512], strides = [1, 1]} : vector<22x512xf32> to vector<16x512xf32>
      %300 = vector.extract_strided_slice %283 {offsets = [3, 0], sizes = [1, 512], strides = [1, 1]} : vector<7x512xf32> to vector<1x512xf32>
      %301 = vector.broadcast %300 : vector<1x512xf32> to vector<16x512xf32>
      %302 = arith.mulf %299, %301 : vector<16x512xf32>
      %303 = arith.addf %298, %302 : vector<16x512xf32>
      %304 = vector.extract_strided_slice %282 {offsets = [4, 0], sizes = [16, 512], strides = [1, 1]} : vector<22x512xf32> to vector<16x512xf32>
      %305 = vector.extract_strided_slice %283 {offsets = [4, 0], sizes = [1, 512], strides = [1, 1]} : vector<7x512xf32> to vector<1x512xf32>
      %306 = vector.broadcast %305 : vector<1x512xf32> to vector<16x512xf32>
      %307 = arith.mulf %304, %306 : vector<16x512xf32>
      %308 = arith.addf %303, %307 : vector<16x512xf32>
      %309 = vector.extract_strided_slice %282 {offsets = [5, 0], sizes = [16, 512], strides = [1, 1]} : vector<22x512xf32> to vector<16x512xf32>
      %310 = vector.extract_strided_slice %283 {offsets = [5, 0], sizes = [1, 512], strides = [1, 1]} : vector<7x512xf32> to vector<1x512xf32>
      %311 = vector.broadcast %310 : vector<1x512xf32> to vector<16x512xf32>
      %312 = arith.mulf %309, %311 : vector<16x512xf32>
      %313 = arith.addf %308, %312 : vector<16x512xf32>
      %314 = vector.extract_strided_slice %282 {offsets = [6, 0], sizes = [16, 512], strides = [1, 1]} : vector<22x512xf32> to vector<16x512xf32>
      %315 = vector.extract_strided_slice %283 {offsets = [6, 0], sizes = [1, 512], strides = [1, 1]} : vector<7x512xf32> to vector<1x512xf32>
      %316 = vector.broadcast %315 : vector<1x512xf32> to vector<16x512xf32>
      %317 = arith.mulf %314, %316 : vector<16x512xf32>
      %318 = arith.addf %313, %317 : vector<16x512xf32>
      %319 = arith.truncf %318 : vector<16x512xf32> to vector<16x512xbf16>
      %320 = arith.extf %319 : vector<16x512xbf16> to vector<16x512xf32>
      %321 = arith.subf %318, %320 : vector<16x512xf32>
      %c0_65 = arith.constant 0 : index
      %c0_66 = arith.constant 0 : index
      %322 = vector.load %arg7[%c0_65, %c0_66] : memref<512x16xf32, #tpu.memory_space<vmem>>, vector<512x16xf32>
      %cst_67 = arith.constant dense<0.000000e+00> : vector<16x16xf32>
      %323 = tpu.matmul %320, %322, %cst_67 {dimension_numbers = #tpu.dot_dimension_numbers<[1], [0], [0], [1], [0, 0, 1, 1], [], []>} : vector<16x512xf32>, vector<512x16xf32>, vector<16x16xf32> -> vector<16x16xf32>
      %c0_68 = arith.constant 0 : index
      %c0_69 = arith.constant 0 : index
      %324 = vector.load %arg7[%c0_68, %c0_69] : memref<512x16xf32, #tpu.memory_space<vmem>>, vector<512x16xf32>
      %cst_70 = arith.constant dense<0.000000e+00> : vector<16x16xf32>
      %325 = tpu.matmul %321, %324, %cst_70 {dimension_numbers = #tpu.dot_dimension_numbers<[1], [0], [0], [1], [0, 0, 1, 1], [], []>} : vector<16x512xf32>, vector<512x16xf32>, vector<16x16xf32> -> vector<16x16xf32>
      %326 = arith.addf %323, %325 : vector<16x16xf32>
      %327 = arith.truncf %326 : vector<16x16xf32> to vector<16x16xbf16>
      %328 = arith.extf %327 : vector<16x16xbf16> to vector<16x16xf32>
      %329 = arith.subf %326, %328 : vector<16x16xf32>
      %c0_71 = arith.constant 0 : index
      %c0_72 = arith.constant 0 : index
      %330 = vector.load %arg8[%c0_71, %c0_72] : memref<16x512xf32, #tpu.memory_space<vmem>>, vector<16x512xf32>
      %cst_73 = arith.constant dense<0.000000e+00> : vector<16x512xf32>
      %331 = tpu.matmul %328, %330, %cst_73 {dimension_numbers = #tpu.dot_dimension_numbers<[1], [0], [0], [1], [0, 0, 1, 1], [], []>} : vector<16x16xf32>, vector<16x512xf32>, vector<16x512xf32> -> vector<16x512xf32>
      %c0_74 = arith.constant 0 : index
      %c0_75 = arith.constant 0 : index
      %332 = vector.load %arg8[%c0_74, %c0_75] : memref<16x512xf32, #tpu.memory_space<vmem>>, vector<16x512xf32>
      %cst_76 = arith.constant dense<0.000000e+00> : vector<16x512xf32>
      %333 = tpu.matmul %329, %332, %cst_76 {dimension_numbers = #tpu.dot_dimension_numbers<[1], [0], [0], [1], [0, 0, 1, 1], [], []>} : vector<16x16xf32>, vector<16x512xf32>, vector<16x512xf32> -> vector<16x512xf32>
      %334 = arith.addf %331, %333 : vector<16x512xf32>
      %c0_i32_77 = arith.constant 0 : i32
      %c0_i32_78 = arith.constant 0 : i32
      %335 = tpu.memref_slice %arg10[%44, %c0_i32_77, %c0_i32_78] : memref<2x32x768xf32, #tpu.memory_space<vmem>> -> memref<1x32x768xf32, #tpu.memory_space<vmem>>
      %336 = tpu.memref_squeeze %335 : memref<1x32x768xf32, #tpu.memory_space<vmem>> -> memref<32x768xf32, #tpu.memory_space<vmem>>
      %c8_79 = arith.constant 8 : index
      %c128_80 = arith.constant 128 : index
      %337 = vector.load %336[%c8_79, %c128_80] : memref<32x768xf32, #tpu.memory_space<vmem>>, vector<16x512xf32>
      %c16_i32 = arith.constant 16 : i32
      %338 = arith.muli %44, %c16_i32 : i32
      %339 = tpu.assume_multiple %338, 16 : i32
      %cst_81 = arith.constant -6.000000e+01 : f32
      %340 = vector.broadcast %cst_81 : f32 to vector<16x512xf32>
      %341 = arith.maximumf %334, %340 : vector<16x512xf32>
      %cst_82 = arith.constant 0.000000e+00 : f32
      %342 = vector.broadcast %cst_82 : f32 to vector<16x512xf32>
      %343 = arith.subf %342, %341 : vector<16x512xf32>
      %344 = math.exp %343 : vector<16x512xf32>
      %cst_83 = arith.constant 1.000000e+00 : f32
      %345 = vector.broadcast %cst_83 : f32 to vector<16x512xf32>
      %346 = arith.addf %345, %344 : vector<16x512xf32>
      %347 = tpu.reciprocal %346 {approx = true} : vector<16x512xf32> -> vector<16x512xf32>
      %348 = arith.mulf %346, %347 : vector<16x512xf32>
      %cst_84 = arith.constant 2.000000e+00 : f32
      %349 = vector.broadcast %cst_84 : f32 to vector<16x512xf32>
      %350 = arith.subf %349, %348 : vector<16x512xf32>
      %351 = arith.mulf %347, %350 : vector<16x512xf32>
      %352 = arith.mulf %351, %337 : vector<16x512xf32>
      %353 = arith.index_cast %339 : i32 to index
      %c0_85 = arith.constant 0 : index
      %354 = vector.load %arg9[%353, %c0_85] : memref<32x512xf32, #tpu.memory_space<vmem>>, vector<16x512xf32>
      tpu.vector_store %arg9[%353, %c0_85], %352 {strides = array<i32>} : memref<32x512xf32, #tpu.memory_space<vmem>>, vector<16x512xf32>,
    }
    %c2_i32_32 = arith.constant 2 : i32
    return
  }
  func.func @transform_0(%arg0: i32) -> (i32, i32) {
    %c0_i32 = arith.constant 0 : i32
    %c0_i32_0 = arith.constant 0 : i32
    return %arg0, %c0_i32 : i32, i32
  }
  func.func @transform_1(%arg0: i32) -> (i32, i32) {
    %c0_i32 = arith.constant 0 : i32
    %c0_i32_0 = arith.constant 0 : i32
    %c0_i32_1 = arith.constant 0 : i32
    return %c0_i32, %c0_i32_0 : i32, i32
  }
  func.func @transform_2(%arg0: i32) -> (i32, i32) {
    %c0_i32 = arith.constant 0 : i32
    %c0_i32_0 = arith.constant 0 : i32
    %c0_i32_1 = arith.constant 0 : i32
    return %c0_i32, %c0_i32_0 : i32, i32
  }
  func.func @transform_3(%arg0: i32) -> (i32, i32) {
    %c0_i32 = arith.constant 0 : i32
    %c0_i32_0 = arith.constant 0 : i32
    %c0_i32_1 = arith.constant 0 : i32
    return %c0_i32, %c0_i32_0 : i32, i32
  }
  func.func @transform_4(%arg0: i32) -> (i32, i32) {
    %c0_i32 = arith.constant 0 : i32
    %c0_i32_0 = arith.constant 0 : i32
    %c0_i32_1 = arith.constant 0 : i32
    return %c0_i32, %c0_i32_0 : i32, i32
  }
  func.func @transform_5(%arg0: i32) -> (i32, i32) {
    %c0_i32 = arith.constant 0 : i32
    %c0_i32_0 = arith.constant 0 : i32
    %c0_i32_1 = arith.constant 0 : i32
    return %c0_i32, %c0_i32_0 : i32, i32
  }
  func.func @transform_6(%arg0: i32) -> (i32, i32) {
    %c0_i32 = arith.constant 0 : i32
    %c0_i32_0 = arith.constant 0 : i32
    %c0_i32_1 = arith.constant 0 : i32
    return %c0_i32, %c0_i32_0 : i32, i32
  }
  func.func @transform_7(%arg0: i32) -> (i32, i32) {
    %c0_i32 = arith.constant 0 : i32
    %c0_i32_0 = arith.constant 0 : i32
    %c0_i32_1 = arith.constant 0 : i32
    return %c0_i32, %c0_i32_0 : i32, i32
  }
  func.func @transform_8(%arg0: i32) -> (i32, i32) {
    %c0_i32 = arith.constant 0 : i32
    %c0_i32_0 = arith.constant 0 : i32
    return %arg0, %c0_i32 : i32, i32
  }
}

</mosaic_0001>

<llo_original>
// kernel: tpu_custom_call.1
$region0: #{tpu_custom_call.1}
  #allocation0 [shape = 'u32[]', space=smem, size = 0x4, offset = 0x4, fixed_abs, tag = 'smem constant byte address 0x4 - core index']
  #allocation1 [shape = 'u32[144,128]{1,0:T(1,128)}', space=vmem, size = 0x12000, scoped, tag = 'internal scratch']
  #allocation2 [shape = 'f32[2,32,768]{2,1,0:T(8,128)}', space=vmem, size = 0x30000, scoped, tag = 'scratch operand']
  %s0 = inlined_call_operand.vmem [shape: f32[32,512], index: 0, kind: input, shape index: {}]
  %s1 = inlined_call_operand.vmem [shape: f32[512,32], index: 1, kind: input, shape index: {}]
  %s2 = inlined_call_operand.vmem [shape: f32[1,32], index: 2, kind: input, shape index: {}]
  %s3 = inlined_call_operand.vmem [shape: f32[32,512], index: 3, kind: input, shape index: {}]
  %s4 = inlined_call_operand.vmem [shape: f32[1,512], index: 4, kind: input, shape index: {}]
  %s5 = inlined_call_operand.vmem [shape: f32[49,512], index: 5, kind: input, shape index: {}]
  %s6 = inlined_call_operand.vmem [shape: f32[512,16], index: 6, kind: input, shape index: {}]
  %s7 = inlined_call_operand.vmem [shape: f32[16,512], index: 7, kind: input, shape index: {}]
  %s8 = inlined_call_operand.hbm [shape: f32[32,512], index: 8, kind: output, shape index: {}]
  %s9 = sld [smem:[#allocation0]]
  $region49: #{tpu_custom_call.1} parent=0
    _
  %s11 = ssub.s32 1, %s9
  %s12 = scalar_select 0, %s11, %s9
  $region1: #{tpu_custom_call.1} parent=0
    #allocation3 [shape = 'u8[65536]{0}', space=vmem, size = 0x10000, scoped, tag = 'output window, operand 0, single buffered']
    #allocation4 [shape = 's32[1]{0}', space=sflag, size = 0x4, scoped, tag = 'scoped memory for tpu_custom_call.1']
    %13 = vsyncpa [#allocation4], 0
    // Predicated region
    $region2: #{tpu_custom_call.1} parent=1 // pred_check
      _
    $region3: #{tpu_custom_call.1} parent=1 // pred_check_branch
      %15 = sbr.rel (0) target = $region5
    $region4: #{tpu_custom_call.1} parent=1 // pred_region
      _
    $region5: #{tpu_custom_call.1} parent=1 // pred_fallthru
      _
    // Predicated region
    $region6: #{tpu_custom_call.1} parent=1 // pred_check
      _
    $region7: #{tpu_custom_call.1} parent=1 // pred_check_branch
      %17 = sbr.rel (0) target = $region9
    $region8: #{tpu_custom_call.1} parent=1 // pred_region
      _
    $region9: #{tpu_custom_call.1} parent=1 // pred_fallthru
      _
    // Predicated region
    $region10: #{tpu_custom_call.1} parent=1 // pred_check
      _
    $region11: #{tpu_custom_call.1} parent=1 // pred_check_branch
      %19 = sbr.rel (0) target = $region13
    $region12: #{tpu_custom_call.1} parent=1 // pred_region
      _
    $region13: #{tpu_custom_call.1} parent=1 // pred_fallthru
      _
    // Predicated region
    $region14: #{tpu_custom_call.1} parent=1 // pred_check
      _
    $region15: #{tpu_custom_call.1} parent=1 // pred_check_branch
      %21 = sbr.rel (0) target = $region17
    $region16: #{tpu_custom_call.1} parent=1 // pred_region
      _
    $region17: #{tpu_custom_call.1} parent=1 // pred_fallthru
      _
    // Predicated region
    $region18: #{tpu_custom_call.1} parent=1 // pred_check
      _
    $region19: #{tpu_custom_call.1} parent=1 // pred_check_branch
      %23 = sbr.rel (0) target = $region21
    $region20: #{tpu_custom_call.1} parent=1 // pred_region
      _
    $region21: #{tpu_custom_call.1} parent=1 // pred_fallthru
      _
    // Predicated region
    $region22: #{tpu_custom_call.1} parent=1 // pred_check
      _
    $region23: #{tpu_custom_call.1} parent=1 // pred_check_branch
      %25 = sbr.rel (0) target = $region25
    $region24: #{tpu_custom_call.1} parent=1 // pred_region
      _
    $region25: #{tpu_custom_call.1} parent=1 // pred_fallthru
      _
    // Predicated region
    $region26: #{tpu_custom_call.1} parent=1 // pred_check
      _
    $region27: #{tpu_custom_call.1} parent=1 // pred_check_branch
      %27 = sbr.rel (0) target = $region29
    $region28: #{tpu_custom_call.1} parent=1 // pred_region
      _
    $region29: #{tpu_custom_call.1} parent=1 // pred_fallthru
      _
    // Predicated region
    $region30: #{tpu_custom_call.1} parent=1 // pred_check
      _
    $region31: #{tpu_custom_call.1} parent=1 // pred_check_branch
      %29 = sbr.rel (0) target = $region33
    $region32: #{tpu_custom_call.1} parent=1 // pred_region
      _
    $region33: #{tpu_custom_call.1} parent=1 // pred_fallthru
      _
    %30 = vst [vmem:[#allocation2] sm:$0xff] 0.0
    %31 = vst [vmem:[#allocation2 + $0x8] sm:$0xff] 0.0
    %32 = vst [vmem:[#allocation2 + $0x10] sm:$0xff] 0.0
    %33 = vst [vmem:[#allocation2 + $0x18] sm:$0xff] 0.0
    %34 = vst [vmem:[#allocation2 + $0x20] sm:$0xff] 0.0
    %35 = vst [vmem:[#allocation2 + $0x28] sm:$0xff] 0.0
    %36 = vst [vmem:[#allocation2 + $0xc0] sm:$0xff] 0.0
    %37 = vst [vmem:[#allocation2 + $0xc8] sm:$0xff] 0.0
    %38 = vst [vmem:[#allocation2 + $0xd0] sm:$0xff] 0.0
    %39 = vst [vmem:[#allocation2 + $0xd8] sm:$0xff] 0.0
    %40 = vst [vmem:[#allocation2 + $0xe0] sm:$0xff] 0.0
    %41 = vst [vmem:[#allocation2 + $0xe8] sm:$0xff] 0.0
    %42 = vst [vmem:[#allocation2 + $0x90] sm:$0xff] 0.0
    %43 = vst [vmem:[#allocation2 + $0x98] sm:$0xff] 0.0
    %44 = vst [vmem:[#allocation2 + $0xa0] sm:$0xff] 0.0
    %45 = vst [vmem:[#allocation2 + $0xa8] sm:$0xff] 0.0
    %46 = vst [vmem:[#allocation2 + $0xb0] sm:$0xff] 0.0
    %47 = vst [vmem:[#allocation2 + $0xb8] sm:$0xff] 0.0
    %48 = vst [vmem:[#allocation2 + $0x150] sm:$0xff] 0.0
    %49 = vst [vmem:[#allocation2 + $0x158] sm:$0xff] 0.0
    %50 = vst [vmem:[#allocation2 + $0x160] sm:$0xff] 0.0
    %51 = vst [vmem:[#allocation2 + $0x168] sm:$0xff] 0.0
    %52 = vst [vmem:[#allocation2 + $0x170] sm:$0xff] 0.0
    %53 = vst [vmem:[#allocation2 + $0x178] sm:$0xff] 0.0
    %54 = vst [vmem:[#allocation2 + $0x30] sm:$0xff] 0.0
    %55 = vst [vmem:[#allocation2 + $0x60] sm:$0xff] 0.0
    %56 = vst [vmem:[#allocation2 + $0xf0] sm:$0xff] 0.0
    %57 = vst [vmem:[#allocation2 + $0x120] sm:$0xff] 0.0
    %58 = vst [vmem:[#allocation2 + $0x58] sm:$0xff] 0.0
    %59 = vst [vmem:[#allocation2 + $0x88] sm:$0xff] 0.0
    %60 = vst [vmem:[#allocation2 + $0x118] sm:$0xff] 0.0
    %61 = vst [vmem:[#allocation2 + $0x148] sm:$0xff] 0.0
    %v62 = vld [vmem:[%s0] sm:$0xff]
    %v63 = vld [vmem:[%s0 + $0x8] sm:$0xff]
    %v64 = vld [vmem:[%s0 + $0x10] sm:$0xff]
    %v65 = vld [vmem:[%s0 + $0x18] sm:$0xff]
    %v66 = vld [vmem:[%s0 + $0x20] sm:$0xff]
    %v67 = vld [vmem:[%s0 + $0x28] sm:$0xff]
    %v68 = vld [vmem:[%s0 + $0x30] sm:$0xff]
    %v69 = vld [vmem:[%s0 + $0x38] sm:$0xff]
    %v70 = vld [vmem:[%s0 + $0x40] sm:$0xff]
    %v71 = vld [vmem:[%s0 + $0x48] sm:$0xff]
    %v72 = vld [vmem:[%s0 + $0x50] sm:$0xff]
    %v73 = vld [vmem:[%s0 + $0x58] sm:$0xff]
    %v74 = vld [vmem:[%s0 + $0x60] sm:$0xff]
    %v75 = vld [vmem:[%s0 + $0x68] sm:$0xff]
    %v76 = vld [vmem:[%s0 + $0x70] sm:$0xff]
    %v77 = vld [vmem:[%s0 + $0x78] sm:$0xff]
    %v78 = vld [vmem:[%s1] sm:$0xff]
    %v79 = vld [vmem:[%s1 + $0x8] sm:$0xff]
    %v80 = vld [vmem:[%s1 + $0x10] sm:$0xff]
    %v81 = vld [vmem:[%s1 + $0x18] sm:$0xff]
    %v82 = vld [vmem:[%s1 + $0x20] sm:$0xff]
    %v83 = vld [vmem:[%s1 + $0x28] sm:$0xff]
    %v84 = vld [vmem:[%s1 + $0x30] sm:$0xff]
    %v85 = vld [vmem:[%s1 + $0x38] sm:$0xff]
    %v86 = vld [vmem:[%s1 + $0x40] sm:$0xff]
    %v87 = vld [vmem:[%s1 + $0x48] sm:$0xff]
    %v88 = vld [vmem:[%s1 + $0x50] sm:$0xff]
    %v89 = vld [vmem:[%s1 + $0x58] sm:$0xff]
    %v90 = vld [vmem:[%s1 + $0x60] sm:$0xff]
    %v91 = vld [vmem:[%s1 + $0x68] sm:$0xff]
    %v92 = vld [vmem:[%s1 + $0x70] sm:$0xff]
    %v93 = vld [vmem:[%s1 + $0x78] sm:$0xff]
    %v94 = vld [vmem:[%s1 + $0x80] sm:$0xff]
    %v95 = vld [vmem:[%s1 + $0x88] sm:$0xff]
    %v96 = vld [vmem:[%s1 + $0x90] sm:$0xff]
    %v97 = vld [vmem:[%s1 + $0x98] sm:$0xff]
    %v98 = vld [vmem:[%s1 + $0xa0] sm:$0xff]
    %v99 = vld [vmem:[%s1 + $0xa8] sm:$0xff]
    %v100 = vld [vmem:[%s1 + $0xb0] sm:$0xff]
    %v101 = vld [vmem:[%s1 + $0xb8] sm:$0xff]
    %v102 = vld [vmem:[%s1 + $0xc0] sm:$0xff]
    %v103 = vld [vmem:[%s1 + $0xc8] sm:$0xff]
    %v104 = vld [vmem:[%s1 + $0xd0] sm:$0xff]
    %v105 = vld [vmem:[%s1 + $0xd8] sm:$0xff]
    %v106 = vld [vmem:[%s1 + $0xe0] sm:$0xff]
    %v107 = vld [vmem:[%s1 + $0xe8] sm:$0xff]
    %v108 = vld [vmem:[%s1 + $0xf0] sm:$0xff]
    %v109 = vld [vmem:[%s1 + $0xf8] sm:$0xff]
    %v110 = vld [vmem:[%s1 + $0x100] sm:$0xff]
    %v111 = vld [vmem:[%s1 + $0x108] sm:$0xff]
    %v112 = vld [vmem:[%s1 + $0x110] sm:$0xff]
    %v113 = vld [vmem:[%s1 + $0x118] sm:$0xff]
    %v114 = vld [vmem:[%s1 + $0x120] sm:$0xff]
    %v115 = vld [vmem:[%s1 + $0x128] sm:$0xff]
    %v116 = vld [vmem:[%s1 + $0x130] sm:$0xff]
    %v117 = vld [vmem:[%s1 + $0x138] sm:$0xff]
    %v118 = vld [vmem:[%s1 + $0x140] sm:$0xff]
    %v119 = vld [vmem:[%s1 + $0x148] sm:$0xff]
    %v120 = vld [vmem:[%s1 + $0x150] sm:$0xff]
    %v121 = vld [vmem:[%s1 + $0x158] sm:$0xff]
    %v122 = vld [vmem:[%s1 + $0x160] sm:$0xff]
    %v123 = vld [vmem:[%s1 + $0x168] sm:$0xff]
    %v124 = vld [vmem:[%s1 + $0x170] sm:$0xff]
    %v125 = vld [vmem:[%s1 + $0x178] sm:$0xff]
    %v126 = vld [vmem:[%s1 + $0x180] sm:$0xff]
    %v127 = vld [vmem:[%s1 + $0x188] sm:$0xff]
    %v128 = vld [vmem:[%s1 + $0x190] sm:$0xff]
    %v129 = vld [vmem:[%s1 + $0x198] sm:$0xff]
    %v130 = vld [vmem:[%s1 + $0x1a0] sm:$0xff]
    %v131 = vld [vmem:[%s1 + $0x1a8] sm:$0xff]
    %v132 = vld [vmem:[%s1 + $0x1b0] sm:$0xff]
    %v133 = vld [vmem:[%s1 + $0x1b8] sm:$0xff]
    %v134 = vld [vmem:[%s1 + $0x1c0] sm:$0xff]
    %v135 = vld [vmem:[%s1 + $0x1c8] sm:$0xff]
    %v136 = vld [vmem:[%s1 + $0x1d0] sm:$0xff]
    %v137 = vld [vmem:[%s1 + $0x1d8] sm:$0xff]
    %v138 = vld [vmem:[%s1 + $0x1e0] sm:$0xff]
    %v139 = vld [vmem:[%s1 + $0x1e8] sm:$0xff]
    %v140 = vld [vmem:[%s1 + $0x1f0] sm:$0xff]
    %v141 = vld [vmem:[%s1 + $0x1f8] sm:$0xff]
    %v142 = vld [vmem:[%s2] sm:$0x1]
    %v144 = vlaneseq
    %v145 = vshrl.u32 %v144, 7
    %v146 = vsub.s32 0, %v145
    %v147 = vrot.slane %v142, %v146
    %149 = vmatprep.subr.mxu0 0.0
    %150 = vmatpush1.msra.mxu0 %v93
    %151 = vmatprep.subr.mxu0 0.0
    %152 = vmatpush1.msra.mxu0 %v92
    %153 = vmatprep.subr.mxu0 0.0
    %154 = vmatpush1.msra.mxu0 %v91
    %155 = vmatprep.subr.mxu0 0.0
    %156 = vmatpush1.msra.mxu0 %v90
    %157 = vmatprep.subr.mxu0 0.0
    %158 = vmatpush1.msra.mxu0 %v89
    %159 = vmatprep.subr.mxu0 0.0
    %160 = vmatpush1.msra.mxu0 %v88
    %161 = vmatprep.subr.mxu0 0.0
    %162 = vmatpush1.msra.mxu0 %v87
    %163 = vmatprep.subr.mxu0 0.0
    %164 = vmatpush1.msra.mxu0 %v86
    %165 = vmatprep.subr.mxu0 0.0
    %166 = vmatpush1.msra.mxu0 %v85
    %167 = vmatprep.subr.mxu0 0.0
    %168 = vmatpush1.msra.mxu0 %v84
    %169 = vmatprep.subr.mxu0 0.0
    %170 = vmatpush1.msra.mxu0 %v83
    %171 = vmatprep.subr.mxu0 0.0
    %172 = vmatpush1.msra.mxu0 %v82
    %173 = vmatprep.subr.mxu0 0.0
    %174 = vmatpush1.msra.mxu0 %v81
    %175 = vmatprep.subr.mxu0 0.0
    %176 = vmatpush1.msra.mxu0 %v80
    %177 = vmatprep.subr.mxu0 0.0
    %178 = vmatpush1.msra.mxu0 %v79
    %179 = vmatprep.subr.mxu0 0.0
    %180 = vmatpush1.msra.mxu0 %v78
    %181 = vmatprep.subr.mxu0 0.0
    %182 = vmatpush2.msra.mxu0 %v109
    %183 = vmatprep.subr.mxu0 0.0
    %184 = vmatpush2.msra.mxu0 %v108
    %185 = vmatprep.subr.mxu0 0.0
    %186 = vmatpush2.msra.mxu0 %v107
    %187 = vmatprep.subr.mxu0 0.0
    %188 = vmatpush2.msra.mxu0 %v106
    %189 = vmatprep.subr.mxu0 0.0
    %190 = vmatpush2.msra.mxu0 %v105
    %191 = vmatprep.subr.mxu0 0.0
    %192 = vmatpush2.msra.mxu0 %v104
    %193 = vmatprep.subr.mxu0 0.0
    %194 = vmatpush2.msra.mxu0 %v103
    %195 = vmatprep.subr.mxu0 0.0
    %196 = vmatpush2.msra.mxu0 %v102
    %197 = vmatprep.subr.mxu0 0.0
    %198 = vmatpush2.msra.mxu0 %v101
    %199 = vmatprep.subr.mxu0 0.0
    %200 = vmatpush2.msra.mxu0 %v100
    %201 = vmatprep.subr.mxu0 0.0
    %202 = vmatpush2.msra.mxu0 %v99
    %203 = vmatprep.subr.mxu0 0.0
    %204 = vmatpush2.msra.mxu0 %v98
    %205 = vmatprep.subr.mxu0 0.0
    %206 = vmatpush2.msra.mxu0 %v97
    %207 = vmatprep.subr.mxu0 0.0
    %208 = vmatpush2.msra.mxu0 %v96
    %209 = vmatprep.subr.mxu0 0.0
    %210 = vmatpush2.msra.mxu0 %v95
    %211 = vmatprep.subr.mxu0 0.0
    %212 = vmatpush2.msra.mxu0 %v94
    %213 = vmatprep.mubr.f32.mxu0 %v63
    %214 = vmatmul.mubr.f32.gmra.mxu0 %v62
    %v215 = vpop.f32.mrf.mxu0
    %v216 = vadd.f32 %v147, %v215
    %v217 = vpop.f32.mrf.mxu0
    %218 = vmatprep.mubr.f32.mxu0 %v67
    %219 = vmatmul.mubr.f32.gmra.mxu0 %v66
    %v220 = vpop.f32.mrf.mxu0
    %v221 = vadd.f32 %v147, %v220
    %v222 = vpop.f32.mrf.mxu0
    %223 = vmatprep.mubr.f32.mxu0 %v71
    %224 = vmatmul.mubr.f32.gmra.mxu0 %v70
    %v225 = vpop.f32.mrf.mxu0
    %v226 = vadd.f32 %v147, %v225
    %v227 = vpop.f32.mrf.mxu0
    %228 = vmatprep.mubr.f32.mxu0 %v75
    %229 = vmatmul.mubr.f32.gmra.mxu0 %v74
    %v230 = vpop.f32.mrf.mxu0
    %v231 = vadd.f32 %v147, %v230
    %v232 = vpop.f32.mrf.mxu0
    %233 = vdwg.mxu0
    %234 = vmatprep.subr.mxu0 0.0
    %235 = vmatpush1.msra.mxu0 %v125
    %236 = vmatprep.subr.mxu0 0.0
    %237 = vmatpush1.msra.mxu0 %v124
    %238 = vmatprep.subr.mxu0 0.0
    %239 = vmatpush1.msra.mxu0 %v123
    %240 = vmatprep.subr.mxu0 0.0
    %241 = vmatpush1.msra.mxu0 %v122
    %242 = vmatprep.subr.mxu0 0.0
    %243 = vmatpush1.msra.mxu0 %v121
    %244 = vmatprep.subr.mxu0 0.0
    %245 = vmatpush1.msra.mxu0 %v120
    %246 = vmatprep.subr.mxu0 0.0
    %247 = vmatpush1.msra.mxu0 %v119
    %248 = vmatprep.subr.mxu0 0.0
    %249 = vmatpush1.msra.mxu0 %v118
    %250 = vmatprep.subr.mxu0 0.0
    %251 = vmatpush1.msra.mxu0 %v117
    %252 = vmatprep.subr.mxu0 0.0
    %253 = vmatpush1.msra.mxu0 %v116
    %254 = vmatprep.subr.mxu0 0.0
    %255 = vmatpush1.msra.mxu0 %v115
    %256 = vmatprep.subr.mxu0 0.0
    %257 = vmatpush1.msra.mxu0 %v114
    %258 = vmatprep.subr.mxu0 0.0
    %259 = vmatpush1.msra.mxu0 %v113
    %260 = vmatprep.subr.mxu0 0.0
    %261 = vmatpush1.msra.mxu0 %v112
    %262 = vmatprep.subr.mxu0 0.0
    %263 = vmatpush1.msra.mxu0 %v111
    %264 = vmatprep.subr.mxu0 0.0
    %265 = vmatpush1.msra.mxu0 %v110
    %266 = vmatprep.subr.mxu0 0.0
    %267 = vmatpush2.msra.mxu0 %v141
    %268 = vmatprep.subr.mxu0 0.0
    %269 = vmatpush2.msra.mxu0 %v140
    %270 = vmatprep.subr.mxu0 0.0
    %271 = vmatpush2.msra.mxu0 %v139
    %272 = vmatprep.subr.mxu0 0.0
    %273 = vmatpush2.msra.mxu0 %v138
    %274 = vmatprep.subr.mxu0 0.0
    %275 = vmatpush2.msra.mxu0 %v137
    %276 = vmatprep.subr.mxu0 0.0
    %277 = vmatpush2.msra.mxu0 %v136
    %278 = vmatprep.subr.mxu0 0.0
    %279 = vmatpush2.msra.mxu0 %v135
    %280 = vmatprep.subr.mxu0 0.0
    %281 = vmatpush2.msra.mxu0 %v134
    %282 = vmatprep.subr.mxu0 0.0
    %283 = vmatpush2.msra.mxu0 %v133
    %284 = vmatprep.subr.mxu0 0.0
    %285 = vmatpush2.msra.mxu0 %v132
    %286 = vmatprep.subr.mxu0 0.0
    %287 = vmatpush2.msra.mxu0 %v131
    %288 = vmatprep.subr.mxu0 0.0
    %289 = vmatpush2.msra.mxu0 %v130
    %290 = vmatprep.subr.mxu0 0.0
    %291 = vmatpush2.msra.mxu0 %v129
    %292 = vmatprep.subr.mxu0 0.0
    %293 = vmatpush2.msra.mxu0 %v128
    %294 = vmatprep.subr.mxu0 0.0
    %295 = vmatpush2.msra.mxu0 %v127
    %296 = vmatprep.subr.mxu0 0.0
    %297 = vmatpush2.msra.mxu0 %v126
    %298 = vmatprep.mubr.f32.mxu0 %v65
    %299 = vmatmul.mubr.f32.gmra.mxu0 %v64
    %v300 = vpop.f32.mrf.mxu0
    %v301 = vadd.f32 %v216, %v300
    %v302 = vpop.f32.mrf.mxu0
    %303 = vmatprep.mubr.f32.mxu0 %v69
    %304 = vmatmul.mubr.f32.gmra.mxu0 %v68
    %v305 = vpop.f32.mrf.mxu0
    %v306 = vadd.f32 %v221, %v305
    %v307 = vpop.f32.mrf.mxu0
    %308 = vmatprep.mubr.f32.mxu0 %v73
    %309 = vmatmul.mubr.f32.gmra.mxu0 %v72
    %v310 = vpop.f32.mrf.mxu0
    %v311 = vadd.f32 %v226, %v310
    %v312 = vpop.f32.mrf.mxu0
    %313 = vmatprep.mubr.f32.mxu0 %v77
    %314 = vmatmul.mubr.f32.gmra.mxu0 %v76
    %v315 = vpop.f32.mrf.mxu0
    %v316 = vadd.f32 %v231, %v315
    %v317 = vpop.f32.mrf.mxu0
    %318 = vdwg.mxu0
    %v319 = vmax.f32 %v301, 0.0
    %v320 = vmax.f32 %v306, 0.0
    %v321 = vmax.f32 %v311, 0.0
    %v322 = vmax.f32 %v316, 0.0
    %v323 = vld [vmem:[%s3] sm:$0xff]
    %v324 = vld [vmem:[%s3 + $0x8] sm:$0xff]
    %v325 = vld [vmem:[%s3 + $0x10] sm:$0xff]
    %v326 = vld [vmem:[%s3 + $0x18] sm:$0xff]
    %v327 = vld [vmem:[%s3 + $0x20] sm:$0xff]
    %v328 = vld [vmem:[%s3 + $0x28] sm:$0xff]
    %v329 = vld [vmem:[%s3 + $0x30] sm:$0xff]
    %v330 = vld [vmem:[%s3 + $0x38] sm:$0xff]
    %v331 = vld [vmem:[%s3 + $0x40] sm:$0xff]
    %v332 = vld [vmem:[%s3 + $0x48] sm:$0xff]
    %v333 = vld [vmem:[%s3 + $0x50] sm:$0xff]
    %v334 = vld [vmem:[%s3 + $0x58] sm:$0xff]
    %v335 = vld [vmem:[%s3 + $0x60] sm:$0xff]
    %v336 = vld [vmem:[%s3 + $0x68] sm:$0xff]
    %v337 = vld [vmem:[%s3 + $0x70] sm:$0xff]
    %v338 = vld [vmem:[%s3 + $0x78] sm:$0xff]
    %v339 = vld [vmem:[%s4] sm:$0xf]
    %v341 = vlaneseq
    %v342 = vshrl.u32 %v341, 7
    %v343 = vsub.s32 0, %v342
    %v344 = vrot.slane %v339, %v343
    %v345 = vlaneseq
    %v346 = vshrl.u32 %v345, 7
    %v347 = vsub.s32 1, %v346
    %v348 = vrot.slane %v339, %v347
    %v349 = vlaneseq
    %v350 = vshrl.u32 %v349, 7
    %v351 = vsub.s32 2, %v350
    %v352 = vrot.slane %v339, %v351
    %v353 = vlaneseq
    %v354 = vshrl.u32 %v353, 7
    %v355 = vsub.s32 3, %v354
    %v356 = vrot.slane %v339, %v355
    %vm361 = vcmask 261120
    %v363 = vsel %vm361, %v319, 0
    %v366 = vsel %vm361, %v320, 0
    %v369 = vsel %vm361, %v321, 0
    %v372 = vsel %vm361, %v322, 0
    %374 = vmatprep.subr.mxu0 0.0
    %375 = vmatpush1.msra.mxu0 0.0
    %376 = vmatprep.subr.mxu0 0.0
    %377 = vmatpush1.msra.mxu0 0.0
    %378 = vmatprep.subr.mxu0 0.0
    %379 = vmatpush1.msra.mxu0 0.0
    %380 = vmatprep.subr.mxu0 0.0
    %381 = vmatpush1.msra.mxu0 0.0
    %382 = vmatprep.subr.mxu0 0.0
    %383 = vmatpush1.msra.mxu0 0.0
    %384 = vmatprep.subr.mxu0 0.0
    %385 = vmatpush1.msra.mxu0 0.0
    %386 = vmatprep.subr.mxu0 0.0
    %387 = vmatpush1.msra.mxu0 0.0
    %388 = vmatprep.subr.mxu0 0.0
    %389 = vmatpush1.msra.mxu0 0.0
    %390 = vmatprep.subr.mxu0 0.0
    %391 = vmatpush1.msra.mxu0 0.0
    %392 = vmatprep.subr.mxu0 0.0
    %393 = vmatpush1.msra.mxu0 0.0
    %394 = vmatprep.subr.mxu0 0.0
    %395 = vmatpush1.msra.mxu0 0.0
    %396 = vmatprep.subr.mxu0 0.0
    %397 = vmatpush1.msra.mxu0 0.0
    %398 = vmatprep.subr.mxu0 %v336
    %399 = vmatpush1.msra.mxu0 %v335
    %400 = vmatprep.subr.mxu0 %v332
    %401 = vmatpush1.msra.mxu0 %v331
    %402 = vmatprep.subr.mxu0 %v328
    %403 = vmatpush1.msra.mxu0 %v327
    %404 = vmatprep.subr.mxu0 %v324
    %405 = vmatpush1.msra.mxu0 %v323
    %406 = vmatprep.subr.mxu0 0.0
    %407 = vmatpush2.msra.mxu0 0.0
    %408 = vmatprep.subr.mxu0 0.0
    %409 = vmatpush2.msra.mxu0 0.0
    %410 = vmatprep.subr.mxu0 0.0
    %411 = vmatpush2.msra.mxu0 0.0
    %412 = vmatprep.subr.mxu0 0.0
    %413 = vmatpush2.msra.mxu0 0.0
    %414 = vmatprep.subr.mxu0 0.0
    %415 = vmatpush2.msra.mxu0 0.0
    %416 = vmatprep.subr.mxu0 0.0
    %417 = vmatpush2.msra.mxu0 0.0
    %418 = vmatprep.subr.mxu0 0.0
    %419 = vmatpush2.msra.mxu0 0.0
    %420 = vmatprep.subr.mxu0 0.0
    %421 = vmatpush2.msra.mxu0 0.0
    %422 = vmatprep.subr.mxu0 0.0
    %423 = vmatpush2.msra.mxu0 0.0
    %424 = vmatprep.subr.mxu0 0.0
    %425 = vmatpush2.msra.mxu0 0.0
    %426 = vmatprep.subr.mxu0 0.0
    %427 = vmatpush2.msra.mxu0 0.0
    %428 = vmatprep.subr.mxu0 0.0
    %429 = vmatpush2.msra.mxu0 0.0
    %430 = vmatprep.subr.mxu0 0.0
    %431 = vmatpush2.msra.mxu0 0.0
    %432 = vmatprep.subr.mxu0 0.0
    %433 = vmatpush2.msra.mxu0 0.0
    %434 = vmatprep.subr.mxu0 0.0
    %435 = vmatpush2.msra.mxu0 0.0
    %436 = vmatprep.subr.mxu0 0.0
    %437 = vmatpush2.msra.mxu0 0.0
    %438 = vmatprep.mubr.f32.mxu0 0.0
    %439 = vmatmul.mubr.f32.gmra.mxu0 %v363
    %v440 = vpop.f32.mrf.mxu0
    %v441 = vadd.f32 %v344, %v440
    %v442 = vpop.f32.mrf.mxu0
    %v443 = vadd.f32 %v348, %v442
    %444 = vmatprep.mubr.f32.mxu0 0.0
    %445 = vmatmul.mubr.f32.gmra.mxu0 %v366
    %v446 = vpop.f32.mrf.mxu0
    %v447 = vadd.f32 %v344, %v446
    %v448 = vpop.f32.mrf.mxu0
    %v449 = vadd.f32 %v348, %v448
    %450 = vmatprep.mubr.f32.mxu0 0.0
    %451 = vmatmul.mubr.f32.gmra.mxu0 %v369
    %v452 = vpop.f32.mrf.mxu0
    %v453 = vadd.f32 %v344, %v452
    %v454 = vpop.f32.mrf.mxu0
    %v455 = vadd.f32 %v348, %v454
    %456 = vmatprep.mubr.f32.mxu0 0.0
    %457 = vmatmul.mubr.f32.gmra.mxu0 %v372
    %v458 = vpop.f32.mrf.mxu0
    %v459 = vadd.f32 %v344, %v458
    %v460 = vpop.f32.mrf.mxu0
    %v461 = vadd.f32 %v348, %v460
    %462 = vdwg.mxu0
    %463 = vmatprep.subr.mxu0 0.0
    %464 = vmatpush1.msra.mxu0 0.0
    %465 = vmatprep.subr.mxu0 0.0
    %466 = vmatpush1.msra.mxu0 0.0
    %467 = vmatprep.subr.mxu0 0.0
    %468 = vmatpush1.msra.mxu0 0.0
    %469 = vmatprep.subr.mxu0 0.0
    %470 = vmatpush1.msra.mxu0 0.0
    %471 = vmatprep.subr.mxu0 0.0
    %472 = vmatpush1.msra.mxu0 0.0
    %473 = vmatprep.subr.mxu0 0.0
    %474 = vmatpush1.msra.mxu0 0.0
    %475 = vmatprep.subr.mxu0 0.0
    %476 = vmatpush1.msra.mxu0 0.0
    %477 = vmatprep.subr.mxu0 0.0
    %478 = vmatpush1.msra.mxu0 0.0
    %479 = vmatprep.subr.mxu0 0.0
    %480 = vmatpush1.msra.mxu0 0.0
    %481 = vmatprep.subr.mxu0 0.0
    %482 = vmatpush1.msra.mxu0 0.0
    %483 = vmatprep.subr.mxu0 0.0
    %484 = vmatpush1.msra.mxu0 0.0
    %485 = vmatprep.subr.mxu0 0.0
    %486 = vmatpush1.msra.mxu0 0.0
    %487 = vmatprep.subr.mxu0 %v338
    %488 = vmatpush1.msra.mxu0 %v337
    %489 = vmatprep.subr.mxu0 %v334
    %490 = vmatpush1.msra.mxu0 %v333
    %491 = vmatprep.subr.mxu0 %v330
    %492 = vmatpush1.msra.mxu0 %v329
    %493 = vmatprep.subr.mxu0 %v326
    %494 = vmatpush1.msra.mxu0 %v325
    %495 = vmatprep.subr.mxu0 0.0
    %496 = vmatpush2.msra.mxu0 0.0
    %497 = vmatprep.subr.mxu0 0.0
    %498 = vmatpush2.msra.mxu0 0.0
    %499 = vmatprep.subr.mxu0 0.0
    %500 = vmatpush2.msra.mxu0 0.0
    %501 = vmatprep.subr.mxu0 0.0
    %502 = vmatpush2.msra.mxu0 0.0
    %503 = vmatprep.subr.mxu0 0.0
    %504 = vmatpush2.msra.mxu0 0.0
    %505 = vmatprep.subr.mxu0 0.0
    %506 = vmatpush2.msra.mxu0 0.0
    %507 = vmatprep.subr.mxu0 0.0
    %508 = vmatpush2.msra.mxu0 0.0
    %509 = vmatprep.subr.mxu0 0.0
    %510 = vmatpush2.msra.mxu0 0.0
    %511 = vmatprep.subr.mxu0 0.0
    %512 = vmatpush2.msra.mxu0 0.0
    %513 = vmatprep.subr.mxu0 0.0
    %514 = vmatpush2.msra.mxu0 0.0
    %515 = vmatprep.subr.mxu0 0.0
    %516 = vmatpush2.msra.mxu0 0.0
    %517 = vmatprep.subr.mxu0 0.0
    %518 = vmatpush2.msra.mxu0 0.0
    %519 = vmatprep.subr.mxu0 0.0
    %520 = vmatpush2.msra.mxu0 0.0
    %521 = vmatprep.subr.mxu0 0.0
    %522 = vmatpush2.msra.mxu0 0.0
    %523 = vmatprep.subr.mxu0 0.0
    %524 = vmatpush2.msra.mxu0 0.0
    %525 = vmatprep.subr.mxu0 0.0
    %526 = vmatpush2.msra.mxu0 0.0
    %527 = vmatprep.mubr.f32.mxu0 0.0
    %528 = vmatmul.mubr.f32.gmra.mxu0 %v363
    %v529 = vpop.f32.mrf.mxu0
    %v530 = vadd.f32 %v352, %v529
    %v531 = vpop.f32.mrf.mxu0
    %v532 = vadd.f32 %v356, %v531
    %533 = vmatprep.mubr.f32.mxu0 0.0
    %534 = vmatmul.mubr.f32.gmra.mxu0 %v366
    %v535 = vpop.f32.mrf.mxu0
    %v536 = vadd.f32 %v352, %v535
    %v537 = vpop.f32.mrf.mxu0
    %v538 = vadd.f32 %v356, %v537
    %539 = vmatprep.mubr.f32.mxu0 0.0
    %540 = vmatmul.mubr.f32.gmra.mxu0 %v369
    %v541 = vpop.f32.mrf.mxu0
    %v542 = vadd.f32 %v352, %v541
    %v543 = vpop.f32.mrf.mxu0
    %v544 = vadd.f32 %v356, %v543
    %545 = vmatprep.mubr.f32.mxu0 0.0
    %546 = vmatmul.mubr.f32.gmra.mxu0 %v372
    %v547 = vpop.f32.mrf.mxu0
    %v548 = vadd.f32 %v352, %v547
    %v549 = vpop.f32.mrf.mxu0
    %v550 = vadd.f32 %v356, %v549
    %551 = vdwg.mxu0
    %v552 = vmax.f32 %v441, -60.0
    %v553 = vmax.f32 %v443, -60.0
    %v554 = vmax.f32 %v530, -60.0
    %v555 = vmax.f32 %v532, -60.0
    %v556 = vmax.f32 %v447, -60.0
    %v557 = vmax.f32 %v449, -60.0
    %v558 = vmax.f32 %v536, -60.0
    %v559 = vmax.f32 %v538, -60.0
    %v560 = vmax.f32 %v453, -60.0
    %v561 = vmax.f32 %v455, -60.0
    %v562 = vmax.f32 %v542, -60.0
    %v563 = vmax.f32 %v544, -60.0
    %v564 = vmax.f32 %v459, -60.0
    %v565 = vmax.f32 %v461, -60.0
    %v566 = vmax.f32 %v548, -60.0
    %v567 = vmax.f32 %v550, -60.0
    %v568 = vsub.f32 0.0, %v552
    %v569 = vsub.f32 0.0, %v553
    %v570 = vsub.f32 0.0, %v554
    %v571 = vsub.f32 0.0, %v555
    %v572 = vsub.f32 0.0, %v556
    %v573 = vsub.f32 0.0, %v557
    %v574 = vsub.f32 0.0, %v558
    %v575 = vsub.f32 0.0, %v559
    %v576 = vsub.f32 0.0, %v560
    %v577 = vsub.f32 0.0, %v561
    %v578 = vsub.f32 0.0, %v562
    %v579 = vsub.f32 0.0, %v563
    %v580 = vsub.f32 0.0, %v564
    %v581 = vsub.f32 0.0, %v565
    %v582 = vsub.f32 0.0, %v566
    %v583 = vsub.f32 0.0, %v567
    %v584 = vmul.f32 %v568, 1.442695
    %v585 = vpow.pop %v584
    %v586 = vmul.f32 %v569, 1.442695
    %v587 = vpow.pop %v586
    %v588 = vmul.f32 %v570, 1.442695
    %v589 = vpow.pop %v588
    %v590 = vmul.f32 %v571, 1.442695
    %v591 = vpow.pop %v590
    %v592 = vmul.f32 %v572, 1.442695
    %v593 = vpow.pop %v592
    %v594 = vmul.f32 %v573, 1.442695
    %v595 = vpow.pop %v594
    %v596 = vmul.f32 %v574, 1.442695
    %v597 = vpow.pop %v596
    %v598 = vmul.f32 %v575, 1.442695
    %v599 = vpow.pop %v598
    %v600 = vmul.f32 %v576, 1.442695
    %v601 = vpow.pop %v600
    %v602 = vmul.f32 %v577, 1.442695
    %v603 = vpow.pop %v602
    %v604 = vmul.f32 %v578, 1.442695
    %v605 = vpow.pop %v604
    %v606 = vmul.f32 %v579, 1.442695
    %v607 = vpow.pop %v606
    %v608 = vmul.f32 %v580, 1.442695
    %v609 = vpow.pop %v608
    %v610 = vmul.f32 %v581, 1.442695
    %v611 = vpow.pop %v610
    %v612 = vmul.f32 %v582, 1.442695
    %v613 = vpow.pop %v612
    %v614 = vmul.f32 %v583, 1.442695
    %v615 = vpow.pop %v614
    %v616 = vadd.f32 %v585, 1.0
    %v617 = vadd.f32 %v587, 1.0
    %v618 = vadd.f32 %v589, 1.0
    %v619 = vadd.f32 %v591, 1.0
    %v620 = vadd.f32 %v593, 1.0
    %v621 = vadd.f32 %v595, 1.0
    %v622 = vadd.f32 %v597, 1.0
    %v623 = vadd.f32 %v599, 1.0
    %v624 = vadd.f32 %v601, 1.0
    %v625 = vadd.f32 %v603, 1.0
    %v626 = vadd.f32 %v605, 1.0
    %v627 = vadd.f32 %v607, 1.0
    %v628 = vadd.f32 %v609, 1.0
    %v629 = vadd.f32 %v611, 1.0
    %v630 = vadd.f32 %v613, 1.0
    %v631 = vadd.f32 %v615, 1.0
    %v632 = vrcp.pop %v616
    %v633 = vrcp.pop %v617
    %v634 = vrcp.pop %v618
    %v635 = vrcp.pop %v619
    %v636 = vrcp.pop %v620
    %v637 = vrcp.pop %v621
    %v638 = vrcp.pop %v622
    %v639 = vrcp.pop %v623
    %v640 = vrcp.pop %v624
    %v641 = vrcp.pop %v625
    %v642 = vrcp.pop %v626
    %v643 = vrcp.pop %v627
    %v644 = vrcp.pop %v628
    %v645 = vrcp.pop %v629
    %v646 = vrcp.pop %v630
    %v647 = vrcp.pop %v631
    %v648 = vmul.f32 %v616, %v632
    %v649 = vmul.f32 %v617, %v633
    %v650 = vmul.f32 %v618, %v634
    %v651 = vmul.f32 %v619, %v635
    %v652 = vmul.f32 %v620, %v636
    %v653 = vmul.f32 %v621, %v637
    %v654 = vmul.f32 %v622, %v638
    %v655 = vmul.f32 %v623, %v639
    %v656 = vmul.f32 %v624, %v640
    %v657 = vmul.f32 %v625, %v641
    %v658 = vmul.f32 %v626, %v642
    %v659 = vmul.f32 %v627, %v643
    %v660 = vmul.f32 %v628, %v644
    %v661 = vmul.f32 %v629, %v645
    %v662 = vmul.f32 %v630, %v646
    %v663 = vmul.f32 %v631, %v647
    %v664 = vsub.f32 2.0, %v648
    %v665 = vsub.f32 2.0, %v649
    %v666 = vsub.f32 2.0, %v650
    %v667 = vsub.f32 2.0, %v651
    %v668 = vsub.f32 2.0, %v652
    %v669 = vsub.f32 2.0, %v653
    %v670 = vsub.f32 2.0, %v654
    %v671 = vsub.f32 2.0, %v655
    %v672 = vsub.f32 2.0, %v656
    %v673 = vsub.f32 2.0, %v657
    %v674 = vsub.f32 2.0, %v658
    %v675 = vsub.f32 2.0, %v659
    %v676 = vsub.f32 2.0, %v660
    %v677 = vsub.f32 2.0, %v661
    %v678 = vsub.f32 2.0, %v662
    %v679 = vsub.f32 2.0, %v663
    %v680 = vmul.f32 %v632, %v664
    %v681 = vmul.f32 %v633, %v665
    %v682 = vmul.f32 %v634, %v666
    %v683 = vmul.f32 %v635, %v667
    %v684 = vmul.f32 %v636, %v668
    %v685 = vmul.f32 %v637, %v669
    %v686 = vmul.f32 %v638, %v670
    %v687 = vmul.f32 %v639, %v671
    %v688 = vmul.f32 %v640, %v672
    %v689 = vmul.f32 %v641, %v673
    %v690 = vmul.f32 %v642, %v674
    %v691 = vmul.f32 %v643, %v675
    %v692 = vmul.f32 %v644, %v676
    %v693 = vmul.f32 %v645, %v677
    %v694 = vmul.f32 %v646, %v678
    %v695 = vmul.f32 %v647, %v679
    %v696 = vmul.f32 %v680, %v62
    %v697 = vmul.f32 %v681, %v63
    %v698 = vmul.f32 %v682, %v64
    %v699 = vmul.f32 %v683, %v65
    %v700 = vmul.f32 %v684, %v66
    %v701 = vmul.f32 %v685, %v67
    %v702 = vmul.f32 %v686, %v68
    %v703 = vmul.f32 %v687, %v69
    %v704 = vmul.f32 %v688, %v70
    %v705 = vmul.f32 %v689, %v71
    %v706 = vmul.f32 %v690, %v72
    %v707 = vmul.f32 %v691, %v73
    %v708 = vmul.f32 %v692, %v74
    %v709 = vmul.f32 %v693, %v75
    %v710 = vmul.f32 %v694, %v76
    %v711 = vmul.f32 %v695, %v77
    %712 = vst [vmem:[#allocation2 + $0x38] sm:$0xff] %v696
    %713 = vst [vmem:[#allocation2 + $0x40] sm:$0xff] %v697
    %714 = vst [vmem:[#allocation2 + $0x48] sm:$0xff] %v698
    %715 = vst [vmem:[#allocation2 + $0x50] sm:$0xff] %v699
    %716 = vst [vmem:[#allocation2 + $0x68] sm:$0xff] %v700
    %717 = vst [vmem:[#allocation2 + $0x70] sm:$0xff] %v701
    %718 = vst [vmem:[#allocation2 + $0x78] sm:$0xff] %v702
    %719 = vst [vmem:[#allocation2 + $0x80] sm:$0xff] %v703
    %s720 = scalar_lea.vmem [#allocation2], 192
    %721 = vst [vmem:[%s720 + $0x38] sm:$0xff] %v704
    %722 = vst [vmem:[%s720 + $0x40] sm:$0xff] %v705
    %723 = vst [vmem:[%s720 + $0x48] sm:$0xff] %v706
    %724 = vst [vmem:[%s720 + $0x50] sm:$0xff] %v707
    %725 = vst [vmem:[%s720 + $0x68] sm:$0xff] %v708
    %726 = vst [vmem:[%s720 + $0x70] sm:$0xff] %v709
    %727 = vst [vmem:[%s720 + $0x78] sm:$0xff] %v710
    %728 = vst [vmem:[%s720 + $0x80] sm:$0xff] %v711
    loop: start=0, step=1, limit=2
    $region34: #{tpu_custom_call.1} parent=1 // loop_pre_header
      _
    $region35: #{tpu_custom_call.1} parent=1 // loop_header
      %s730 = sphi 0, %s734
      %p731 = scmp.ge.s32.totalorder %s730, 2
    $region36: #{tpu_custom_call.1} parent=1 // loop_header_branch
      %733 = sbr.rel (%p731) target = $region40
    $region37: #{tpu_custom_call.1} parent=1 // loop_body
      %s735 = smul.u32 %s730, 24
      %s736 = smul.addr %s735, 8
      %s737 = scalar_lea.vmem [#allocation2], %s736
      %v738 = vld [vmem:[%s737] sm:$0xe0]
      %v739 = vld [vmem:[%s737 + $0x8] sm:$0xe0]
      %v740 = vld [vmem:[%s737 + $0x10] sm:$0xe0]
      %v741 = vld [vmem:[%s737 + $0x18] sm:$0xe0]
      %v742 = vld [vmem:[%s737 + $0x20] sm:$0xe0]
      %v743 = vld [vmem:[%s737 + $0x30] sm:$0xff]
      %v744 = vld [vmem:[%s737 + $0x38] sm:$0xff]
      %v745 = vld [vmem:[%s737 + $0x40] sm:$0xff]
      %v746 = vld [vmem:[%s737 + $0x48] sm:$0xff]
      %v747 = vld [vmem:[%s737 + $0x50] sm:$0xff]
      %v748 = vld [vmem:[%s737 + $0x60] sm:$0xff]
      %v749 = vld [vmem:[%s737 + $0x68] sm:$0xff]
      %v750 = vld [vmem:[%s737 + $0x70] sm:$0xff]
      %v751 = vld [vmem:[%s737 + $0x78] sm:$0xff]
      %v752 = vld [vmem:[%s737 + $0x80] sm:$0xff]
      %v753 = vld [vmem:[%s737 + $0x90] sm:$0x7]
      %v754 = vld [vmem:[%s737 + $0x98] sm:$0x7]
      %v755 = vld [vmem:[%s737 + $0xa0] sm:$0x7]
      %v756 = vld [vmem:[%s737 + $0xa8] sm:$0x7]
      %v757 = vld [vmem:[%s737 + $0xb0] sm:$0x7]
      %v758 = vld [vmem:[%s5] sm:$0x7f]
      %v759 = vld [vmem:[%s5 + $0x8] sm:$0x7f]
      %v760 = vld [vmem:[%s5 + $0x10] sm:$0x7f]
      %v761 = vld [vmem:[%s5 + $0x18] sm:$0x7f]
      %v762 = vlaneseq
      %v763 = vshrl.u32 %v762, 7
      %v764 = vsub.s32 0, %v763
      %v765 = vrot.slane %v758, %v764
      %v766 = vlaneseq
      %v767 = vshrl.u32 %v766, 7
      %v768 = vsub.s32 0, %v767
      %v769 = vrot.slane %v759, %v768
      %v770 = vlaneseq
      %v771 = vshrl.u32 %v770, 7
      %v772 = vsub.s32 0, %v771
      %v773 = vrot.slane %v760, %v772
      %v774 = vlaneseq
      %v775 = vshrl.u32 %v774, 7
      %v776 = vsub.s32 0, %v775
      %v777 = vrot.slane %v761, %v776
      %782 = vrot.lane.b32.xlu0 %v765, 32
      %v783 = vpop.permute.xlu0 %782
      %784 = vrot.lane.b32.xlu0 %v769, 32
      %v785 = vpop.permute.xlu0 %784
      %786 = vrot.lane.b32.xlu0 %v773, 32
      %v787 = vpop.permute.xlu0 %786
      %788 = vrot.lane.b32.xlu0 %v777, 32
      %v789 = vpop.permute.xlu0 %788
      %v790 = vsel %vm361, %v783, %v785
      %v791 = vsel %vm361, %v785, %v787
      %v792 = vsel %vm361, %v787, %v789
      %v798 = vmul.f32 %v738, %v783
      %v799 = vmul.f32 %v739, %v790
      %v800 = vmul.f32 %v740, %v791
      %v801 = vmul.f32 %v741, %v792
      %v802 = vmul.f32 %v742, %v789
      %v803 = vmul.f32 %v743, %v783
      %v804 = vmul.f32 %v744, %v790
      %v805 = vmul.f32 %v745, %v791
      %v806 = vmul.f32 %v746, %v792
      %v807 = vmul.f32 %v747, %v789
      %v808 = vmul.f32 %v748, %v783
      %v809 = vmul.f32 %v749, %v790
      %v810 = vmul.f32 %v750, %v791
      %v811 = vmul.f32 %v751, %v792
      %v812 = vmul.f32 %v752, %v789
      %v813 = vadd.f32 %v798, 0.0
      %v814 = vadd.f32 %v799, 0.0
      %v815 = vadd.f32 %v800, 0.0
      %v816 = vadd.f32 %v801, 0.0
      %v817 = vadd.f32 %v802, 0.0
      %v818 = vadd.f32 %v803, 0.0
      %v819 = vadd.f32 %v804, 0.0
      %v820 = vadd.f32 %v805, 0.0
      %v821 = vadd.f32 %v806, 0.0
      %v822 = vadd.f32 %v807, 0.0
      %v823 = vadd.f32 %v808, 0.0
      %v824 = vadd.f32 %v809, 0.0
      %v825 = vadd.f32 %v810, 0.0
      %v826 = vadd.f32 %v811, 0.0
      %v827 = vadd.f32 %v812, 0.0
      %v828 = vlaneseq
      %v829 = vshrl.u32 %v828, 7
      %v830 = vsub.s32 1, %v829
      %v831 = vrot.slane %v758, %v830
      %v832 = vlaneseq
      %v833 = vshrl.u32 %v832, 7
      %v834 = vsub.s32 1, %v833
      %v835 = vrot.slane %v759, %v834
      %v836 = vlaneseq
      %v837 = vshrl.u32 %v836, 7
      %v838 = vsub.s32 1, %v837
      %v839 = vrot.slane %v760, %v838
      %v840 = vlaneseq
      %v841 = vshrl.u32 %v840, 7
      %v842 = vsub.s32 1, %v841
      %v843 = vrot.slane %v761, %v842
      %848 = vrot.lane.b32.xlu0 %v831, 32
      %v849 = vpop.permute.xlu0 %848
      %850 = vrot.lane.b32.xlu0 %v835, 32
      %v851 = vpop.permute.xlu0 %850
      %852 = vrot.lane.b32.xlu0 %v839, 32
      %v853 = vpop.permute.xlu0 %852
      %854 = vrot.lane.b32.xlu0 %v843, 32
      %v855 = vpop.permute.xlu0 %854
      %v856 = vsel %vm361, %v849, %v851
      %v857 = vsel %vm361, %v851, %v853
      %v858 = vsel %vm361, %v853, %v855
      %v864 = vmul.f32 %v738, %v849
      %v865 = vmul.f32 %v739, %v856
      %v866 = vmul.f32 %v740, %v857
      %v867 = vmul.f32 %v741, %v858
      %v868 = vmul.f32 %v742, %v855
      %v869 = vmul.f32 %v743, %v849
      %v870 = vmul.f32 %v744, %v856
      %v871 = vmul.f32 %v745, %v857
      %v872 = vmul.f32 %v746, %v858
      %v873 = vmul.f32 %v747, %v855
      %v874 = vmul.f32 %v748, %v849
      %v875 = vmul.f32 %v749, %v856
      %v876 = vmul.f32 %v750, %v857
      %v877 = vmul.f32 %v751, %v858
      %v878 = vmul.f32 %v752, %v855
      %vm894 = vcmask 1046528
      %v895 = vrot.slane %v864, 1
      %v896 = vrot.slane %v869, 1
      %v897 = vsel %vm894, %v895, %v896
      %v898 = vrot.slane %v865, 1
      %v899 = vrot.slane %v870, 1
      %v900 = vsel %vm894, %v898, %v899
      %v901 = vrot.slane %v866, 1
      %v902 = vrot.slane %v871, 1
      %v903 = vsel %vm894, %v901, %v902
      %v904 = vrot.slane %v867, 1
      %v905 = vrot.slane %v872, 1
      %v906 = vsel %vm894, %v904, %v905
      %v907 = vrot.slane %v868, 1
      %v908 = vrot.slane %v873, 1
      %v909 = vsel %vm894, %v907, %v908
      %v910 = vrot.slane %v874, 1
      %v911 = vsel %vm894, %v896, %v910
      %v912 = vrot.slane %v875, 1
      %v913 = vsel %vm894, %v899, %v912
      %v914 = vrot.slane %v876, 1
      %v915 = vsel %vm894, %v902, %v914
      %v916 = vrot.slane %v877, 1
      %v917 = vsel %vm894, %v905, %v916
      %v918 = vrot.slane %v878, 1
      %v919 = vsel %vm894, %v908, %v918
      %v935 = vadd.f32 %v813, %v897
      %v936 = vadd.f32 %v814, %v900
      %v937 = vadd.f32 %v815, %v903
      %v938 = vadd.f32 %v816, %v906
      %v939 = vadd.f32 %v817, %v909
      %v940 = vadd.f32 %v818, %v911
      %v941 = vadd.f32 %v819, %v913
      %v942 = vadd.f32 %v820, %v915
      %v943 = vadd.f32 %v821, %v917
      %v944 = vadd.f32 %v822, %v919
      %v945 = vadd.f32 %v823, %v910
      %v946 = vadd.f32 %v824, %v912
      %v947 = vadd.f32 %v825, %v914
      %v948 = vadd.f32 %v826, %v916
      %v949 = vadd.f32 %v827, %v918
      %v950 = vlaneseq
      %v951 = vshrl.u32 %v950, 7
      %v952 = vsub.s32 2, %v951
      %v953 = vrot.slane %v758, %v952
      %v954 = vlaneseq
      %v955 = vshrl.u32 %v954, 7
      %v956 = vsub.s32 2, %v955
      %v957 = vrot.slane %v759, %v956
      %v958 = vlaneseq
      %v959 = vshrl.u32 %v958, 7
      %v960 = vsub.s32 2, %v959
      %v961 = vrot.slane %v760, %v960
      %v962 = vlaneseq
      %v963 = vshrl.u32 %v962, 7
      %v964 = vsub.s32 2, %v963
      %v965 = vrot.slane %v761, %v964
      %970 = vrot.lane.b32.xlu0 %v953, 32
      %v971 = vpop.permute.xlu0 %970
      %972 = vrot.lane.b32.xlu0 %v957, 32
      %v973 = vpop.permute.xlu0 %972
      %974 = vrot.lane.b32.xlu0 %v961, 32
      %v975 = vpop.permute.xlu0 %974
      %976 = vrot.lane.b32.xlu0 %v965, 32
      %v977 = vpop.permute.xlu0 %976
      %v978 = vsel %vm361, %v971, %v973
      %v979 = vsel %vm361, %v973, %v975
      %v980 = vsel %vm361, %v975, %v977
      %v986 = vmul.f32 %v738, %v971
      %v987 = vmul.f32 %v739, %v978
      %v988 = vmul.f32 %v740, %v979
      %v989 = vmul.f32 %v741, %v980
      %v990 = vmul.f32 %v742, %v977
      %v991 = vmul.f32 %v743, %v971
      %v992 = vmul.f32 %v744, %v978
      %v993 = vmul.f32 %v745, %v979
      %v994 = vmul.f32 %v746, %v980
      %v995 = vmul.f32 %v747, %v977
      %v996 = vmul.f32 %v748, %v971
      %v997 = vmul.f32 %v749, %v978
      %v998 = vmul.f32 %v750, %v979
      %v999 = vmul.f32 %v751, %v980
      %v1000 = vmul.f32 %v752, %v977
      %vm1016 = vcmask 1045504
      %v1017 = vrot.slane %v986, 2
      %v1018 = vrot.slane %v991, 2
      %v1019 = vsel %vm1016, %v1017, %v1018
      %v1020 = vrot.slane %v987, 2
      %v1021 = vrot.slane %v992, 2
      %v1022 = vsel %vm1016, %v1020, %v1021
      %v1023 = vrot.slane %v988, 2
      %v1024 = vrot.slane %v993, 2
      %v1025 = vsel %vm1016, %v1023, %v1024
      %v1026 = vrot.slane %v989, 2
      %v1027 = vrot.slane %v994, 2
      %v1028 = vsel %vm1016, %v1026, %v1027
      %v1029 = vrot.slane %v990, 2
      %v1030 = vrot.slane %v995, 2
      %v1031 = vsel %vm1016, %v1029, %v1030
      %v1032 = vrot.slane %v996, 2
      %v1033 = vsel %vm1016, %v1018, %v1032
      %v1034 = vrot.slane %v997, 2
      %v1035 = vsel %vm1016, %v1021, %v1034
      %v1036 = vrot.slane %v998, 2
      %v1037 = vsel %vm1016, %v1024, %v1036
      %v1038 = vrot.slane %v999, 2
      %v1039 = vsel %vm1016, %v1027, %v1038
      %v1040 = vrot.slane %v1000, 2
      %v1041 = vsel %vm1016, %v1030, %v1040
      %v1057 = vadd.f32 %v935, %v1019
      %v1058 = vadd.f32 %v936, %v1022
      %v1059 = vadd.f32 %v937, %v1025
      %v1060 = vadd.f32 %v938, %v1028
      %v1061 = vadd.f32 %v939, %v1031
      %v1062 = vadd.f32 %v940, %v1033
      %v1063 = vadd.f32 %v941, %v1035
      %v1064 = vadd.f32 %v942, %v1037
      %v1065 = vadd.f32 %v943, %v1039
      %v1066 = vadd.f32 %v944, %v1041
      %v1067 = vadd.f32 %v945, %v1032
      %v1068 = vadd.f32 %v946, %v1034
      %v1069 = vadd.f32 %v947, %v1036
      %v1070 = vadd.f32 %v948, %v1038
      %v1071 = vadd.f32 %v949, %v1040
      %v1072 = vlaneseq
      %v1073 = vshrl.u32 %v1072, 7
      %v1074 = vsub.s32 3, %v1073
      %v1075 = vrot.slane %v758, %v1074
      %v1076 = vlaneseq
      %v1077 = vshrl.u32 %v1076, 7
      %v1078 = vsub.s32 3, %v1077
      %v1079 = vrot.slane %v759, %v1078
      %v1080 = vlaneseq
      %v1081 = vshrl.u32 %v1080, 7
      %v1082 = vsub.s32 3, %v1081
      %v1083 = vrot.slane %v760, %v1082
      %v1084 = vlaneseq
      %v1085 = vshrl.u32 %v1084, 7
      %v1086 = vsub.s32 3, %v1085
      %v1087 = vrot.slane %v761, %v1086
      %1092 = vrot.lane.b32.xlu0 %v1075, 32
      %v1093 = vpop.permute.xlu0 %1092
      %1094 = vrot.lane.b32.xlu0 %v1079, 32
      %v1095 = vpop.permute.xlu0 %1094
      %1096 = vrot.lane.b32.xlu0 %v1083, 32
      %v1097 = vpop.permute.xlu0 %1096
      %1098 = vrot.lane.b32.xlu0 %v1087, 32
      %v1099 = vpop.permute.xlu0 %1098
      %v1100 = vsel %vm361, %v1093, %v1095
      %v1101 = vsel %vm361, %v1095, %v1097
      %v1102 = vsel %vm361, %v1097, %v1099
      %v1108 = vmul.f32 %v743, %v1093
      %v1109 = vmul.f32 %v744, %v1100
      %v1110 = vmul.f32 %v745, %v1101
      %v1111 = vmul.f32 %v746, %v1102
      %v1112 = vmul.f32 %v747, %v1099
      %v1113 = vmul.f32 %v748, %v1093
      %v1114 = vmul.f32 %v749, %v1100
      %v1115 = vmul.f32 %v750, %v1101
      %v1116 = vmul.f32 %v751, %v1102
      %v1117 = vmul.f32 %v752, %v1099
      %vm1128 = vcmask 1044480
      %v1129 = vrot.slane %v1108, 3
      %v1130 = vrot.slane %v1109, 3
      %v1131 = vrot.slane %v1110, 3
      %v1132 = vrot.slane %v1111, 3
      %v1133 = vrot.slane %v1112, 3
      %v1134 = vrot.slane %v1113, 3
      %v1135 = vsel %vm1128, %v1129, %v1134
      %v1136 = vrot.slane %v1114, 3
      %v1137 = vsel %vm1128, %v1130, %v1136
      %v1138 = vrot.slane %v1115, 3
      %v1139 = vsel %vm1128, %v1131, %v1138
      %v1140 = vrot.slane %v1116, 3
      %v1141 = vsel %vm1128, %v1132, %v1140
      %v1142 = vrot.slane %v1117, 3
      %v1143 = vsel %vm1128, %v1133, %v1142
      %v1159 = vadd.f32 %v1057, %v1129
      %v1160 = vadd.f32 %v1058, %v1130
      %v1161 = vadd.f32 %v1059, %v1131
      %v1162 = vadd.f32 %v1060, %v1132
      %v1163 = vadd.f32 %v1061, %v1133
      %v1164 = vadd.f32 %v1062, %v1135
      %v1165 = vadd.f32 %v1063, %v1137
      %v1166 = vadd.f32 %v1064, %v1139
      %v1167 = vadd.f32 %v1065, %v1141
      %v1168 = vadd.f32 %v1066, %v1143
      %v1169 = vadd.f32 %v1067, %v1134
      %v1170 = vadd.f32 %v1068, %v1136
      %v1171 = vadd.f32 %v1069, %v1138
      %v1172 = vadd.f32 %v1070, %v1140
      %v1173 = vadd.f32 %v1071, %v1142
      %v1174 = vlaneseq
      %v1175 = vshrl.u32 %v1174, 7
      %v1176 = vsub.s32 4, %v1175
      %v1177 = vrot.slane %v758, %v1176
      %v1178 = vlaneseq
      %v1179 = vshrl.u32 %v1178, 7
      %v1180 = vsub.s32 4, %v1179
      %v1181 = vrot.slane %v759, %v1180
      %v1182 = vlaneseq
      %v1183 = vshrl.u32 %v1182, 7
      %v1184 = vsub.s32 4, %v1183
      %v1185 = vrot.slane %v760, %v1184
      %v1186 = vlaneseq
      %v1187 = vshrl.u32 %v1186, 7
      %v1188 = vsub.s32 4, %v1187
      %v1189 = vrot.slane %v761, %v1188
      %1194 = vrot.lane.b32.xlu0 %v1177, 32
      %v1195 = vpop.permute.xlu0 %1194
      %1196 = vrot.lane.b32.xlu0 %v1181, 32
      %v1197 = vpop.permute.xlu0 %1196
      %1198 = vrot.lane.b32.xlu0 %v1185, 32
      %v1199 = vpop.permute.xlu0 %1198
      %1200 = vrot.lane.b32.xlu0 %v1189, 32
      %v1201 = vpop.permute.xlu0 %1200
      %v1202 = vsel %vm361, %v1195, %v1197
      %v1203 = vsel %vm361, %v1197, %v1199
      %v1204 = vsel %vm361, %v1199, %v1201
      %v1210 = vmul.f32 %v743, %v1195
      %v1211 = vmul.f32 %v744, %v1202
      %v1212 = vmul.f32 %v745, %v1203
      %v1213 = vmul.f32 %v746, %v1204
      %v1214 = vmul.f32 %v747, %v1201
      %v1215 = vmul.f32 %v748, %v1195
      %v1216 = vmul.f32 %v749, %v1202
      %v1217 = vmul.f32 %v750, %v1203
      %v1218 = vmul.f32 %v751, %v1204
      %v1219 = vmul.f32 %v752, %v1201
      %v1220 = vmul.f32 %v753, %v1195
      %v1221 = vmul.f32 %v754, %v1202
      %v1222 = vmul.f32 %v755, %v1203
      %v1223 = vmul.f32 %v756, %v1204
      %v1224 = vmul.f32 %v757, %v1201
      %vm1240 = vcmask 1043456
      %v1241 = vrot.slane %v1210, 4
      %v1242 = vrot.slane %v1211, 4
      %v1243 = vrot.slane %v1212, 4
      %v1244 = vrot.slane %v1213, 4
      %v1245 = vrot.slane %v1214, 4
      %v1246 = vrot.slane %v1215, 4
      %v1247 = vsel %vm1240, %v1241, %v1246
      %v1248 = vrot.slane %v1216, 4
      %v1249 = vsel %vm1240, %v1242, %v1248
      %v1250 = vrot.slane %v1217, 4
      %v1251 = vsel %vm1240, %v1243, %v1250
      %v1252 = vrot.slane %v1218, 4
      %v1253 = vsel %vm1240, %v1244, %v1252
      %v1254 = vrot.slane %v1219, 4
      %v1255 = vsel %vm1240, %v1245, %v1254
      %v1256 = vrot.slane %v1220, 4
      %v1257 = vsel %vm1240, %v1246, %v1256
      %v1258 = vrot.slane %v1221, 4
      %v1259 = vsel %vm1240, %v1248, %v1258
      %v1260 = vrot.slane %v1222, 4
      %v1261 = vsel %vm1240, %v1250, %v1260
      %v1262 = vrot.slane %v1223, 4
      %v1263 = vsel %vm1240, %v1252, %v1262
      %v1264 = vrot.slane %v1224, 4
      %v1265 = vsel %vm1240, %v1254, %v1264
      %v1281 = vadd.f32 %v1159, %v1241
      %v1282 = vadd.f32 %v1160, %v1242
      %v1283 = vadd.f32 %v1161, %v1243
      %v1284 = vadd.f32 %v1162, %v1244
      %v1285 = vadd.f32 %v1163, %v1245
      %v1286 = vadd.f32 %v1164, %v1247
      %v1287 = vadd.f32 %v1165, %v1249
      %v1288 = vadd.f32 %v1166, %v1251
      %v1289 = vadd.f32 %v1167, %v1253
      %v1290 = vadd.f32 %v1168, %v1255
      %v1291 = vadd.f32 %v1169, %v1257
      %v1292 = vadd.f32 %v1170, %v1259
      %v1293 = vadd.f32 %v1171, %v1261
      %v1294 = vadd.f32 %v1172, %v1263
      %v1295 = vadd.f32 %v1173, %v1265
      %v1296 = vlaneseq
      %v1297 = vshrl.u32 %v1296, 7
      %v1298 = vsub.s32 5, %v1297
      %v1299 = vrot.slane %v758, %v1298
      %v1300 = vlaneseq
      %v1301 = vshrl.u32 %v1300, 7
      %v1302 = vsub.s32 5, %v1301
      %v1303 = vrot.slane %v759, %v1302
      %v1304 = vlaneseq
      %v1305 = vshrl.u32 %v1304, 7
      %v1306 = vsub.s32 5, %v1305
      %v1307 = vrot.slane %v760, %v1306
      %v1308 = vlaneseq
      %v1309 = vshrl.u32 %v1308, 7
      %v1310 = vsub.s32 5, %v1309
      %v1311 = vrot.slane %v761, %v1310
      %1316 = vrot.lane.b32.xlu0 %v1299, 32
      %v1317 = vpop.permute.xlu0 %1316
      %1318 = vrot.lane.b32.xlu0 %v1303, 32
      %v1319 = vpop.permute.xlu0 %1318
      %1320 = vrot.lane.b32.xlu0 %v1307, 32
      %v1321 = vpop.permute.xlu0 %1320
      %1322 = vrot.lane.b32.xlu0 %v1311, 32
      %v1323 = vpop.permute.xlu0 %1322
      %v1324 = vsel %vm361, %v1317, %v1319
      %v1325 = vsel %vm361, %v1319, %v1321
      %v1326 = vsel %vm361, %v1321, %v1323
      %v1332 = vmul.f32 %v743, %v1317
      %v1333 = vmul.f32 %v744, %v1324
      %v1334 = vmul.f32 %v745, %v1325
      %v1335 = vmul.f32 %v746, %v1326
      %v1336 = vmul.f32 %v747, %v1323
      %v1337 = vmul.f32 %v748, %v1317
      %v1338 = vmul.f32 %v749, %v1324
      %v1339 = vmul.f32 %v750, %v1325
      %v1340 = vmul.f32 %v751, %v1326
      %v1341 = vmul.f32 %v752, %v1323
      %v1342 = vmul.f32 %v753, %v1317
      %v1343 = vmul.f32 %v754, %v1324
      %v1344 = vmul.f32 %v755, %v1325
      %v1345 = vmul.f32 %v756, %v1326
      %v1346 = vmul.f32 %v757, %v1323
      %vm1362 = vcmask 1042432
      %v1363 = vrot.slane %v1332, 5
      %v1364 = vrot.slane %v1333, 5
      %v1365 = vrot.slane %v1334, 5
      %v1366 = vrot.slane %v1335, 5
      %v1367 = vrot.slane %v1336, 5
      %v1368 = vrot.slane %v1337, 5
      %v1369 = vsel %vm1362, %v1363, %v1368
      %v1370 = vrot.slane %v1338, 5
      %v1371 = vsel %vm1362, %v1364, %v1370
      %v1372 = vrot.slane %v1339, 5
      %v1373 = vsel %vm1362, %v1365, %v1372
      %v1374 = vrot.slane %v1340, 5
      %v1375 = vsel %vm1362, %v1366, %v1374
      %v1376 = vrot.slane %v1341, 5
      %v1377 = vsel %vm1362, %v1367, %v1376
      %v1378 = vrot.slane %v1342, 5
      %v1379 = vsel %vm1362, %v1368, %v1378
      %v1380 = vrot.slane %v1343, 5
      %v1381 = vsel %vm1362, %v1370, %v1380
      %v1382 = vrot.slane %v1344, 5
      %v1383 = vsel %vm1362, %v1372, %v1382
      %v1384 = vrot.slane %v1345, 5
      %v1385 = vsel %vm1362, %v1374, %v1384
      %v1386 = vrot.slane %v1346, 5
      %v1387 = vsel %vm1362, %v1376, %v1386
      %v1403 = vadd.f32 %v1281, %v1363
      %v1404 = vadd.f32 %v1282, %v1364
      %v1405 = vadd.f32 %v1283, %v1365
      %v1406 = vadd.f32 %v1284, %v1366
      %v1407 = vadd.f32 %v1285, %v1367
      %v1408 = vadd.f32 %v1286, %v1369
      %v1409 = vadd.f32 %v1287, %v1371
      %v1410 = vadd.f32 %v1288, %v1373
      %v1411 = vadd.f32 %v1289, %v1375
      %v1412 = vadd.f32 %v1290, %v1377
      %v1413 = vadd.f32 %v1291, %v1379
      %v1414 = vadd.f32 %v1292, %v1381
      %v1415 = vadd.f32 %v1293, %v1383
      %v1416 = vadd.f32 %v1294, %v1385
      %v1417 = vadd.f32 %v1295, %v1387
      %v1418 = vlaneseq
      %v1419 = vshrl.u32 %v1418, 7
      %v1420 = vsub.s32 6, %v1419
      %v1421 = vrot.slane %v758, %v1420
      %v1422 = vlaneseq
      %v1423 = vshrl.u32 %v1422, 7
      %v1424 = vsub.s32 6, %v1423
      %v1425 = vrot.slane %v759, %v1424
      %v1426 = vlaneseq
      %v1427 = vshrl.u32 %v1426, 7
      %v1428 = vsub.s32 6, %v1427
      %v1429 = vrot.slane %v760, %v1428
      %v1430 = vlaneseq
      %v1431 = vshrl.u32 %v1430, 7
      %v1432 = vsub.s32 6, %v1431
      %v1433 = vrot.slane %v761, %v1432
      %1438 = vrot.lane.b32.xlu0 %v1421, 32
      %v1439 = vpop.permute.xlu0 %1438
      %1440 = vrot.lane.b32.xlu0 %v1425, 32
      %v1441 = vpop.permute.xlu0 %1440
      %1442 = vrot.lane.b32.xlu0 %v1429, 32
      %v1443 = vpop.permute.xlu0 %1442
      %1444 = vrot.lane.b32.xlu0 %v1433, 32
      %v1445 = vpop.permute.xlu0 %1444
      %v1446 = vsel %vm361, %v1439, %v1441
      %v1447 = vsel %vm361, %v1441, %v1443
      %v1448 = vsel %vm361, %v1443, %v1445
      %v1454 = vmul.f32 %v743, %v1439
      %v1455 = vmul.f32 %v744, %v1446
      %v1456 = vmul.f32 %v745, %v1447
      %v1457 = vmul.f32 %v746, %v1448
      %v1458 = vmul.f32 %v747, %v1445
      %v1459 = vmul.f32 %v748, %v1439
      %v1460 = vmul.f32 %v749, %v1446
      %v1461 = vmul.f32 %v750, %v1447
      %v1462 = vmul.f32 %v751, %v1448
      %v1463 = vmul.f32 %v752, %v1445
      %v1464 = vmul.f32 %v753, %v1439
      %v1465 = vmul.f32 %v754, %v1446
      %v1466 = vmul.f32 %v755, %v1447
      %v1467 = vmul.f32 %v756, %v1448
      %v1468 = vmul.f32 %v757, %v1445
      %vm1484 = vcmask 1041408
      %v1485 = vrot.slane %v1454, 6
      %v1486 = vrot.slane %v1455, 6
      %v1487 = vrot.slane %v1456, 6
      %v1488 = vrot.slane %v1457, 6
      %v1489 = vrot.slane %v1458, 6
      %v1490 = vrot.slane %v1459, 6
      %v1491 = vsel %vm1484, %v1485, %v1490
      %v1492 = vrot.slane %v1460, 6
      %v1493 = vsel %vm1484, %v1486, %v1492
      %v1494 = vrot.slane %v1461, 6
      %v1495 = vsel %vm1484, %v1487, %v1494
      %v1496 = vrot.slane %v1462, 6
      %v1497 = vsel %vm1484, %v1488, %v1496
      %v1498 = vrot.slane %v1463, 6
      %v1499 = vsel %vm1484, %v1489, %v1498
      %v1500 = vrot.slane %v1464, 6
      %v1501 = vsel %vm1484, %v1490, %v1500
      %v1502 = vrot.slane %v1465, 6
      %v1503 = vsel %vm1484, %v1492, %v1502
      %v1504 = vrot.slane %v1466, 6
      %v1505 = vsel %vm1484, %v1494, %v1504
      %v1506 = vrot.slane %v1467, 6
      %v1507 = vsel %vm1484, %v1496, %v1506
      %v1508 = vrot.slane %v1468, 6
      %v1509 = vsel %vm1484, %v1498, %v1508
      %v1525 = vadd.f32 %v1403, %v1485
      %v1526 = vadd.f32 %v1404, %v1486
      %v1527 = vadd.f32 %v1405, %v1487
      %v1528 = vadd.f32 %v1406, %v1488
      %v1529 = vadd.f32 %v1407, %v1489
      %v1530 = vadd.f32 %v1408, %v1491
      %v1531 = vadd.f32 %v1409, %v1493
      %v1532 = vadd.f32 %v1410, %v1495
      %v1533 = vadd.f32 %v1411, %v1497
      %v1534 = vadd.f32 %v1412, %v1499
      %v1535 = vadd.f32 %v1413, %v1501
      %v1536 = vadd.f32 %v1414, %v1503
      %v1537 = vadd.f32 %v1415, %v1505
      %v1538 = vadd.f32 %v1416, %v1507
      %v1539 = vadd.f32 %v1417, %v1509
      %v1540 = vld [vmem:[%s5] sm:$0x80]
      %v1541 = vld [vmem:[%s5 + $0x8] sm:$0x80]
      %v1542 = vld [vmem:[%s5 + $0x10] sm:$0x80]
      %v1543 = vld [vmem:[%s5 + $0x18] sm:$0x80]
      %v1544 = vld [vmem:[%s5 + $0x20] sm:$0x3f]
      %v1545 = vld [vmem:[%s5 + $0x28] sm:$0x3f]
      %v1546 = vld [vmem:[%s5 + $0x30] sm:$0x3f]
      %v1547 = vld [vmem:[%s5 + $0x38] sm:$0x3f]
      %v1548 = vlaneseq
      %v1549 = vshrl.u32 %v1548, 7
      %v1550 = vsub.s32 7, %v1549
      %v1551 = vrot.slane %v1540, %v1550
      %v1552 = vlaneseq
      %v1553 = vshrl.u32 %v1552, 7
      %v1554 = vsub.s32 7, %v1553
      %v1555 = vrot.slane %v1541, %v1554
      %v1556 = vlaneseq
      %v1557 = vshrl.u32 %v1556, 7
      %v1558 = vsub.s32 7, %v1557
      %v1559 = vrot.slane %v1542, %v1558
      %v1560 = vlaneseq
      %v1561 = vshrl.u32 %v1560, 7
      %v1562 = vsub.s32 7, %v1561
      %v1563 = vrot.slane %v1543, %v1562
      %1568 = vrot.lane.b32.xlu0 %v1551, 64
      %v1569 = vpop.permute.xlu0 %1568
      %1570 = vrot.lane.b32.xlu0 %v1555, 64
      %v1571 = vpop.permute.xlu0 %1570
      %1572 = vrot.lane.b32.xlu0 %v1559, 64
      %v1573 = vpop.permute.xlu0 %1572
      %1574 = vrot.lane.b32.xlu0 %v1563, 64
      %v1575 = vpop.permute.xlu0 %1574
      %vm1576 = vcmask 523264
      %v1577 = vsel %vm1576, %v1569, %v1571
      %v1578 = vsel %vm1576, %v1571, %v1573
      %v1579 = vsel %vm1576, %v1573, %v1575
      %v1585 = vmul.f32 %v738, %v1569
      %v1586 = vmul.f32 %v739, %v1577
      %v1587 = vmul.f32 %v740, %v1578
      %v1588 = vmul.f32 %v741, %v1579
      %v1589 = vmul.f32 %v742, %v1575
      %v1590 = vmul.f32 %v743, %v1569
      %v1591 = vmul.f32 %v744, %v1577
      %v1592 = vmul.f32 %v745, %v1578
      %v1593 = vmul.f32 %v746, %v1579
      %v1594 = vmul.f32 %v747, %v1575
      %v1595 = vmul.f32 %v748, %v1569
      %v1596 = vmul.f32 %v749, %v1577
      %v1597 = vmul.f32 %v750, %v1578
      %v1598 = vmul.f32 %v751, %v1579
      %v1599 = vmul.f32 %v752, %v1575
      %1615 = vrot.lane.b32.xlu0 %v1585, 96
      %v1616 = vpop.permute.xlu0 %1615
      %1617 = vrot.lane.b32.xlu0 %v1586, 96
      %v1618 = vpop.permute.xlu0 %1617
      %1619 = vrot.lane.b32.xlu0 %v1587, 96
      %v1620 = vpop.permute.xlu0 %1619
      %1621 = vrot.lane.b32.xlu0 %v1588, 96
      %v1622 = vpop.permute.xlu0 %1621
      %1623 = vrot.lane.b32.xlu0 %v1589, 96
      %v1624 = vpop.permute.xlu0 %1623
      %1625 = vrot.lane.b32.xlu0 %v1590, 96
      %v1626 = vpop.permute.xlu0 %1625
      %1627 = vrot.lane.b32.xlu0 %v1591, 96
      %v1628 = vpop.permute.xlu0 %1627
      %1629 = vrot.lane.b32.xlu0 %v1592, 96
      %v1630 = vpop.permute.xlu0 %1629
      %1631 = vrot.lane.b32.xlu0 %v1593, 96
      %v1632 = vpop.permute.xlu0 %1631
      %1633 = vrot.lane.b32.xlu0 %v1594, 96
      %v1634 = vpop.permute.xlu0 %1633
      %1635 = vrot.lane.b32.xlu0 %v1595, 96
      %v1636 = vpop.permute.xlu0 %1635
      %1637 = vrot.lane.b32.xlu0 %v1596, 96
      %v1638 = vpop.permute.xlu0 %1637
      %1639 = vrot.lane.b32.xlu0 %v1597, 96
      %v1640 = vpop.permute.xlu0 %1639
      %1641 = vrot.lane.b32.xlu0 %v1598, 96
      %v1642 = vpop.permute.xlu0 %1641
      %1643 = vrot.lane.b32.xlu0 %v1599, 96
      %v1644 = vpop.permute.xlu0 %1643
      %vm1645 = vcmask 785408
      %v1646 = vsel %vm1645, %v1616, %v1618
      %v1647 = vsel %vm1645, %v1618, %v1620
      %v1648 = vsel %vm1645, %v1620, %v1622
      %v1649 = vsel %vm1645, %v1622, %v1624
      %v1650 = vsel %vm1645, %v1626, %v1628
      %v1651 = vsel %vm1645, %v1628, %v1630
      %v1652 = vsel %vm1645, %v1630, %v1632
      %v1653 = vsel %vm1645, %v1632, %v1634
      %v1654 = vsel %vm1645, %v1636, %v1638
      %v1655 = vsel %vm1645, %v1638, %v1640
      %v1656 = vsel %vm1645, %v1640, %v1642
      %v1657 = vsel %vm1645, %v1642, %v1644
      %v1673 = vadd.f32 %v1525, %v1646
      %v1674 = vadd.f32 %v1526, %v1647
      %v1675 = vadd.f32 %v1527, %v1648
      %v1676 = vadd.f32 %v1528, %v1649
      %v1677 = vadd.f32 %v1529, %v1624
      %v1678 = vadd.f32 %v1530, %v1650
      %v1679 = vadd.f32 %v1531, %v1651
      %v1680 = vadd.f32 %v1532, %v1652
      %v1681 = vadd.f32 %v1533, %v1653
      %v1682 = vadd.f32 %v1534, %v1634
      %v1683 = vadd.f32 %v1535, %v1654
      %v1684 = vadd.f32 %v1536, %v1655
      %v1685 = vadd.f32 %v1537, %v1656
      %v1686 = vadd.f32 %v1538, %v1657
      %v1687 = vadd.f32 %v1539, %v1644
      %v1688 = vlaneseq
      %v1689 = vshrl.u32 %v1688, 7
      %v1690 = vsub.s32 0, %v1689
      %v1691 = vrot.slane %v1544, %v1690
      %v1692 = vlaneseq
      %v1693 = vshrl.u32 %v1692, 7
      %v1694 = vsub.s32 0, %v1693
      %v1695 = vrot.slane %v1545, %v1694
      %v1696 = vlaneseq
      %v1697 = vshrl.u32 %v1696, 7
      %v1698 = vsub.s32 0, %v1697
      %v1699 = vrot.slane %v1546, %v1698
      %v1700 = vlaneseq
      %v1701 = vshrl.u32 %v1700, 7
      %v1702 = vsub.s32 0, %v1701
      %v1703 = vrot.slane %v1547, %v1702
      %1708 = vrot.lane.b32.xlu0 %v1691, 64
      %v1709 = vpop.permute.xlu0 %1708
      %1710 = vrot.lane.b32.xlu0 %v1695, 64
      %v1711 = vpop.permute.xlu0 %1710
      %1712 = vrot.lane.b32.xlu0 %v1699, 64
      %v1713 = vpop.permute.xlu0 %1712
      %1714 = vrot.lane.b32.xlu0 %v1703, 64
      %v1715 = vpop.permute.xlu0 %1714
      %v1716 = vsel %vm1576, %v1709, %v1711
      %v1717 = vsel %vm1576, %v1711, %v1713
      %v1718 = vsel %vm1576, %v1713, %v1715
      %v1724 = vmul.f32 %v738, %v1709
      %v1725 = vmul.f32 %v739, %v1716
      %v1726 = vmul.f32 %v740, %v1717
      %v1727 = vmul.f32 %v741, %v1718
      %v1728 = vmul.f32 %v742, %v1715
      %v1729 = vmul.f32 %v743, %v1709
      %v1730 = vmul.f32 %v744, %v1716
      %v1731 = vmul.f32 %v745, %v1717
      %v1732 = vmul.f32 %v746, %v1718
      %v1733 = vmul.f32 %v747, %v1715
      %v1734 = vmul.f32 %v748, %v1709
      %v1735 = vmul.f32 %v749, %v1716
      %v1736 = vmul.f32 %v750, %v1717
      %v1737 = vmul.f32 %v751, %v1718
      %v1738 = vmul.f32 %v752, %v1715
      %v1754 = vrot.slane %v1724, 1
      %v1755 = vrot.slane %v1729, 1
      %v1756 = vsel %vm894, %v1754, %v1755
      %v1757 = vrot.slane %v1725, 1
      %v1758 = vrot.slane %v1730, 1
      %v1759 = vsel %vm894, %v1757, %v1758
      %v1760 = vrot.slane %v1726, 1
      %v1761 = vrot.slane %v1731, 1
      %v1762 = vsel %vm894, %v1760, %v1761
      %v1763 = vrot.slane %v1727, 1
      %v1764 = vrot.slane %v1732, 1
      %v1765 = vsel %vm894, %v1763, %v1764
      %v1766 = vrot.slane %v1728, 1
      %v1767 = vrot.slane %v1733, 1
      %v1768 = vsel %vm894, %v1766, %v1767
      %v1769 = vrot.slane %v1734, 1
      %v1770 = vsel %vm894, %v1755, %v1769
      %v1771 = vrot.slane %v1735, 1
      %v1772 = vsel %vm894, %v1758, %v1771
      %v1773 = vrot.slane %v1736, 1
      %v1774 = vsel %vm894, %v1761, %v1773
      %v1775 = vrot.slane %v1737, 1
      %v1776 = vsel %vm894, %v1764, %v1775
      %v1777 = vrot.slane %v1738, 1
      %v1778 = vsel %vm894, %v1767, %v1777
      %1779 = vrot.lane.b32.xlu0 %v1756, 96
      %v1780 = vpop.permute.xlu0 %1779
      %1781 = vrot.lane.b32.xlu0 %v1759, 96
      %v1782 = vpop.permute.xlu0 %1781
      %1783 = vrot.lane.b32.xlu0 %v1762, 96
      %v1784 = vpop.permute.xlu0 %1783
      %1785 = vrot.lane.b32.xlu0 %v1765, 96
      %v1786 = vpop.permute.xlu0 %1785
      %1787 = vrot.lane.b32.xlu0 %v1768, 96
      %v1788 = vpop.permute.xlu0 %1787
      %1789 = vrot.lane.b32.xlu0 %v1770, 96
      %v1790 = vpop.permute.xlu0 %1789
      %1791 = vrot.lane.b32.xlu0 %v1772, 96
      %v1792 = vpop.permute.xlu0 %1791
      %1793 = vrot.lane.b32.xlu0 %v1774, 96
      %v1794 = vpop.permute.xlu0 %1793
      %1795 = vrot.lane.b32.xlu0 %v1776, 96
      %v1796 = vpop.permute.xlu0 %1795
      %1797 = vrot.lane.b32.xlu0 %v1778, 96
      %v1798 = vpop.permute.xlu0 %1797
      %1799 = vrot.lane.b32.xlu0 %v1769, 96
      %v1800 = vpop.permute.xlu0 %1799
      %1801 = vrot.lane.b32.xlu0 %v1771, 96
      %v1802 = vpop.permute.xlu0 %1801
      %1803 = vrot.lane.b32.xlu0 %v1773, 96
      %v1804 = vpop.permute.xlu0 %1803
      %1805 = vrot.lane.b32.xlu0 %v1775, 96
      %v1806 = vpop.permute.xlu0 %1805
      %1807 = vrot.lane.b32.xlu0 %v1777, 96
      %v1808 = vpop.permute.xlu0 %1807
      %v1809 = vsel %vm1645, %v1780, %v1782
      %v1810 = vsel %vm1645, %v1782, %v1784
      %v1811 = vsel %vm1645, %v1784, %v1786
      %v1812 = vsel %vm1645, %v1786, %v1788
      %v1813 = vsel %vm1645, %v1790, %v1792
      %v1814 = vsel %vm1645, %v1792, %v1794
      %v1815 = vsel %vm1645, %v1794, %v1796
      %v1816 = vsel %vm1645, %v1796, %v1798
      %v1817 = vsel %vm1645, %v1800, %v1802
      %v1818 = vsel %vm1645, %v1802, %v1804
      %v1819 = vsel %vm1645, %v1804, %v1806
      %v1820 = vsel %vm1645, %v1806, %v1808
      %v1836 = vadd.f32 %v1673, %v1809
      %v1837 = vadd.f32 %v1674, %v1810
      %v1838 = vadd.f32 %v1675, %v1811
      %v1839 = vadd.f32 %v1676, %v1812
      %v1840 = vadd.f32 %v1677, %v1788
      %v1841 = vadd.f32 %v1678, %v1813
      %v1842 = vadd.f32 %v1679, %v1814
      %v1843 = vadd.f32 %v1680, %v1815
      %v1844 = vadd.f32 %v1681, %v1816
      %v1845 = vadd.f32 %v1682, %v1798
      %v1846 = vadd.f32 %v1683, %v1817
      %v1847 = vadd.f32 %v1684, %v1818
      %v1848 = vadd.f32 %v1685, %v1819
      %v1849 = vadd.f32 %v1686, %v1820
      %v1850 = vadd.f32 %v1687, %v1808
      %v1851 = vlaneseq
      %v1852 = vshrl.u32 %v1851, 7
      %v1853 = vsub.s32 1, %v1852
      %v1854 = vrot.slane %v1544, %v1853
      %v1855 = vlaneseq
      %v1856 = vshrl.u32 %v1855, 7
      %v1857 = vsub.s32 1, %v1856
      %v1858 = vrot.slane %v1545, %v1857
      %v1859 = vlaneseq
      %v1860 = vshrl.u32 %v1859, 7
      %v1861 = vsub.s32 1, %v1860
      %v1862 = vrot.slane %v1546, %v1861
      %v1863 = vlaneseq
      %v1864 = vshrl.u32 %v1863, 7
      %v1865 = vsub.s32 1, %v1864
      %v1866 = vrot.slane %v1547, %v1865
      %1871 = vrot.lane.b32.xlu0 %v1854, 64
      %v1872 = vpop.permute.xlu0 %1871
      %1873 = vrot.lane.b32.xlu0 %v1858, 64
      %v1874 = vpop.permute.xlu0 %1873
      %1875 = vrot.lane.b32.xlu0 %v1862, 64
      %v1876 = vpop.permute.xlu0 %1875
      %1877 = vrot.lane.b32.xlu0 %v1866, 64
      %v1878 = vpop.permute.xlu0 %1877
      %v1879 = vsel %vm1576, %v1872, %v1874
      %v1880 = vsel %vm1576, %v1874, %v1876
      %v1881 = vsel %vm1576, %v1876, %v1878
      %v1887 = vmul.f32 %v738, %v1872
      %v1888 = vmul.f32 %v739, %v1879
      %v1889 = vmul.f32 %v740, %v1880
      %v1890 = vmul.f32 %v741, %v1881
      %v1891 = vmul.f32 %v742, %v1878
      %v1892 = vmul.f32 %v743, %v1872
      %v1893 = vmul.f32 %v744, %v1879
      %v1894 = vmul.f32 %v745, %v1880
      %v1895 = vmul.f32 %v746, %v1881
      %v1896 = vmul.f32 %v747, %v1878
      %v1897 = vmul.f32 %v748, %v1872
      %v1898 = vmul.f32 %v749, %v1879
      %v1899 = vmul.f32 %v750, %v1880
      %v1900 = vmul.f32 %v751, %v1881
      %v1901 = vmul.f32 %v752, %v1878
      %v1917 = vrot.slane %v1887, 2
      %v1918 = vrot.slane %v1892, 2
      %v1919 = vsel %vm1016, %v1917, %v1918
      %v1920 = vrot.slane %v1888, 2
      %v1921 = vrot.slane %v1893, 2
      %v1922 = vsel %vm1016, %v1920, %v1921
      %v1923 = vrot.slane %v1889, 2
      %v1924 = vrot.slane %v1894, 2
      %v1925 = vsel %vm1016, %v1923, %v1924
      %v1926 = vrot.slane %v1890, 2
      %v1927 = vrot.slane %v1895, 2
      %v1928 = vsel %vm1016, %v1926, %v1927
      %v1929 = vrot.slane %v1891, 2
      %v1930 = vrot.slane %v1896, 2
      %v1931 = vsel %vm1016, %v1929, %v1930
      %v1932 = vrot.slane %v1897, 2
      %v1933 = vsel %vm1016, %v1918, %v1932
      %v1934 = vrot.slane %v1898, 2
      %v1935 = vsel %vm1016, %v1921, %v1934
      %v1936 = vrot.slane %v1899, 2
      %v1937 = vsel %vm1016, %v1924, %v1936
      %v1938 = vrot.slane %v1900, 2
      %v1939 = vsel %vm1016, %v1927, %v1938
      %v1940 = vrot.slane %v1901, 2
      %v1941 = vsel %vm1016, %v1930, %v1940
      %1942 = vrot.lane.b32.xlu0 %v1919, 96
      %v1943 = vpop.permute.xlu0 %1942
      %1944 = vrot.lane.b32.xlu0 %v1922, 96
      %v1945 = vpop.permute.xlu0 %1944
      %1946 = vrot.lane.b32.xlu0 %v1925, 96
      %v1947 = vpop.permute.xlu0 %1946
      %1948 = vrot.lane.b32.xlu0 %v1928, 96
      %v1949 = vpop.permute.xlu0 %1948
      %1950 = vrot.lane.b32.xlu0 %v1931, 96
      %v1951 = vpop.permute.xlu0 %1950
      %1952 = vrot.lane.b32.xlu0 %v1933, 96
      %v1953 = vpop.permute.xlu0 %1952
      %1954 = vrot.lane.b32.xlu0 %v1935, 96
      %v1955 = vpop.permute.xlu0 %1954
      %1956 = vrot.lane.b32.xlu0 %v1937, 96
      %v1957 = vpop.permute.xlu0 %1956
      %1958 = vrot.lane.b32.xlu0 %v1939, 96
      %v1959 = vpop.permute.xlu0 %1958
      %1960 = vrot.lane.b32.xlu0 %v1941, 96
      %v1961 = vpop.permute.xlu0 %1960
      %1962 = vrot.lane.b32.xlu0 %v1932, 96
      %v1963 = vpop.permute.xlu0 %1962
      %1964 = vrot.lane.b32.xlu0 %v1934, 96
      %v1965 = vpop.permute.xlu0 %1964
      %1966 = vrot.lane.b32.xlu0 %v1936, 96
      %v1967 = vpop.permute.xlu0 %1966
      %1968 = vrot.lane.b32.xlu0 %v1938, 96
      %v1969 = vpop.permute.xlu0 %1968
      %1970 = vrot.lane.b32.xlu0 %v1940, 96
      %v1971 = vpop.permute.xlu0 %1970
      %v1972 = vsel %vm1645, %v1943, %v1945
      %v1973 = vsel %vm1645, %v1945, %v1947
      %v1974 = vsel %vm1645, %v1947, %v1949
      %v1975 = vsel %vm1645, %v1949, %v1951
      %v1976 = vsel %vm1645, %v1953, %v1955
      %v1977 = vsel %vm1645, %v1955, %v1957
      %v1978 = vsel %vm1645, %v1957, %v1959
      %v1979 = vsel %vm1645, %v1959, %v1961
      %v1980 = vsel %vm1645, %v1963, %v1965
      %v1981 = vsel %vm1645, %v1965, %v1967
      %v1982 = vsel %vm1645, %v1967, %v1969
      %v1983 = vsel %vm1645, %v1969, %v1971
      %v1999 = vadd.f32 %v1836, %v1972
      %v2000 = vadd.f32 %v1837, %v1973
      %v2001 = vadd.f32 %v1838, %v1974
      %v2002 = vadd.f32 %v1839, %v1975
      %v2003 = vadd.f32 %v1840, %v1951
      %v2004 = vadd.f32 %v1841, %v1976
      %v2005 = vadd.f32 %v1842, %v1977
      %v2006 = vadd.f32 %v1843, %v1978
      %v2007 = vadd.f32 %v1844, %v1979
      %v2008 = vadd.f32 %v1845, %v1961
      %v2009 = vadd.f32 %v1846, %v1980
      %v2010 = vadd.f32 %v1847, %v1981
      %v2011 = vadd.f32 %v1848, %v1982
      %v2012 = vadd.f32 %v1849, %v1983
      %v2013 = vadd.f32 %v1850, %v1971
      %v2014 = vlaneseq
      %v2015 = vshrl.u32 %v2014, 7
      %v2016 = vsub.s32 2, %v2015
      %v2017 = vrot.slane %v1544, %v2016
      %v2018 = vlaneseq
      %v2019 = vshrl.u32 %v2018, 7
      %v2020 = vsub.s32 2, %v2019
      %v2021 = vrot.slane %v1545, %v2020
      %v2022 = vlaneseq
      %v2023 = vshrl.u32 %v2022, 7
      %v2024 = vsub.s32 2, %v2023
      %v2025 = vrot.slane %v1546, %v2024
      %v2026 = vlaneseq
      %v2027 = vshrl.u32 %v2026, 7
      %v2028 = vsub.s32 2, %v2027
      %v2029 = vrot.slane %v1547, %v2028
      %2034 = vrot.lane.b32.xlu0 %v2017, 64
      %v2035 = vpop.permute.xlu0 %2034
      %2036 = vrot.lane.b32.xlu0 %v2021, 64
      %v2037 = vpop.permute.xlu0 %2036
      %2038 = vrot.lane.b32.xlu0 %v2025, 64
      %v2039 = vpop.permute.xlu0 %2038
      %2040 = vrot.lane.b32.xlu0 %v2029, 64
      %v2041 = vpop.permute.xlu0 %2040
      %v2042 = vsel %vm1576, %v2035, %v2037
      %v2043 = vsel %vm1576, %v2037, %v2039
      %v2044 = vsel %vm1576, %v2039, %v2041
      %v2050 = vmul.f32 %v743, %v2035
      %v2051 = vmul.f32 %v744, %v2042
      %v2052 = vmul.f32 %v745, %v2043
      %v2053 = vmul.f32 %v746, %v2044
      %v2054 = vmul.f32 %v747, %v2041
      %v2055 = vmul.f32 %v748, %v2035
      %v2056 = vmul.f32 %v749, %v2042
      %v2057 = vmul.f32 %v750, %v2043
      %v2058 = vmul.f32 %v751, %v2044
      %v2059 = vmul.f32 %v752, %v2041
      %v2070 = vrot.slane %v2050, 3
      %v2071 = vrot.slane %v2051, 3
      %v2072 = vrot.slane %v2052, 3
      %v2073 = vrot.slane %v2053, 3
      %v2074 = vrot.slane %v2054, 3
      %v2075 = vrot.slane %v2055, 3
      %v2076 = vsel %vm1128, %v2070, %v2075
      %v2077 = vrot.slane %v2056, 3
      %v2078 = vsel %vm1128, %v2071, %v2077
      %v2079 = vrot.slane %v2057, 3
      %v2080 = vsel %vm1128, %v2072, %v2079
      %v2081 = vrot.slane %v2058, 3
      %v2082 = vsel %vm1128, %v2073, %v2081
      %v2083 = vrot.slane %v2059, 3
      %v2084 = vsel %vm1128, %v2074, %v2083
      %2085 = vrot.lane.b32.xlu0 %v2070, 96
      %v2086 = vpop.permute.xlu0 %2085
      %2087 = vrot.lane.b32.xlu0 %v2071, 96
      %v2088 = vpop.permute.xlu0 %2087
      %2089 = vrot.lane.b32.xlu0 %v2072, 96
      %v2090 = vpop.permute.xlu0 %2089
      %2091 = vrot.lane.b32.xlu0 %v2073, 96
      %v2092 = vpop.permute.xlu0 %2091
      %2093 = vrot.lane.b32.xlu0 %v2074, 96
      %v2094 = vpop.permute.xlu0 %2093
      %2095 = vrot.lane.b32.xlu0 %v2076, 96
      %v2096 = vpop.permute.xlu0 %2095
      %2097 = vrot.lane.b32.xlu0 %v2078, 96
      %v2098 = vpop.permute.xlu0 %2097
      %2099 = vrot.lane.b32.xlu0 %v2080, 96
      %v2100 = vpop.permute.xlu0 %2099
      %2101 = vrot.lane.b32.xlu0 %v2082, 96
      %v2102 = vpop.permute.xlu0 %2101
      %2103 = vrot.lane.b32.xlu0 %v2084, 96
      %v2104 = vpop.permute.xlu0 %2103
      %2105 = vrot.lane.b32.xlu0 %v2075, 96
      %v2106 = vpop.permute.xlu0 %2105
      %2107 = vrot.lane.b32.xlu0 %v2077, 96
      %v2108 = vpop.permute.xlu0 %2107
      %2109 = vrot.lane.b32.xlu0 %v2079, 96
      %v2110 = vpop.permute.xlu0 %2109
      %2111 = vrot.lane.b32.xlu0 %v2081, 96
      %v2112 = vpop.permute.xlu0 %2111
      %2113 = vrot.lane.b32.xlu0 %v2083, 96
      %v2114 = vpop.permute.xlu0 %2113
      %v2115 = vsel %vm1645, %v2086, %v2088
      %v2116 = vsel %vm1645, %v2088, %v2090
      %v2117 = vsel %vm1645, %v2090, %v2092
      %v2118 = vsel %vm1645, %v2092, %v2094
      %v2119 = vsel %vm1645, %v2096, %v2098
      %v2120 = vsel %vm1645, %v2098, %v2100
      %v2121 = vsel %vm1645, %v2100, %v2102
      %v2122 = vsel %vm1645, %v2102, %v2104
      %v2123 = vsel %vm1645, %v2106, %v2108
      %v2124 = vsel %vm1645, %v2108, %v2110
      %v2125 = vsel %vm1645, %v2110, %v2112
      %v2126 = vsel %vm1645, %v2112, %v2114
      %v2142 = vadd.f32 %v1999, %v2115
      %v2143 = vadd.f32 %v2000, %v2116
      %v2144 = vadd.f32 %v2001, %v2117
      %v2145 = vadd.f32 %v2002, %v2118
      %v2146 = vadd.f32 %v2003, %v2094
      %v2147 = vadd.f32 %v2004, %v2119
      %v2148 = vadd.f32 %v2005, %v2120
      %v2149 = vadd.f32 %v2006, %v2121
      %v2150 = vadd.f32 %v2007, %v2122
      %v2151 = vadd.f32 %v2008, %v2104
      %v2152 = vadd.f32 %v2009, %v2123
      %v2153 = vadd.f32 %v2010, %v2124
      %v2154 = vadd.f32 %v2011, %v2125
      %v2155 = vadd.f32 %v2012, %v2126
      %v2156 = vadd.f32 %v2013, %v2114
      %v2157 = vlaneseq
      %v2158 = vshrl.u32 %v2157, 7
      %v2159 = vsub.s32 3, %v2158
      %v2160 = vrot.slane %v1544, %v2159
      %v2161 = vlaneseq
      %v2162 = vshrl.u32 %v2161, 7
      %v2163 = vsub.s32 3, %v2162
      %v2164 = vrot.slane %v1545, %v2163
      %v2165 = vlaneseq
      %v2166 = vshrl.u32 %v2165, 7
      %v2167 = vsub.s32 3, %v2166
      %v2168 = vrot.slane %v1546, %v2167
      %v2169 = vlaneseq
      %v2170 = vshrl.u32 %v2169, 7
      %v2171 = vsub.s32 3, %v2170
      %v2172 = vrot.slane %v1547, %v2171
      %2177 = vrot.lane.b32.xlu0 %v2160, 64
      %v2178 = vpop.permute.xlu0 %2177
      %2179 = vrot.lane.b32.xlu0 %v2164, 64
      %v2180 = vpop.permute.xlu0 %2179
      %2181 = vrot.lane.b32.xlu0 %v2168, 64
      %v2182 = vpop.permute.xlu0 %2181
      %2183 = vrot.lane.b32.xlu0 %v2172, 64
      %v2184 = vpop.permute.xlu0 %2183
      %v2185 = vsel %vm1576, %v2178, %v2180
      %v2186 = vsel %vm1576, %v2180, %v2182
      %v2187 = vsel %vm1576, %v2182, %v2184
      %v2193 = vmul.f32 %v743, %v2178
      %v2194 = vmul.f32 %v744, %v2185
      %v2195 = vmul.f32 %v745, %v2186
      %v2196 = vmul.f32 %v746, %v2187
      %v2197 = vmul.f32 %v747, %v2184
      %v2198 = vmul.f32 %v748, %v2178
      %v2199 = vmul.f32 %v749, %v2185
      %v2200 = vmul.f32 %v750, %v2186
      %v2201 = vmul.f32 %v751, %v2187
      %v2202 = vmul.f32 %v752, %v2184
      %v2203 = vmul.f32 %v753, %v2178
      %v2204 = vmul.f32 %v754, %v2185
      %v2205 = vmul.f32 %v755, %v2186
      %v2206 = vmul.f32 %v756, %v2187
      %v2207 = vmul.f32 %v757, %v2184
      %v2223 = vrot.slane %v2193, 4
      %v2224 = vrot.slane %v2194, 4
      %v2225 = vrot.slane %v2195, 4
      %v2226 = vrot.slane %v2196, 4
      %v2227 = vrot.slane %v2197, 4
      %v2228 = vrot.slane %v2198, 4
      %v2229 = vsel %vm1240, %v2223, %v2228
      %v2230 = vrot.slane %v2199, 4
      %v2231 = vsel %vm1240, %v2224, %v2230
      %v2232 = vrot.slane %v2200, 4
      %v2233 = vsel %vm1240, %v2225, %v2232
      %v2234 = vrot.slane %v2201, 4
      %v2235 = vsel %vm1240, %v2226, %v2234
      %v2236 = vrot.slane %v2202, 4
      %v2237 = vsel %vm1240, %v2227, %v2236
      %v2238 = vrot.slane %v2203, 4
      %v2239 = vsel %vm1240, %v2228, %v2238
      %v2240 = vrot.slane %v2204, 4
      %v2241 = vsel %vm1240, %v2230, %v2240
      %v2242 = vrot.slane %v2205, 4
      %v2243 = vsel %vm1240, %v2232, %v2242
      %v2244 = vrot.slane %v2206, 4
      %v2245 = vsel %vm1240, %v2234, %v2244
      %v2246 = vrot.slane %v2207, 4
      %v2247 = vsel %vm1240, %v2236, %v2246
      %2248 = vrot.lane.b32.xlu0 %v2223, 96
      %v2249 = vpop.permute.xlu0 %2248
      %2250 = vrot.lane.b32.xlu0 %v2224, 96
      %v2251 = vpop.permute.xlu0 %2250
      %2252 = vrot.lane.b32.xlu0 %v2225, 96
      %v2253 = vpop.permute.xlu0 %2252
      %2254 = vrot.lane.b32.xlu0 %v2226, 96
      %v2255 = vpop.permute.xlu0 %2254
      %2256 = vrot.lane.b32.xlu0 %v2227, 96
      %v2257 = vpop.permute.xlu0 %2256
      %2258 = vrot.lane.b32.xlu0 %v2229, 96
      %v2259 = vpop.permute.xlu0 %2258
      %2260 = vrot.lane.b32.xlu0 %v2231, 96
      %v2261 = vpop.permute.xlu0 %2260
      %2262 = vrot.lane.b32.xlu0 %v2233, 96
      %v2263 = vpop.permute.xlu0 %2262
      %2264 = vrot.lane.b32.xlu0 %v2235, 96
      %v2265 = vpop.permute.xlu0 %2264
      %2266 = vrot.lane.b32.xlu0 %v2237, 96
      %v2267 = vpop.permute.xlu0 %2266
      %2268 = vrot.lane.b32.xlu0 %v2239, 96
      %v2269 = vpop.permute.xlu0 %2268
      %2270 = vrot.lane.b32.xlu0 %v2241, 96
      %v2271 = vpop.permute.xlu0 %2270
      %2272 = vrot.lane.b32.xlu0 %v2243, 96
      %v2273 = vpop.permute.xlu0 %2272
      %2274 = vrot.lane.b32.xlu0 %v2245, 96
      %v2275 = vpop.permute.xlu0 %2274
      %2276 = vrot.lane.b32.xlu0 %v2247, 96
      %v2277 = vpop.permute.xlu0 %2276
      %v2278 = vsel %vm1645, %v2249, %v2251
      %v2279 = vsel %vm1645, %v2251, %v2253
      %v2280 = vsel %vm1645, %v2253, %v2255
      %v2281 = vsel %vm1645, %v2255, %v2257
      %v2282 = vsel %vm1645, %v2259, %v2261
      %v2283 = vsel %vm1645, %v2261, %v2263
      %v2284 = vsel %vm1645, %v2263, %v2265
      %v2285 = vsel %vm1645, %v2265, %v2267
      %v2286 = vsel %vm1645, %v2269, %v2271
      %v2287 = vsel %vm1645, %v2271, %v2273
      %v2288 = vsel %vm1645, %v2273, %v2275
      %v2289 = vsel %vm1645, %v2275, %v2277
      %v2305 = vadd.f32 %v2142, %v2278
      %v2306 = vadd.f32 %v2143, %v2279
      %v2307 = vadd.f32 %v2144, %v2280
      %v2308 = vadd.f32 %v2145, %v2281
      %v2309 = vadd.f32 %v2146, %v2257
      %v2310 = vadd.f32 %v2147, %v2282
      %v2311 = vadd.f32 %v2148, %v2283
      %v2312 = vadd.f32 %v2149, %v2284
      %v2313 = vadd.f32 %v2150, %v2285
      %v2314 = vadd.f32 %v2151, %v2267
      %v2315 = vadd.f32 %v2152, %v2286
      %v2316 = vadd.f32 %v2153, %v2287
      %v2317 = vadd.f32 %v2154, %v2288
      %v2318 = vadd.f32 %v2155, %v2289
      %v2319 = vadd.f32 %v2156, %v2277
      %v2320 = vlaneseq
      %v2321 = vshrl.u32 %v2320, 7
      %v2322 = vsub.s32 4, %v2321
      %v2323 = vrot.slane %v1544, %v2322
      %v2324 = vlaneseq
      %v2325 = vshrl.u32 %v2324, 7
      %v2326 = vsub.s32 4, %v2325
      %v2327 = vrot.slane %v1545, %v2326
      %v2328 = vlaneseq
      %v2329 = vshrl.u32 %v2328, 7
      %v2330 = vsub.s32 4, %v2329
      %v2331 = vrot.slane %v1546, %v2330
      %v2332 = vlaneseq
      %v2333 = vshrl.u32 %v2332, 7
      %v2334 = vsub.s32 4, %v2333
      %v2335 = vrot.slane %v1547, %v2334
      %2340 = vrot.lane.b32.xlu0 %v2323, 64
      %v2341 = vpop.permute.xlu0 %2340
      %2342 = vrot.lane.b32.xlu0 %v2327, 64
      %v2343 = vpop.permute.xlu0 %2342
      %2344 = vrot.lane.b32.xlu0 %v2331, 64
      %v2345 = vpop.permute.xlu0 %2344
      %2346 = vrot.lane.b32.xlu0 %v2335, 64
      %v2347 = vpop.permute.xlu0 %2346
      %v2348 = vsel %vm1576, %v2341, %v2343
      %v2349 = vsel %vm1576, %v2343, %v2345
      %v2350 = vsel %vm1576, %v2345, %v2347
      %v2356 = vmul.f32 %v743, %v2341
      %v2357 = vmul.f32 %v744, %v2348
      %v2358 = vmul.f32 %v745, %v2349
      %v2359 = vmul.f32 %v746, %v2350
      %v2360 = vmul.f32 %v747, %v2347
      %v2361 = vmul.f32 %v748, %v2341
      %v2362 = vmul.f32 %v749, %v2348
      %v2363 = vmul.f32 %v750, %v2349
      %v2364 = vmul.f32 %v751, %v2350
      %v2365 = vmul.f32 %v752, %v2347
      %v2366 = vmul.f32 %v753, %v2341
      %v2367 = vmul.f32 %v754, %v2348
      %v2368 = vmul.f32 %v755, %v2349
      %v2369 = vmul.f32 %v756, %v2350
      %v2370 = vmul.f32 %v757, %v2347
      %v2386 = vrot.slane %v2356, 5
      %v2387 = vrot.slane %v2357, 5
      %v2388 = vrot.slane %v2358, 5
      %v2389 = vrot.slane %v2359, 5
      %v2390 = vrot.slane %v2360, 5
      %v2391 = vrot.slane %v2361, 5
      %v2392 = vsel %vm1362, %v2386, %v2391
      %v2393 = vrot.slane %v2362, 5
      %v2394 = vsel %vm1362, %v2387, %v2393
      %v2395 = vrot.slane %v2363, 5
      %v2396 = vsel %vm1362, %v2388, %v2395
      %v2397 = vrot.slane %v2364, 5
      %v2398 = vsel %vm1362, %v2389, %v2397
      %v2399 = vrot.slane %v2365, 5
      %v2400 = vsel %vm1362, %v2390, %v2399
      %v2401 = vrot.slane %v2366, 5
      %v2402 = vsel %vm1362, %v2391, %v2401
      %v2403 = vrot.slane %v2367, 5
      %v2404 = vsel %vm1362, %v2393, %v2403
      %v2405 = vrot.slane %v2368, 5
      %v2406 = vsel %vm1362, %v2395, %v2405
      %v2407 = vrot.slane %v2369, 5
      %v2408 = vsel %vm1362, %v2397, %v2407
      %v2409 = vrot.slane %v2370, 5
      %v2410 = vsel %vm1362, %v2399, %v2409
      %2411 = vrot.lane.b32.xlu0 %v2386, 96
      %v2412 = vpop.permute.xlu0 %2411
      %2413 = vrot.lane.b32.xlu0 %v2387, 96
      %v2414 = vpop.permute.xlu0 %2413
      %2415 = vrot.lane.b32.xlu0 %v2388, 96
      %v2416 = vpop.permute.xlu0 %2415
      %2417 = vrot.lane.b32.xlu0 %v2389, 96
      %v2418 = vpop.permute.xlu0 %2417
      %2419 = vrot.lane.b32.xlu0 %v2390, 96
      %v2420 = vpop.permute.xlu0 %2419
      %2421 = vrot.lane.b32.xlu0 %v2392, 96
      %v2422 = vpop.permute.xlu0 %2421
      %2423 = vrot.lane.b32.xlu0 %v2394, 96
      %v2424 = vpop.permute.xlu0 %2423
      %2425 = vrot.lane.b32.xlu0 %v2396, 96
      %v2426 = vpop.permute.xlu0 %2425
      %2427 = vrot.lane.b32.xlu0 %v2398, 96
      %v2428 = vpop.permute.xlu0 %2427
      %2429 = vrot.lane.b32.xlu0 %v2400, 96
      %v2430 = vpop.permute.xlu0 %2429
      %2431 = vrot.lane.b32.xlu0 %v2402, 96
      %v2432 = vpop.permute.xlu0 %2431
      %2433 = vrot.lane.b32.xlu0 %v2404, 96
      %v2434 = vpop.permute.xlu0 %2433
      %2435 = vrot.lane.b32.xlu0 %v2406, 96
      %v2436 = vpop.permute.xlu0 %2435
      %2437 = vrot.lane.b32.xlu0 %v2408, 96
      %v2438 = vpop.permute.xlu0 %2437
      %2439 = vrot.lane.b32.xlu0 %v2410, 96
      %v2440 = vpop.permute.xlu0 %2439
      %v2441 = vsel %vm1645, %v2412, %v2414
      %v2442 = vsel %vm1645, %v2414, %v2416
      %v2443 = vsel %vm1645, %v2416, %v2418
      %v2444 = vsel %vm1645, %v2418, %v2420
      %v2445 = vsel %vm1645, %v2422, %v2424
      %v2446 = vsel %vm1645, %v2424, %v2426
      %v2447 = vsel %vm1645, %v2426, %v2428
      %v2448 = vsel %vm1645, %v2428, %v2430
      %v2449 = vsel %vm1645, %v2432, %v2434
      %v2450 = vsel %vm1645, %v2434, %v2436
      %v2451 = vsel %vm1645, %v2436, %v2438
      %v2452 = vsel %vm1645, %v2438, %v2440
      %v2468 = vadd.f32 %v2305, %v2441
      %v2469 = vadd.f32 %v2306, %v2442
      %v2470 = vadd.f32 %v2307, %v2443
      %v2471 = vadd.f32 %v2308, %v2444
      %v2472 = vadd.f32 %v2309, %v2420
      %v2473 = vadd.f32 %v2310, %v2445
      %v2474 = vadd.f32 %v2311, %v2446
      %v2475 = vadd.f32 %v2312, %v2447
      %v2476 = vadd.f32 %v2313, %v2448
      %v2477 = vadd.f32 %v2314, %v2430
      %v2478 = vadd.f32 %v2315, %v2449
      %v2479 = vadd.f32 %v2316, %v2450
      %v2480 = vadd.f32 %v2317, %v2451
      %v2481 = vadd.f32 %v2318, %v2452
      %v2482 = vadd.f32 %v2319, %v2440
      %v2483 = vlaneseq
      %v2484 = vshrl.u32 %v2483, 7
      %v2485 = vsub.s32 5, %v2484
      %v2486 = vrot.slane %v1544, %v2485
      %v2487 = vlaneseq
      %v2488 = vshrl.u32 %v2487, 7
      %v2489 = vsub.s32 5, %v2488
      %v2490 = vrot.slane %v1545, %v2489
      %v2491 = vlaneseq
      %v2492 = vshrl.u32 %v2491, 7
      %v2493 = vsub.s32 5, %v2492
      %v2494 = vrot.slane %v1546, %v2493
      %v2495 = vlaneseq
      %v2496 = vshrl.u32 %v2495, 7
      %v2497 = vsub.s32 5, %v2496
      %v2498 = vrot.slane %v1547, %v2497
      %2503 = vrot.lane.b32.xlu0 %v2486, 64
      %v2504 = vpop.permute.xlu0 %2503
      %2505 = vrot.lane.b32.xlu0 %v2490, 64
      %v2506 = vpop.permute.xlu0 %2505
      %2507 = vrot.lane.b32.xlu0 %v2494, 64
      %v2508 = vpop.permute.xlu0 %2507
      %2509 = vrot.lane.b32.xlu0 %v2498, 64
      %v2510 = vpop.permute.xlu0 %2509
      %v2511 = vsel %vm1576, %v2504, %v2506
      %v2512 = vsel %vm1576, %v2506, %v2508
      %v2513 = vsel %vm1576, %v2508, %v2510
      %v2519 = vmul.f32 %v743, %v2504
      %v2520 = vmul.f32 %v744, %v2511
      %v2521 = vmul.f32 %v745, %v2512
      %v2522 = vmul.f32 %v746, %v2513
      %v2523 = vmul.f32 %v747, %v2510
      %v2524 = vmul.f32 %v748, %v2504
      %v2525 = vmul.f32 %v749, %v2511
      %v2526 = vmul.f32 %v750, %v2512
      %v2527 = vmul.f32 %v751, %v2513
      %v2528 = vmul.f32 %v752, %v2510
      %v2529 = vmul.f32 %v753, %v2504
      %v2530 = vmul.f32 %v754, %v2511
      %v2531 = vmul.f32 %v755, %v2512
      %v2532 = vmul.f32 %v756, %v2513
      %v2533 = vmul.f32 %v757, %v2510
      %v2549 = vrot.slane %v2519, 6
      %v2550 = vrot.slane %v2520, 6
      %v2551 = vrot.slane %v2521, 6
      %v2552 = vrot.slane %v2522, 6
      %v2553 = vrot.slane %v2523, 6
      %v2554 = vrot.slane %v2524, 6
      %v2555 = vsel %vm1484, %v2549, %v2554
      %v2556 = vrot.slane %v2525, 6
      %v2557 = vsel %vm1484, %v2550, %v2556
      %v2558 = vrot.slane %v2526, 6
      %v2559 = vsel %vm1484, %v2551, %v2558
      %v2560 = vrot.slane %v2527, 6
      %v2561 = vsel %vm1484, %v2552, %v2560
      %v2562 = vrot.slane %v2528, 6
      %v2563 = vsel %vm1484, %v2553, %v2562
      %v2564 = vrot.slane %v2529, 6
      %v2565 = vsel %vm1484, %v2554, %v2564
      %v2566 = vrot.slane %v2530, 6
      %v2567 = vsel %vm1484, %v2556, %v2566
      %v2568 = vrot.slane %v2531, 6
      %v2569 = vsel %vm1484, %v2558, %v2568
      %v2570 = vrot.slane %v2532, 6
      %v2571 = vsel %vm1484, %v2560, %v2570
      %v2572 = vrot.slane %v2533, 6
      %v2573 = vsel %vm1484, %v2562, %v2572
      %2574 = vrot.lane.b32.xlu0 %v2549, 96
      %v2575 = vpop.permute.xlu0 %2574
      %2576 = vrot.lane.b32.xlu0 %v2550, 96
      %v2577 = vpop.permute.xlu0 %2576
      %2578 = vrot.lane.b32.xlu0 %v2551, 96
      %v2579 = vpop.permute.xlu0 %2578
      %2580 = vrot.lane.b32.xlu0 %v2552, 96
      %v2581 = vpop.permute.xlu0 %2580
      %2582 = vrot.lane.b32.xlu0 %v2553, 96
      %v2583 = vpop.permute.xlu0 %2582
      %2584 = vrot.lane.b32.xlu0 %v2555, 96
      %v2585 = vpop.permute.xlu0 %2584
      %2586 = vrot.lane.b32.xlu0 %v2557, 96
      %v2587 = vpop.permute.xlu0 %2586
      %2588 = vrot.lane.b32.xlu0 %v2559, 96
      %v2589 = vpop.permute.xlu0 %2588
      %2590 = vrot.lane.b32.xlu0 %v2561, 96
      %v2591 = vpop.permute.xlu0 %2590
      %2592 = vrot.lane.b32.xlu0 %v2563, 96
      %v2593 = vpop.permute.xlu0 %2592
      %2594 = vrot.lane.b32.xlu0 %v2565, 96
      %v2595 = vpop.permute.xlu0 %2594
      %2596 = vrot.lane.b32.xlu0 %v2567, 96
      %v2597 = vpop.permute.xlu0 %2596
      %2598 = vrot.lane.b32.xlu0 %v2569, 96
      %v2599 = vpop.permute.xlu0 %2598
      %2600 = vrot.lane.b32.xlu0 %v2571, 96
      %v2601 = vpop.permute.xlu0 %2600
      %2602 = vrot.lane.b32.xlu0 %v2573, 96
      %v2603 = vpop.permute.xlu0 %2602
      %v2604 = vsel %vm1645, %v2575, %v2577
      %v2605 = vsel %vm1645, %v2577, %v2579
      %v2606 = vsel %vm1645, %v2579, %v2581
      %v2607 = vsel %vm1645, %v2581, %v2583
      %v2608 = vsel %vm1645, %v2585, %v2587
      %v2609 = vsel %vm1645, %v2587, %v2589
      %v2610 = vsel %vm1645, %v2589, %v2591
      %v2611 = vsel %vm1645, %v2591, %v2593
      %v2612 = vsel %vm1645, %v2595, %v2597
      %v2613 = vsel %vm1645, %v2597, %v2599
      %v2614 = vsel %vm1645, %v2599, %v2601
      %v2615 = vsel %vm1645, %v2601, %v2603
      %v2631 = vadd.f32 %v2468, %v2604
      %v2632 = vadd.f32 %v2469, %v2605
      %v2633 = vadd.f32 %v2470, %v2606
      %v2634 = vadd.f32 %v2471, %v2607
      %v2635 = vadd.f32 %v2472, %v2583
      %v2636 = vadd.f32 %v2473, %v2608
      %v2637 = vadd.f32 %v2474, %v2609
      %v2638 = vadd.f32 %v2475, %v2610
      %v2639 = vadd.f32 %v2476, %v2611
      %v2640 = vadd.f32 %v2477, %v2593
      %v2641 = vadd.f32 %v2478, %v2612
      %v2642 = vadd.f32 %v2479, %v2613
      %v2643 = vadd.f32 %v2480, %v2614
      %v2644 = vadd.f32 %v2481, %v2615
      %v2645 = vadd.f32 %v2482, %v2603
      %v2646 = vld [vmem:[%s5 + $0x20] sm:$0xc0]
      %v2647 = vld [vmem:[%s5 + $0x28] sm:$0xc0]
      %v2648 = vld [vmem:[%s5 + $0x30] sm:$0xc0]
      %v2649 = vld [vmem:[%s5 + $0x38] sm:$0xc0]
      %v2650 = vld [vmem:[%s5 + $0x40] sm:$0x1f]
      %v2651 = vld [vmem:[%s5 + $0x48] sm:$0x1f]
      %v2652 = vld [vmem:[%s5 + $0x50] sm:$0x1f]
      %v2653 = vld [vmem:[%s5 + $0x58] sm:$0x1f]
      %v2654 = vlaneseq
      %v2655 = vshrl.u32 %v2654, 7
      %v2656 = vsub.s32 6, %v2655
      %v2657 = vrot.slane %v2646, %v2656
      %v2658 = vlaneseq
      %v2659 = vshrl.u32 %v2658, 7
      %v2660 = vsub.s32 6, %v2659
      %v2661 = vrot.slane %v2647, %v2660
      %v2662 = vlaneseq
      %v2663 = vshrl.u32 %v2662, 7
      %v2664 = vsub.s32 6, %v2663
      %v2665 = vrot.slane %v2648, %v2664
      %v2666 = vlaneseq
      %v2667 = vshrl.u32 %v2666, 7
      %v2668 = vsub.s32 6, %v2667
      %v2669 = vrot.slane %v2649, %v2668
      %2674 = vrot.lane.b32.xlu0 %v2657, 96
      %v2675 = vpop.permute.xlu0 %2674
      %2676 = vrot.lane.b32.xlu0 %v2661, 96
      %v2677 = vpop.permute.xlu0 %2676
      %2678 = vrot.lane.b32.xlu0 %v2665, 96
      %v2679 = vpop.permute.xlu0 %2678
      %2680 = vrot.lane.b32.xlu0 %v2669, 96
      %v2681 = vpop.permute.xlu0 %2680
      %v2682 = vsel %vm1645, %v2675, %v2677
      %v2683 = vsel %vm1645, %v2677, %v2679
      %v2684 = vsel %vm1645, %v2679, %v2681
      %v2690 = vmul.f32 %v738, %v2675
      %v2691 = vmul.f32 %v739, %v2682
      %v2692 = vmul.f32 %v740, %v2683
      %v2693 = vmul.f32 %v741, %v2684
      %v2694 = vmul.f32 %v742, %v2681
      %v2695 = vmul.f32 %v743, %v2675
      %v2696 = vmul.f32 %v744, %v2682
      %v2697 = vmul.f32 %v745, %v2683
      %v2698 = vmul.f32 %v746, %v2684
      %v2699 = vmul.f32 %v747, %v2681
      %v2700 = vmul.f32 %v748, %v2675
      %v2701 = vmul.f32 %v749, %v2682
      %v2702 = vmul.f32 %v750, %v2683
      %v2703 = vmul.f32 %v751, %v2684
      %v2704 = vmul.f32 %v752, %v2681
      %2720 = vrot.lane.b32.xlu0 %v2690, 64
      %v2721 = vpop.permute.xlu0 %2720
      %2722 = vrot.lane.b32.xlu0 %v2691, 64
      %v2723 = vpop.permute.xlu0 %2722
      %2724 = vrot.lane.b32.xlu0 %v2692, 64
      %v2725 = vpop.permute.xlu0 %2724
      %2726 = vrot.lane.b32.xlu0 %v2693, 64
      %v2727 = vpop.permute.xlu0 %2726
      %2728 = vrot.lane.b32.xlu0 %v2694, 64
      %v2729 = vpop.permute.xlu0 %2728
      %2730 = vrot.lane.b32.xlu0 %v2695, 64
      %v2731 = vpop.permute.xlu0 %2730
      %2732 = vrot.lane.b32.xlu0 %v2696, 64
      %v2733 = vpop.permute.xlu0 %2732
      %2734 = vrot.lane.b32.xlu0 %v2697, 64
      %v2735 = vpop.permute.xlu0 %2734
      %2736 = vrot.lane.b32.xlu0 %v2698, 64
      %v2737 = vpop.permute.xlu0 %2736
      %2738 = vrot.lane.b32.xlu0 %v2699, 64
      %v2739 = vpop.permute.xlu0 %2738
      %2740 = vrot.lane.b32.xlu0 %v2700, 64
      %v2741 = vpop.permute.xlu0 %2740
      %2742 = vrot.lane.b32.xlu0 %v2701, 64
      %v2743 = vpop.permute.xlu0 %2742
      %2744 = vrot.lane.b32.xlu0 %v2702, 64
      %v2745 = vpop.permute.xlu0 %2744
      %2746 = vrot.lane.b32.xlu0 %v2703, 64
      %v2747 = vpop.permute.xlu0 %2746
      %2748 = vrot.lane.b32.xlu0 %v2704, 64
      %v2749 = vpop.permute.xlu0 %2748
      %v2750 = vsel %vm1576, %v2721, %v2723
      %v2751 = vsel %vm1576, %v2723, %v2725
      %v2752 = vsel %vm1576, %v2725, %v2727
      %v2753 = vsel %vm1576, %v2727, %v2729
      %v2754 = vsel %vm1576, %v2731, %v2733
      %v2755 = vsel %vm1576, %v2733, %v2735
      %v2756 = vsel %vm1576, %v2735, %v2737
      %v2757 = vsel %vm1576, %v2737, %v2739
      %v2758 = vsel %vm1576, %v2741, %v2743
      %v2759 = vsel %vm1576, %v2743, %v2745
      %v2760 = vsel %vm1576, %v2745, %v2747
      %v2761 = vsel %vm1576, %v2747, %v2749
      %v2777 = vadd.f32 %v2631, %v2750
      %v2778 = vadd.f32 %v2632, %v2751
      %v2779 = vadd.f32 %v2633, %v2752
      %v2780 = vadd.f32 %v2634, %v2753
      %v2781 = vadd.f32 %v2635, %v2729
      %v2782 = vadd.f32 %v2636, %v2754
      %v2783 = vadd.f32 %v2637, %v2755
      %v2784 = vadd.f32 %v2638, %v2756
      %v2785 = vadd.f32 %v2639, %v2757
      %v2786 = vadd.f32 %v2640, %v2739
      %v2787 = vadd.f32 %v2641, %v2758
      %v2788 = vadd.f32 %v2642, %v2759
      %v2789 = vadd.f32 %v2643, %v2760
      %v2790 = vadd.f32 %v2644, %v2761
      %v2791 = vadd.f32 %v2645, %v2749
      %v2792 = vlaneseq
      %v2793 = vshrl.u32 %v2792, 7
      %v2794 = vsub.s32 7, %v2793
      %v2795 = vrot.slane %v2646, %v2794
      %v2796 = vlaneseq
      %v2797 = vshrl.u32 %v2796, 7
      %v2798 = vsub.s32 7, %v2797
      %v2799 = vrot.slane %v2647, %v2798
      %v2800 = vlaneseq
      %v2801 = vshrl.u32 %v2800, 7
      %v2802 = vsub.s32 7, %v2801
      %v2803 = vrot.slane %v2648, %v2802
      %v2804 = vlaneseq
      %v2805 = vshrl.u32 %v2804, 7
      %v2806 = vsub.s32 7, %v2805
      %v2807 = vrot.slane %v2649, %v2806
      %2812 = vrot.lane.b32.xlu0 %v2795, 96
      %v2813 = vpop.permute.xlu0 %2812
      %2814 = vrot.lane.b32.xlu0 %v2799, 96
      %v2815 = vpop.permute.xlu0 %2814
      %2816 = vrot.lane.b32.xlu0 %v2803, 96
      %v2817 = vpop.permute.xlu0 %2816
      %2818 = vrot.lane.b32.xlu0 %v2807, 96
      %v2819 = vpop.permute.xlu0 %2818
      %v2820 = vsel %vm1645, %v2813, %v2815
      %v2821 = vsel %vm1645, %v2815, %v2817
      %v2822 = vsel %vm1645, %v2817, %v2819
      %v2828 = vmul.f32 %v738, %v2813
      %v2829 = vmul.f32 %v739, %v2820
      %v2830 = vmul.f32 %v740, %v2821
      %v2831 = vmul.f32 %v741, %v2822
      %v2832 = vmul.f32 %v742, %v2819
      %v2833 = vmul.f32 %v743, %v2813
      %v2834 = vmul.f32 %v744, %v2820
      %v2835 = vmul.f32 %v745, %v2821
      %v2836 = vmul.f32 %v746, %v2822
      %v2837 = vmul.f32 %v747, %v2819
      %v2838 = vmul.f32 %v748, %v2813
      %v2839 = vmul.f32 %v749, %v2820
      %v2840 = vmul.f32 %v750, %v2821
      %v2841 = vmul.f32 %v751, %v2822
      %v2842 = vmul.f32 %v752, %v2819
      %v2858 = vrot.slane %v2828, 1
      %v2859 = vrot.slane %v2833, 1
      %v2860 = vsel %vm894, %v2858, %v2859
      %v2861 = vrot.slane %v2829, 1
      %v2862 = vrot.slane %v2834, 1
      %v2863 = vsel %vm894, %v2861, %v2862
      %v2864 = vrot.slane %v2830, 1
      %v2865 = vrot.slane %v2835, 1
      %v2866 = vsel %vm894, %v2864, %v2865
      %v2867 = vrot.slane %v2831, 1
      %v2868 = vrot.slane %v2836, 1
      %v2869 = vsel %vm894, %v2867, %v2868
      %v2870 = vrot.slane %v2832, 1
      %v2871 = vrot.slane %v2837, 1
      %v2872 = vsel %vm894, %v2870, %v2871
      %v2873 = vrot.slane %v2838, 1
      %v2874 = vsel %vm894, %v2859, %v2873
      %v2875 = vrot.slane %v2839, 1
      %v2876 = vsel %vm894, %v2862, %v2875
      %v2877 = vrot.slane %v2840, 1
      %v2878 = vsel %vm894, %v2865, %v2877
      %v2879 = vrot.slane %v2841, 1
      %v2880 = vsel %vm894, %v2868, %v2879
      %v2881 = vrot.slane %v2842, 1
      %v2882 = vsel %vm894, %v2871, %v2881
      %2883 = vrot.lane.b32.xlu0 %v2860, 64
      %v2884 = vpop.permute.xlu0 %2883
      %2885 = vrot.lane.b32.xlu0 %v2863, 64
      %v2886 = vpop.permute.xlu0 %2885
      %2887 = vrot.lane.b32.xlu0 %v2866, 64
      %v2888 = vpop.permute.xlu0 %2887
      %2889 = vrot.lane.b32.xlu0 %v2869, 64
      %v2890 = vpop.permute.xlu0 %2889
      %2891 = vrot.lane.b32.xlu0 %v2872, 64
      %v2892 = vpop.permute.xlu0 %2891
      %2893 = vrot.lane.b32.xlu0 %v2874, 64
      %v2894 = vpop.permute.xlu0 %2893
      %2895 = vrot.lane.b32.xlu0 %v2876, 64
      %v2896 = vpop.permute.xlu0 %2895
      %2897 = vrot.lane.b32.xlu0 %v2878, 64
      %v2898 = vpop.permute.xlu0 %2897
      %2899 = vrot.lane.b32.xlu0 %v2880, 64
      %v2900 = vpop.permute.xlu0 %2899
      %2901 = vrot.lane.b32.xlu0 %v2882, 64
      %v2902 = vpop.permute.xlu0 %2901
      %2903 = vrot.lane.b32.xlu0 %v2873, 64
      %v2904 = vpop.permute.xlu0 %2903
      %2905 = vrot.lane.b32.xlu0 %v2875, 64
      %v2906 = vpop.permute.xlu0 %2905
      %2907 = vrot.lane.b32.xlu0 %v2877, 64
      %v2908 = vpop.permute.xlu0 %2907
      %2909 = vrot.lane.b32.xlu0 %v2879, 64
      %v2910 = vpop.permute.xlu0 %2909
      %2911 = vrot.lane.b32.xlu0 %v2881, 64
      %v2912 = vpop.permute.xlu0 %2911
      %v2913 = vsel %vm1576, %v2884, %v2886
      %v2914 = vsel %vm1576, %v2886, %v2888
      %v2915 = vsel %vm1576, %v2888, %v2890
      %v2916 = vsel %vm1576, %v2890, %v2892
      %v2917 = vsel %vm1576, %v2894, %v2896
      %v2918 = vsel %vm1576, %v2896, %v2898
      %v2919 = vsel %vm1576, %v2898, %v2900
      %v2920 = vsel %vm1576, %v2900, %v2902
      %v2921 = vsel %vm1576, %v2904, %v2906
      %v2922 = vsel %vm1576, %v2906, %v2908
      %v2923 = vsel %vm1576, %v2908, %v2910
      %v2924 = vsel %vm1576, %v2910, %v2912
      %v2940 = vadd.f32 %v2777, %v2913
      %v2941 = vadd.f32 %v2778, %v2914
      %v2942 = vadd.f32 %v2779, %v2915
      %v2943 = vadd.f32 %v2780, %v2916
      %v2944 = vadd.f32 %v2781, %v2892
      %v2945 = vadd.f32 %v2782, %v2917
      %v2946 = vadd.f32 %v2783, %v2918
      %v2947 = vadd.f32 %v2784, %v2919
      %v2948 = vadd.f32 %v2785, %v2920
      %v2949 = vadd.f32 %v2786, %v2902
      %v2950 = vadd.f32 %v2787, %v2921
      %v2951 = vadd.f32 %v2788, %v2922
      %v2952 = vadd.f32 %v2789, %v2923
      %v2953 = vadd.f32 %v2790, %v2924
      %v2954 = vadd.f32 %v2791, %v2912
      %v2955 = vlaneseq
      %v2956 = vshrl.u32 %v2955, 7
      %v2957 = vsub.s32 0, %v2956
      %v2958 = vrot.slane %v2650, %v2957
      %v2959 = vlaneseq
      %v2960 = vshrl.u32 %v2959, 7
      %v2961 = vsub.s32 0, %v2960
      %v2962 = vrot.slane %v2651, %v2961
      %v2963 = vlaneseq
      %v2964 = vshrl.u32 %v2963, 7
      %v2965 = vsub.s32 0, %v2964
      %v2966 = vrot.slane %v2652, %v2965
      %v2967 = vlaneseq
      %v2968 = vshrl.u32 %v2967, 7
      %v2969 = vsub.s32 0, %v2968
      %v2970 = vrot.slane %v2653, %v2969
      %2975 = vrot.lane.b32.xlu0 %v2958, 96
      %v2976 = vpop.permute.xlu0 %2975
      %2977 = vrot.lane.b32.xlu0 %v2962, 96
      %v2978 = vpop.permute.xlu0 %2977
      %2979 = vrot.lane.b32.xlu0 %v2966, 96
      %v2980 = vpop.permute.xlu0 %2979
      %2981 = vrot.lane.b32.xlu0 %v2970, 96
      %v2982 = vpop.permute.xlu0 %2981
      %v2983 = vsel %vm1645, %v2976, %v2978
      %v2984 = vsel %vm1645, %v2978, %v2980
      %v2985 = vsel %vm1645, %v2980, %v2982
      %v2991 = vmul.f32 %v738, %v2976
      %v2992 = vmul.f32 %v739, %v2983
      %v2993 = vmul.f32 %v740, %v2984
      %v2994 = vmul.f32 %v741, %v2985
      %v2995 = vmul.f32 %v742, %v2982
      %v2996 = vmul.f32 %v743, %v2976
      %v2997 = vmul.f32 %v744, %v2983
      %v2998 = vmul.f32 %v745, %v2984
      %v2999 = vmul.f32 %v746, %v2985
      %v3000 = vmul.f32 %v747, %v2982
      %v3001 = vmul.f32 %v748, %v2976
      %v3002 = vmul.f32 %v749, %v2983
      %v3003 = vmul.f32 %v750, %v2984
      %v3004 = vmul.f32 %v751, %v2985
      %v3005 = vmul.f32 %v752, %v2982
      %v3021 = vrot.slane %v2991, 2
      %v3022 = vrot.slane %v2996, 2
      %v3023 = vsel %vm1016, %v3021, %v3022
      %v3024 = vrot.slane %v2992, 2
      %v3025 = vrot.slane %v2997, 2
      %v3026 = vsel %vm1016, %v3024, %v3025
      %v3027 = vrot.slane %v2993, 2
      %v3028 = vrot.slane %v2998, 2
      %v3029 = vsel %vm1016, %v3027, %v3028
      %v3030 = vrot.slane %v2994, 2
      %v3031 = vrot.slane %v2999, 2
      %v3032 = vsel %vm1016, %v3030, %v3031
      %v3033 = vrot.slane %v2995, 2
      %v3034 = vrot.slane %v3000, 2
      %v3035 = vsel %vm1016, %v3033, %v3034
      %v3036 = vrot.slane %v3001, 2
      %v3037 = vsel %vm1016, %v3022, %v3036
      %v3038 = vrot.slane %v3002, 2
      %v3039 = vsel %vm1016, %v3025, %v3038
      %v3040 = vrot.slane %v3003, 2
      %v3041 = vsel %vm1016, %v3028, %v3040
      %v3042 = vrot.slane %v3004, 2
      %v3043 = vsel %vm1016, %v3031, %v3042
      %v3044 = vrot.slane %v3005, 2
      %v3045 = vsel %vm1016, %v3034, %v3044
      %3046 = vrot.lane.b32.xlu0 %v3023, 64
      %v3047 = vpop.permute.xlu0 %3046
      %3048 = vrot.lane.b32.xlu0 %v3026, 64
      %v3049 = vpop.permute.xlu0 %3048
      %3050 = vrot.lane.b32.xlu0 %v3029, 64
      %v3051 = vpop.permute.xlu0 %3050
      %3052 = vrot.lane.b32.xlu0 %v3032, 64
      %v3053 = vpop.permute.xlu0 %3052
      %3054 = vrot.lane.b32.xlu0 %v3035, 64
      %v3055 = vpop.permute.xlu0 %3054
      %3056 = vrot.lane.b32.xlu0 %v3037, 64
      %v3057 = vpop.permute.xlu0 %3056
      %3058 = vrot.lane.b32.xlu0 %v3039, 64
      %v3059 = vpop.permute.xlu0 %3058
      %3060 = vrot.lane.b32.xlu0 %v3041, 64
      %v3061 = vpop.permute.xlu0 %3060
      %3062 = vrot.lane.b32.xlu0 %v3043, 64
      %v3063 = vpop.permute.xlu0 %3062
      %3064 = vrot.lane.b32.xlu0 %v3045, 64
      %v3065 = vpop.permute.xlu0 %3064
      %3066 = vrot.lane.b32.xlu0 %v3036, 64
      %v3067 = vpop.permute.xlu0 %3066
      %3068 = vrot.lane.b32.xlu0 %v3038, 64
      %v3069 = vpop.permute.xlu0 %3068
      %3070 = vrot.lane.b32.xlu0 %v3040, 64
      %v3071 = vpop.permute.xlu0 %3070
      %3072 = vrot.lane.b32.xlu0 %v3042, 64
      %v3073 = vpop.permute.xlu0 %3072
      %3074 = vrot.lane.b32.xlu0 %v3044, 64
      %v3075 = vpop.permute.xlu0 %3074
      %v3076 = vsel %vm1576, %v3047, %v3049
      %v3077 = vsel %vm1576, %v3049, %v3051
      %v3078 = vsel %vm1576, %v3051, %v3053
      %v3079 = vsel %vm1576, %v3053, %v3055
      %v3080 = vsel %vm1576, %v3057, %v3059
      %v3081 = vsel %vm1576, %v3059, %v3061
      %v3082 = vsel %vm1576, %v3061, %v3063
      %v3083 = vsel %vm1576, %v3063, %v3065
      %v3084 = vsel %vm1576, %v3067, %v3069
      %v3085 = vsel %vm1576, %v3069, %v3071
      %v3086 = vsel %vm1576, %v3071, %v3073
      %v3087 = vsel %vm1576, %v3073, %v3075
      %v3103 = vadd.f32 %v2940, %v3076
      %v3104 = vadd.f32 %v2941, %v3077
      %v3105 = vadd.f32 %v2942, %v3078
      %v3106 = vadd.f32 %v2943, %v3079
      %v3107 = vadd.f32 %v2944, %v3055
      %v3108 = vadd.f32 %v2945, %v3080
      %v3109 = vadd.f32 %v2946, %v3081
      %v3110 = vadd.f32 %v2947, %v3082
      %v3111 = vadd.f32 %v2948, %v3083
      %v3112 = vadd.f32 %v2949, %v3065
      %v3113 = vadd.f32 %v2950, %v3084
      %v3114 = vadd.f32 %v2951, %v3085
      %v3115 = vadd.f32 %v2952, %v3086
      %v3116 = vadd.f32 %v2953, %v3087
      %v3117 = vadd.f32 %v2954, %v3075
      %v3118 = vlaneseq
      %v3119 = vshrl.u32 %v3118, 7
      %v3120 = vsub.s32 1, %v3119
      %v3121 = vrot.slane %v2650, %v3120
      %v3122 = vlaneseq
      %v3123 = vshrl.u32 %v3122, 7
      %v3124 = vsub.s32 1, %v3123
      %v3125 = vrot.slane %v2651, %v3124
      %v3126 = vlaneseq
      %v3127 = vshrl.u32 %v3126, 7
      %v3128 = vsub.s32 1, %v3127
      %v3129 = vrot.slane %v2652, %v3128
      %v3130 = vlaneseq
      %v3131 = vshrl.u32 %v3130, 7
      %v3132 = vsub.s32 1, %v3131
      %v3133 = vrot.slane %v2653, %v3132
      %3138 = vrot.lane.b32.xlu0 %v3121, 96
      %v3139 = vpop.permute.xlu0 %3138
      %3140 = vrot.lane.b32.xlu0 %v3125, 96
      %v3141 = vpop.permute.xlu0 %3140
      %3142 = vrot.lane.b32.xlu0 %v3129, 96
      %v3143 = vpop.permute.xlu0 %3142
      %3144 = vrot.lane.b32.xlu0 %v3133, 96
      %v3145 = vpop.permute.xlu0 %3144
      %v3146 = vsel %vm1645, %v3139, %v3141
      %v3147 = vsel %vm1645, %v3141, %v3143
      %v3148 = vsel %vm1645, %v3143, %v3145
      %v3154 = vmul.f32 %v743, %v3139
      %v3155 = vmul.f32 %v744, %v3146
      %v3156 = vmul.f32 %v745, %v3147
      %v3157 = vmul.f32 %v746, %v3148
      %v3158 = vmul.f32 %v747, %v3145
      %v3159 = vmul.f32 %v748, %v3139
      %v3160 = vmul.f32 %v749, %v3146
      %v3161 = vmul.f32 %v750, %v3147
      %v3162 = vmul.f32 %v751, %v3148
      %v3163 = vmul.f32 %v752, %v3145
      %v3174 = vrot.slane %v3154, 3
      %v3175 = vrot.slane %v3155, 3
      %v3176 = vrot.slane %v3156, 3
      %v3177 = vrot.slane %v3157, 3
      %v3178 = vrot.slane %v3158, 3
      %v3179 = vrot.slane %v3159, 3
      %v3180 = vsel %vm1128, %v3174, %v3179
      %v3181 = vrot.slane %v3160, 3
      %v3182 = vsel %vm1128, %v3175, %v3181
      %v3183 = vrot.slane %v3161, 3
      %v3184 = vsel %vm1128, %v3176, %v3183
      %v3185 = vrot.slane %v3162, 3
      %v3186 = vsel %vm1128, %v3177, %v3185
      %v3187 = vrot.slane %v3163, 3
      %v3188 = vsel %vm1128, %v3178, %v3187
      %3189 = vrot.lane.b32.xlu0 %v3174, 64
      %v3190 = vpop.permute.xlu0 %3189
      %3191 = vrot.lane.b32.xlu0 %v3175, 64
      %v3192 = vpop.permute.xlu0 %3191
      %3193 = vrot.lane.b32.xlu0 %v3176, 64
      %v3194 = vpop.permute.xlu0 %3193
      %3195 = vrot.lane.b32.xlu0 %v3177, 64
      %v3196 = vpop.permute.xlu0 %3195
      %3197 = vrot.lane.b32.xlu0 %v3178, 64
      %v3198 = vpop.permute.xlu0 %3197
      %3199 = vrot.lane.b32.xlu0 %v3180, 64
      %v3200 = vpop.permute.xlu0 %3199
      %3201 = vrot.lane.b32.xlu0 %v3182, 64
      %v3202 = vpop.permute.xlu0 %3201
      %3203 = vrot.lane.b32.xlu0 %v3184, 64
      %v3204 = vpop.permute.xlu0 %3203
      %3205 = vrot.lane.b32.xlu0 %v3186, 64
      %v3206 = vpop.permute.xlu0 %3205
      %3207 = vrot.lane.b32.xlu0 %v3188, 64
      %v3208 = vpop.permute.xlu0 %3207
      %3209 = vrot.lane.b32.xlu0 %v3179, 64
      %v3210 = vpop.permute.xlu0 %3209
      %3211 = vrot.lane.b32.xlu0 %v3181, 64
      %v3212 = vpop.permute.xlu0 %3211
      %3213 = vrot.lane.b32.xlu0 %v3183, 64
      %v3214 = vpop.permute.xlu0 %3213
      %3215 = vrot.lane.b32.xlu0 %v3185, 64
      %v3216 = vpop.permute.xlu0 %3215
      %3217 = vrot.lane.b32.xlu0 %v3187, 64
      %v3218 = vpop.permute.xlu0 %3217
      %v3219 = vsel %vm1576, %v3190, %v3192
      %v3220 = vsel %vm1576, %v3192, %v3194
      %v3221 = vsel %vm1576, %v3194, %v3196
      %v3222 = vsel %vm1576, %v3196, %v3198
      %v3223 = vsel %vm1576, %v3200, %v3202
      %v3224 = vsel %vm1576, %v3202, %v3204
      %v3225 = vsel %vm1576, %v3204, %v3206
      %v3226 = vsel %vm1576, %v3206, %v3208
      %v3227 = vsel %vm1576, %v3210, %v3212
      %v3228 = vsel %vm1576, %v3212, %v3214
      %v3229 = vsel %vm1576, %v3214, %v3216
      %v3230 = vsel %vm1576, %v3216, %v3218
      %v3246 = vadd.f32 %v3103, %v3219
      %v3247 = vadd.f32 %v3104, %v3220
      %v3248 = vadd.f32 %v3105, %v3221
      %v3249 = vadd.f32 %v3106, %v3222
      %v3250 = vadd.f32 %v3107, %v3198
      %v3251 = vadd.f32 %v3108, %v3223
      %v3252 = vadd.f32 %v3109, %v3224
      %v3253 = vadd.f32 %v3110, %v3225
      %v3254 = vadd.f32 %v3111, %v3226
      %v3255 = vadd.f32 %v3112, %v3208
      %v3256 = vadd.f32 %v3113, %v3227
      %v3257 = vadd.f32 %v3114, %v3228
      %v3258 = vadd.f32 %v3115, %v3229
      %v3259 = vadd.f32 %v3116, %v3230
      %v3260 = vadd.f32 %v3117, %v3218
      %v3261 = vlaneseq
      %v3262 = vshrl.u32 %v3261, 7
      %v3263 = vsub.s32 2, %v3262
      %v3264 = vrot.slane %v2650, %v3263
      %v3265 = vlaneseq
      %v3266 = vshrl.u32 %v3265, 7
      %v3267 = vsub.s32 2, %v3266
      %v3268 = vrot.slane %v2651, %v3267
      %v3269 = vlaneseq
      %v3270 = vshrl.u32 %v3269, 7
      %v3271 = vsub.s32 2, %v3270
      %v3272 = vrot.slane %v2652, %v3271
      %v3273 = vlaneseq
      %v3274 = vshrl.u32 %v3273, 7
      %v3275 = vsub.s32 2, %v3274
      %v3276 = vrot.slane %v2653, %v3275
      %3281 = vrot.lane.b32.xlu0 %v3264, 96
      %v3282 = vpop.permute.xlu0 %3281
      %3283 = vrot.lane.b32.xlu0 %v3268, 96
      %v3284 = vpop.permute.xlu0 %3283
      %3285 = vrot.lane.b32.xlu0 %v3272, 96
      %v3286 = vpop.permute.xlu0 %3285
      %3287 = vrot.lane.b32.xlu0 %v3276, 96
      %v3288 = vpop.permute.xlu0 %3287
      %v3289 = vsel %vm1645, %v3282, %v3284
      %v3290 = vsel %vm1645, %v3284, %v3286
      %v3291 = vsel %vm1645, %v3286, %v3288
      %v3297 = vmul.f32 %v743, %v3282
      %v3298 = vmul.f32 %v744, %v3289
      %v3299 = vmul.f32 %v745, %v3290
      %v3300 = vmul.f32 %v746, %v3291
      %v3301 = vmul.f32 %v747, %v3288
      %v3302 = vmul.f32 %v748, %v3282
      %v3303 = vmul.f32 %v749, %v3289
      %v3304 = vmul.f32 %v750, %v3290
      %v3305 = vmul.f32 %v751, %v3291
      %v3306 = vmul.f32 %v752, %v3288
      %v3307 = vmul.f32 %v753, %v3282
      %v3308 = vmul.f32 %v754, %v3289
      %v3309 = vmul.f32 %v755, %v3290
      %v3310 = vmul.f32 %v756, %v3291
      %v3311 = vmul.f32 %v757, %v3288
      %v3327 = vrot.slane %v3297, 4
      %v3328 = vrot.slane %v3298, 4
      %v3329 = vrot.slane %v3299, 4
      %v3330 = vrot.slane %v3300, 4
      %v3331 = vrot.slane %v3301, 4
      %v3332 = vrot.slane %v3302, 4
      %v3333 = vsel %vm1240, %v3327, %v3332
      %v3334 = vrot.slane %v3303, 4
      %v3335 = vsel %vm1240, %v3328, %v3334
      %v3336 = vrot.slane %v3304, 4
      %v3337 = vsel %vm1240, %v3329, %v3336
      %v3338 = vrot.slane %v3305, 4
      %v3339 = vsel %vm1240, %v3330, %v3338
      %v3340 = vrot.slane %v3306, 4
      %v3341 = vsel %vm1240, %v3331, %v3340
      %v3342 = vrot.slane %v3307, 4
      %v3343 = vsel %vm1240, %v3332, %v3342
      %v3344 = vrot.slane %v3308, 4
      %v3345 = vsel %vm1240, %v3334, %v3344
      %v3346 = vrot.slane %v3309, 4
      %v3347 = vsel %vm1240, %v3336, %v3346
      %v3348 = vrot.slane %v3310, 4
      %v3349 = vsel %vm1240, %v3338, %v3348
      %v3350 = vrot.slane %v3311, 4
      %v3351 = vsel %vm1240, %v3340, %v3350
      %3352 = vrot.lane.b32.xlu0 %v3327, 64
      %v3353 = vpop.permute.xlu0 %3352
      %3354 = vrot.lane.b32.xlu0 %v3328, 64
      %v3355 = vpop.permute.xlu0 %3354
      %3356 = vrot.lane.b32.xlu0 %v3329, 64
      %v3357 = vpop.permute.xlu0 %3356
      %3358 = vrot.lane.b32.xlu0 %v3330, 64
      %v3359 = vpop.permute.xlu0 %3358
      %3360 = vrot.lane.b32.xlu0 %v3331, 64
      %v3361 = vpop.permute.xlu0 %3360
      %3362 = vrot.lane.b32.xlu0 %v3333, 64
      %v3363 = vpop.permute.xlu0 %3362
      %3364 = vrot.lane.b32.xlu0 %v3335, 64
      %v3365 = vpop.permute.xlu0 %3364
      %3366 = vrot.lane.b32.xlu0 %v3337, 64
      %v3367 = vpop.permute.xlu0 %3366
      %3368 = vrot.lane.b32.xlu0 %v3339, 64
      %v3369 = vpop.permute.xlu0 %3368
      %3370 = vrot.lane.b32.xlu0 %v3341, 64
      %v3371 = vpop.permute.xlu0 %3370
      %3372 = vrot.lane.b32.xlu0 %v3343, 64
      %v3373 = vpop.permute.xlu0 %3372
      %3374 = vrot.lane.b32.xlu0 %v3345, 64
      %v3375 = vpop.permute.xlu0 %3374
      %3376 = vrot.lane.b32.xlu0 %v3347, 64
      %v3377 = vpop.permute.xlu0 %3376
      %3378 = vrot.lane.b32.xlu0 %v3349, 64
      %v3379 = vpop.permute.xlu0 %3378
      %3380 = vrot.lane.b32.xlu0 %v3351, 64
      %v3381 = vpop.permute.xlu0 %3380
      %v3382 = vsel %vm1576, %v3353, %v3355
      %v3383 = vsel %vm1576, %v3355, %v3357
      %v3384 = vsel %vm1576, %v3357, %v3359
      %v3385 = vsel %vm1576, %v3359, %v3361
      %v3386 = vsel %vm1576, %v3363, %v3365
      %v3387 = vsel %vm1576, %v3365, %v3367
      %v3388 = vsel %vm1576, %v3367, %v3369
      %v3389 = vsel %vm1576, %v3369, %v3371
      %v3390 = vsel %vm1576, %v3373, %v3375
      %v3391 = vsel %vm1576, %v3375, %v3377
      %v3392 = vsel %vm1576, %v3377, %v3379
      %v3393 = vsel %vm1576, %v3379, %v3381
      %v3409 = vadd.f32 %v3246, %v3382
      %v3410 = vadd.f32 %v3247, %v3383
      %v3411 = vadd.f32 %v3248, %v3384
      %v3412 = vadd.f32 %v3249, %v3385
      %v3413 = vadd.f32 %v3250, %v3361
      %v3414 = vadd.f32 %v3251, %v3386
      %v3415 = vadd.f32 %v3252, %v3387
      %v3416 = vadd.f32 %v3253, %v3388
      %v3417 = vadd.f32 %v3254, %v3389
      %v3418 = vadd.f32 %v3255, %v3371
      %v3419 = vadd.f32 %v3256, %v3390
      %v3420 = vadd.f32 %v3257, %v3391
      %v3421 = vadd.f32 %v3258, %v3392
      %v3422 = vadd.f32 %v3259, %v3393
      %v3423 = vadd.f32 %v3260, %v3381
      %v3424 = vlaneseq
      %v3425 = vshrl.u32 %v3424, 7
      %v3426 = vsub.s32 3, %v3425
      %v3427 = vrot.slane %v2650, %v3426
      %v3428 = vlaneseq
      %v3429 = vshrl.u32 %v3428, 7
      %v3430 = vsub.s32 3, %v3429
      %v3431 = vrot.slane %v2651, %v3430
      %v3432 = vlaneseq
      %v3433 = vshrl.u32 %v3432, 7
      %v3434 = vsub.s32 3, %v3433
      %v3435 = vrot.slane %v2652, %v3434
      %v3436 = vlaneseq
      %v3437 = vshrl.u32 %v3436, 7
      %v3438 = vsub.s32 3, %v3437
      %v3439 = vrot.slane %v2653, %v3438
      %3444 = vrot.lane.b32.xlu0 %v3427, 96
      %v3445 = vpop.permute.xlu0 %3444
      %3446 = vrot.lane.b32.xlu0 %v3431, 96
      %v3447 = vpop.permute.xlu0 %3446
      %3448 = vrot.lane.b32.xlu0 %v3435, 96
      %v3449 = vpop.permute.xlu0 %3448
      %3450 = vrot.lane.b32.xlu0 %v3439, 96
      %v3451 = vpop.permute.xlu0 %3450
      %v3452 = vsel %vm1645, %v3445, %v3447
      %v3453 = vsel %vm1645, %v3447, %v3449
      %v3454 = vsel %vm1645, %v3449, %v3451
      %v3460 = vmul.f32 %v743, %v3445
      %v3461 = vmul.f32 %v744, %v3452
      %v3462 = vmul.f32 %v745, %v3453
      %v3463 = vmul.f32 %v746, %v3454
      %v3464 = vmul.f32 %v747, %v3451
      %v3465 = vmul.f32 %v748, %v3445
      %v3466 = vmul.f32 %v749, %v3452
      %v3467 = vmul.f32 %v750, %v3453
      %v3468 = vmul.f32 %v751, %v3454
      %v3469 = vmul.f32 %v752, %v3451
      %v3470 = vmul.f32 %v753, %v3445
      %v3471 = vmul.f32 %v754, %v3452
      %v3472 = vmul.f32 %v755, %v3453
      %v3473 = vmul.f32 %v756, %v3454
      %v3474 = vmul.f32 %v757, %v3451
      %v3490 = vrot.slane %v3460, 5
      %v3491 = vrot.slane %v3461, 5
      %v3492 = vrot.slane %v3462, 5
      %v3493 = vrot.slane %v3463, 5
      %v3494 = vrot.slane %v3464, 5
      %v3495 = vrot.slane %v3465, 5
      %v3496 = vsel %vm1362, %v3490, %v3495
      %v3497 = vrot.slane %v3466, 5
      %v3498 = vsel %vm1362, %v3491, %v3497
      %v3499 = vrot.slane %v3467, 5
      %v3500 = vsel %vm1362, %v3492, %v3499
      %v3501 = vrot.slane %v3468, 5
      %v3502 = vsel %vm1362, %v3493, %v3501
      %v3503 = vrot.slane %v3469, 5
      %v3504 = vsel %vm1362, %v3494, %v3503
      %v3505 = vrot.slane %v3470, 5
      %v3506 = vsel %vm1362, %v3495, %v3505
      %v3507 = vrot.slane %v3471, 5
      %v3508 = vsel %vm1362, %v3497, %v3507
      %v3509 = vrot.slane %v3472, 5
      %v3510 = vsel %vm1362, %v3499, %v3509
      %v3511 = vrot.slane %v3473, 5
      %v3512 = vsel %vm1362, %v3501, %v3511
      %v3513 = vrot.slane %v3474, 5
      %v3514 = vsel %vm1362, %v3503, %v3513
      %3515 = vrot.lane.b32.xlu0 %v3490, 64
      %v3516 = vpop.permute.xlu0 %3515
      %3517 = vrot.lane.b32.xlu0 %v3491, 64
      %v3518 = vpop.permute.xlu0 %3517
      %3519 = vrot.lane.b32.xlu0 %v3492, 64
      %v3520 = vpop.permute.xlu0 %3519
      %3521 = vrot.lane.b32.xlu0 %v3493, 64
      %v3522 = vpop.permute.xlu0 %3521
      %3523 = vrot.lane.b32.xlu0 %v3494, 64
      %v3524 = vpop.permute.xlu0 %3523
      %3525 = vrot.lane.b32.xlu0 %v3496, 64
      %v3526 = vpop.permute.xlu0 %3525
      %3527 = vrot.lane.b32.xlu0 %v3498, 64
      %v3528 = vpop.permute.xlu0 %3527
      %3529 = vrot.lane.b32.xlu0 %v3500, 64
      %v3530 = vpop.permute.xlu0 %3529
      %3531 = vrot.lane.b32.xlu0 %v3502, 64
      %v3532 = vpop.permute.xlu0 %3531
      %3533 = vrot.lane.b32.xlu0 %v3504, 64
      %v3534 = vpop.permute.xlu0 %3533
      %3535 = vrot.lane.b32.xlu0 %v3506, 64
      %v3536 = vpop.permute.xlu0 %3535
      %3537 = vrot.lane.b32.xlu0 %v3508, 64
      %v3538 = vpop.permute.xlu0 %3537
      %3539 = vrot.lane.b32.xlu0 %v3510, 64
      %v3540 = vpop.permute.xlu0 %3539
      %3541 = vrot.lane.b32.xlu0 %v3512, 64
      %v3542 = vpop.permute.xlu0 %3541
      %3543 = vrot.lane.b32.xlu0 %v3514, 64
      %v3544 = vpop.permute.xlu0 %3543
      %v3545 = vsel %vm1576, %v3516, %v3518
      %v3546 = vsel %vm1576, %v3518, %v3520
      %v3547 = vsel %vm1576, %v3520, %v3522
      %v3548 = vsel %vm1576, %v3522, %v3524
      %v3549 = vsel %vm1576, %v3526, %v3528
      %v3550 = vsel %vm1576, %v3528, %v3530
      %v3551 = vsel %vm1576, %v3530, %v3532
      %v3552 = vsel %vm1576, %v3532, %v3534
      %v3553 = vsel %vm1576, %v3536, %v3538
      %v3554 = vsel %vm1576, %v3538, %v3540
      %v3555 = vsel %vm1576, %v3540, %v3542
      %v3556 = vsel %vm1576, %v3542, %v3544
      %v3572 = vadd.f32 %v3409, %v3545
      %v3573 = vadd.f32 %v3410, %v3546
      %v3574 = vadd.f32 %v3411, %v3547
      %v3575 = vadd.f32 %v3412, %v3548
      %v3576 = vadd.f32 %v3413, %v3524
      %v3577 = vadd.f32 %v3414, %v3549
      %v3578 = vadd.f32 %v3415, %v3550
      %v3579 = vadd.f32 %v3416, %v3551
      %v3580 = vadd.f32 %v3417, %v3552
      %v3581 = vadd.f32 %v3418, %v3534
      %v3582 = vadd.f32 %v3419, %v3553
      %v3583 = vadd.f32 %v3420, %v3554
      %v3584 = vadd.f32 %v3421, %v3555
      %v3585 = vadd.f32 %v3422, %v3556
      %v3586 = vadd.f32 %v3423, %v3544
      %v3587 = vlaneseq
      %v3588 = vshrl.u32 %v3587, 7
      %v3589 = vsub.s32 4, %v3588
      %v3590 = vrot.slane %v2650, %v3589
      %v3591 = vlaneseq
      %v3592 = vshrl.u32 %v3591, 7
      %v3593 = vsub.s32 4, %v3592
      %v3594 = vrot.slane %v2651, %v3593
      %v3595 = vlaneseq
      %v3596 = vshrl.u32 %v3595, 7
      %v3597 = vsub.s32 4, %v3596
      %v3598 = vrot.slane %v2652, %v3597
      %v3599 = vlaneseq
      %v3600 = vshrl.u32 %v3599, 7
      %v3601 = vsub.s32 4, %v3600
      %v3602 = vrot.slane %v2653, %v3601
      %3607 = vrot.lane.b32.xlu0 %v3590, 96
      %v3608 = vpop.permute.xlu0 %3607
      %3609 = vrot.lane.b32.xlu0 %v3594, 96
      %v3610 = vpop.permute.xlu0 %3609
      %3611 = vrot.lane.b32.xlu0 %v3598, 96
      %v3612 = vpop.permute.xlu0 %3611
      %3613 = vrot.lane.b32.xlu0 %v3602, 96
      %v3614 = vpop.permute.xlu0 %3613
      %v3615 = vsel %vm1645, %v3608, %v3610
      %v3616 = vsel %vm1645, %v3610, %v3612
      %v3617 = vsel %vm1645, %v3612, %v3614
      %v3623 = vmul.f32 %v743, %v3608
      %v3624 = vmul.f32 %v744, %v3615
      %v3625 = vmul.f32 %v745, %v3616
      %v3626 = vmul.f32 %v746, %v3617
      %v3627 = vmul.f32 %v747, %v3614
      %v3628 = vmul.f32 %v748, %v3608
      %v3629 = vmul.f32 %v749, %v3615
      %v3630 = vmul.f32 %v750, %v3616
      %v3631 = vmul.f32 %v751, %v3617
      %v3632 = vmul.f32 %v752, %v3614
      %v3633 = vmul.f32 %v753, %v3608
      %v3634 = vmul.f32 %v754, %v3615
      %v3635 = vmul.f32 %v755, %v3616
      %v3636 = vmul.f32 %v756, %v3617
      %v3637 = vmul.f32 %v757, %v3614
      %v3653 = vrot.slane %v3623, 6
      %v3654 = vrot.slane %v3624, 6
      %v3655 = vrot.slane %v3625, 6
      %v3656 = vrot.slane %v3626, 6
      %v3657 = vrot.slane %v3627, 6
      %v3658 = vrot.slane %v3628, 6
      %v3659 = vsel %vm1484, %v3653, %v3658
      %v3660 = vrot.slane %v3629, 6
      %v3661 = vsel %vm1484, %v3654, %v3660
      %v3662 = vrot.slane %v3630, 6
      %v3663 = vsel %vm1484, %v3655, %v3662
      %v3664 = vrot.slane %v3631, 6
      %v3665 = vsel %vm1484, %v3656, %v3664
      %v3666 = vrot.slane %v3632, 6
      %v3667 = vsel %vm1484, %v3657, %v3666
      %v3668 = vrot.slane %v3633, 6
      %v3669 = vsel %vm1484, %v3658, %v3668
      %v3670 = vrot.slane %v3634, 6
      %v3671 = vsel %vm1484, %v3660, %v3670
      %v3672 = vrot.slane %v3635, 6
      %v3673 = vsel %vm1484, %v3662, %v3672
      %v3674 = vrot.slane %v3636, 6
      %v3675 = vsel %vm1484, %v3664, %v3674
      %v3676 = vrot.slane %v3637, 6
      %v3677 = vsel %vm1484, %v3666, %v3676
      %3678 = vrot.lane.b32.xlu0 %v3653, 64
      %v3679 = vpop.permute.xlu0 %3678
      %3680 = vrot.lane.b32.xlu0 %v3654, 64
      %v3681 = vpop.permute.xlu0 %3680
      %3682 = vrot.lane.b32.xlu0 %v3655, 64
      %v3683 = vpop.permute.xlu0 %3682
      %3684 = vrot.lane.b32.xlu0 %v3656, 64
      %v3685 = vpop.permute.xlu0 %3684
      %3686 = vrot.lane.b32.xlu0 %v3657, 64
      %v3687 = vpop.permute.xlu0 %3686
      %3688 = vrot.lane.b32.xlu0 %v3659, 64
      %v3689 = vpop.permute.xlu0 %3688
      %3690 = vrot.lane.b32.xlu0 %v3661, 64
      %v3691 = vpop.permute.xlu0 %3690
      %3692 = vrot.lane.b32.xlu0 %v3663, 64
      %v3693 = vpop.permute.xlu0 %3692
      %3694 = vrot.lane.b32.xlu0 %v3665, 64
      %v3695 = vpop.permute.xlu0 %3694
      %3696 = vrot.lane.b32.xlu0 %v3667, 64
      %v3697 = vpop.permute.xlu0 %3696
      %3698 = vrot.lane.b32.xlu0 %v3669, 64
      %v3699 = vpop.permute.xlu0 %3698
      %3700 = vrot.lane.b32.xlu0 %v3671, 64
      %v3701 = vpop.permute.xlu0 %3700
      %3702 = vrot.lane.b32.xlu0 %v3673, 64
      %v3703 = vpop.permute.xlu0 %3702
      %3704 = vrot.lane.b32.xlu0 %v3675, 64
      %v3705 = vpop.permute.xlu0 %3704
      %3706 = vrot.lane.b32.xlu0 %v3677, 64
      %v3707 = vpop.permute.xlu0 %3706
      %v3708 = vsel %vm1576, %v3679, %v3681
      %v3709 = vsel %vm1576, %v3681, %v3683
      %v3710 = vsel %vm1576, %v3683, %v3685
      %v3711 = vsel %vm1576, %v3685, %v3687
      %v3712 = vsel %vm1576, %v3689, %v3691
      %v3713 = vsel %vm1576, %v3691, %v3693
      %v3714 = vsel %vm1576, %v3693, %v3695
      %v3715 = vsel %vm1576, %v3695, %v3697
      %v3716 = vsel %vm1576, %v3699, %v3701
      %v3717 = vsel %vm1576, %v3701, %v3703
      %v3718 = vsel %vm1576, %v3703, %v3705
      %v3719 = vsel %vm1576, %v3705, %v3707
      %v3735 = vadd.f32 %v3572, %v3708
      %v3736 = vadd.f32 %v3573, %v3709
      %v3737 = vadd.f32 %v3574, %v3710
      %v3738 = vadd.f32 %v3575, %v3711
      %v3739 = vadd.f32 %v3576, %v3687
      %v3740 = vadd.f32 %v3577, %v3712
      %v3741 = vadd.f32 %v3578, %v3713
      %v3742 = vadd.f32 %v3579, %v3714
      %v3743 = vadd.f32 %v3580, %v3715
      %v3744 = vadd.f32 %v3581, %v3697
      %v3745 = vadd.f32 %v3582, %v3716
      %v3746 = vadd.f32 %v3583, %v3717
      %v3747 = vadd.f32 %v3584, %v3718
      %v3748 = vadd.f32 %v3585, %v3719
      %v3749 = vadd.f32 %v3586, %v3707
      %v3750 = vld [vmem:[%s5 + $0x40] sm:$0xe0]
      %v3751 = vld [vmem:[%s5 + $0x48] sm:$0xe0]
      %v3752 = vld [vmem:[%s5 + $0x50] sm:$0xe0]
      %v3753 = vld [vmem:[%s5 + $0x58] sm:$0xe0]
      %v3754 = vld [vmem:[%s5 + $0x60] sm:$0xf]
      %v3755 = vld [vmem:[%s5 + $0x68] sm:$0xf]
      %v3756 = vld [vmem:[%s5 + $0x70] sm:$0xf]
      %v3757 = vld [vmem:[%s5 + $0x78] sm:$0xf]
      %v3758 = vlaneseq
      %v3759 = vshrl.u32 %v3758, 7
      %v3760 = vsub.s32 5, %v3759
      %v3761 = vrot.slane %v3750, %v3760
      %v3762 = vlaneseq
      %v3763 = vshrl.u32 %v3762, 7
      %v3764 = vsub.s32 5, %v3763
      %v3765 = vrot.slane %v3751, %v3764
      %v3766 = vlaneseq
      %v3767 = vshrl.u32 %v3766, 7
      %v3768 = vsub.s32 5, %v3767
      %v3769 = vrot.slane %v3752, %v3768
      %v3770 = vlaneseq
      %v3771 = vshrl.u32 %v3770, 7
      %v3772 = vsub.s32 5, %v3771
      %v3773 = vrot.slane %v3753, %v3772
      %v3774 = vmul.f32 %v739, %v3761
      %v3775 = vmul.f32 %v740, %v3765
      %v3776 = vmul.f32 %v741, %v3769
      %v3777 = vmul.f32 %v742, %v3773
      %v3778 = vmul.f32 %v744, %v3761
      %v3779 = vmul.f32 %v745, %v3765
      %v3780 = vmul.f32 %v746, %v3769
      %v3781 = vmul.f32 %v747, %v3773
      %v3782 = vmul.f32 %v749, %v3761
      %v3783 = vmul.f32 %v750, %v3765
      %v3784 = vmul.f32 %v751, %v3769
      %v3785 = vmul.f32 %v752, %v3773
      %3798 = vrot.lane.b32.xlu0 %v3774, 32
      %v3799 = vpop.permute.xlu0 %3798
      %3800 = vrot.lane.b32.xlu0 %v3775, 32
      %v3801 = vpop.permute.xlu0 %3800
      %3802 = vrot.lane.b32.xlu0 %v3776, 32
      %v3803 = vpop.permute.xlu0 %3802
      %3804 = vrot.lane.b32.xlu0 %v3777, 32
      %v3805 = vpop.permute.xlu0 %3804
      %3806 = vrot.lane.b32.xlu0 %v3778, 32
      %v3807 = vpop.permute.xlu0 %3806
      %3808 = vrot.lane.b32.xlu0 %v3779, 32
      %v3809 = vpop.permute.xlu0 %3808
      %3810 = vrot.lane.b32.xlu0 %v3780, 32
      %v3811 = vpop.permute.xlu0 %3810
      %3812 = vrot.lane.b32.xlu0 %v3781, 32
      %v3813 = vpop.permute.xlu0 %3812
      %3814 = vrot.lane.b32.xlu0 %v3782, 32
      %v3815 = vpop.permute.xlu0 %3814
      %3816 = vrot.lane.b32.xlu0 %v3783, 32
      %v3817 = vpop.permute.xlu0 %3816
      %3818 = vrot.lane.b32.xlu0 %v3784, 32
      %v3819 = vpop.permute.xlu0 %3818
      %3820 = vrot.lane.b32.xlu0 %v3785, 32
      %v3821 = vpop.permute.xlu0 %3820
      %v3822 = vsel %vm361, %v3799, %v3801
      %v3823 = vsel %vm361, %v3801, %v3803
      %v3824 = vsel %vm361, %v3803, %v3805
      %v3825 = vsel %vm361, %v3807, %v3809
      %v3826 = vsel %vm361, %v3809, %v3811
      %v3827 = vsel %vm361, %v3811, %v3813
      %v3828 = vsel %vm361, %v3815, %v3817
      %v3829 = vsel %vm361, %v3817, %v3819
      %v3830 = vsel %vm361, %v3819, %v3821
      %v3846 = vadd.f32 %v3735, %v3799
      %v3847 = vadd.f32 %v3736, %v3822
      %v3848 = vadd.f32 %v3737, %v3823
      %v3849 = vadd.f32 %v3738, %v3824
      %v3850 = vadd.f32 %v3739, %v3805
      %v3851 = vadd.f32 %v3740, %v3807
      %v3852 = vadd.f32 %v3741, %v3825
      %v3853 = vadd.f32 %v3742, %v3826
      %v3854 = vadd.f32 %v3743, %v3827
      %v3855 = vadd.f32 %v3744, %v3813
      %v3856 = vadd.f32 %v3745, %v3815
      %v3857 = vadd.f32 %v3746, %v3828
      %v3858 = vadd.f32 %v3747, %v3829
      %v3859 = vadd.f32 %v3748, %v3830
      %v3860 = vadd.f32 %v3749, %v3821
      %v3861 = vlaneseq
      %v3862 = vshrl.u32 %v3861, 7
      %v3863 = vsub.s32 6, %v3862
      %v3864 = vrot.slane %v3750, %v3863
      %v3865 = vlaneseq
      %v3866 = vshrl.u32 %v3865, 7
      %v3867 = vsub.s32 6, %v3866
      %v3868 = vrot.slane %v3751, %v3867
      %v3869 = vlaneseq
      %v3870 = vshrl.u32 %v3869, 7
      %v3871 = vsub.s32 6, %v3870
      %v3872 = vrot.slane %v3752, %v3871
      %v3873 = vlaneseq
      %v3874 = vshrl.u32 %v3873, 7
      %v3875 = vsub.s32 6, %v3874
      %v3876 = vrot.slane %v3753, %v3875
      %v3877 = vmul.f32 %v739, %v3864
      %v3878 = vmul.f32 %v740, %v3868
      %v3879 = vmul.f32 %v741, %v3872
      %v3880 = vmul.f32 %v742, %v3876
      %v3881 = vmul.f32 %v744, %v3864
      %v3882 = vmul.f32 %v745, %v3868
      %v3883 = vmul.f32 %v746, %v3872
      %v3884 = vmul.f32 %v747, %v3876
      %v3885 = vmul.f32 %v749, %v3864
      %v3886 = vmul.f32 %v750, %v3868
      %v3887 = vmul.f32 %v751, %v3872
      %v3888 = vmul.f32 %v752, %v3876
      %v3901 = vrot.slane %v3877, 1
      %v3902 = vrot.slane %v3881, 1
      %v3903 = vsel %vm894, %v3901, %v3902
      %v3904 = vrot.slane %v3878, 1
      %v3905 = vrot.slane %v3882, 1
      %v3906 = vsel %vm894, %v3904, %v3905
      %v3907 = vrot.slane %v3879, 1
      %v3908 = vrot.slane %v3883, 1
      %v3909 = vsel %vm894, %v3907, %v3908
      %v3910 = vrot.slane %v3880, 1
      %v3911 = vrot.slane %v3884, 1
      %v3912 = vsel %vm894, %v3910, %v3911
      %v3913 = vrot.slane %v3885, 1
      %v3914 = vsel %vm894, %v3902, %v3913
      %v3915 = vrot.slane %v3886, 1
      %v3916 = vsel %vm894, %v3905, %v3915
      %v3917 = vrot.slane %v3887, 1
      %v3918 = vsel %vm894, %v3908, %v3917
      %v3919 = vrot.slane %v3888, 1
      %v3920 = vsel %vm894, %v3911, %v3919
      %3921 = vrot.lane.b32.xlu0 %v3903, 32
      %v3922 = vpop.permute.xlu0 %3921
      %3923 = vrot.lane.b32.xlu0 %v3906, 32
      %v3924 = vpop.permute.xlu0 %3923
      %3925 = vrot.lane.b32.xlu0 %v3909, 32
      %v3926 = vpop.permute.xlu0 %3925
      %3927 = vrot.lane.b32.xlu0 %v3912, 32
      %v3928 = vpop.permute.xlu0 %3927
      %3929 = vrot.lane.b32.xlu0 %v3914, 32
      %v3930 = vpop.permute.xlu0 %3929
      %3931 = vrot.lane.b32.xlu0 %v3916, 32
      %v3932 = vpop.permute.xlu0 %3931
      %3933 = vrot.lane.b32.xlu0 %v3918, 32
      %v3934 = vpop.permute.xlu0 %3933
      %3935 = vrot.lane.b32.xlu0 %v3920, 32
      %v3936 = vpop.permute.xlu0 %3935
      %3937 = vrot.lane.b32.xlu0 %v3913, 32
      %v3938 = vpop.permute.xlu0 %3937
      %3939 = vrot.lane.b32.xlu0 %v3915, 32
      %v3940 = vpop.permute.xlu0 %3939
      %3941 = vrot.lane.b32.xlu0 %v3917, 32
      %v3942 = vpop.permute.xlu0 %3941
      %3943 = vrot.lane.b32.xlu0 %v3919, 32
      %v3944 = vpop.permute.xlu0 %3943
      %v3945 = vsel %vm361, %v3922, %v3924
      %v3946 = vsel %vm361, %v3924, %v3926
      %v3947 = vsel %vm361, %v3926, %v3928
      %v3948 = vsel %vm361, %v3930, %v3932
      %v3949 = vsel %vm361, %v3932, %v3934
      %v3950 = vsel %vm361, %v3934, %v3936
      %v3951 = vsel %vm361, %v3938, %v3940
      %v3952 = vsel %vm361, %v3940, %v3942
      %v3953 = vsel %vm361, %v3942, %v3944
      %v3969 = vadd.f32 %v3846, %v3922
      %v3970 = vadd.f32 %v3847, %v3945
      %v3971 = vadd.f32 %v3848, %v3946
      %v3972 = vadd.f32 %v3849, %v3947
      %v3973 = vadd.f32 %v3850, %v3928
      %v3974 = vadd.f32 %v3851, %v3930
      %v3975 = vadd.f32 %v3852, %v3948
      %v3976 = vadd.f32 %v3853, %v3949
      %v3977 = vadd.f32 %v3854, %v3950
      %v3978 = vadd.f32 %v3855, %v3936
      %v3979 = vadd.f32 %v3856, %v3938
      %v3980 = vadd.f32 %v3857, %v3951
      %v3981 = vadd.f32 %v3858, %v3952
      %v3982 = vadd.f32 %v3859, %v3953
      %v3983 = vadd.f32 %v3860, %v3944
      %v3984 = vlaneseq
      %v3985 = vshrl.u32 %v3984, 7
      %v3986 = vsub.s32 7, %v3985
      %v3987 = vrot.slane %v3750, %v3986
      %v3988 = vlaneseq
      %v3989 = vshrl.u32 %v3988, 7
      %v3990 = vsub.s32 7, %v3989
      %v3991 = vrot.slane %v3751, %v3990
      %v3992 = vlaneseq
      %v3993 = vshrl.u32 %v3992, 7
      %v3994 = vsub.s32 7, %v3993
      %v3995 = vrot.slane %v3752, %v3994
      %v3996 = vlaneseq
      %v3997 = vshrl.u32 %v3996, 7
      %v3998 = vsub.s32 7, %v3997
      %v3999 = vrot.slane %v3753, %v3998
      %v4000 = vmul.f32 %v739, %v3987
      %v4001 = vmul.f32 %v740, %v3991
      %v4002 = vmul.f32 %v741, %v3995
      %v4003 = vmul.f32 %v742, %v3999
      %v4004 = vmul.f32 %v744, %v3987
      %v4005 = vmul.f32 %v745, %v3991
      %v4006 = vmul.f32 %v746, %v3995
      %v4007 = vmul.f32 %v747, %v3999
      %v4008 = vmul.f32 %v749, %v3987
      %v4009 = vmul.f32 %v750, %v3991
      %v4010 = vmul.f32 %v751, %v3995
      %v4011 = vmul.f32 %v752, %v3999
      %v4024 = vrot.slane %v4000, 2
      %v4025 = vrot.slane %v4004, 2
      %v4026 = vsel %vm1016, %v4024, %v4025
      %v4027 = vrot.slane %v4001, 2
      %v4028 = vrot.slane %v4005, 2
      %v4029 = vsel %vm1016, %v4027, %v4028
      %v4030 = vrot.slane %v4002, 2
      %v4031 = vrot.slane %v4006, 2
      %v4032 = vsel %vm1016, %v4030, %v4031
      %v4033 = vrot.slane %v4003, 2
      %v4034 = vrot.slane %v4007, 2
      %v4035 = vsel %vm1016, %v4033, %v4034
      %v4036 = vrot.slane %v4008, 2
      %v4037 = vsel %vm1016, %v4025, %v4036
      %v4038 = vrot.slane %v4009, 2
      %v4039 = vsel %vm1016, %v4028, %v4038
      %v4040 = vrot.slane %v4010, 2
      %v4041 = vsel %vm1016, %v4031, %v4040
      %v4042 = vrot.slane %v4011, 2
      %v4043 = vsel %vm1016, %v4034, %v4042
      %4044 = vrot.lane.b32.xlu0 %v4026, 32
      %v4045 = vpop.permute.xlu0 %4044
      %4046 = vrot.lane.b32.xlu0 %v4029, 32
      %v4047 = vpop.permute.xlu0 %4046
      %4048 = vrot.lane.b32.xlu0 %v4032, 32
      %v4049 = vpop.permute.xlu0 %4048
      %4050 = vrot.lane.b32.xlu0 %v4035, 32
      %v4051 = vpop.permute.xlu0 %4050
      %4052 = vrot.lane.b32.xlu0 %v4037, 32
      %v4053 = vpop.permute.xlu0 %4052
      %4054 = vrot.lane.b32.xlu0 %v4039, 32
      %v4055 = vpop.permute.xlu0 %4054
      %4056 = vrot.lane.b32.xlu0 %v4041, 32
      %v4057 = vpop.permute.xlu0 %4056
      %4058 = vrot.lane.b32.xlu0 %v4043, 32
      %v4059 = vpop.permute.xlu0 %4058
      %4060 = vrot.lane.b32.xlu0 %v4036, 32
      %v4061 = vpop.permute.xlu0 %4060
      %4062 = vrot.lane.b32.xlu0 %v4038, 32
      %v4063 = vpop.permute.xlu0 %4062
      %4064 = vrot.lane.b32.xlu0 %v4040, 32
      %v4065 = vpop.permute.xlu0 %4064
      %4066 = vrot.lane.b32.xlu0 %v4042, 32
      %v4067 = vpop.permute.xlu0 %4066
      %v4068 = vsel %vm361, %v4045, %v4047
      %v4069 = vsel %vm361, %v4047, %v4049
      %v4070 = vsel %vm361, %v4049, %v4051
      %v4071 = vsel %vm361, %v4053, %v4055
      %v4072 = vsel %vm361, %v4055, %v4057
      %v4073 = vsel %vm361, %v4057, %v4059
      %v4074 = vsel %vm361, %v4061, %v4063
      %v4075 = vsel %vm361, %v4063, %v4065
      %v4076 = vsel %vm361, %v4065, %v4067
      %v4092 = vadd.f32 %v3969, %v4045
      %v4093 = vadd.f32 %v3970, %v4068
      %v4094 = vadd.f32 %v3971, %v4069
      %v4095 = vadd.f32 %v3972, %v4070
      %v4096 = vadd.f32 %v3973, %v4051
      %v4097 = vadd.f32 %v3974, %v4053
      %v4098 = vadd.f32 %v3975, %v4071
      %v4099 = vadd.f32 %v3976, %v4072
      %v4100 = vadd.f32 %v3977, %v4073
      %v4101 = vadd.f32 %v3978, %v4059
      %v4102 = vadd.f32 %v3979, %v4061
      %v4103 = vadd.f32 %v3980, %v4074
      %v4104 = vadd.f32 %v3981, %v4075
      %v4105 = vadd.f32 %v3982, %v4076
      %v4106 = vadd.f32 %v3983, %v4067
      %v4107 = vlaneseq
      %v4108 = vshrl.u32 %v4107, 7
      %v4109 = vsub.s32 0, %v4108
      %v4110 = vrot.slane %v3754, %v4109
      %v4111 = vlaneseq
      %v4112 = vshrl.u32 %v4111, 7
      %v4113 = vsub.s32 0, %v4112
      %v4114 = vrot.slane %v3755, %v4113
      %v4115 = vlaneseq
      %v4116 = vshrl.u32 %v4115, 7
      %v4117 = vsub.s32 0, %v4116
      %v4118 = vrot.slane %v3756, %v4117
      %v4119 = vlaneseq
      %v4120 = vshrl.u32 %v4119, 7
      %v4121 = vsub.s32 0, %v4120
      %v4122 = vrot.slane %v3757, %v4121
      %v4123 = vmul.f32 %v744, %v4110
      %v4124 = vmul.f32 %v745, %v4114
      %v4125 = vmul.f32 %v746, %v4118
      %v4126 = vmul.f32 %v747, %v4122
      %v4127 = vmul.f32 %v749, %v4110
      %v4128 = vmul.f32 %v750, %v4114
      %v4129 = vmul.f32 %v751, %v4118
      %v4130 = vmul.f32 %v752, %v4122
      %v4139 = vrot.slane %v4123, 3
      %v4140 = vrot.slane %v4124, 3
      %v4141 = vrot.slane %v4125, 3
      %v4142 = vrot.slane %v4126, 3
      %v4143 = vrot.slane %v4127, 3
      %v4144 = vsel %vm1128, %v4139, %v4143
      %v4145 = vrot.slane %v4128, 3
      %v4146 = vsel %vm1128, %v4140, %v4145
      %v4147 = vrot.slane %v4129, 3
      %v4148 = vsel %vm1128, %v4141, %v4147
      %v4149 = vrot.slane %v4130, 3
      %v4150 = vsel %vm1128, %v4142, %v4149
      %4151 = vrot.lane.b32.xlu0 %v4139, 32
      %v4152 = vpop.permute.xlu0 %4151
      %4153 = vrot.lane.b32.xlu0 %v4140, 32
      %v4154 = vpop.permute.xlu0 %4153
      %4155 = vrot.lane.b32.xlu0 %v4141, 32
      %v4156 = vpop.permute.xlu0 %4155
      %4157 = vrot.lane.b32.xlu0 %v4142, 32
      %v4158 = vpop.permute.xlu0 %4157
      %4159 = vrot.lane.b32.xlu0 %v4144, 32
      %v4160 = vpop.permute.xlu0 %4159
      %4161 = vrot.lane.b32.xlu0 %v4146, 32
      %v4162 = vpop.permute.xlu0 %4161
      %4163 = vrot.lane.b32.xlu0 %v4148, 32
      %v4164 = vpop.permute.xlu0 %4163
      %4165 = vrot.lane.b32.xlu0 %v4150, 32
      %v4166 = vpop.permute.xlu0 %4165
      %4167 = vrot.lane.b32.xlu0 %v4143, 32
      %v4168 = vpop.permute.xlu0 %4167
      %4169 = vrot.lane.b32.xlu0 %v4145, 32
      %v4170 = vpop.permute.xlu0 %4169
      %4171 = vrot.lane.b32.xlu0 %v4147, 32
      %v4172 = vpop.permute.xlu0 %4171
      %4173 = vrot.lane.b32.xlu0 %v4149, 32
      %v4174 = vpop.permute.xlu0 %4173
      %v4175 = vsel %vm361, %v4152, %v4154
      %v4176 = vsel %vm361, %v4154, %v4156
      %v4177 = vsel %vm361, %v4156, %v4158
      %v4178 = vsel %vm361, %v4160, %v4162
      %v4179 = vsel %vm361, %v4162, %v4164
      %v4180 = vsel %vm361, %v4164, %v4166
      %v4181 = vsel %vm361, %v4168, %v4170
      %v4182 = vsel %vm361, %v4170, %v4172
      %v4183 = vsel %vm361, %v4172, %v4174
      %v4199 = vadd.f32 %v4092, %v4152
      %v4200 = vadd.f32 %v4093, %v4175
      %v4201 = vadd.f32 %v4094, %v4176
      %v4202 = vadd.f32 %v4095, %v4177
      %v4203 = vadd.f32 %v4096, %v4158
      %v4204 = vadd.f32 %v4097, %v4160
      %v4205 = vadd.f32 %v4098, %v4178
      %v4206 = vadd.f32 %v4099, %v4179
      %v4207 = vadd.f32 %v4100, %v4180
      %v4208 = vadd.f32 %v4101, %v4166
      %v4209 = vadd.f32 %v4102, %v4168
      %v4210 = vadd.f32 %v4103, %v4181
      %v4211 = vadd.f32 %v4104, %v4182
      %v4212 = vadd.f32 %v4105, %v4183
      %v4213 = vadd.f32 %v4106, %v4174
      %v4214 = vlaneseq
      %v4215 = vshrl.u32 %v4214, 7
      %v4216 = vsub.s32 1, %v4215
      %v4217 = vrot.slane %v3754, %v4216
      %v4218 = vlaneseq
      %v4219 = vshrl.u32 %v4218, 7
      %v4220 = vsub.s32 1, %v4219
      %v4221 = vrot.slane %v3755, %v4220
      %v4222 = vlaneseq
      %v4223 = vshrl.u32 %v4222, 7
      %v4224 = vsub.s32 1, %v4223
      %v4225 = vrot.slane %v3756, %v4224
      %v4226 = vlaneseq
      %v4227 = vshrl.u32 %v4226, 7
      %v4228 = vsub.s32 1, %v4227
      %v4229 = vrot.slane %v3757, %v4228
      %v4230 = vmul.f32 %v744, %v4217
      %v4231 = vmul.f32 %v745, %v4221
      %v4232 = vmul.f32 %v746, %v4225
      %v4233 = vmul.f32 %v747, %v4229
      %v4234 = vmul.f32 %v749, %v4217
      %v4235 = vmul.f32 %v750, %v4221
      %v4236 = vmul.f32 %v751, %v4225
      %v4237 = vmul.f32 %v752, %v4229
      %v4238 = vmul.f32 %v754, %v4217
      %v4239 = vmul.f32 %v755, %v4221
      %v4240 = vmul.f32 %v756, %v4225
      %v4241 = vmul.f32 %v757, %v4229
      %v4254 = vrot.slane %v4230, 4
      %v4255 = vrot.slane %v4231, 4
      %v4256 = vrot.slane %v4232, 4
      %v4257 = vrot.slane %v4233, 4
      %v4258 = vrot.slane %v4234, 4
      %v4259 = vsel %vm1240, %v4254, %v4258
      %v4260 = vrot.slane %v4235, 4
      %v4261 = vsel %vm1240, %v4255, %v4260
      %v4262 = vrot.slane %v4236, 4
      %v4263 = vsel %vm1240, %v4256, %v4262
      %v4264 = vrot.slane %v4237, 4
      %v4265 = vsel %vm1240, %v4257, %v4264
      %v4266 = vrot.slane %v4238, 4
      %v4267 = vsel %vm1240, %v4258, %v4266
      %v4268 = vrot.slane %v4239, 4
      %v4269 = vsel %vm1240, %v4260, %v4268
      %v4270 = vrot.slane %v4240, 4
      %v4271 = vsel %vm1240, %v4262, %v4270
      %v4272 = vrot.slane %v4241, 4
      %v4273 = vsel %vm1240, %v4264, %v4272
      %4274 = vrot.lane.b32.xlu0 %v4254, 32
      %v4275 = vpop.permute.xlu0 %4274
      %4276 = vrot.lane.b32.xlu0 %v4255, 32
      %v4277 = vpop.permute.xlu0 %4276
      %4278 = vrot.lane.b32.xlu0 %v4256, 32
      %v4279 = vpop.permute.xlu0 %4278
      %4280 = vrot.lane.b32.xlu0 %v4257, 32
      %v4281 = vpop.permute.xlu0 %4280
      %4282 = vrot.lane.b32.xlu0 %v4259, 32
      %v4283 = vpop.permute.xlu0 %4282
      %4284 = vrot.lane.b32.xlu0 %v4261, 32
      %v4285 = vpop.permute.xlu0 %4284
      %4286 = vrot.lane.b32.xlu0 %v4263, 32
      %v4287 = vpop.permute.xlu0 %4286
      %4288 = vrot.lane.b32.xlu0 %v4265, 32
      %v4289 = vpop.permute.xlu0 %4288
      %4290 = vrot.lane.b32.xlu0 %v4267, 32
      %v4291 = vpop.permute.xlu0 %4290
      %4292 = vrot.lane.b32.xlu0 %v4269, 32
      %v4293 = vpop.permute.xlu0 %4292
      %4294 = vrot.lane.b32.xlu0 %v4271, 32
      %v4295 = vpop.permute.xlu0 %4294
      %4296 = vrot.lane.b32.xlu0 %v4273, 32
      %v4297 = vpop.permute.xlu0 %4296
      %v4298 = vsel %vm361, %v4275, %v4277
      %v4299 = vsel %vm361, %v4277, %v4279
      %v4300 = vsel %vm361, %v4279, %v4281
      %v4301 = vsel %vm361, %v4283, %v4285
      %v4302 = vsel %vm361, %v4285, %v4287
      %v4303 = vsel %vm361, %v4287, %v4289
      %v4304 = vsel %vm361, %v4291, %v4293
      %v4305 = vsel %vm361, %v4293, %v4295
      %v4306 = vsel %vm361, %v4295, %v4297
      %v4322 = vadd.f32 %v4199, %v4275
      %v4323 = vadd.f32 %v4200, %v4298
      %v4324 = vadd.f32 %v4201, %v4299
      %v4325 = vadd.f32 %v4202, %v4300
      %v4326 = vadd.f32 %v4203, %v4281
      %v4327 = vadd.f32 %v4204, %v4283
      %v4328 = vadd.f32 %v4205, %v4301
      %v4329 = vadd.f32 %v4206, %v4302
      %v4330 = vadd.f32 %v4207, %v4303
      %v4331 = vadd.f32 %v4208, %v4289
      %v4332 = vadd.f32 %v4209, %v4291
      %v4333 = vadd.f32 %v4210, %v4304
      %v4334 = vadd.f32 %v4211, %v4305
      %v4335 = vadd.f32 %v4212, %v4306
      %v4336 = vadd.f32 %v4213, %v4297
      %v4337 = vlaneseq
      %v4338 = vshrl.u32 %v4337, 7
      %v4339 = vsub.s32 2, %v4338
      %v4340 = vrot.slane %v3754, %v4339
      %v4341 = vlaneseq
      %v4342 = vshrl.u32 %v4341, 7
      %v4343 = vsub.s32 2, %v4342
      %v4344 = vrot.slane %v3755, %v4343
      %v4345 = vlaneseq
      %v4346 = vshrl.u32 %v4345, 7
      %v4347 = vsub.s32 2, %v4346
      %v4348 = vrot.slane %v3756, %v4347
      %v4349 = vlaneseq
      %v4350 = vshrl.u32 %v4349, 7
      %v4351 = vsub.s32 2, %v4350
      %v4352 = vrot.slane %v3757, %v4351
      %v4353 = vmul.f32 %v744, %v4340
      %v4354 = vmul.f32 %v745, %v4344
      %v4355 = vmul.f32 %v746, %v4348
      %v4356 = vmul.f32 %v747, %v4352
      %v4357 = vmul.f32 %v749, %v4340
      %v4358 = vmul.f32 %v750, %v4344
      %v4359 = vmul.f32 %v751, %v4348
      %v4360 = vmul.f32 %v752, %v4352
      %v4361 = vmul.f32 %v754, %v4340
      %v4362 = vmul.f32 %v755, %v4344
      %v4363 = vmul.f32 %v756, %v4348
      %v4364 = vmul.f32 %v757, %v4352
      %v4377 = vrot.slane %v4353, 5
      %v4378 = vrot.slane %v4354, 5
      %v4379 = vrot.slane %v4355, 5
      %v4380 = vrot.slane %v4356, 5
      %v4381 = vrot.slane %v4357, 5
      %v4382 = vsel %vm1362, %v4377, %v4381
      %v4383 = vrot.slane %v4358, 5
      %v4384 = vsel %vm1362, %v4378, %v4383
      %v4385 = vrot.slane %v4359, 5
      %v4386 = vsel %vm1362, %v4379, %v4385
      %v4387 = vrot.slane %v4360, 5
      %v4388 = vsel %vm1362, %v4380, %v4387
      %v4389 = vrot.slane %v4361, 5
      %v4390 = vsel %vm1362, %v4381, %v4389
      %v4391 = vrot.slane %v4362, 5
      %v4392 = vsel %vm1362, %v4383, %v4391
      %v4393 = vrot.slane %v4363, 5
      %v4394 = vsel %vm1362, %v4385, %v4393
      %v4395 = vrot.slane %v4364, 5
      %v4396 = vsel %vm1362, %v4387, %v4395
      %4397 = vrot.lane.b32.xlu0 %v4377, 32
      %v4398 = vpop.permute.xlu0 %4397
      %4399 = vrot.lane.b32.xlu0 %v4378, 32
      %v4400 = vpop.permute.xlu0 %4399
      %4401 = vrot.lane.b32.xlu0 %v4379, 32
      %v4402 = vpop.permute.xlu0 %4401
      %4403 = vrot.lane.b32.xlu0 %v4380, 32
      %v4404 = vpop.permute.xlu0 %4403
      %4405 = vrot.lane.b32.xlu0 %v4382, 32
      %v4406 = vpop.permute.xlu0 %4405
      %4407 = vrot.lane.b32.xlu0 %v4384, 32
      %v4408 = vpop.permute.xlu0 %4407
      %4409 = vrot.lane.b32.xlu0 %v4386, 32
      %v4410 = vpop.permute.xlu0 %4409
      %4411 = vrot.lane.b32.xlu0 %v4388, 32
      %v4412 = vpop.permute.xlu0 %4411
      %4413 = vrot.lane.b32.xlu0 %v4390, 32
      %v4414 = vpop.permute.xlu0 %4413
      %4415 = vrot.lane.b32.xlu0 %v4392, 32
      %v4416 = vpop.permute.xlu0 %4415
      %4417 = vrot.lane.b32.xlu0 %v4394, 32
      %v4418 = vpop.permute.xlu0 %4417
      %4419 = vrot.lane.b32.xlu0 %v4396, 32
      %v4420 = vpop.permute.xlu0 %4419
      %v4421 = vsel %vm361, %v4398, %v4400
      %v4422 = vsel %vm361, %v4400, %v4402
      %v4423 = vsel %vm361, %v4402, %v4404
      %v4424 = vsel %vm361, %v4406, %v4408
      %v4425 = vsel %vm361, %v4408, %v4410
      %v4426 = vsel %vm361, %v4410, %v4412
      %v4427 = vsel %vm361, %v4414, %v4416
      %v4428 = vsel %vm361, %v4416, %v4418
      %v4429 = vsel %vm361, %v4418, %v4420
      %v4445 = vadd.f32 %v4322, %v4398
      %v4446 = vadd.f32 %v4323, %v4421
      %v4447 = vadd.f32 %v4324, %v4422
      %v4448 = vadd.f32 %v4325, %v4423
      %v4449 = vadd.f32 %v4326, %v4404
      %v4450 = vadd.f32 %v4327, %v4406
      %v4451 = vadd.f32 %v4328, %v4424
      %v4452 = vadd.f32 %v4329, %v4425
      %v4453 = vadd.f32 %v4330, %v4426
      %v4454 = vadd.f32 %v4331, %v4412
      %v4455 = vadd.f32 %v4332, %v4414
      %v4456 = vadd.f32 %v4333, %v4427
      %v4457 = vadd.f32 %v4334, %v4428
      %v4458 = vadd.f32 %v4335, %v4429
      %v4459 = vadd.f32 %v4336, %v4420
      %v4460 = vlaneseq
      %v4461 = vshrl.u32 %v4460, 7
      %v4462 = vsub.s32 3, %v4461
      %v4463 = vrot.slane %v3754, %v4462
      %v4464 = vlaneseq
      %v4465 = vshrl.u32 %v4464, 7
      %v4466 = vsub.s32 3, %v4465
      %v4467 = vrot.slane %v3755, %v4466
      %v4468 = vlaneseq
      %v4469 = vshrl.u32 %v4468, 7
      %v4470 = vsub.s32 3, %v4469
      %v4471 = vrot.slane %v3756, %v4470
      %v4472 = vlaneseq
      %v4473 = vshrl.u32 %v4472, 7
      %v4474 = vsub.s32 3, %v4473
      %v4475 = vrot.slane %v3757, %v4474
      %v4476 = vmul.f32 %v744, %v4463
      %v4477 = vmul.f32 %v745, %v4467
      %v4478 = vmul.f32 %v746, %v4471
      %v4479 = vmul.f32 %v747, %v4475
      %v4480 = vmul.f32 %v749, %v4463
      %v4481 = vmul.f32 %v750, %v4467
      %v4482 = vmul.f32 %v751, %v4471
      %v4483 = vmul.f32 %v752, %v4475
      %v4484 = vmul.f32 %v754, %v4463
      %v4485 = vmul.f32 %v755, %v4467
      %v4486 = vmul.f32 %v756, %v4471
      %v4487 = vmul.f32 %v757, %v4475
      %v4500 = vrot.slane %v4476, 6
      %v4501 = vrot.slane %v4477, 6
      %v4502 = vrot.slane %v4478, 6
      %v4503 = vrot.slane %v4479, 6
      %v4504 = vrot.slane %v4480, 6
      %v4505 = vsel %vm1484, %v4500, %v4504
      %v4506 = vrot.slane %v4481, 6
      %v4507 = vsel %vm1484, %v4501, %v4506
      %v4508 = vrot.slane %v4482, 6
      %v4509 = vsel %vm1484, %v4502, %v4508
      %v4510 = vrot.slane %v4483, 6
      %v4511 = vsel %vm1484, %v4503, %v4510
      %v4512 = vrot.slane %v4484, 6
      %v4513 = vsel %vm1484, %v4504, %v4512
      %v4514 = vrot.slane %v4485, 6
      %v4515 = vsel %vm1484, %v4506, %v4514
      %v4516 = vrot.slane %v4486, 6
      %v4517 = vsel %vm1484, %v4508, %v4516
      %v4518 = vrot.slane %v4487, 6
      %v4519 = vsel %vm1484, %v4510, %v4518
      %4520 = vrot.lane.b32.xlu0 %v4500, 32
      %v4521 = vpop.permute.xlu0 %4520
      %4522 = vrot.lane.b32.xlu0 %v4501, 32
      %v4523 = vpop.permute.xlu0 %4522
      %4524 = vrot.lane.b32.xlu0 %v4502, 32
      %v4525 = vpop.permute.xlu0 %4524
      %4526 = vrot.lane.b32.xlu0 %v4503, 32
      %v4527 = vpop.permute.xlu0 %4526
      %4528 = vrot.lane.b32.xlu0 %v4505, 32
      %v4529 = vpop.permute.xlu0 %4528
      %4530 = vrot.lane.b32.xlu0 %v4507, 32
      %v4531 = vpop.permute.xlu0 %4530
      %4532 = vrot.lane.b32.xlu0 %v4509, 32
      %v4533 = vpop.permute.xlu0 %4532
      %4534 = vrot.lane.b32.xlu0 %v4511, 32
      %v4535 = vpop.permute.xlu0 %4534
      %4536 = vrot.lane.b32.xlu0 %v4513, 32
      %v4537 = vpop.permute.xlu0 %4536
      %4538 = vrot.lane.b32.xlu0 %v4515, 32
      %v4539 = vpop.permute.xlu0 %4538
      %4540 = vrot.lane.b32.xlu0 %v4517, 32
      %v4541 = vpop.permute.xlu0 %4540
      %4542 = vrot.lane.b32.xlu0 %v4519, 32
      %v4543 = vpop.permute.xlu0 %4542
      %v4544 = vsel %vm361, %v4521, %v4523
      %v4545 = vsel %vm361, %v4523, %v4525
      %v4546 = vsel %vm361, %v4525, %v4527
      %v4547 = vsel %vm361, %v4529, %v4531
      %v4548 = vsel %vm361, %v4531, %v4533
      %v4549 = vsel %vm361, %v4533, %v4535
      %v4550 = vsel %vm361, %v4537, %v4539
      %v4551 = vsel %vm361, %v4539, %v4541
      %v4552 = vsel %vm361, %v4541, %v4543
      %v4568 = vadd.f32 %v4445, %v4521
      %v4569 = vadd.f32 %v4446, %v4544
      %v4570 = vadd.f32 %v4447, %v4545
      %v4571 = vadd.f32 %v4448, %v4546
      %v4572 = vadd.f32 %v4449, %v4527
      %v4573 = vadd.f32 %v4450, %v4529
      %v4574 = vadd.f32 %v4451, %v4547
      %v4575 = vadd.f32 %v4452, %v4548
      %v4576 = vadd.f32 %v4453, %v4549
      %v4577 = vadd.f32 %v4454, %v4535
      %v4578 = vadd.f32 %v4455, %v4537
      %v4579 = vadd.f32 %v4456, %v4550
      %v4580 = vadd.f32 %v4457, %v4551
      %v4581 = vadd.f32 %v4458, %v4552
      %v4582 = vadd.f32 %v4459, %v4543
      %v4583 = vld [vmem:[%s737 + $0x8] sm:$0xe0]
      %v4584 = vld [vmem:[%s737 + $0x10] sm:$0xe0]
      %v4585 = vld [vmem:[%s737 + $0x18] sm:$0xe0]
      %v4586 = vld [vmem:[%s737 + $0x20] sm:$0xe0]
      %v4587 = vld [vmem:[%s737 + $0x28] sm:$0xe0]
      %v4588 = vld [vmem:[%s737 + $0x38] sm:$0xff]
      %v4589 = vld [vmem:[%s737 + $0x40] sm:$0xff]
      %v4590 = vld [vmem:[%s737 + $0x48] sm:$0xff]
      %v4591 = vld [vmem:[%s737 + $0x50] sm:$0xff]
      %v4592 = vld [vmem:[%s737 + $0x58] sm:$0xff]
      %v4593 = vld [vmem:[%s737 + $0x68] sm:$0xff]
      %v4594 = vld [vmem:[%s737 + $0x70] sm:$0xff]
      %v4595 = vld [vmem:[%s737 + $0x78] sm:$0xff]
      %v4596 = vld [vmem:[%s737 + $0x80] sm:$0xff]
      %v4597 = vld [vmem:[%s737 + $0x88] sm:$0xff]
      %v4598 = vld [vmem:[%s737 + $0x98] sm:$0x7]
      %v4599 = vld [vmem:[%s737 + $0xa0] sm:$0x7]
      %v4600 = vld [vmem:[%s737 + $0xa8] sm:$0x7]
      %v4601 = vld [vmem:[%s737 + $0xb0] sm:$0x7]
      %v4602 = vld [vmem:[%s737 + $0xb8] sm:$0x7]
      %v4603 = vld [vmem:[%s5 + $0x60] sm:$0xf0]
      %v4604 = vld [vmem:[%s5 + $0x68] sm:$0xf0]
      %v4605 = vld [vmem:[%s5 + $0x70] sm:$0xf0]
      %v4606 = vld [vmem:[%s5 + $0x78] sm:$0xf0]
      %v4607 = vld [vmem:[%s5 + $0x80] sm:$0x7]
      %v4608 = vld [vmem:[%s5 + $0x88] sm:$0x7]
      %v4609 = vld [vmem:[%s5 + $0x90] sm:$0x7]
      %v4610 = vld [vmem:[%s5 + $0x98] sm:$0x7]
      %v4611 = vlaneseq
      %v4612 = vshrl.u32 %v4611, 7
      %v4613 = vsub.s32 4, %v4612
      %v4614 = vrot.slane %v4603, %v4613
      %v4615 = vlaneseq
      %v4616 = vshrl.u32 %v4615, 7
      %v4617 = vsub.s32 4, %v4616
      %v4618 = vrot.slane %v4604, %v4617
      %v4619 = vlaneseq
      %v4620 = vshrl.u32 %v4619, 7
      %v4621 = vsub.s32 4, %v4620
      %v4622 = vrot.slane %v4605, %v4621
      %v4623 = vlaneseq
      %v4624 = vshrl.u32 %v4623, 7
      %v4625 = vsub.s32 4, %v4624
      %v4626 = vrot.slane %v4606, %v4625
      %4631 = vrot.lane.b32.xlu0 %v4614, 32
      %v4632 = vpop.permute.xlu0 %4631
      %4633 = vrot.lane.b32.xlu0 %v4618, 32
      %v4634 = vpop.permute.xlu0 %4633
      %4635 = vrot.lane.b32.xlu0 %v4622, 32
      %v4636 = vpop.permute.xlu0 %4635
      %4637 = vrot.lane.b32.xlu0 %v4626, 32
      %v4638 = vpop.permute.xlu0 %4637
      %v4639 = vsel %vm361, %v4632, %v4634
      %v4640 = vsel %vm361, %v4634, %v4636
      %v4641 = vsel %vm361, %v4636, %v4638
      %v4647 = vmul.f32 %v4583, %v4632
      %v4648 = vmul.f32 %v4584, %v4639
      %v4649 = vmul.f32 %v4585, %v4640
      %v4650 = vmul.f32 %v4586, %v4641
      %v4651 = vmul.f32 %v4587, %v4638
      %v4652 = vmul.f32 %v4588, %v4632
      %v4653 = vmul.f32 %v4589, %v4639
      %v4654 = vmul.f32 %v4590, %v4640
      %v4655 = vmul.f32 %v4591, %v4641
      %v4656 = vmul.f32 %v4592, %v4638
      %v4657 = vmul.f32 %v4593, %v4632
      %v4658 = vmul.f32 %v4594, %v4639
      %v4659 = vmul.f32 %v4595, %v4640
      %v4660 = vmul.f32 %v4596, %v4641
      %v4661 = vmul.f32 %v4597, %v4638
      %v4662 = vadd.f32 %v4568, %v4647
      %v4663 = vadd.f32 %v4569, %v4648
      %v4664 = vadd.f32 %v4570, %v4649
      %v4665 = vadd.f32 %v4571, %v4650
      %v4666 = vadd.f32 %v4572, %v4651
      %v4667 = vadd.f32 %v4573, %v4652
      %v4668 = vadd.f32 %v4574, %v4653
      %v4669 = vadd.f32 %v4575, %v4654
      %v4670 = vadd.f32 %v4576, %v4655
      %v4671 = vadd.f32 %v4577, %v4656
      %v4672 = vadd.f32 %v4578, %v4657
      %v4673 = vadd.f32 %v4579, %v4658
      %v4674 = vadd.f32 %v4580, %v4659
      %v4675 = vadd.f32 %v4581, %v4660
      %v4676 = vadd.f32 %v4582, %v4661
      %v4677 = vlaneseq
      %v4678 = vshrl.u32 %v4677, 7
      %v4679 = vsub.s32 5, %v4678
      %v4680 = vrot.slane %v4603, %v4679
      %v4681 = vlaneseq
      %v4682 = vshrl.u32 %v4681, 7
      %v4683 = vsub.s32 5, %v4682
      %v4684 = vrot.slane %v4604, %v4683
      %v4685 = vlaneseq
      %v4686 = vshrl.u32 %v4685, 7
      %v4687 = vsub.s32 5, %v4686
      %v4688 = vrot.slane %v4605, %v4687
      %v4689 = vlaneseq
      %v4690 = vshrl.u32 %v4689, 7
      %v4691 = vsub.s32 5, %v4690
      %v4692 = vrot.slane %v4606, %v4691
      %4697 = vrot.lane.b32.xlu0 %v4680, 32
      %v4698 = vpop.permute.xlu0 %4697
      %4699 = vrot.lane.b32.xlu0 %v4684, 32
      %v4700 = vpop.permute.xlu0 %4699
      %4701 = vrot.lane.b32.xlu0 %v4688, 32
      %v4702 = vpop.permute.xlu0 %4701
      %4703 = vrot.lane.b32.xlu0 %v4692, 32
      %v4704 = vpop.permute.xlu0 %4703
      %v4705 = vsel %vm361, %v4698, %v4700
      %v4706 = vsel %vm361, %v4700, %v4702
      %v4707 = vsel %vm361, %v4702, %v4704
      %v4713 = vmul.f32 %v4583, %v4698
      %v4714 = vmul.f32 %v4584, %v4705
      %v4715 = vmul.f32 %v4585, %v4706
      %v4716 = vmul.f32 %v4586, %v4707
      %v4717 = vmul.f32 %v4587, %v4704
      %v4718 = vmul.f32 %v4588, %v4698
      %v4719 = vmul.f32 %v4589, %v4705
      %v4720 = vmul.f32 %v4590, %v4706
      %v4721 = vmul.f32 %v4591, %v4707
      %v4722 = vmul.f32 %v4592, %v4704
      %v4723 = vmul.f32 %v4593, %v4698
      %v4724 = vmul.f32 %v4594, %v4705
      %v4725 = vmul.f32 %v4595, %v4706
      %v4726 = vmul.f32 %v4596, %v4707
      %v4727 = vmul.f32 %v4597, %v4704
      %v4743 = vrot.slane %v4713, 1
      %v4744 = vrot.slane %v4718, 1
      %v4745 = vsel %vm894, %v4743, %v4744
      %v4746 = vrot.slane %v4714, 1
      %v4747 = vrot.slane %v4719, 1
      %v4748 = vsel %vm894, %v4746, %v4747
      %v4749 = vrot.slane %v4715, 1
      %v4750 = vrot.slane %v4720, 1
      %v4751 = vsel %vm894, %v4749, %v4750
      %v4752 = vrot.slane %v4716, 1
      %v4753 = vrot.slane %v4721, 1
      %v4754 = vsel %vm894, %v4752, %v4753
      %v4755 = vrot.slane %v4717, 1
      %v4756 = vrot.slane %v4722, 1
      %v4757 = vsel %vm894, %v4755, %v4756
      %v4758 = vrot.slane %v4723, 1
      %v4759 = vsel %vm894, %v4744, %v4758
      %v4760 = vrot.slane %v4724, 1
      %v4761 = vsel %vm894, %v4747, %v4760
      %v4762 = vrot.slane %v4725, 1
      %v4763 = vsel %vm894, %v4750, %v4762
      %v4764 = vrot.slane %v4726, 1
      %v4765 = vsel %vm894, %v4753, %v4764
      %v4766 = vrot.slane %v4727, 1
      %v4767 = vsel %vm894, %v4756, %v4766
      %v4783 = vadd.f32 %v4662, %v4745
      %v4784 = vadd.f32 %v4663, %v4748
      %v4785 = vadd.f32 %v4664, %v4751
      %v4786 = vadd.f32 %v4665, %v4754
      %v4787 = vadd.f32 %v4666, %v4757
      %v4788 = vadd.f32 %v4667, %v4759
      %v4789 = vadd.f32 %v4668, %v4761
      %v4790 = vadd.f32 %v4669, %v4763
      %v4791 = vadd.f32 %v4670, %v4765
      %v4792 = vadd.f32 %v4671, %v4767
      %v4793 = vadd.f32 %v4672, %v4758
      %v4794 = vadd.f32 %v4673, %v4760
      %v4795 = vadd.f32 %v4674, %v4762
      %v4796 = vadd.f32 %v4675, %v4764
      %v4797 = vadd.f32 %v4676, %v4766
      %v4798 = vlaneseq
      %v4799 = vshrl.u32 %v4798, 7
      %v4800 = vsub.s32 6, %v4799
      %v4801 = vrot.slane %v4603, %v4800
      %v4802 = vlaneseq
      %v4803 = vshrl.u32 %v4802, 7
      %v4804 = vsub.s32 6, %v4803
      %v4805 = vrot.slane %v4604, %v4804
      %v4806 = vlaneseq
      %v4807 = vshrl.u32 %v4806, 7
      %v4808 = vsub.s32 6, %v4807
      %v4809 = vrot.slane %v4605, %v4808
      %v4810 = vlaneseq
      %v4811 = vshrl.u32 %v4810, 7
      %v4812 = vsub.s32 6, %v4811
      %v4813 = vrot.slane %v4606, %v4812
      %4818 = vrot.lane.b32.xlu0 %v4801, 32
      %v4819 = vpop.permute.xlu0 %4818
      %4820 = vrot.lane.b32.xlu0 %v4805, 32
      %v4821 = vpop.permute.xlu0 %4820
      %4822 = vrot.lane.b32.xlu0 %v4809, 32
      %v4823 = vpop.permute.xlu0 %4822
      %4824 = vrot.lane.b32.xlu0 %v4813, 32
      %v4825 = vpop.permute.xlu0 %4824
      %v4826 = vsel %vm361, %v4819, %v4821
      %v4827 = vsel %vm361, %v4821, %v4823
      %v4828 = vsel %vm361, %v4823, %v4825
      %v4834 = vmul.f32 %v4583, %v4819
      %v4835 = vmul.f32 %v4584, %v4826
      %v4836 = vmul.f32 %v4585, %v4827
      %v4837 = vmul.f32 %v4586, %v4828
      %v4838 = vmul.f32 %v4587, %v4825
      %v4839 = vmul.f32 %v4588, %v4819
      %v4840 = vmul.f32 %v4589, %v4826
      %v4841 = vmul.f32 %v4590, %v4827
      %v4842 = vmul.f32 %v4591, %v4828
      %v4843 = vmul.f32 %v4592, %v4825
      %v4844 = vmul.f32 %v4593, %v4819
      %v4845 = vmul.f32 %v4594, %v4826
      %v4846 = vmul.f32 %v4595, %v4827
      %v4847 = vmul.f32 %v4596, %v4828
      %v4848 = vmul.f32 %v4597, %v4825
      %v4864 = vrot.slane %v4834, 2
      %v4865 = vrot.slane %v4839, 2
      %v4866 = vsel %vm1016, %v4864, %v4865
      %v4867 = vrot.slane %v4835, 2
      %v4868 = vrot.slane %v4840, 2
      %v4869 = vsel %vm1016, %v4867, %v4868
      %v4870 = vrot.slane %v4836, 2
      %v4871 = vrot.slane %v4841, 2
      %v4872 = vsel %vm1016, %v4870, %v4871
      %v4873 = vrot.slane %v4837, 2
      %v4874 = vrot.slane %v4842, 2
      %v4875 = vsel %vm1016, %v4873, %v4874
      %v4876 = vrot.slane %v4838, 2
      %v4877 = vrot.slane %v4843, 2
      %v4878 = vsel %vm1016, %v4876, %v4877
      %v4879 = vrot.slane %v4844, 2
      %v4880 = vsel %vm1016, %v4865, %v4879
      %v4881 = vrot.slane %v4845, 2
      %v4882 = vsel %vm1016, %v4868, %v4881
      %v4883 = vrot.slane %v4846, 2
      %v4884 = vsel %vm1016, %v4871, %v4883
      %v4885 = vrot.slane %v4847, 2
      %v4886 = vsel %vm1016, %v4874, %v4885
      %v4887 = vrot.slane %v4848, 2
      %v4888 = vsel %vm1016, %v4877, %v4887
      %v4904 = vadd.f32 %v4783, %v4866
      %v4905 = vadd.f32 %v4784, %v4869
      %v4906 = vadd.f32 %v4785, %v4872
      %v4907 = vadd.f32 %v4786, %v4875
      %v4908 = vadd.f32 %v4787, %v4878
      %v4909 = vadd.f32 %v4788, %v4880
      %v4910 = vadd.f32 %v4789, %v4882
      %v4911 = vadd.f32 %v4790, %v4884
      %v4912 = vadd.f32 %v4791, %v4886
      %v4913 = vadd.f32 %v4792, %v4888
      %v4914 = vadd.f32 %v4793, %v4879
      %v4915 = vadd.f32 %v4794, %v4881
      %v4916 = vadd.f32 %v4795, %v4883
      %v4917 = vadd.f32 %v4796, %v4885
      %v4918 = vadd.f32 %v4797, %v4887
      %v4919 = vlaneseq
      %v4920 = vshrl.u32 %v4919, 7
      %v4921 = vsub.s32 7, %v4920
      %v4922 = vrot.slane %v4603, %v4921
      %v4923 = vlaneseq
      %v4924 = vshrl.u32 %v4923, 7
      %v4925 = vsub.s32 7, %v4924
      %v4926 = vrot.slane %v4604, %v4925
      %v4927 = vlaneseq
      %v4928 = vshrl.u32 %v4927, 7
      %v4929 = vsub.s32 7, %v4928
      %v4930 = vrot.slane %v4605, %v4929
      %v4931 = vlaneseq
      %v4932 = vshrl.u32 %v4931, 7
      %v4933 = vsub.s32 7, %v4932
      %v4934 = vrot.slane %v4606, %v4933
      %4939 = vrot.lane.b32.xlu0 %v4922, 32
      %v4940 = vpop.permute.xlu0 %4939
      %4941 = vrot.lane.b32.xlu0 %v4926, 32
      %v4942 = vpop.permute.xlu0 %4941
      %4943 = vrot.lane.b32.xlu0 %v4930, 32
      %v4944 = vpop.permute.xlu0 %4943
      %4945 = vrot.lane.b32.xlu0 %v4934, 32
      %v4946 = vpop.permute.xlu0 %4945
      %v4947 = vsel %vm361, %v4940, %v4942
      %v4948 = vsel %vm361, %v4942, %v4944
      %v4949 = vsel %vm361, %v4944, %v4946
      %v4955 = vmul.f32 %v4588, %v4940
      %v4956 = vmul.f32 %v4589, %v4947
      %v4957 = vmul.f32 %v4590, %v4948
      %v4958 = vmul.f32 %v4591, %v4949
      %v4959 = vmul.f32 %v4592, %v4946
      %v4960 = vmul.f32 %v4593, %v4940
      %v4961 = vmul.f32 %v4594, %v4947
      %v4962 = vmul.f32 %v4595, %v4948
      %v4963 = vmul.f32 %v4596, %v4949
      %v4964 = vmul.f32 %v4597, %v4946
      %v4975 = vrot.slane %v4955, 3
      %v4976 = vrot.slane %v4956, 3
      %v4977 = vrot.slane %v4957, 3
      %v4978 = vrot.slane %v4958, 3
      %v4979 = vrot.slane %v4959, 3
      %v4980 = vrot.slane %v4960, 3
      %v4981 = vsel %vm1128, %v4975, %v4980
      %v4982 = vrot.slane %v4961, 3
      %v4983 = vsel %vm1128, %v4976, %v4982
      %v4984 = vrot.slane %v4962, 3
      %v4985 = vsel %vm1128, %v4977, %v4984
      %v4986 = vrot.slane %v4963, 3
      %v4987 = vsel %vm1128, %v4978, %v4986
      %v4988 = vrot.slane %v4964, 3
      %v4989 = vsel %vm1128, %v4979, %v4988
      %v5005 = vadd.f32 %v4904, %v4975
      %v5006 = vadd.f32 %v4905, %v4976
      %v5007 = vadd.f32 %v4906, %v4977
      %v5008 = vadd.f32 %v4907, %v4978
      %v5009 = vadd.f32 %v4908, %v4979
      %v5010 = vadd.f32 %v4909, %v4981
      %v5011 = vadd.f32 %v4910, %v4983
      %v5012 = vadd.f32 %v4911, %v4985
      %v5013 = vadd.f32 %v4912, %v4987
      %v5014 = vadd.f32 %v4913, %v4989
      %v5015 = vadd.f32 %v4914, %v4980
      %v5016 = vadd.f32 %v4915, %v4982
      %v5017 = vadd.f32 %v4916, %v4984
      %v5018 = vadd.f32 %v4917, %v4986
      %v5019 = vadd.f32 %v4918, %v4988
      %v5020 = vlaneseq
      %v5021 = vshrl.u32 %v5020, 7
      %v5022 = vsub.s32 0, %v5021
      %v5023 = vrot.slane %v4607, %v5022
      %v5024 = vlaneseq
      %v5025 = vshrl.u32 %v5024, 7
      %v5026 = vsub.s32 0, %v5025
      %v5027 = vrot.slane %v4608, %v5026
      %v5028 = vlaneseq
      %v5029 = vshrl.u32 %v5028, 7
      %v5030 = vsub.s32 0, %v5029
      %v5031 = vrot.slane %v4609, %v5030
      %v5032 = vlaneseq
      %v5033 = vshrl.u32 %v5032, 7
      %v5034 = vsub.s32 0, %v5033
      %v5035 = vrot.slane %v4610, %v5034
      %5040 = vrot.lane.b32.xlu0 %v5023, 32
      %v5041 = vpop.permute.xlu0 %5040
      %5042 = vrot.lane.b32.xlu0 %v5027, 32
      %v5043 = vpop.permute.xlu0 %5042
      %5044 = vrot.lane.b32.xlu0 %v5031, 32
      %v5045 = vpop.permute.xlu0 %5044
      %5046 = vrot.lane.b32.xlu0 %v5035, 32
      %v5047 = vpop.permute.xlu0 %5046
      %v5048 = vsel %vm361, %v5041, %v5043
      %v5049 = vsel %vm361, %v5043, %v5045
      %v5050 = vsel %vm361, %v5045, %v5047
      %v5056 = vmul.f32 %v4588, %v5041
      %v5057 = vmul.f32 %v4589, %v5048
      %v5058 = vmul.f32 %v4590, %v5049
      %v5059 = vmul.f32 %v4591, %v5050
      %v5060 = vmul.f32 %v4592, %v5047
      %v5061 = vmul.f32 %v4593, %v5041
      %v5062 = vmul.f32 %v4594, %v5048
      %v5063 = vmul.f32 %v4595, %v5049
      %v5064 = vmul.f32 %v4596, %v5050
      %v5065 = vmul.f32 %v4597, %v5047
      %v5066 = vmul.f32 %v4598, %v5041
      %v5067 = vmul.f32 %v4599, %v5048
      %v5068 = vmul.f32 %v4600, %v5049
      %v5069 = vmul.f32 %v4601, %v5050
      %v5070 = vmul.f32 %v4602, %v5047
      %v5086 = vrot.slane %v5056, 4
      %v5087 = vrot.slane %v5057, 4
      %v5088 = vrot.slane %v5058, 4
      %v5089 = vrot.slane %v5059, 4
      %v5090 = vrot.slane %v5060, 4
      %v5091 = vrot.slane %v5061, 4
      %v5092 = vsel %vm1240, %v5086, %v5091
      %v5093 = vrot.slane %v5062, 4
      %v5094 = vsel %vm1240, %v5087, %v5093
      %v5095 = vrot.slane %v5063, 4
      %v5096 = vsel %vm1240, %v5088, %v5095
      %v5097 = vrot.slane %v5064, 4
      %v5098 = vsel %vm1240, %v5089, %v5097
      %v5099 = vrot.slane %v5065, 4
      %v5100 = vsel %vm1240, %v5090, %v5099
      %v5101 = vrot.slane %v5066, 4
      %v5102 = vsel %vm1240, %v5091, %v5101
      %v5103 = vrot.slane %v5067, 4
      %v5104 = vsel %vm1240, %v5093, %v5103
      %v5105 = vrot.slane %v5068, 4
      %v5106 = vsel %vm1240, %v5095, %v5105
      %v5107 = vrot.slane %v5069, 4
      %v5108 = vsel %vm1240, %v5097, %v5107
      %v5109 = vrot.slane %v5070, 4
      %v5110 = vsel %vm1240, %v5099, %v5109
      %v5126 = vadd.f32 %v5005, %v5086
      %v5127 = vadd.f32 %v5006, %v5087
      %v5128 = vadd.f32 %v5007, %v5088
      %v5129 = vadd.f32 %v5008, %v5089
      %v5130 = vadd.f32 %v5009, %v5090
      %v5131 = vadd.f32 %v5010, %v5092
      %v5132 = vadd.f32 %v5011, %v5094
      %v5133 = vadd.f32 %v5012, %v5096
      %v5134 = vadd.f32 %v5013, %v5098
      %v5135 = vadd.f32 %v5014, %v5100
      %v5136 = vadd.f32 %v5015, %v5102
      %v5137 = vadd.f32 %v5016, %v5104
      %v5138 = vadd.f32 %v5017, %v5106
      %v5139 = vadd.f32 %v5018, %v5108
      %v5140 = vadd.f32 %v5019, %v5110
      %v5141 = vlaneseq
      %v5142 = vshrl.u32 %v5141, 7
      %v5143 = vsub.s32 1, %v5142
      %v5144 = vrot.slane %v4607, %v5143
      %v5145 = vlaneseq
      %v5146 = vshrl.u32 %v5145, 7
      %v5147 = vsub.s32 1, %v5146
      %v5148 = vrot.slane %v4608, %v5147
      %v5149 = vlaneseq
      %v5150 = vshrl.u32 %v5149, 7
      %v5151 = vsub.s32 1, %v5150
      %v5152 = vrot.slane %v4609, %v5151
      %v5153 = vlaneseq
      %v5154 = vshrl.u32 %v5153, 7
      %v5155 = vsub.s32 1, %v5154
      %v5156 = vrot.slane %v4610, %v5155
      %5161 = vrot.lane.b32.xlu0 %v5144, 32
      %v5162 = vpop.permute.xlu0 %5161
      %5163 = vrot.lane.b32.xlu0 %v5148, 32
      %v5164 = vpop.permute.xlu0 %5163
      %5165 = vrot.lane.b32.xlu0 %v5152, 32
      %v5166 = vpop.permute.xlu0 %5165
      %5167 = vrot.lane.b32.xlu0 %v5156, 32
      %v5168 = vpop.permute.xlu0 %5167
      %v5169 = vsel %vm361, %v5162, %v5164
      %v5170 = vsel %vm361, %v5164, %v5166
      %v5171 = vsel %vm361, %v5166, %v5168
      %v5177 = vmul.f32 %v4588, %v5162
      %v5178 = vmul.f32 %v4589, %v5169
      %v5179 = vmul.f32 %v4590, %v5170
      %v5180 = vmul.f32 %v4591, %v5171
      %v5181 = vmul.f32 %v4592, %v5168
      %v5182 = vmul.f32 %v4593, %v5162
      %v5183 = vmul.f32 %v4594, %v5169
      %v5184 = vmul.f32 %v4595, %v5170
      %v5185 = vmul.f32 %v4596, %v5171
      %v5186 = vmul.f32 %v4597, %v5168
      %v5187 = vmul.f32 %v4598, %v5162
      %v5188 = vmul.f32 %v4599, %v5169
      %v5189 = vmul.f32 %v4600, %v5170
      %v5190 = vmul.f32 %v4601, %v5171
      %v5191 = vmul.f32 %v4602, %v5168
      %v5207 = vrot.slane %v5177, 5
      %v5208 = vrot.slane %v5178, 5
      %v5209 = vrot.slane %v5179, 5
      %v5210 = vrot.slane %v5180, 5
      %v5211 = vrot.slane %v5181, 5
      %v5212 = vrot.slane %v5182, 5
      %v5213 = vsel %vm1362, %v5207, %v5212
      %v5214 = vrot.slane %v5183, 5
      %v5215 = vsel %vm1362, %v5208, %v5214
      %v5216 = vrot.slane %v5184, 5
      %v5217 = vsel %vm1362, %v5209, %v5216
      %v5218 = vrot.slane %v5185, 5
      %v5219 = vsel %vm1362, %v5210, %v5218
      %v5220 = vrot.slane %v5186, 5
      %v5221 = vsel %vm1362, %v5211, %v5220
      %v5222 = vrot.slane %v5187, 5
      %v5223 = vsel %vm1362, %v5212, %v5222
      %v5224 = vrot.slane %v5188, 5
      %v5225 = vsel %vm1362, %v5214, %v5224
      %v5226 = vrot.slane %v5189, 5
      %v5227 = vsel %vm1362, %v5216, %v5226
      %v5228 = vrot.slane %v5190, 5
      %v5229 = vsel %vm1362, %v5218, %v5228
      %v5230 = vrot.slane %v5191, 5
      %v5231 = vsel %vm1362, %v5220, %v5230
      %v5247 = vadd.f32 %v5126, %v5207
      %v5248 = vadd.f32 %v5127, %v5208
      %v5249 = vadd.f32 %v5128, %v5209
      %v5250 = vadd.f32 %v5129, %v5210
      %v5251 = vadd.f32 %v5130, %v5211
      %v5252 = vadd.f32 %v5131, %v5213
      %v5253 = vadd.f32 %v5132, %v5215
      %v5254 = vadd.f32 %v5133, %v5217
      %v5255 = vadd.f32 %v5134, %v5219
      %v5256 = vadd.f32 %v5135, %v5221
      %v5257 = vadd.f32 %v5136, %v5223
      %v5258 = vadd.f32 %v5137, %v5225
      %v5259 = vadd.f32 %v5138, %v5227
      %v5260 = vadd.f32 %v5139, %v5229
      %v5261 = vadd.f32 %v5140, %v5231
      %v5262 = vlaneseq
      %v5263 = vshrl.u32 %v5262, 7
      %v5264 = vsub.s32 2, %v5263
      %v5265 = vrot.slane %v4607, %v5264
      %v5266 = vlaneseq
      %v5267 = vshrl.u32 %v5266, 7
      %v5268 = vsub.s32 2, %v5267
      %v5269 = vrot.slane %v4608, %v5268
      %v5270 = vlaneseq
      %v5271 = vshrl.u32 %v5270, 7
      %v5272 = vsub.s32 2, %v5271
      %v5273 = vrot.slane %v4609, %v5272
      %v5274 = vlaneseq
      %v5275 = vshrl.u32 %v5274, 7
      %v5276 = vsub.s32 2, %v5275
      %v5277 = vrot.slane %v4610, %v5276
      %5282 = vrot.lane.b32.xlu0 %v5265, 32
      %v5283 = vpop.permute.xlu0 %5282
      %5284 = vrot.lane.b32.xlu0 %v5269, 32
      %v5285 = vpop.permute.xlu0 %5284
      %5286 = vrot.lane.b32.xlu0 %v5273, 32
      %v5287 = vpop.permute.xlu0 %5286
      %5288 = vrot.lane.b32.xlu0 %v5277, 32
      %v5289 = vpop.permute.xlu0 %5288
      %v5290 = vsel %vm361, %v5283, %v5285
      %v5291 = vsel %vm361, %v5285, %v5287
      %v5292 = vsel %vm361, %v5287, %v5289
      %v5298 = vmul.f32 %v4588, %v5283
      %v5299 = vmul.f32 %v4589, %v5290
      %v5300 = vmul.f32 %v4590, %v5291
      %v5301 = vmul.f32 %v4591, %v5292
      %v5302 = vmul.f32 %v4592, %v5289
      %v5303 = vmul.f32 %v4593, %v5283
      %v5304 = vmul.f32 %v4594, %v5290
      %v5305 = vmul.f32 %v4595, %v5291
      %v5306 = vmul.f32 %v4596, %v5292
      %v5307 = vmul.f32 %v4597, %v5289
      %v5308 = vmul.f32 %v4598, %v5283
      %v5309 = vmul.f32 %v4599, %v5290
      %v5310 = vmul.f32 %v4600, %v5291
      %v5311 = vmul.f32 %v4601, %v5292
      %v5312 = vmul.f32 %v4602, %v5289
      %v5328 = vrot.slane %v5298, 6
      %v5329 = vrot.slane %v5299, 6
      %v5330 = vrot.slane %v5300, 6
      %v5331 = vrot.slane %v5301, 6
      %v5332 = vrot.slane %v5302, 6
      %v5333 = vrot.slane %v5303, 6
      %v5334 = vsel %vm1484, %v5328, %v5333
      %v5335 = vrot.slane %v5304, 6
      %v5336 = vsel %vm1484, %v5329, %v5335
      %v5337 = vrot.slane %v5305, 6
      %v5338 = vsel %vm1484, %v5330, %v5337
      %v5339 = vrot.slane %v5306, 6
      %v5340 = vsel %vm1484, %v5331, %v5339
      %v5341 = vrot.slane %v5307, 6
      %v5342 = vsel %vm1484, %v5332, %v5341
      %v5343 = vrot.slane %v5308, 6
      %v5344 = vsel %vm1484, %v5333, %v5343
      %v5345 = vrot.slane %v5309, 6
      %v5346 = vsel %vm1484, %v5335, %v5345
      %v5347 = vrot.slane %v5310, 6
      %v5348 = vsel %vm1484, %v5337, %v5347
      %v5349 = vrot.slane %v5311, 6
      %v5350 = vsel %vm1484, %v5339, %v5349
      %v5351 = vrot.slane %v5312, 6
      %v5352 = vsel %vm1484, %v5341, %v5351
      %v5368 = vadd.f32 %v5247, %v5328
      %v5369 = vadd.f32 %v5248, %v5329
      %v5370 = vadd.f32 %v5249, %v5330
      %v5371 = vadd.f32 %v5250, %v5331
      %v5372 = vadd.f32 %v5251, %v5332
      %v5373 = vadd.f32 %v5252, %v5334
      %v5374 = vadd.f32 %v5253, %v5336
      %v5375 = vadd.f32 %v5254, %v5338
      %v5376 = vadd.f32 %v5255, %v5340
      %v5377 = vadd.f32 %v5256, %v5342
      %v5378 = vadd.f32 %v5257, %v5344
      %v5379 = vadd.f32 %v5258, %v5346
      %v5380 = vadd.f32 %v5259, %v5348
      %v5381 = vadd.f32 %v5260, %v5350
      %v5382 = vadd.f32 %v5261, %v5352
      %v5383 = vld [vmem:[%s5 + $0x80] sm:$0xf8]
      %v5384 = vld [vmem:[%s5 + $0x88] sm:$0xf8]
      %v5385 = vld [vmem:[%s5 + $0x90] sm:$0xf8]
      %v5386 = vld [vmem:[%s5 + $0x98] sm:$0xf8]
      %v5387 = vld [vmem:[%s5 + $0xa0] sm:$0x3]
      %v5388 = vld [vmem:[%s5 + $0xa8] sm:$0x3]
      %v5389 = vld [vmem:[%s5 + $0xb0] sm:$0x3]
      %v5390 = vld [vmem:[%s5 + $0xb8] sm:$0x3]
      %v5391 = vlaneseq
      %v5392 = vshrl.u32 %v5391, 7
      %v5393 = vsub.s32 3, %v5392
      %v5394 = vrot.slane %v5383, %v5393
      %v5395 = vlaneseq
      %v5396 = vshrl.u32 %v5395, 7
      %v5397 = vsub.s32 3, %v5396
      %v5398 = vrot.slane %v5384, %v5397
      %v5399 = vlaneseq
      %v5400 = vshrl.u32 %v5399, 7
      %v5401 = vsub.s32 3, %v5400
      %v5402 = vrot.slane %v5385, %v5401
      %v5403 = vlaneseq
      %v5404 = vshrl.u32 %v5403, 7
      %v5405 = vsub.s32 3, %v5404
      %v5406 = vrot.slane %v5386, %v5405
      %5411 = vrot.lane.b32.xlu0 %v5394, 64
      %v5412 = vpop.permute.xlu0 %5411
      %5413 = vrot.lane.b32.xlu0 %v5398, 64
      %v5414 = vpop.permute.xlu0 %5413
      %5415 = vrot.lane.b32.xlu0 %v5402, 64
      %v5416 = vpop.permute.xlu0 %5415
      %5417 = vrot.lane.b32.xlu0 %v5406, 64
      %v5418 = vpop.permute.xlu0 %5417
      %v5419 = vsel %vm1576, %v5412, %v5414
      %v5420 = vsel %vm1576, %v5414, %v5416
      %v5421 = vsel %vm1576, %v5416, %v5418
      %v5427 = vmul.f32 %v4583, %v5412
      %v5428 = vmul.f32 %v4584, %v5419
      %v5429 = vmul.f32 %v4585, %v5420
      %v5430 = vmul.f32 %v4586, %v5421
      %v5431 = vmul.f32 %v4587, %v5418
      %v5432 = vmul.f32 %v4588, %v5412
      %v5433 = vmul.f32 %v4589, %v5419
      %v5434 = vmul.f32 %v4590, %v5420
      %v5435 = vmul.f32 %v4591, %v5421
      %v5436 = vmul.f32 %v4592, %v5418
      %v5437 = vmul.f32 %v4593, %v5412
      %v5438 = vmul.f32 %v4594, %v5419
      %v5439 = vmul.f32 %v4595, %v5420
      %v5440 = vmul.f32 %v4596, %v5421
      %v5441 = vmul.f32 %v4597, %v5418
      %5457 = vrot.lane.b32.xlu0 %v5427, 96
      %v5458 = vpop.permute.xlu0 %5457
      %5459 = vrot.lane.b32.xlu0 %v5428, 96
      %v5460 = vpop.permute.xlu0 %5459
      %5461 = vrot.lane.b32.xlu0 %v5429, 96
      %v5462 = vpop.permute.xlu0 %5461
      %5463 = vrot.lane.b32.xlu0 %v5430, 96
      %v5464 = vpop.permute.xlu0 %5463
      %5465 = vrot.lane.b32.xlu0 %v5431, 96
      %v5466 = vpop.permute.xlu0 %5465
      %5467 = vrot.lane.b32.xlu0 %v5432, 96
      %v5468 = vpop.permute.xlu0 %5467
      %5469 = vrot.lane.b32.xlu0 %v5433, 96
      %v5470 = vpop.permute.xlu0 %5469
      %5471 = vrot.lane.b32.xlu0 %v5434, 96
      %v5472 = vpop.permute.xlu0 %5471
      %5473 = vrot.lane.b32.xlu0 %v5435, 96
      %v5474 = vpop.permute.xlu0 %5473
      %5475 = vrot.lane.b32.xlu0 %v5436, 96
      %v5476 = vpop.permute.xlu0 %5475
      %5477 = vrot.lane.b32.xlu0 %v5437, 96
      %v5478 = vpop.permute.xlu0 %5477
      %5479 = vrot.lane.b32.xlu0 %v5438, 96
      %v5480 = vpop.permute.xlu0 %5479
      %5481 = vrot.lane.b32.xlu0 %v5439, 96
      %v5482 = vpop.permute.xlu0 %5481
      %5483 = vrot.lane.b32.xlu0 %v5440, 96
      %v5484 = vpop.permute.xlu0 %5483
      %5485 = vrot.lane.b32.xlu0 %v5441, 96
      %v5486 = vpop.permute.xlu0 %5485
      %v5487 = vsel %vm1645, %v5458, %v5460
      %v5488 = vsel %vm1645, %v5460, %v5462
      %v5489 = vsel %vm1645, %v5462, %v5464
      %v5490 = vsel %vm1645, %v5464, %v5466
      %v5491 = vsel %vm1645, %v5468, %v5470
      %v5492 = vsel %vm1645, %v5470, %v5472
      %v5493 = vsel %vm1645, %v5472, %v5474
      %v5494 = vsel %vm1645, %v5474, %v5476
      %v5495 = vsel %vm1645, %v5478, %v5480
      %v5496 = vsel %vm1645, %v5480, %v5482
      %v5497 = vsel %vm1645, %v5482, %v5484
      %v5498 = vsel %vm1645, %v5484, %v5486
      %v5514 = vadd.f32 %v5368, %v5487
      %v5515 = vadd.f32 %v5369, %v5488
      %v5516 = vadd.f32 %v5370, %v5489
      %v5517 = vadd.f32 %v5371, %v5490
      %v5518 = vadd.f32 %v5372, %v5466
      %v5519 = vadd.f32 %v5373, %v5491
      %v5520 = vadd.f32 %v5374, %v5492
      %v5521 = vadd.f32 %v5375, %v5493
      %v5522 = vadd.f32 %v5376, %v5494
      %v5523 = vadd.f32 %v5377, %v5476
      %v5524 = vadd.f32 %v5378, %v5495
      %v5525 = vadd.f32 %v5379, %v5496
      %v5526 = vadd.f32 %v5380, %v5497
      %v5527 = vadd.f32 %v5381, %v5498
      %v5528 = vadd.f32 %v5382, %v5486
      %v5529 = vlaneseq
      %v5530 = vshrl.u32 %v5529, 7
      %v5531 = vsub.s32 4, %v5530
      %v5532 = vrot.slane %v5383, %v5531
      %v5533 = vlaneseq
      %v5534 = vshrl.u32 %v5533, 7
      %v5535 = vsub.s32 4, %v5534
      %v5536 = vrot.slane %v5384, %v5535
      %v5537 = vlaneseq
      %v5538 = vshrl.u32 %v5537, 7
      %v5539 = vsub.s32 4, %v5538
      %v5540 = vrot.slane %v5385, %v5539
      %v5541 = vlaneseq
      %v5542 = vshrl.u32 %v5541, 7
      %v5543 = vsub.s32 4, %v5542
      %v5544 = vrot.slane %v5386, %v5543
      %5549 = vrot.lane.b32.xlu0 %v5532, 64
      %v5550 = vpop.permute.xlu0 %5549
      %5551 = vrot.lane.b32.xlu0 %v5536, 64
      %v5552 = vpop.permute.xlu0 %5551
      %5553 = vrot.lane.b32.xlu0 %v5540, 64
      %v5554 = vpop.permute.xlu0 %5553
      %5555 = vrot.lane.b32.xlu0 %v5544, 64
      %v5556 = vpop.permute.xlu0 %5555
      %v5557 = vsel %vm1576, %v5550, %v5552
      %v5558 = vsel %vm1576, %v5552, %v5554
      %v5559 = vsel %vm1576, %v5554, %v5556
      %v5565 = vmul.f32 %v4583, %v5550
      %v5566 = vmul.f32 %v4584, %v5557
      %v5567 = vmul.f32 %v4585, %v5558
      %v5568 = vmul.f32 %v4586, %v5559
      %v5569 = vmul.f32 %v4587, %v5556
      %v5570 = vmul.f32 %v4588, %v5550
      %v5571 = vmul.f32 %v4589, %v5557
      %v5572 = vmul.f32 %v4590, %v5558
      %v5573 = vmul.f32 %v4591, %v5559
      %v5574 = vmul.f32 %v4592, %v5556
      %v5575 = vmul.f32 %v4593, %v5550
      %v5576 = vmul.f32 %v4594, %v5557
      %v5577 = vmul.f32 %v4595, %v5558
      %v5578 = vmul.f32 %v4596, %v5559
      %v5579 = vmul.f32 %v4597, %v5556
      %v5595 = vrot.slane %v5565, 1
      %v5596 = vrot.slane %v5570, 1
      %v5597 = vsel %vm894, %v5595, %v5596
      %v5598 = vrot.slane %v5566, 1
      %v5599 = vrot.slane %v5571, 1
      %v5600 = vsel %vm894, %v5598, %v5599
      %v5601 = vrot.slane %v5567, 1
      %v5602 = vrot.slane %v5572, 1
      %v5603 = vsel %vm894, %v5601, %v5602
      %v5604 = vrot.slane %v5568, 1
      %v5605 = vrot.slane %v5573, 1
      %v5606 = vsel %vm894, %v5604, %v5605
      %v5607 = vrot.slane %v5569, 1
      %v5608 = vrot.slane %v5574, 1
      %v5609 = vsel %vm894, %v5607, %v5608
      %v5610 = vrot.slane %v5575, 1
      %v5611 = vsel %vm894, %v5596, %v5610
      %v5612 = vrot.slane %v5576, 1
      %v5613 = vsel %vm894, %v5599, %v5612
      %v5614 = vrot.slane %v5577, 1
      %v5615 = vsel %vm894, %v5602, %v5614
      %v5616 = vrot.slane %v5578, 1
      %v5617 = vsel %vm894, %v5605, %v5616
      %v5618 = vrot.slane %v5579, 1
      %v5619 = vsel %vm894, %v5608, %v5618
      %5620 = vrot.lane.b32.xlu0 %v5597, 96
      %v5621 = vpop.permute.xlu0 %5620
      %5622 = vrot.lane.b32.xlu0 %v5600, 96
      %v5623 = vpop.permute.xlu0 %5622
      %5624 = vrot.lane.b32.xlu0 %v5603, 96
      %v5625 = vpop.permute.xlu0 %5624
      %5626 = vrot.lane.b32.xlu0 %v5606, 96
      %v5627 = vpop.permute.xlu0 %5626
      %5628 = vrot.lane.b32.xlu0 %v5609, 96
      %v5629 = vpop.permute.xlu0 %5628
      %5630 = vrot.lane.b32.xlu0 %v5611, 96
      %v5631 = vpop.permute.xlu0 %5630
      %5632 = vrot.lane.b32.xlu0 %v5613, 96
      %v5633 = vpop.permute.xlu0 %5632
      %5634 = vrot.lane.b32.xlu0 %v5615, 96
      %v5635 = vpop.permute.xlu0 %5634
      %5636 = vrot.lane.b32.xlu0 %v5617, 96
      %v5637 = vpop.permute.xlu0 %5636
      %5638 = vrot.lane.b32.xlu0 %v5619, 96
      %v5639 = vpop.permute.xlu0 %5638
      %5640 = vrot.lane.b32.xlu0 %v5610, 96
      %v5641 = vpop.permute.xlu0 %5640
      %5642 = vrot.lane.b32.xlu0 %v5612, 96
      %v5643 = vpop.permute.xlu0 %5642
      %5644 = vrot.lane.b32.xlu0 %v5614, 96
      %v5645 = vpop.permute.xlu0 %5644
      %5646 = vrot.lane.b32.xlu0 %v5616, 96
      %v5647 = vpop.permute.xlu0 %5646
      %5648 = vrot.lane.b32.xlu0 %v5618, 96
      %v5649 = vpop.permute.xlu0 %5648
      %v5650 = vsel %vm1645, %v5621, %v5623
      %v5651 = vsel %vm1645, %v5623, %v5625
      %v5652 = vsel %vm1645, %v5625, %v5627
      %v5653 = vsel %vm1645, %v5627, %v5629
      %v5654 = vsel %vm1645, %v5631, %v5633
      %v5655 = vsel %vm1645, %v5633, %v5635
      %v5656 = vsel %vm1645, %v5635, %v5637
      %v5657 = vsel %vm1645, %v5637, %v5639
      %v5658 = vsel %vm1645, %v5641, %v5643
      %v5659 = vsel %vm1645, %v5643, %v5645
      %v5660 = vsel %vm1645, %v5645, %v5647
      %v5661 = vsel %vm1645, %v5647, %v5649
      %v5677 = vadd.f32 %v5514, %v5650
      %v5678 = vadd.f32 %v5515, %v5651
      %v5679 = vadd.f32 %v5516, %v5652
      %v5680 = vadd.f32 %v5517, %v5653
      %v5681 = vadd.f32 %v5518, %v5629
      %v5682 = vadd.f32 %v5519, %v5654
      %v5683 = vadd.f32 %v5520, %v5655
      %v5684 = vadd.f32 %v5521, %v5656
      %v5685 = vadd.f32 %v5522, %v5657
      %v5686 = vadd.f32 %v5523, %v5639
      %v5687 = vadd.f32 %v5524, %v5658
      %v5688 = vadd.f32 %v5525, %v5659
      %v5689 = vadd.f32 %v5526, %v5660
      %v5690 = vadd.f32 %v5527, %v5661
      %v5691 = vadd.f32 %v5528, %v5649
      %v5692 = vlaneseq
      %v5693 = vshrl.u32 %v5692, 7
      %v5694 = vsub.s32 5, %v5693
      %v5695 = vrot.slane %v5383, %v5694
      %v5696 = vlaneseq
      %v5697 = vshrl.u32 %v5696, 7
      %v5698 = vsub.s32 5, %v5697
      %v5699 = vrot.slane %v5384, %v5698
      %v5700 = vlaneseq
      %v5701 = vshrl.u32 %v5700, 7
      %v5702 = vsub.s32 5, %v5701
      %v5703 = vrot.slane %v5385, %v5702
      %v5704 = vlaneseq
      %v5705 = vshrl.u32 %v5704, 7
      %v5706 = vsub.s32 5, %v5705
      %v5707 = vrot.slane %v5386, %v5706
      %5712 = vrot.lane.b32.xlu0 %v5695, 64
      %v5713 = vpop.permute.xlu0 %5712
      %5714 = vrot.lane.b32.xlu0 %v5699, 64
      %v5715 = vpop.permute.xlu0 %5714
      %5716 = vrot.lane.b32.xlu0 %v5703, 64
      %v5717 = vpop.permute.xlu0 %5716
      %5718 = vrot.lane.b32.xlu0 %v5707, 64
      %v5719 = vpop.permute.xlu0 %5718
      %v5720 = vsel %vm1576, %v5713, %v5715
      %v5721 = vsel %vm1576, %v5715, %v5717
      %v5722 = vsel %vm1576, %v5717, %v5719
      %v5728 = vmul.f32 %v4583, %v5713
      %v5729 = vmul.f32 %v4584, %v5720
      %v5730 = vmul.f32 %v4585, %v5721
      %v5731 = vmul.f32 %v4586, %v5722
      %v5732 = vmul.f32 %v4587, %v5719
      %v5733 = vmul.f32 %v4588, %v5713
      %v5734 = vmul.f32 %v4589, %v5720
      %v5735 = vmul.f32 %v4590, %v5721
      %v5736 = vmul.f32 %v4591, %v5722
      %v5737 = vmul.f32 %v4592, %v5719
      %v5738 = vmul.f32 %v4593, %v5713
      %v5739 = vmul.f32 %v4594, %v5720
      %v5740 = vmul.f32 %v4595, %v5721
      %v5741 = vmul.f32 %v4596, %v5722
      %v5742 = vmul.f32 %v4597, %v5719
      %v5758 = vrot.slane %v5728, 2
      %v5759 = vrot.slane %v5733, 2
      %v5760 = vsel %vm1016, %v5758, %v5759
      %v5761 = vrot.slane %v5729, 2
      %v5762 = vrot.slane %v5734, 2
      %v5763 = vsel %vm1016, %v5761, %v5762
      %v5764 = vrot.slane %v5730, 2
      %v5765 = vrot.slane %v5735, 2
      %v5766 = vsel %vm1016, %v5764, %v5765
      %v5767 = vrot.slane %v5731, 2
      %v5768 = vrot.slane %v5736, 2
      %v5769 = vsel %vm1016, %v5767, %v5768
      %v5770 = vrot.slane %v5732, 2
      %v5771 = vrot.slane %v5737, 2
      %v5772 = vsel %vm1016, %v5770, %v5771
      %v5773 = vrot.slane %v5738, 2
      %v5774 = vsel %vm1016, %v5759, %v5773
      %v5775 = vrot.slane %v5739, 2
      %v5776 = vsel %vm1016, %v5762, %v5775
      %v5777 = vrot.slane %v5740, 2
      %v5778 = vsel %vm1016, %v5765, %v5777
      %v5779 = vrot.slane %v5741, 2
      %v5780 = vsel %vm1016, %v5768, %v5779
      %v5781 = vrot.slane %v5742, 2
      %v5782 = vsel %vm1016, %v5771, %v5781
      %5783 = vrot.lane.b32.xlu0 %v5760, 96
      %v5784 = vpop.permute.xlu0 %5783
      %5785 = vrot.lane.b32.xlu0 %v5763, 96
      %v5786 = vpop.permute.xlu0 %5785
      %5787 = vrot.lane.b32.xlu0 %v5766, 96
      %v5788 = vpop.permute.xlu0 %5787
      %5789 = vrot.lane.b32.xlu0 %v5769, 96
      %v5790 = vpop.permute.xlu0 %5789
      %5791 = vrot.lane.b32.xlu0 %v5772, 96
      %v5792 = vpop.permute.xlu0 %5791
      %5793 = vrot.lane.b32.xlu0 %v5774, 96
      %v5794 = vpop.permute.xlu0 %5793
      %5795 = vrot.lane.b32.xlu0 %v5776, 96
      %v5796 = vpop.permute.xlu0 %5795
      %5797 = vrot.lane.b32.xlu0 %v5778, 96
      %v5798 = vpop.permute.xlu0 %5797
      %5799 = vrot.lane.b32.xlu0 %v5780, 96
      %v5800 = vpop.permute.xlu0 %5799
      %5801 = vrot.lane.b32.xlu0 %v5782, 96
      %v5802 = vpop.permute.xlu0 %5801
      %5803 = vrot.lane.b32.xlu0 %v5773, 96
      %v5804 = vpop.permute.xlu0 %5803
      %5805 = vrot.lane.b32.xlu0 %v5775, 96
      %v5806 = vpop.permute.xlu0 %5805
      %5807 = vrot.lane.b32.xlu0 %v5777, 96
      %v5808 = vpop.permute.xlu0 %5807
      %5809 = vrot.lane.b32.xlu0 %v5779, 96
      %v5810 = vpop.permute.xlu0 %5809
      %5811 = vrot.lane.b32.xlu0 %v5781, 96
      %v5812 = vpop.permute.xlu0 %5811
      %v5813 = vsel %vm1645, %v5784, %v5786
      %v5814 = vsel %vm1645, %v5786, %v5788
      %v5815 = vsel %vm1645, %v5788, %v5790
      %v5816 = vsel %vm1645, %v5790, %v5792
      %v5817 = vsel %vm1645, %v5794, %v5796
      %v5818 = vsel %vm1645, %v5796, %v5798
      %v5819 = vsel %vm1645, %v5798, %v5800
      %v5820 = vsel %vm1645, %v5800, %v5802
      %v5821 = vsel %vm1645, %v5804, %v5806
      %v5822 = vsel %vm1645, %v5806, %v5808
      %v5823 = vsel %vm1645, %v5808, %v5810
      %v5824 = vsel %vm1645, %v5810, %v5812
      %v5840 = vadd.f32 %v5677, %v5813
      %v5841 = vadd.f32 %v5678, %v5814
      %v5842 = vadd.f32 %v5679, %v5815
      %v5843 = vadd.f32 %v5680, %v5816
      %v5844 = vadd.f32 %v5681, %v5792
      %v5845 = vadd.f32 %v5682, %v5817
      %v5846 = vadd.f32 %v5683, %v5818
      %v5847 = vadd.f32 %v5684, %v5819
      %v5848 = vadd.f32 %v5685, %v5820
      %v5849 = vadd.f32 %v5686, %v5802
      %v5850 = vadd.f32 %v5687, %v5821
      %v5851 = vadd.f32 %v5688, %v5822
      %v5852 = vadd.f32 %v5689, %v5823
      %v5853 = vadd.f32 %v5690, %v5824
      %v5854 = vadd.f32 %v5691, %v5812
      %v5855 = vlaneseq
      %v5856 = vshrl.u32 %v5855, 7
      %v5857 = vsub.s32 6, %v5856
      %v5858 = vrot.slane %v5383, %v5857
      %v5859 = vlaneseq
      %v5860 = vshrl.u32 %v5859, 7
      %v5861 = vsub.s32 6, %v5860
      %v5862 = vrot.slane %v5384, %v5861
      %v5863 = vlaneseq
      %v5864 = vshrl.u32 %v5863, 7
      %v5865 = vsub.s32 6, %v5864
      %v5866 = vrot.slane %v5385, %v5865
      %v5867 = vlaneseq
      %v5868 = vshrl.u32 %v5867, 7
      %v5869 = vsub.s32 6, %v5868
      %v5870 = vrot.slane %v5386, %v5869
      %5875 = vrot.lane.b32.xlu0 %v5858, 64
      %v5876 = vpop.permute.xlu0 %5875
      %5877 = vrot.lane.b32.xlu0 %v5862, 64
      %v5878 = vpop.permute.xlu0 %5877
      %5879 = vrot.lane.b32.xlu0 %v5866, 64
      %v5880 = vpop.permute.xlu0 %5879
      %5881 = vrot.lane.b32.xlu0 %v5870, 64
      %v5882 = vpop.permute.xlu0 %5881
      %v5883 = vsel %vm1576, %v5876, %v5878
      %v5884 = vsel %vm1576, %v5878, %v5880
      %v5885 = vsel %vm1576, %v5880, %v5882
      %v5891 = vmul.f32 %v4588, %v5876
      %v5892 = vmul.f32 %v4589, %v5883
      %v5893 = vmul.f32 %v4590, %v5884
      %v5894 = vmul.f32 %v4591, %v5885
      %v5895 = vmul.f32 %v4592, %v5882
      %v5896 = vmul.f32 %v4593, %v5876
      %v5897 = vmul.f32 %v4594, %v5883
      %v5898 = vmul.f32 %v4595, %v5884
      %v5899 = vmul.f32 %v4596, %v5885
      %v5900 = vmul.f32 %v4597, %v5882
      %v5911 = vrot.slane %v5891, 3
      %v5912 = vrot.slane %v5892, 3
      %v5913 = vrot.slane %v5893, 3
      %v5914 = vrot.slane %v5894, 3
      %v5915 = vrot.slane %v5895, 3
      %v5916 = vrot.slane %v5896, 3
      %v5917 = vsel %vm1128, %v5911, %v5916
      %v5918 = vrot.slane %v5897, 3
      %v5919 = vsel %vm1128, %v5912, %v5918
      %v5920 = vrot.slane %v5898, 3
      %v5921 = vsel %vm1128, %v5913, %v5920
      %v5922 = vrot.slane %v5899, 3
      %v5923 = vsel %vm1128, %v5914, %v5922
      %v5924 = vrot.slane %v5900, 3
      %v5925 = vsel %vm1128, %v5915, %v5924
      %5926 = vrot.lane.b32.xlu0 %v5911, 96
      %v5927 = vpop.permute.xlu0 %5926
      %5928 = vrot.lane.b32.xlu0 %v5912, 96
      %v5929 = vpop.permute.xlu0 %5928
      %5930 = vrot.lane.b32.xlu0 %v5913, 96
      %v5931 = vpop.permute.xlu0 %5930
      %5932 = vrot.lane.b32.xlu0 %v5914, 96
      %v5933 = vpop.permute.xlu0 %5932
      %5934 = vrot.lane.b32.xlu0 %v5915, 96
      %v5935 = vpop.permute.xlu0 %5934
      %5936 = vrot.lane.b32.xlu0 %v5917, 96
      %v5937 = vpop.permute.xlu0 %5936
      %5938 = vrot.lane.b32.xlu0 %v5919, 96
      %v5939 = vpop.permute.xlu0 %5938
      %5940 = vrot.lane.b32.xlu0 %v5921, 96
      %v5941 = vpop.permute.xlu0 %5940
      %5942 = vrot.lane.b32.xlu0 %v5923, 96
      %v5943 = vpop.permute.xlu0 %5942
      %5944 = vrot.lane.b32.xlu0 %v5925, 96
      %v5945 = vpop.permute.xlu0 %5944
      %5946 = vrot.lane.b32.xlu0 %v5916, 96
      %v5947 = vpop.permute.xlu0 %5946
      %5948 = vrot.lane.b32.xlu0 %v5918, 96
      %v5949 = vpop.permute.xlu0 %5948
      %5950 = vrot.lane.b32.xlu0 %v5920, 96
      %v5951 = vpop.permute.xlu0 %5950
      %5952 = vrot.lane.b32.xlu0 %v5922, 96
      %v5953 = vpop.permute.xlu0 %5952
      %5954 = vrot.lane.b32.xlu0 %v5924, 96
      %v5955 = vpop.permute.xlu0 %5954
      %v5956 = vsel %vm1645, %v5927, %v5929
      %v5957 = vsel %vm1645, %v5929, %v5931
      %v5958 = vsel %vm1645, %v5931, %v5933
      %v5959 = vsel %vm1645, %v5933, %v5935
      %v5960 = vsel %vm1645, %v5937, %v5939
      %v5961 = vsel %vm1645, %v5939, %v5941
      %v5962 = vsel %vm1645, %v5941, %v5943
      %v5963 = vsel %vm1645, %v5943, %v5945
      %v5964 = vsel %vm1645, %v5947, %v5949
      %v5965 = vsel %vm1645, %v5949, %v5951
      %v5966 = vsel %vm1645, %v5951, %v5953
      %v5967 = vsel %vm1645, %v5953, %v5955
      %v5983 = vadd.f32 %v5840, %v5956
      %v5984 = vadd.f32 %v5841, %v5957
      %v5985 = vadd.f32 %v5842, %v5958
      %v5986 = vadd.f32 %v5843, %v5959
      %v5987 = vadd.f32 %v5844, %v5935
      %v5988 = vadd.f32 %v5845, %v5960
      %v5989 = vadd.f32 %v5846, %v5961
      %v5990 = vadd.f32 %v5847, %v5962
      %v5991 = vadd.f32 %v5848, %v5963
      %v5992 = vadd.f32 %v5849, %v5945
      %v5993 = vadd.f32 %v5850, %v5964
      %v5994 = vadd.f32 %v5851, %v5965
      %v5995 = vadd.f32 %v5852, %v5966
      %v5996 = vadd.f32 %v5853, %v5967
      %v5997 = vadd.f32 %v5854, %v5955
      %v5998 = vlaneseq
      %v5999 = vshrl.u32 %v5998, 7
      %v6000 = vsub.s32 7, %v5999
      %v6001 = vrot.slane %v5383, %v6000
      %v6002 = vlaneseq
      %v6003 = vshrl.u32 %v6002, 7
      %v6004 = vsub.s32 7, %v6003
      %v6005 = vrot.slane %v5384, %v6004
      %v6006 = vlaneseq
      %v6007 = vshrl.u32 %v6006, 7
      %v6008 = vsub.s32 7, %v6007
      %v6009 = vrot.slane %v5385, %v6008
      %v6010 = vlaneseq
      %v6011 = vshrl.u32 %v6010, 7
      %v6012 = vsub.s32 7, %v6011
      %v6013 = vrot.slane %v5386, %v6012
      %6018 = vrot.lane.b32.xlu0 %v6001, 64
      %v6019 = vpop.permute.xlu0 %6018
      %6020 = vrot.lane.b32.xlu0 %v6005, 64
      %v6021 = vpop.permute.xlu0 %6020
      %6022 = vrot.lane.b32.xlu0 %v6009, 64
      %v6023 = vpop.permute.xlu0 %6022
      %6024 = vrot.lane.b32.xlu0 %v6013, 64
      %v6025 = vpop.permute.xlu0 %6024
      %v6026 = vsel %vm1576, %v6019, %v6021
      %v6027 = vsel %vm1576, %v6021, %v6023
      %v6028 = vsel %vm1576, %v6023, %v6025
      %v6034 = vmul.f32 %v4588, %v6019
      %v6035 = vmul.f32 %v4589, %v6026
      %v6036 = vmul.f32 %v4590, %v6027
      %v6037 = vmul.f32 %v4591, %v6028
      %v6038 = vmul.f32 %v4592, %v6025
      %v6039 = vmul.f32 %v4593, %v6019
      %v6040 = vmul.f32 %v4594, %v6026
      %v6041 = vmul.f32 %v4595, %v6027
      %v6042 = vmul.f32 %v4596, %v6028
      %v6043 = vmul.f32 %v4597, %v6025
      %v6044 = vmul.f32 %v4598, %v6019
      %v6045 = vmul.f32 %v4599, %v6026
      %v6046 = vmul.f32 %v4600, %v6027
      %v6047 = vmul.f32 %v4601, %v6028
      %v6048 = vmul.f32 %v4602, %v6025
      %v6064 = vrot.slane %v6034, 4
      %v6065 = vrot.slane %v6035, 4
      %v6066 = vrot.slane %v6036, 4
      %v6067 = vrot.slane %v6037, 4
      %v6068 = vrot.slane %v6038, 4
      %v6069 = vrot.slane %v6039, 4
      %v6070 = vsel %vm1240, %v6064, %v6069
      %v6071 = vrot.slane %v6040, 4
      %v6072 = vsel %vm1240, %v6065, %v6071
      %v6073 = vrot.slane %v6041, 4
      %v6074 = vsel %vm1240, %v6066, %v6073
      %v6075 = vrot.slane %v6042, 4
      %v6076 = vsel %vm1240, %v6067, %v6075
      %v6077 = vrot.slane %v6043, 4
      %v6078 = vsel %vm1240, %v6068, %v6077
      %v6079 = vrot.slane %v6044, 4
      %v6080 = vsel %vm1240, %v6069, %v6079
      %v6081 = vrot.slane %v6045, 4
      %v6082 = vsel %vm1240, %v6071, %v6081
      %v6083 = vrot.slane %v6046, 4
      %v6084 = vsel %vm1240, %v6073, %v6083
      %v6085 = vrot.slane %v6047, 4
      %v6086 = vsel %vm1240, %v6075, %v6085
      %v6087 = vrot.slane %v6048, 4
      %v6088 = vsel %vm1240, %v6077, %v6087
      %6089 = vrot.lane.b32.xlu0 %v6064, 96
      %v6090 = vpop.permute.xlu0 %6089
      %6091 = vrot.lane.b32.xlu0 %v6065, 96
      %v6092 = vpop.permute.xlu0 %6091
      %6093 = vrot.lane.b32.xlu0 %v6066, 96
      %v6094 = vpop.permute.xlu0 %6093
      %6095 = vrot.lane.b32.xlu0 %v6067, 96
      %v6096 = vpop.permute.xlu0 %6095
      %6097 = vrot.lane.b32.xlu0 %v6068, 96
      %v6098 = vpop.permute.xlu0 %6097
      %6099 = vrot.lane.b32.xlu0 %v6070, 96
      %v6100 = vpop.permute.xlu0 %6099
      %6101 = vrot.lane.b32.xlu0 %v6072, 96
      %v6102 = vpop.permute.xlu0 %6101
      %6103 = vrot.lane.b32.xlu0 %v6074, 96
      %v6104 = vpop.permute.xlu0 %6103
      %6105 = vrot.lane.b32.xlu0 %v6076, 96
      %v6106 = vpop.permute.xlu0 %6105
      %6107 = vrot.lane.b32.xlu0 %v6078, 96
      %v6108 = vpop.permute.xlu0 %6107
      %6109 = vrot.lane.b32.xlu0 %v6080, 96
      %v6110 = vpop.permute.xlu0 %6109
      %6111 = vrot.lane.b32.xlu0 %v6082, 96
      %v6112 = vpop.permute.xlu0 %6111
      %6113 = vrot.lane.b32.xlu0 %v6084, 96
      %v6114 = vpop.permute.xlu0 %6113
      %6115 = vrot.lane.b32.xlu0 %v6086, 96
      %v6116 = vpop.permute.xlu0 %6115
      %6117 = vrot.lane.b32.xlu0 %v6088, 96
      %v6118 = vpop.permute.xlu0 %6117
      %v6119 = vsel %vm1645, %v6090, %v6092
      %v6120 = vsel %vm1645, %v6092, %v6094
      %v6121 = vsel %vm1645, %v6094, %v6096
      %v6122 = vsel %vm1645, %v6096, %v6098
      %v6123 = vsel %vm1645, %v6100, %v6102
      %v6124 = vsel %vm1645, %v6102, %v6104
      %v6125 = vsel %vm1645, %v6104, %v6106
      %v6126 = vsel %vm1645, %v6106, %v6108
      %v6127 = vsel %vm1645, %v6110, %v6112
      %v6128 = vsel %vm1645, %v6112, %v6114
      %v6129 = vsel %vm1645, %v6114, %v6116
      %v6130 = vsel %vm1645, %v6116, %v6118
      %v6146 = vadd.f32 %v5983, %v6119
      %v6147 = vadd.f32 %v5984, %v6120
      %v6148 = vadd.f32 %v5985, %v6121
      %v6149 = vadd.f32 %v5986, %v6122
      %v6150 = vadd.f32 %v5987, %v6098
      %v6151 = vadd.f32 %v5988, %v6123
      %v6152 = vadd.f32 %v5989, %v6124
      %v6153 = vadd.f32 %v5990, %v6125
      %v6154 = vadd.f32 %v5991, %v6126
      %v6155 = vadd.f32 %v5992, %v6108
      %v6156 = vadd.f32 %v5993, %v6127
      %v6157 = vadd.f32 %v5994, %v6128
      %v6158 = vadd.f32 %v5995, %v6129
      %v6159 = vadd.f32 %v5996, %v6130
      %v6160 = vadd.f32 %v5997, %v6118
      %v6161 = vlaneseq
      %v6162 = vshrl.u32 %v6161, 7
      %v6163 = vsub.s32 0, %v6162
      %v6164 = vrot.slane %v5387, %v6163
      %v6165 = vlaneseq
      %v6166 = vshrl.u32 %v6165, 7
      %v6167 = vsub.s32 0, %v6166
      %v6168 = vrot.slane %v5388, %v6167
      %v6169 = vlaneseq
      %v6170 = vshrl.u32 %v6169, 7
      %v6171 = vsub.s32 0, %v6170
      %v6172 = vrot.slane %v5389, %v6171
      %v6173 = vlaneseq
      %v6174 = vshrl.u32 %v6173, 7
      %v6175 = vsub.s32 0, %v6174
      %v6176 = vrot.slane %v5390, %v6175
      %6181 = vrot.lane.b32.xlu0 %v6164, 64
      %v6182 = vpop.permute.xlu0 %6181
      %6183 = vrot.lane.b32.xlu0 %v6168, 64
      %v6184 = vpop.permute.xlu0 %6183
      %6185 = vrot.lane.b32.xlu0 %v6172, 64
      %v6186 = vpop.permute.xlu0 %6185
      %6187 = vrot.lane.b32.xlu0 %v6176, 64
      %v6188 = vpop.permute.xlu0 %6187
      %v6189 = vsel %vm1576, %v6182, %v6184
      %v6190 = vsel %vm1576, %v6184, %v6186
      %v6191 = vsel %vm1576, %v6186, %v6188
      %v6197 = vmul.f32 %v4588, %v6182
      %v6198 = vmul.f32 %v4589, %v6189
      %v6199 = vmul.f32 %v4590, %v6190
      %v6200 = vmul.f32 %v4591, %v6191
      %v6201 = vmul.f32 %v4592, %v6188
      %v6202 = vmul.f32 %v4593, %v6182
      %v6203 = vmul.f32 %v4594, %v6189
      %v6204 = vmul.f32 %v4595, %v6190
      %v6205 = vmul.f32 %v4596, %v6191
      %v6206 = vmul.f32 %v4597, %v6188
      %v6207 = vmul.f32 %v4598, %v6182
      %v6208 = vmul.f32 %v4599, %v6189
      %v6209 = vmul.f32 %v4600, %v6190
      %v6210 = vmul.f32 %v4601, %v6191
      %v6211 = vmul.f32 %v4602, %v6188
      %v6227 = vrot.slane %v6197, 5
      %v6228 = vrot.slane %v6198, 5
      %v6229 = vrot.slane %v6199, 5
      %v6230 = vrot.slane %v6200, 5
      %v6231 = vrot.slane %v6201, 5
      %v6232 = vrot.slane %v6202, 5
      %v6233 = vsel %vm1362, %v6227, %v6232
      %v6234 = vrot.slane %v6203, 5
      %v6235 = vsel %vm1362, %v6228, %v6234
      %v6236 = vrot.slane %v6204, 5
      %v6237 = vsel %vm1362, %v6229, %v6236
      %v6238 = vrot.slane %v6205, 5
      %v6239 = vsel %vm1362, %v6230, %v6238
      %v6240 = vrot.slane %v6206, 5
      %v6241 = vsel %vm1362, %v6231, %v6240
      %v6242 = vrot.slane %v6207, 5
      %v6243 = vsel %vm1362, %v6232, %v6242
      %v6244 = vrot.slane %v6208, 5
      %v6245 = vsel %vm1362, %v6234, %v6244
      %v6246 = vrot.slane %v6209, 5
      %v6247 = vsel %vm1362, %v6236, %v6246
      %v6248 = vrot.slane %v6210, 5
      %v6249 = vsel %vm1362, %v6238, %v6248
      %v6250 = vrot.slane %v6211, 5
      %v6251 = vsel %vm1362, %v6240, %v6250
      %6252 = vrot.lane.b32.xlu0 %v6227, 96
      %v6253 = vpop.permute.xlu0 %6252
      %6254 = vrot.lane.b32.xlu0 %v6228, 96
      %v6255 = vpop.permute.xlu0 %6254
      %6256 = vrot.lane.b32.xlu0 %v6229, 96
      %v6257 = vpop.permute.xlu0 %6256
      %6258 = vrot.lane.b32.xlu0 %v6230, 96
      %v6259 = vpop.permute.xlu0 %6258
      %6260 = vrot.lane.b32.xlu0 %v6231, 96
      %v6261 = vpop.permute.xlu0 %6260
      %6262 = vrot.lane.b32.xlu0 %v6233, 96
      %v6263 = vpop.permute.xlu0 %6262
      %6264 = vrot.lane.b32.xlu0 %v6235, 96
      %v6265 = vpop.permute.xlu0 %6264
      %6266 = vrot.lane.b32.xlu0 %v6237, 96
      %v6267 = vpop.permute.xlu0 %6266
      %6268 = vrot.lane.b32.xlu0 %v6239, 96
      %v6269 = vpop.permute.xlu0 %6268
      %6270 = vrot.lane.b32.xlu0 %v6241, 96
      %v6271 = vpop.permute.xlu0 %6270
      %6272 = vrot.lane.b32.xlu0 %v6243, 96
      %v6273 = vpop.permute.xlu0 %6272
      %6274 = vrot.lane.b32.xlu0 %v6245, 96
      %v6275 = vpop.permute.xlu0 %6274
      %6276 = vrot.lane.b32.xlu0 %v6247, 96
      %v6277 = vpop.permute.xlu0 %6276
      %6278 = vrot.lane.b32.xlu0 %v6249, 96
      %v6279 = vpop.permute.xlu0 %6278
      %6280 = vrot.lane.b32.xlu0 %v6251, 96
      %v6281 = vpop.permute.xlu0 %6280
      %v6282 = vsel %vm1645, %v6253, %v6255
      %v6283 = vsel %vm1645, %v6255, %v6257
      %v6284 = vsel %vm1645, %v6257, %v6259
      %v6285 = vsel %vm1645, %v6259, %v6261
      %v6286 = vsel %vm1645, %v6263, %v6265
      %v6287 = vsel %vm1645, %v6265, %v6267
      %v6288 = vsel %vm1645, %v6267, %v6269
      %v6289 = vsel %vm1645, %v6269, %v6271
      %v6290 = vsel %vm1645, %v6273, %v6275
      %v6291 = vsel %vm1645, %v6275, %v6277
      %v6292 = vsel %vm1645, %v6277, %v6279
      %v6293 = vsel %vm1645, %v6279, %v6281
      %v6309 = vadd.f32 %v6146, %v6282
      %v6310 = vadd.f32 %v6147, %v6283
      %v6311 = vadd.f32 %v6148, %v6284
      %v6312 = vadd.f32 %v6149, %v6285
      %v6313 = vadd.f32 %v6150, %v6261
      %v6314 = vadd.f32 %v6151, %v6286
      %v6315 = vadd.f32 %v6152, %v6287
      %v6316 = vadd.f32 %v6153, %v6288
      %v6317 = vadd.f32 %v6154, %v6289
      %v6318 = vadd.f32 %v6155, %v6271
      %v6319 = vadd.f32 %v6156, %v6290
      %v6320 = vadd.f32 %v6157, %v6291
      %v6321 = vadd.f32 %v6158, %v6292
      %v6322 = vadd.f32 %v6159, %v6293
      %v6323 = vadd.f32 %v6160, %v6281
      %v6324 = vlaneseq
      %v6325 = vshrl.u32 %v6324, 7
      %v6326 = vsub.s32 1, %v6325
      %v6327 = vrot.slane %v5387, %v6326
      %v6328 = vlaneseq
      %v6329 = vshrl.u32 %v6328, 7
      %v6330 = vsub.s32 1, %v6329
      %v6331 = vrot.slane %v5388, %v6330
      %v6332 = vlaneseq
      %v6333 = vshrl.u32 %v6332, 7
      %v6334 = vsub.s32 1, %v6333
      %v6335 = vrot.slane %v5389, %v6334
      %v6336 = vlaneseq
      %v6337 = vshrl.u32 %v6336, 7
      %v6338 = vsub.s32 1, %v6337
      %v6339 = vrot.slane %v5390, %v6338
      %6344 = vrot.lane.b32.xlu0 %v6327, 64
      %v6345 = vpop.permute.xlu0 %6344
      %6346 = vrot.lane.b32.xlu0 %v6331, 64
      %v6347 = vpop.permute.xlu0 %6346
      %6348 = vrot.lane.b32.xlu0 %v6335, 64
      %v6349 = vpop.permute.xlu0 %6348
      %6350 = vrot.lane.b32.xlu0 %v6339, 64
      %v6351 = vpop.permute.xlu0 %6350
      %v6352 = vsel %vm1576, %v6345, %v6347
      %v6353 = vsel %vm1576, %v6347, %v6349
      %v6354 = vsel %vm1576, %v6349, %v6351
      %v6360 = vmul.f32 %v4588, %v6345
      %v6361 = vmul.f32 %v4589, %v6352
      %v6362 = vmul.f32 %v4590, %v6353
      %v6363 = vmul.f32 %v4591, %v6354
      %v6364 = vmul.f32 %v4592, %v6351
      %v6365 = vmul.f32 %v4593, %v6345
      %v6366 = vmul.f32 %v4594, %v6352
      %v6367 = vmul.f32 %v4595, %v6353
      %v6368 = vmul.f32 %v4596, %v6354
      %v6369 = vmul.f32 %v4597, %v6351
      %v6370 = vmul.f32 %v4598, %v6345
      %v6371 = vmul.f32 %v4599, %v6352
      %v6372 = vmul.f32 %v4600, %v6353
      %v6373 = vmul.f32 %v4601, %v6354
      %v6374 = vmul.f32 %v4602, %v6351
      %v6390 = vrot.slane %v6360, 6
      %v6391 = vrot.slane %v6361, 6
      %v6392 = vrot.slane %v6362, 6
      %v6393 = vrot.slane %v6363, 6
      %v6394 = vrot.slane %v6364, 6
      %v6395 = vrot.slane %v6365, 6
      %v6396 = vsel %vm1484, %v6390, %v6395
      %v6397 = vrot.slane %v6366, 6
      %v6398 = vsel %vm1484, %v6391, %v6397
      %v6399 = vrot.slane %v6367, 6
      %v6400 = vsel %vm1484, %v6392, %v6399
      %v6401 = vrot.slane %v6368, 6
      %v6402 = vsel %vm1484, %v6393, %v6401
      %v6403 = vrot.slane %v6369, 6
      %v6404 = vsel %vm1484, %v6394, %v6403
      %v6405 = vrot.slane %v6370, 6
      %v6406 = vsel %vm1484, %v6395, %v6405
      %v6407 = vrot.slane %v6371, 6
      %v6408 = vsel %vm1484, %v6397, %v6407
      %v6409 = vrot.slane %v6372, 6
      %v6410 = vsel %vm1484, %v6399, %v6409
      %v6411 = vrot.slane %v6373, 6
      %v6412 = vsel %vm1484, %v6401, %v6411
      %v6413 = vrot.slane %v6374, 6
      %v6414 = vsel %vm1484, %v6403, %v6413
      %6415 = vrot.lane.b32.xlu0 %v6390, 96
      %v6416 = vpop.permute.xlu0 %6415
      %6417 = vrot.lane.b32.xlu0 %v6391, 96
      %v6418 = vpop.permute.xlu0 %6417
      %6419 = vrot.lane.b32.xlu0 %v6392, 96
      %v6420 = vpop.permute.xlu0 %6419
      %6421 = vrot.lane.b32.xlu0 %v6393, 96
      %v6422 = vpop.permute.xlu0 %6421
      %6423 = vrot.lane.b32.xlu0 %v6394, 96
      %v6424 = vpop.permute.xlu0 %6423
      %6425 = vrot.lane.b32.xlu0 %v6396, 96
      %v6426 = vpop.permute.xlu0 %6425
      %6427 = vrot.lane.b32.xlu0 %v6398, 96
      %v6428 = vpop.permute.xlu0 %6427
      %6429 = vrot.lane.b32.xlu0 %v6400, 96
      %v6430 = vpop.permute.xlu0 %6429
      %6431 = vrot.lane.b32.xlu0 %v6402, 96
      %v6432 = vpop.permute.xlu0 %6431
      %6433 = vrot.lane.b32.xlu0 %v6404, 96
      %v6434 = vpop.permute.xlu0 %6433
      %6435 = vrot.lane.b32.xlu0 %v6406, 96
      %v6436 = vpop.permute.xlu0 %6435
      %6437 = vrot.lane.b32.xlu0 %v6408, 96
      %v6438 = vpop.permute.xlu0 %6437
      %6439 = vrot.lane.b32.xlu0 %v6410, 96
      %v6440 = vpop.permute.xlu0 %6439
      %6441 = vrot.lane.b32.xlu0 %v6412, 96
      %v6442 = vpop.permute.xlu0 %6441
      %6443 = vrot.lane.b32.xlu0 %v6414, 96
      %v6444 = vpop.permute.xlu0 %6443
      %v6445 = vsel %vm1645, %v6416, %v6418
      %v6446 = vsel %vm1645, %v6418, %v6420
      %v6447 = vsel %vm1645, %v6420, %v6422
      %v6448 = vsel %vm1645, %v6422, %v6424
      %v6449 = vsel %vm1645, %v6426, %v6428
      %v6450 = vsel %vm1645, %v6428, %v6430
      %v6451 = vsel %vm1645, %v6430, %v6432
      %v6452 = vsel %vm1645, %v6432, %v6434
      %v6453 = vsel %vm1645, %v6436, %v6438
      %v6454 = vsel %vm1645, %v6438, %v6440
      %v6455 = vsel %vm1645, %v6440, %v6442
      %v6456 = vsel %vm1645, %v6442, %v6444
      %v6472 = vadd.f32 %v6309, %v6445
      %v6473 = vadd.f32 %v6310, %v6446
      %v6474 = vadd.f32 %v6311, %v6447
      %v6475 = vadd.f32 %v6312, %v6448
      %v6476 = vadd.f32 %v6313, %v6424
      %v6477 = vadd.f32 %v6314, %v6449
      %v6478 = vadd.f32 %v6315, %v6450
      %v6479 = vadd.f32 %v6316, %v6451
      %v6480 = vadd.f32 %v6317, %v6452
      %v6481 = vadd.f32 %v6318, %v6434
      %v6482 = vadd.f32 %v6319, %v6453
      %v6483 = vadd.f32 %v6320, %v6454
      %v6484 = vadd.f32 %v6321, %v6455
      %v6485 = vadd.f32 %v6322, %v6456
      %v6486 = vadd.f32 %v6323, %v6444
      %v6487 = vld [vmem:[%s5 + $0xa0] sm:$0xfc]
      %v6488 = vld [vmem:[%s5 + $0xa8] sm:$0xfc]
      %v6489 = vld [vmem:[%s5 + $0xb0] sm:$0xfc]
      %v6490 = vld [vmem:[%s5 + $0xb8] sm:$0xfc]
      %v6491 = vld [vmem:[%s5 + $0xc0] sm:$0x1]
      %v6492 = vld [vmem:[%s5 + $0xc8] sm:$0x1]
      %v6493 = vld [vmem:[%s5 + $0xd0] sm:$0x1]
      %v6494 = vld [vmem:[%s5 + $0xd8] sm:$0x1]
      %v6495 = vlaneseq
      %v6496 = vshrl.u32 %v6495, 7
      %v6497 = vsub.s32 2, %v6496
      %v6498 = vrot.slane %v6487, %v6497
      %v6499 = vlaneseq
      %v6500 = vshrl.u32 %v6499, 7
      %v6501 = vsub.s32 2, %v6500
      %v6502 = vrot.slane %v6488, %v6501
      %v6503 = vlaneseq
      %v6504 = vshrl.u32 %v6503, 7
      %v6505 = vsub.s32 2, %v6504
      %v6506 = vrot.slane %v6489, %v6505
      %v6507 = vlaneseq
      %v6508 = vshrl.u32 %v6507, 7
      %v6509 = vsub.s32 2, %v6508
      %v6510 = vrot.slane %v6490, %v6509
      %6515 = vrot.lane.b32.xlu0 %v6498, 96
      %v6516 = vpop.permute.xlu0 %6515
      %6517 = vrot.lane.b32.xlu0 %v6502, 96
      %v6518 = vpop.permute.xlu0 %6517
      %6519 = vrot.lane.b32.xlu0 %v6506, 96
      %v6520 = vpop.permute.xlu0 %6519
      %6521 = vrot.lane.b32.xlu0 %v6510, 96
      %v6522 = vpop.permute.xlu0 %6521
      %v6523 = vsel %vm1645, %v6516, %v6518
      %v6524 = vsel %vm1645, %v6518, %v6520
      %v6525 = vsel %vm1645, %v6520, %v6522
      %v6531 = vmul.f32 %v4583, %v6516
      %v6532 = vmul.f32 %v4584, %v6523
      %v6533 = vmul.f32 %v4585, %v6524
      %v6534 = vmul.f32 %v4586, %v6525
      %v6535 = vmul.f32 %v4587, %v6522
      %v6536 = vmul.f32 %v4588, %v6516
      %v6537 = vmul.f32 %v4589, %v6523
      %v6538 = vmul.f32 %v4590, %v6524
      %v6539 = vmul.f32 %v4591, %v6525
      %v6540 = vmul.f32 %v4592, %v6522
      %v6541 = vmul.f32 %v4593, %v6516
      %v6542 = vmul.f32 %v4594, %v6523
      %v6543 = vmul.f32 %v4595, %v6524
      %v6544 = vmul.f32 %v4596, %v6525
      %v6545 = vmul.f32 %v4597, %v6522
      %6561 = vrot.lane.b32.xlu0 %v6531, 64
      %v6562 = vpop.permute.xlu0 %6561
      %6563 = vrot.lane.b32.xlu0 %v6532, 64
      %v6564 = vpop.permute.xlu0 %6563
      %6565 = vrot.lane.b32.xlu0 %v6533, 64
      %v6566 = vpop.permute.xlu0 %6565
      %6567 = vrot.lane.b32.xlu0 %v6534, 64
      %v6568 = vpop.permute.xlu0 %6567
      %6569 = vrot.lane.b32.xlu0 %v6535, 64
      %v6570 = vpop.permute.xlu0 %6569
      %6571 = vrot.lane.b32.xlu0 %v6536, 64
      %v6572 = vpop.permute.xlu0 %6571
      %6573 = vrot.lane.b32.xlu0 %v6537, 64
      %v6574 = vpop.permute.xlu0 %6573
      %6575 = vrot.lane.b32.xlu0 %v6538, 64
      %v6576 = vpop.permute.xlu0 %6575
      %6577 = vrot.lane.b32.xlu0 %v6539, 64
      %v6578 = vpop.permute.xlu0 %6577
      %6579 = vrot.lane.b32.xlu0 %v6540, 64
      %v6580 = vpop.permute.xlu0 %6579
      %6581 = vrot.lane.b32.xlu0 %v6541, 64
      %v6582 = vpop.permute.xlu0 %6581
      %6583 = vrot.lane.b32.xlu0 %v6542, 64
      %v6584 = vpop.permute.xlu0 %6583
      %6585 = vrot.lane.b32.xlu0 %v6543, 64
      %v6586 = vpop.permute.xlu0 %6585
      %6587 = vrot.lane.b32.xlu0 %v6544, 64
      %v6588 = vpop.permute.xlu0 %6587
      %6589 = vrot.lane.b32.xlu0 %v6545, 64
      %v6590 = vpop.permute.xlu0 %6589
      %v6591 = vsel %vm1576, %v6562, %v6564
      %v6592 = vsel %vm1576, %v6564, %v6566
      %v6593 = vsel %vm1576, %v6566, %v6568
      %v6594 = vsel %vm1576, %v6568, %v6570
      %v6595 = vsel %vm1576, %v6572, %v6574
      %v6596 = vsel %vm1576, %v6574, %v6576
      %v6597 = vsel %vm1576, %v6576, %v6578
      %v6598 = vsel %vm1576, %v6578, %v6580
      %v6599 = vsel %vm1576, %v6582, %v6584
      %v6600 = vsel %vm1576, %v6584, %v6586
      %v6601 = vsel %vm1576, %v6586, %v6588
      %v6602 = vsel %vm1576, %v6588, %v6590
      %v6618 = vadd.f32 %v6472, %v6591
      %v6619 = vadd.f32 %v6473, %v6592
      %v6620 = vadd.f32 %v6474, %v6593
      %v6621 = vadd.f32 %v6475, %v6594
      %v6622 = vadd.f32 %v6476, %v6570
      %v6623 = vadd.f32 %v6477, %v6595
      %v6624 = vadd.f32 %v6478, %v6596
      %v6625 = vadd.f32 %v6479, %v6597
      %v6626 = vadd.f32 %v6480, %v6598
      %v6627 = vadd.f32 %v6481, %v6580
      %v6628 = vadd.f32 %v6482, %v6599
      %v6629 = vadd.f32 %v6483, %v6600
      %v6630 = vadd.f32 %v6484, %v6601
      %v6631 = vadd.f32 %v6485, %v6602
      %v6632 = vadd.f32 %v6486, %v6590
      %v6633 = vlaneseq
      %v6634 = vshrl.u32 %v6633, 7
      %v6635 = vsub.s32 3, %v6634
      %v6636 = vrot.slane %v6487, %v6635
      %v6637 = vlaneseq
      %v6638 = vshrl.u32 %v6637, 7
      %v6639 = vsub.s32 3, %v6638
      %v6640 = vrot.slane %v6488, %v6639
      %v6641 = vlaneseq
      %v6642 = vshrl.u32 %v6641, 7
      %v6643 = vsub.s32 3, %v6642
      %v6644 = vrot.slane %v6489, %v6643
      %v6645 = vlaneseq
      %v6646 = vshrl.u32 %v6645, 7
      %v6647 = vsub.s32 3, %v6646
      %v6648 = vrot.slane %v6490, %v6647
      %6653 = vrot.lane.b32.xlu0 %v6636, 96
      %v6654 = vpop.permute.xlu0 %6653
      %6655 = vrot.lane.b32.xlu0 %v6640, 96
      %v6656 = vpop.permute.xlu0 %6655
      %6657 = vrot.lane.b32.xlu0 %v6644, 96
      %v6658 = vpop.permute.xlu0 %6657
      %6659 = vrot.lane.b32.xlu0 %v6648, 96
      %v6660 = vpop.permute.xlu0 %6659
      %v6661 = vsel %vm1645, %v6654, %v6656
      %v6662 = vsel %vm1645, %v6656, %v6658
      %v6663 = vsel %vm1645, %v6658, %v6660
      %v6669 = vmul.f32 %v4583, %v6654
      %v6670 = vmul.f32 %v4584, %v6661
      %v6671 = vmul.f32 %v4585, %v6662
      %v6672 = vmul.f32 %v4586, %v6663
      %v6673 = vmul.f32 %v4587, %v6660
      %v6674 = vmul.f32 %v4588, %v6654
      %v6675 = vmul.f32 %v4589, %v6661
      %v6676 = vmul.f32 %v4590, %v6662
      %v6677 = vmul.f32 %v4591, %v6663
      %v6678 = vmul.f32 %v4592, %v6660
      %v6679 = vmul.f32 %v4593, %v6654
      %v6680 = vmul.f32 %v4594, %v6661
      %v6681 = vmul.f32 %v4595, %v6662
      %v6682 = vmul.f32 %v4596, %v6663
      %v6683 = vmul.f32 %v4597, %v6660
      %v6699 = vrot.slane %v6669, 1
      %v6700 = vrot.slane %v6674, 1
      %v6701 = vsel %vm894, %v6699, %v6700
      %v6702 = vrot.slane %v6670, 1
      %v6703 = vrot.slane %v6675, 1
      %v6704 = vsel %vm894, %v6702, %v6703
      %v6705 = vrot.slane %v6671, 1
      %v6706 = vrot.slane %v6676, 1
      %v6707 = vsel %vm894, %v6705, %v6706
      %v6708 = vrot.slane %v6672, 1
      %v6709 = vrot.slane %v6677, 1
      %v6710 = vsel %vm894, %v6708, %v6709
      %v6711 = vrot.slane %v6673, 1
      %v6712 = vrot.slane %v6678, 1
      %v6713 = vsel %vm894, %v6711, %v6712
      %v6714 = vrot.slane %v6679, 1
      %v6715 = vsel %vm894, %v6700, %v6714
      %v6716 = vrot.slane %v6680, 1
      %v6717 = vsel %vm894, %v6703, %v6716
      %v6718 = vrot.slane %v6681, 1
      %v6719 = vsel %vm894, %v6706, %v6718
      %v6720 = vrot.slane %v6682, 1
      %v6721 = vsel %vm894, %v6709, %v6720
      %v6722 = vrot.slane %v6683, 1
      %v6723 = vsel %vm894, %v6712, %v6722
      %6724 = vrot.lane.b32.xlu0 %v6701, 64
      %v6725 = vpop.permute.xlu0 %6724
      %6726 = vrot.lane.b32.xlu0 %v6704, 64
      %v6727 = vpop.permute.xlu0 %6726
      %6728 = vrot.lane.b32.xlu0 %v6707, 64
      %v6729 = vpop.permute.xlu0 %6728
      %6730 = vrot.lane.b32.xlu0 %v6710, 64
      %v6731 = vpop.permute.xlu0 %6730
      %6732 = vrot.lane.b32.xlu0 %v6713, 64
      %v6733 = vpop.permute.xlu0 %6732
      %6734 = vrot.lane.b32.xlu0 %v6715, 64
      %v6735 = vpop.permute.xlu0 %6734
      %6736 = vrot.lane.b32.xlu0 %v6717, 64
      %v6737 = vpop.permute.xlu0 %6736
      %6738 = vrot.lane.b32.xlu0 %v6719, 64
      %v6739 = vpop.permute.xlu0 %6738
      %6740 = vrot.lane.b32.xlu0 %v6721, 64
      %v6741 = vpop.permute.xlu0 %6740
      %6742 = vrot.lane.b32.xlu0 %v6723, 64
      %v6743 = vpop.permute.xlu0 %6742
      %6744 = vrot.lane.b32.xlu0 %v6714, 64
      %v6745 = vpop.permute.xlu0 %6744
      %6746 = vrot.lane.b32.xlu0 %v6716, 64
      %v6747 = vpop.permute.xlu0 %6746
      %6748 = vrot.lane.b32.xlu0 %v6718, 64
      %v6749 = vpop.permute.xlu0 %6748
      %6750 = vrot.lane.b32.xlu0 %v6720, 64
      %v6751 = vpop.permute.xlu0 %6750
      %6752 = vrot.lane.b32.xlu0 %v6722, 64
      %v6753 = vpop.permute.xlu0 %6752
      %v6754 = vsel %vm1576, %v6725, %v6727
      %v6755 = vsel %vm1576, %v6727, %v6729
      %v6756 = vsel %vm1576, %v6729, %v6731
      %v6757 = vsel %vm1576, %v6731, %v6733
      %v6758 = vsel %vm1576, %v6735, %v6737
      %v6759 = vsel %vm1576, %v6737, %v6739
      %v6760 = vsel %vm1576, %v6739, %v6741
      %v6761 = vsel %vm1576, %v6741, %v6743
      %v6762 = vsel %vm1576, %v6745, %v6747
      %v6763 = vsel %vm1576, %v6747, %v6749
      %v6764 = vsel %vm1576, %v6749, %v6751
      %v6765 = vsel %vm1576, %v6751, %v6753
      %v6781 = vadd.f32 %v6618, %v6754
      %v6782 = vadd.f32 %v6619, %v6755
      %v6783 = vadd.f32 %v6620, %v6756
      %v6784 = vadd.f32 %v6621, %v6757
      %v6785 = vadd.f32 %v6622, %v6733
      %v6786 = vadd.f32 %v6623, %v6758
      %v6787 = vadd.f32 %v6624, %v6759
      %v6788 = vadd.f32 %v6625, %v6760
      %v6789 = vadd.f32 %v6626, %v6761
      %v6790 = vadd.f32 %v6627, %v6743
      %v6791 = vadd.f32 %v6628, %v6762
      %v6792 = vadd.f32 %v6629, %v6763
      %v6793 = vadd.f32 %v6630, %v6764
      %v6794 = vadd.f32 %v6631, %v6765
      %v6795 = vadd.f32 %v6632, %v6753
      %v6796 = vlaneseq
      %v6797 = vshrl.u32 %v6796, 7
      %v6798 = vsub.s32 4, %v6797
      %v6799 = vrot.slane %v6487, %v6798
      %v6800 = vlaneseq
      %v6801 = vshrl.u32 %v6800, 7
      %v6802 = vsub.s32 4, %v6801
      %v6803 = vrot.slane %v6488, %v6802
      %v6804 = vlaneseq
      %v6805 = vshrl.u32 %v6804, 7
      %v6806 = vsub.s32 4, %v6805
      %v6807 = vrot.slane %v6489, %v6806
      %v6808 = vlaneseq
      %v6809 = vshrl.u32 %v6808, 7
      %v6810 = vsub.s32 4, %v6809
      %v6811 = vrot.slane %v6490, %v6810
      %6816 = vrot.lane.b32.xlu0 %v6799, 96
      %v6817 = vpop.permute.xlu0 %6816
      %6818 = vrot.lane.b32.xlu0 %v6803, 96
      %v6819 = vpop.permute.xlu0 %6818
      %6820 = vrot.lane.b32.xlu0 %v6807, 96
      %v6821 = vpop.permute.xlu0 %6820
      %6822 = vrot.lane.b32.xlu0 %v6811, 96
      %v6823 = vpop.permute.xlu0 %6822
      %v6824 = vsel %vm1645, %v6817, %v6819
      %v6825 = vsel %vm1645, %v6819, %v6821
      %v6826 = vsel %vm1645, %v6821, %v6823
      %v6832 = vmul.f32 %v4583, %v6817
      %v6833 = vmul.f32 %v4584, %v6824
      %v6834 = vmul.f32 %v4585, %v6825
      %v6835 = vmul.f32 %v4586, %v6826
      %v6836 = vmul.f32 %v4587, %v6823
      %v6837 = vmul.f32 %v4588, %v6817
      %v6838 = vmul.f32 %v4589, %v6824
      %v6839 = vmul.f32 %v4590, %v6825
      %v6840 = vmul.f32 %v4591, %v6826
      %v6841 = vmul.f32 %v4592, %v6823
      %v6842 = vmul.f32 %v4593, %v6817
      %v6843 = vmul.f32 %v4594, %v6824
      %v6844 = vmul.f32 %v4595, %v6825
      %v6845 = vmul.f32 %v4596, %v6826
      %v6846 = vmul.f32 %v4597, %v6823
      %v6862 = vrot.slane %v6832, 2
      %v6863 = vrot.slane %v6837, 2
      %v6864 = vsel %vm1016, %v6862, %v6863
      %v6865 = vrot.slane %v6833, 2
      %v6866 = vrot.slane %v6838, 2
      %v6867 = vsel %vm1016, %v6865, %v6866
      %v6868 = vrot.slane %v6834, 2
      %v6869 = vrot.slane %v6839, 2
      %v6870 = vsel %vm1016, %v6868, %v6869
      %v6871 = vrot.slane %v6835, 2
      %v6872 = vrot.slane %v6840, 2
      %v6873 = vsel %vm1016, %v6871, %v6872
      %v6874 = vrot.slane %v6836, 2
      %v6875 = vrot.slane %v6841, 2
      %v6876 = vsel %vm1016, %v6874, %v6875
      %v6877 = vrot.slane %v6842, 2
      %v6878 = vsel %vm1016, %v6863, %v6877
      %v6879 = vrot.slane %v6843, 2
      %v6880 = vsel %vm1016, %v6866, %v6879
      %v6881 = vrot.slane %v6844, 2
      %v6882 = vsel %vm1016, %v6869, %v6881
      %v6883 = vrot.slane %v6845, 2
      %v6884 = vsel %vm1016, %v6872, %v6883
      %v6885 = vrot.slane %v6846, 2
      %v6886 = vsel %vm1016, %v6875, %v6885
      %6887 = vrot.lane.b32.xlu0 %v6864, 64
      %v6888 = vpop.permute.xlu0 %6887
      %6889 = vrot.lane.b32.xlu0 %v6867, 64
      %v6890 = vpop.permute.xlu0 %6889
      %6891 = vrot.lane.b32.xlu0 %v6870, 64
      %v6892 = vpop.permute.xlu0 %6891
      %6893 = vrot.lane.b32.xlu0 %v6873, 64
      %v6894 = vpop.permute.xlu0 %6893
      %6895 = vrot.lane.b32.xlu0 %v6876, 64
      %v6896 = vpop.permute.xlu0 %6895
      %6897 = vrot.lane.b32.xlu0 %v6878, 64
      %v6898 = vpop.permute.xlu0 %6897
      %6899 = vrot.lane.b32.xlu0 %v6880, 64
      %v6900 = vpop.permute.xlu0 %6899
      %6901 = vrot.lane.b32.xlu0 %v6882, 64
      %v6902 = vpop.permute.xlu0 %6901
      %6903 = vrot.lane.b32.xlu0 %v6884, 64
      %v6904 = vpop.permute.xlu0 %6903
      %6905 = vrot.lane.b32.xlu0 %v6886, 64
      %v6906 = vpop.permute.xlu0 %6905
      %6907 = vrot.lane.b32.xlu0 %v6877, 64
      %v6908 = vpop.permute.xlu0 %6907
      %6909 = vrot.lane.b32.xlu0 %v6879, 64
      %v6910 = vpop.permute.xlu0 %6909
      %6911 = vrot.lane.b32.xlu0 %v6881, 64
      %v6912 = vpop.permute.xlu0 %6911
      %6913 = vrot.lane.b32.xlu0 %v6883, 64
      %v6914 = vpop.permute.xlu0 %6913
      %6915 = vrot.lane.b32.xlu0 %v6885, 64
      %v6916 = vpop.permute.xlu0 %6915
      %v6917 = vsel %vm1576, %v6888, %v6890
      %v6918 = vsel %vm1576, %v6890, %v6892
      %v6919 = vsel %vm1576, %v6892, %v6894
      %v6920 = vsel %vm1576, %v6894, %v6896
      %v6921 = vsel %vm1576, %v6898, %v6900
      %v6922 = vsel %vm1576, %v6900, %v6902
      %v6923 = vsel %vm1576, %v6902, %v6904
      %v6924 = vsel %vm1576, %v6904, %v6906
      %v6925 = vsel %vm1576, %v6908, %v6910
      %v6926 = vsel %vm1576, %v6910, %v6912
      %v6927 = vsel %vm1576, %v6912, %v6914
      %v6928 = vsel %vm1576, %v6914, %v6916
      %v6944 = vadd.f32 %v6781, %v6917
      %v6945 = vadd.f32 %v6782, %v6918
      %v6946 = vadd.f32 %v6783, %v6919
      %v6947 = vadd.f32 %v6784, %v6920
      %v6948 = vadd.f32 %v6785, %v6896
      %v6949 = vadd.f32 %v6786, %v6921
      %v6950 = vadd.f32 %v6787, %v6922
      %v6951 = vadd.f32 %v6788, %v6923
      %v6952 = vadd.f32 %v6789, %v6924
      %v6953 = vadd.f32 %v6790, %v6906
      %v6954 = vadd.f32 %v6791, %v6925
      %v6955 = vadd.f32 %v6792, %v6926
      %v6956 = vadd.f32 %v6793, %v6927
      %v6957 = vadd.f32 %v6794, %v6928
      %v6958 = vadd.f32 %v6795, %v6916
      %v6959 = vlaneseq
      %v6960 = vshrl.u32 %v6959, 7
      %v6961 = vsub.s32 5, %v6960
      %v6962 = vrot.slane %v6487, %v6961
      %v6963 = vlaneseq
      %v6964 = vshrl.u32 %v6963, 7
      %v6965 = vsub.s32 5, %v6964
      %v6966 = vrot.slane %v6488, %v6965
      %v6967 = vlaneseq
      %v6968 = vshrl.u32 %v6967, 7
      %v6969 = vsub.s32 5, %v6968
      %v6970 = vrot.slane %v6489, %v6969
      %v6971 = vlaneseq
      %v6972 = vshrl.u32 %v6971, 7
      %v6973 = vsub.s32 5, %v6972
      %v6974 = vrot.slane %v6490, %v6973
      %6979 = vrot.lane.b32.xlu0 %v6962, 96
      %v6980 = vpop.permute.xlu0 %6979
      %6981 = vrot.lane.b32.xlu0 %v6966, 96
      %v6982 = vpop.permute.xlu0 %6981
      %6983 = vrot.lane.b32.xlu0 %v6970, 96
      %v6984 = vpop.permute.xlu0 %6983
      %6985 = vrot.lane.b32.xlu0 %v6974, 96
      %v6986 = vpop.permute.xlu0 %6985
      %v6987 = vsel %vm1645, %v6980, %v6982
      %v6988 = vsel %vm1645, %v6982, %v6984
      %v6989 = vsel %vm1645, %v6984, %v6986
      %v6995 = vmul.f32 %v4588, %v6980
      %v6996 = vmul.f32 %v4589, %v6987
      %v6997 = vmul.f32 %v4590, %v6988
      %v6998 = vmul.f32 %v4591, %v6989
      %v6999 = vmul.f32 %v4592, %v6986
      %v7000 = vmul.f32 %v4593, %v6980
      %v7001 = vmul.f32 %v4594, %v6987
      %v7002 = vmul.f32 %v4595, %v6988
      %v7003 = vmul.f32 %v4596, %v6989
      %v7004 = vmul.f32 %v4597, %v6986
      %v7015 = vrot.slane %v6995, 3
      %v7016 = vrot.slane %v6996, 3
      %v7017 = vrot.slane %v6997, 3
      %v7018 = vrot.slane %v6998, 3
      %v7019 = vrot.slane %v6999, 3
      %v7020 = vrot.slane %v7000, 3
      %v7021 = vsel %vm1128, %v7015, %v7020
      %v7022 = vrot.slane %v7001, 3
      %v7023 = vsel %vm1128, %v7016, %v7022
      %v7024 = vrot.slane %v7002, 3
      %v7025 = vsel %vm1128, %v7017, %v7024
      %v7026 = vrot.slane %v7003, 3
      %v7027 = vsel %vm1128, %v7018, %v7026
      %v7028 = vrot.slane %v7004, 3
      %v7029 = vsel %vm1128, %v7019, %v7028
      %7030 = vrot.lane.b32.xlu0 %v7015, 64
      %v7031 = vpop.permute.xlu0 %7030
      %7032 = vrot.lane.b32.xlu0 %v7016, 64
      %v7033 = vpop.permute.xlu0 %7032
      %7034 = vrot.lane.b32.xlu0 %v7017, 64
      %v7035 = vpop.permute.xlu0 %7034
      %7036 = vrot.lane.b32.xlu0 %v7018, 64
      %v7037 = vpop.permute.xlu0 %7036
      %7038 = vrot.lane.b32.xlu0 %v7019, 64
      %v7039 = vpop.permute.xlu0 %7038
      %7040 = vrot.lane.b32.xlu0 %v7021, 64
      %v7041 = vpop.permute.xlu0 %7040
      %7042 = vrot.lane.b32.xlu0 %v7023, 64
      %v7043 = vpop.permute.xlu0 %7042
      %7044 = vrot.lane.b32.xlu0 %v7025, 64
      %v7045 = vpop.permute.xlu0 %7044
      %7046 = vrot.lane.b32.xlu0 %v7027, 64
      %v7047 = vpop.permute.xlu0 %7046
      %7048 = vrot.lane.b32.xlu0 %v7029, 64
      %v7049 = vpop.permute.xlu0 %7048
      %7050 = vrot.lane.b32.xlu0 %v7020, 64
      %v7051 = vpop.permute.xlu0 %7050
      %7052 = vrot.lane.b32.xlu0 %v7022, 64
      %v7053 = vpop.permute.xlu0 %7052
      %7054 = vrot.lane.b32.xlu0 %v7024, 64
      %v7055 = vpop.permute.xlu0 %7054
      %7056 = vrot.lane.b32.xlu0 %v7026, 64
      %v7057 = vpop.permute.xlu0 %7056
      %7058 = vrot.lane.b32.xlu0 %v7028, 64
      %v7059 = vpop.permute.xlu0 %7058
      %v7060 = vsel %vm1576, %v7031, %v7033
      %v7061 = vsel %vm1576, %v7033, %v7035
      %v7062 = vsel %vm1576, %v7035, %v7037
      %v7063 = vsel %vm1576, %v7037, %v7039
      %v7064 = vsel %vm1576, %v7041, %v7043
      %v7065 = vsel %vm1576, %v7043, %v7045
      %v7066 = vsel %vm1576, %v7045, %v7047
      %v7067 = vsel %vm1576, %v7047, %v7049
      %v7068 = vsel %vm1576, %v7051, %v7053
      %v7069 = vsel %vm1576, %v7053, %v7055
      %v7070 = vsel %vm1576, %v7055, %v7057
      %v7071 = vsel %vm1576, %v7057, %v7059
      %v7087 = vadd.f32 %v6944, %v7060
      %v7088 = vadd.f32 %v6945, %v7061
      %v7089 = vadd.f32 %v6946, %v7062
      %v7090 = vadd.f32 %v6947, %v7063
      %v7091 = vadd.f32 %v6948, %v7039
      %v7092 = vadd.f32 %v6949, %v7064
      %v7093 = vadd.f32 %v6950, %v7065
      %v7094 = vadd.f32 %v6951, %v7066
      %v7095 = vadd.f32 %v6952, %v7067
      %v7096 = vadd.f32 %v6953, %v7049
      %v7097 = vadd.f32 %v6954, %v7068
      %v7098 = vadd.f32 %v6955, %v7069
      %v7099 = vadd.f32 %v6956, %v7070
      %v7100 = vadd.f32 %v6957, %v7071
      %v7101 = vadd.f32 %v6958, %v7059
      %v7102 = vlaneseq
      %v7103 = vshrl.u32 %v7102, 7
      %v7104 = vsub.s32 6, %v7103
      %v7105 = vrot.slane %v6487, %v7104
      %v7106 = vlaneseq
      %v7107 = vshrl.u32 %v7106, 7
      %v7108 = vsub.s32 6, %v7107
      %v7109 = vrot.slane %v6488, %v7108
      %v7110 = vlaneseq
      %v7111 = vshrl.u32 %v7110, 7
      %v7112 = vsub.s32 6, %v7111
      %v7113 = vrot.slane %v6489, %v7112
      %v7114 = vlaneseq
      %v7115 = vshrl.u32 %v7114, 7
      %v7116 = vsub.s32 6, %v7115
      %v7117 = vrot.slane %v6490, %v7116
      %7122 = vrot.lane.b32.xlu0 %v7105, 96
      %v7123 = vpop.permute.xlu0 %7122
      %7124 = vrot.lane.b32.xlu0 %v7109, 96
      %v7125 = vpop.permute.xlu0 %7124
      %7126 = vrot.lane.b32.xlu0 %v7113, 96
      %v7127 = vpop.permute.xlu0 %7126
      %7128 = vrot.lane.b32.xlu0 %v7117, 96
      %v7129 = vpop.permute.xlu0 %7128
      %v7130 = vsel %vm1645, %v7123, %v7125
      %v7131 = vsel %vm1645, %v7125, %v7127
      %v7132 = vsel %vm1645, %v7127, %v7129
      %v7138 = vmul.f32 %v4588, %v7123
      %v7139 = vmul.f32 %v4589, %v7130
      %v7140 = vmul.f32 %v4590, %v7131
      %v7141 = vmul.f32 %v4591, %v7132
      %v7142 = vmul.f32 %v4592, %v7129
      %v7143 = vmul.f32 %v4593, %v7123
      %v7144 = vmul.f32 %v4594, %v7130
      %v7145 = vmul.f32 %v4595, %v7131
      %v7146 = vmul.f32 %v4596, %v7132
      %v7147 = vmul.f32 %v4597, %v7129
      %v7148 = vmul.f32 %v4598, %v7123
      %v7149 = vmul.f32 %v4599, %v7130
      %v7150 = vmul.f32 %v4600, %v7131
      %v7151 = vmul.f32 %v4601, %v7132
      %v7152 = vmul.f32 %v4602, %v7129
      %v7168 = vrot.slane %v7138, 4
      %v7169 = vrot.slane %v7139, 4
      %v7170 = vrot.slane %v7140, 4
      %v7171 = vrot.slane %v7141, 4
      %v7172 = vrot.slane %v7142, 4
      %v7173 = vrot.slane %v7143, 4
      %v7174 = vsel %vm1240, %v7168, %v7173
      %v7175 = vrot.slane %v7144, 4
      %v7176 = vsel %vm1240, %v7169, %v7175
      %v7177 = vrot.slane %v7145, 4
      %v7178 = vsel %vm1240, %v7170, %v7177
      %v7179 = vrot.slane %v7146, 4
      %v7180 = vsel %vm1240, %v7171, %v7179
      %v7181 = vrot.slane %v7147, 4
      %v7182 = vsel %vm1240, %v7172, %v7181
      %v7183 = vrot.slane %v7148, 4
      %v7184 = vsel %vm1240, %v7173, %v7183
      %v7185 = vrot.slane %v7149, 4
      %v7186 = vsel %vm1240, %v7175, %v7185
      %v7187 = vrot.slane %v7150, 4
      %v7188 = vsel %vm1240, %v7177, %v7187
      %v7189 = vrot.slane %v7151, 4
      %v7190 = vsel %vm1240, %v7179, %v7189
      %v7191 = vrot.slane %v7152, 4
      %v7192 = vsel %vm1240, %v7181, %v7191
      %7193 = vrot.lane.b32.xlu0 %v7168, 64
      %v7194 = vpop.permute.xlu0 %7193
      %7195 = vrot.lane.b32.xlu0 %v7169, 64
      %v7196 = vpop.permute.xlu0 %7195
      %7197 = vrot.lane.b32.xlu0 %v7170, 64
      %v7198 = vpop.permute.xlu0 %7197
      %7199 = vrot.lane.b32.xlu0 %v7171, 64
      %v7200 = vpop.permute.xlu0 %7199
      %7201 = vrot.lane.b32.xlu0 %v7172, 64
      %v7202 = vpop.permute.xlu0 %7201
      %7203 = vrot.lane.b32.xlu0 %v7174, 64
      %v7204 = vpop.permute.xlu0 %7203
      %7205 = vrot.lane.b32.xlu0 %v7176, 64
      %v7206 = vpop.permute.xlu0 %7205
      %7207 = vrot.lane.b32.xlu0 %v7178, 64
      %v7208 = vpop.permute.xlu0 %7207
      %7209 = vrot.lane.b32.xlu0 %v7180, 64
      %v7210 = vpop.permute.xlu0 %7209
      %7211 = vrot.lane.b32.xlu0 %v7182, 64
      %v7212 = vpop.permute.xlu0 %7211
      %7213 = vrot.lane.b32.xlu0 %v7184, 64
      %v7214 = vpop.permute.xlu0 %7213
      %7215 = vrot.lane.b32.xlu0 %v7186, 64
      %v7216 = vpop.permute.xlu0 %7215
      %7217 = vrot.lane.b32.xlu0 %v7188, 64
      %v7218 = vpop.permute.xlu0 %7217
      %7219 = vrot.lane.b32.xlu0 %v7190, 64
      %v7220 = vpop.permute.xlu0 %7219
      %7221 = vrot.lane.b32.xlu0 %v7192, 64
      %v7222 = vpop.permute.xlu0 %7221
      %v7223 = vsel %vm1576, %v7194, %v7196
      %v7224 = vsel %vm1576, %v7196, %v7198
      %v7225 = vsel %vm1576, %v7198, %v7200
      %v7226 = vsel %vm1576, %v7200, %v7202
      %v7227 = vsel %vm1576, %v7204, %v7206
      %v7228 = vsel %vm1576, %v7206, %v7208
      %v7229 = vsel %vm1576, %v7208, %v7210
      %v7230 = vsel %vm1576, %v7210, %v7212
      %v7231 = vsel %vm1576, %v7214, %v7216
      %v7232 = vsel %vm1576, %v7216, %v7218
      %v7233 = vsel %vm1576, %v7218, %v7220
      %v7234 = vsel %vm1576, %v7220, %v7222
      %v7250 = vadd.f32 %v7087, %v7223
      %v7251 = vadd.f32 %v7088, %v7224
      %v7252 = vadd.f32 %v7089, %v7225
      %v7253 = vadd.f32 %v7090, %v7226
      %v7254 = vadd.f32 %v7091, %v7202
      %v7255 = vadd.f32 %v7092, %v7227
      %v7256 = vadd.f32 %v7093, %v7228
      %v7257 = vadd.f32 %v7094, %v7229
      %v7258 = vadd.f32 %v7095, %v7230
      %v7259 = vadd.f32 %v7096, %v7212
      %v7260 = vadd.f32 %v7097, %v7231
      %v7261 = vadd.f32 %v7098, %v7232
      %v7262 = vadd.f32 %v7099, %v7233
      %v7263 = vadd.f32 %v7100, %v7234
      %v7264 = vadd.f32 %v7101, %v7222
      %v7265 = vlaneseq
      %v7266 = vshrl.u32 %v7265, 7
      %v7267 = vsub.s32 7, %v7266
      %v7268 = vrot.slane %v6487, %v7267
      %v7269 = vlaneseq
      %v7270 = vshrl.u32 %v7269, 7
      %v7271 = vsub.s32 7, %v7270
      %v7272 = vrot.slane %v6488, %v7271
      %v7273 = vlaneseq
      %v7274 = vshrl.u32 %v7273, 7
      %v7275 = vsub.s32 7, %v7274
      %v7276 = vrot.slane %v6489, %v7275
      %v7277 = vlaneseq
      %v7278 = vshrl.u32 %v7277, 7
      %v7279 = vsub.s32 7, %v7278
      %v7280 = vrot.slane %v6490, %v7279
      %7285 = vrot.lane.b32.xlu0 %v7268, 96
      %v7286 = vpop.permute.xlu0 %7285
      %7287 = vrot.lane.b32.xlu0 %v7272, 96
      %v7288 = vpop.permute.xlu0 %7287
      %7289 = vrot.lane.b32.xlu0 %v7276, 96
      %v7290 = vpop.permute.xlu0 %7289
      %7291 = vrot.lane.b32.xlu0 %v7280, 96
      %v7292 = vpop.permute.xlu0 %7291
      %v7293 = vsel %vm1645, %v7286, %v7288
      %v7294 = vsel %vm1645, %v7288, %v7290
      %v7295 = vsel %vm1645, %v7290, %v7292
      %v7301 = vmul.f32 %v4588, %v7286
      %v7302 = vmul.f32 %v4589, %v7293
      %v7303 = vmul.f32 %v4590, %v7294
      %v7304 = vmul.f32 %v4591, %v7295
      %v7305 = vmul.f32 %v4592, %v7292
      %v7306 = vmul.f32 %v4593, %v7286
      %v7307 = vmul.f32 %v4594, %v7293
      %v7308 = vmul.f32 %v4595, %v7294
      %v7309 = vmul.f32 %v4596, %v7295
      %v7310 = vmul.f32 %v4597, %v7292
      %v7311 = vmul.f32 %v4598, %v7286
      %v7312 = vmul.f32 %v4599, %v7293
      %v7313 = vmul.f32 %v4600, %v7294
      %v7314 = vmul.f32 %v4601, %v7295
      %v7315 = vmul.f32 %v4602, %v7292
      %v7331 = vrot.slane %v7301, 5
      %v7332 = vrot.slane %v7302, 5
      %v7333 = vrot.slane %v7303, 5
      %v7334 = vrot.slane %v7304, 5
      %v7335 = vrot.slane %v7305, 5
      %v7336 = vrot.slane %v7306, 5
      %v7337 = vsel %vm1362, %v7331, %v7336
      %v7338 = vrot.slane %v7307, 5
      %v7339 = vsel %vm1362, %v7332, %v7338
      %v7340 = vrot.slane %v7308, 5
      %v7341 = vsel %vm1362, %v7333, %v7340
      %v7342 = vrot.slane %v7309, 5
      %v7343 = vsel %vm1362, %v7334, %v7342
      %v7344 = vrot.slane %v7310, 5
      %v7345 = vsel %vm1362, %v7335, %v7344
      %v7346 = vrot.slane %v7311, 5
      %v7347 = vsel %vm1362, %v7336, %v7346
      %v7348 = vrot.slane %v7312, 5
      %v7349 = vsel %vm1362, %v7338, %v7348
      %v7350 = vrot.slane %v7313, 5
      %v7351 = vsel %vm1362, %v7340, %v7350
      %v7352 = vrot.slane %v7314, 5
      %v7353 = vsel %vm1362, %v7342, %v7352
      %v7354 = vrot.slane %v7315, 5
      %v7355 = vsel %vm1362, %v7344, %v7354
      %7356 = vrot.lane.b32.xlu0 %v7331, 64
      %v7357 = vpop.permute.xlu0 %7356
      %7358 = vrot.lane.b32.xlu0 %v7332, 64
      %v7359 = vpop.permute.xlu0 %7358
      %7360 = vrot.lane.b32.xlu0 %v7333, 64
      %v7361 = vpop.permute.xlu0 %7360
      %7362 = vrot.lane.b32.xlu0 %v7334, 64
      %v7363 = vpop.permute.xlu0 %7362
      %7364 = vrot.lane.b32.xlu0 %v7335, 64
      %v7365 = vpop.permute.xlu0 %7364
      %7366 = vrot.lane.b32.xlu0 %v7337, 64
      %v7367 = vpop.permute.xlu0 %7366
      %7368 = vrot.lane.b32.xlu0 %v7339, 64
      %v7369 = vpop.permute.xlu0 %7368
      %7370 = vrot.lane.b32.xlu0 %v7341, 64
      %v7371 = vpop.permute.xlu0 %7370
      %7372 = vrot.lane.b32.xlu0 %v7343, 64
      %v7373 = vpop.permute.xlu0 %7372
      %7374 = vrot.lane.b32.xlu0 %v7345, 64
      %v7375 = vpop.permute.xlu0 %7374
      %7376 = vrot.lane.b32.xlu0 %v7347, 64
      %v7377 = vpop.permute.xlu0 %7376
      %7378 = vrot.lane.b32.xlu0 %v7349, 64
      %v7379 = vpop.permute.xlu0 %7378
      %7380 = vrot.lane.b32.xlu0 %v7351, 64
      %v7381 = vpop.permute.xlu0 %7380
      %7382 = vrot.lane.b32.xlu0 %v7353, 64
      %v7383 = vpop.permute.xlu0 %7382
      %7384 = vrot.lane.b32.xlu0 %v7355, 64
      %v7385 = vpop.permute.xlu0 %7384
      %v7386 = vsel %vm1576, %v7357, %v7359
      %v7387 = vsel %vm1576, %v7359, %v7361
      %v7388 = vsel %vm1576, %v7361, %v7363
      %v7389 = vsel %vm1576, %v7363, %v7365
      %v7390 = vsel %vm1576, %v7367, %v7369
      %v7391 = vsel %vm1576, %v7369, %v7371
      %v7392 = vsel %vm1576, %v7371, %v7373
      %v7393 = vsel %vm1576, %v7373, %v7375
      %v7394 = vsel %vm1576, %v7377, %v7379
      %v7395 = vsel %vm1576, %v7379, %v7381
      %v7396 = vsel %vm1576, %v7381, %v7383
      %v7397 = vsel %vm1576, %v7383, %v7385
      %v7413 = vadd.f32 %v7250, %v7386
      %v7414 = vadd.f32 %v7251, %v7387
      %v7415 = vadd.f32 %v7252, %v7388
      %v7416 = vadd.f32 %v7253, %v7389
      %v7417 = vadd.f32 %v7254, %v7365
      %v7418 = vadd.f32 %v7255, %v7390
      %v7419 = vadd.f32 %v7256, %v7391
      %v7420 = vadd.f32 %v7257, %v7392
      %v7421 = vadd.f32 %v7258, %v7393
      %v7422 = vadd.f32 %v7259, %v7375
      %v7423 = vadd.f32 %v7260, %v7394
      %v7424 = vadd.f32 %v7261, %v7395
      %v7425 = vadd.f32 %v7262, %v7396
      %v7426 = vadd.f32 %v7263, %v7397
      %v7427 = vadd.f32 %v7264, %v7385
      %v7428 = vlaneseq
      %v7429 = vshrl.u32 %v7428, 7
      %v7430 = vsub.s32 0, %v7429
      %v7431 = vrot.slane %v6491, %v7430
      %v7432 = vlaneseq
      %v7433 = vshrl.u32 %v7432, 7
      %v7434 = vsub.s32 0, %v7433
      %v7435 = vrot.slane %v6492, %v7434
      %v7436 = vlaneseq
      %v7437 = vshrl.u32 %v7436, 7
      %v7438 = vsub.s32 0, %v7437
      %v7439 = vrot.slane %v6493, %v7438
      %v7440 = vlaneseq
      %v7441 = vshrl.u32 %v7440, 7
      %v7442 = vsub.s32 0, %v7441
      %v7443 = vrot.slane %v6494, %v7442
      %7448 = vrot.lane.b32.xlu0 %v7431, 96
      %v7449 = vpop.permute.xlu0 %7448
      %7450 = vrot.lane.b32.xlu0 %v7435, 96
      %v7451 = vpop.permute.xlu0 %7450
      %7452 = vrot.lane.b32.xlu0 %v7439, 96
      %v7453 = vpop.permute.xlu0 %7452
      %7454 = vrot.lane.b32.xlu0 %v7443, 96
      %v7455 = vpop.permute.xlu0 %7454
      %v7456 = vsel %vm1645, %v7449, %v7451
      %v7457 = vsel %vm1645, %v7451, %v7453
      %v7458 = vsel %vm1645, %v7453, %v7455
      %v7464 = vmul.f32 %v4588, %v7449
      %v7465 = vmul.f32 %v4589, %v7456
      %v7466 = vmul.f32 %v4590, %v7457
      %v7467 = vmul.f32 %v4591, %v7458
      %v7468 = vmul.f32 %v4592, %v7455
      %v7469 = vmul.f32 %v4593, %v7449
      %v7470 = vmul.f32 %v4594, %v7456
      %v7471 = vmul.f32 %v4595, %v7457
      %v7472 = vmul.f32 %v4596, %v7458
      %v7473 = vmul.f32 %v4597, %v7455
      %v7474 = vmul.f32 %v4598, %v7449
      %v7475 = vmul.f32 %v4599, %v7456
      %v7476 = vmul.f32 %v4600, %v7457
      %v7477 = vmul.f32 %v4601, %v7458
      %v7478 = vmul.f32 %v4602, %v7455
      %v7494 = vrot.slane %v7464, 6
      %v7495 = vrot.slane %v7465, 6
      %v7496 = vrot.slane %v7466, 6
      %v7497 = vrot.slane %v7467, 6
      %v7498 = vrot.slane %v7468, 6
      %v7499 = vrot.slane %v7469, 6
      %v7500 = vsel %vm1484, %v7494, %v7499
      %v7501 = vrot.slane %v7470, 6
      %v7502 = vsel %vm1484, %v7495, %v7501
      %v7503 = vrot.slane %v7471, 6
      %v7504 = vsel %vm1484, %v7496, %v7503
      %v7505 = vrot.slane %v7472, 6
      %v7506 = vsel %vm1484, %v7497, %v7505
      %v7507 = vrot.slane %v7473, 6
      %v7508 = vsel %vm1484, %v7498, %v7507
      %v7509 = vrot.slane %v7474, 6
      %v7510 = vsel %vm1484, %v7499, %v7509
      %v7511 = vrot.slane %v7475, 6
      %v7512 = vsel %vm1484, %v7501, %v7511
      %v7513 = vrot.slane %v7476, 6
      %v7514 = vsel %vm1484, %v7503, %v7513
      %v7515 = vrot.slane %v7477, 6
      %v7516 = vsel %vm1484, %v7505, %v7515
      %v7517 = vrot.slane %v7478, 6
      %v7518 = vsel %vm1484, %v7507, %v7517
      %7519 = vrot.lane.b32.xlu0 %v7494, 64
      %v7520 = vpop.permute.xlu0 %7519
      %7521 = vrot.lane.b32.xlu0 %v7495, 64
      %v7522 = vpop.permute.xlu0 %7521
      %7523 = vrot.lane.b32.xlu0 %v7496, 64
      %v7524 = vpop.permute.xlu0 %7523
      %7525 = vrot.lane.b32.xlu0 %v7497, 64
      %v7526 = vpop.permute.xlu0 %7525
      %7527 = vrot.lane.b32.xlu0 %v7498, 64
      %v7528 = vpop.permute.xlu0 %7527
      %7529 = vrot.lane.b32.xlu0 %v7500, 64
      %v7530 = vpop.permute.xlu0 %7529
      %7531 = vrot.lane.b32.xlu0 %v7502, 64
      %v7532 = vpop.permute.xlu0 %7531
      %7533 = vrot.lane.b32.xlu0 %v7504, 64
      %v7534 = vpop.permute.xlu0 %7533
      %7535 = vrot.lane.b32.xlu0 %v7506, 64
      %v7536 = vpop.permute.xlu0 %7535
      %7537 = vrot.lane.b32.xlu0 %v7508, 64
      %v7538 = vpop.permute.xlu0 %7537
      %7539 = vrot.lane.b32.xlu0 %v7510, 64
      %v7540 = vpop.permute.xlu0 %7539
      %7541 = vrot.lane.b32.xlu0 %v7512, 64
      %v7542 = vpop.permute.xlu0 %7541
      %7543 = vrot.lane.b32.xlu0 %v7514, 64
      %v7544 = vpop.permute.xlu0 %7543
      %7545 = vrot.lane.b32.xlu0 %v7516, 64
      %v7546 = vpop.permute.xlu0 %7545
      %7547 = vrot.lane.b32.xlu0 %v7518, 64
      %v7548 = vpop.permute.xlu0 %7547
      %v7549 = vsel %vm1576, %v7520, %v7522
      %v7550 = vsel %vm1576, %v7522, %v7524
      %v7551 = vsel %vm1576, %v7524, %v7526
      %v7552 = vsel %vm1576, %v7526, %v7528
      %v7553 = vsel %vm1576, %v7530, %v7532
      %v7554 = vsel %vm1576, %v7532, %v7534
      %v7555 = vsel %vm1576, %v7534, %v7536
      %v7556 = vsel %vm1576, %v7536, %v7538
      %v7557 = vsel %vm1576, %v7540, %v7542
      %v7558 = vsel %vm1576, %v7542, %v7544
      %v7559 = vsel %vm1576, %v7544, %v7546
      %v7560 = vsel %vm1576, %v7546, %v7548
      %v7576 = vadd.f32 %v7413, %v7549
      %v7577 = vadd.f32 %v7414, %v7550
      %v7578 = vadd.f32 %v7415, %v7551
      %v7579 = vadd.f32 %v7416, %v7552
      %v7580 = vadd.f32 %v7417, %v7528
      %v7581 = vadd.f32 %v7418, %v7553
      %v7582 = vadd.f32 %v7419, %v7554
      %v7583 = vadd.f32 %v7420, %v7555
      %v7584 = vadd.f32 %v7421, %v7556
      %v7585 = vadd.f32 %v7422, %v7538
      %v7586 = vadd.f32 %v7423, %v7557
      %v7587 = vadd.f32 %v7424, %v7558
      %v7588 = vadd.f32 %v7425, %v7559
      %v7589 = vadd.f32 %v7426, %v7560
      %v7590 = vadd.f32 %v7427, %v7548
      %v7591 = vpack.c.bf16 %v7581, %v7576
      %v7592 = vpack.c.bf16 %v7582, %v7577
      %v7593 = vpack.c.bf16 %v7583, %v7578
      %v7594 = vpack.c.bf16 %v7584, %v7579
      %v7595 = vpack.c.bf16 %v7585, %v7580
      %v7596 = vpack.c.bf16 %v7586, %v7586
      %v7597 = vpack.c.bf16 %v7587, %v7587
      %v7598 = vpack.c.bf16 %v7588, %v7588
      %v7599 = vpack.c.bf16 %v7589, %v7589
      %v7600 = vpack.c.bf16 %v7590, %v7590
      %v7601 = vunpack.c.l.bf16 %v7591
      %v7602 = vunpack.c.l.bf16 %v7592
      %v7603 = vunpack.c.l.bf16 %v7593
      %v7604 = vunpack.c.l.bf16 %v7594
      %v7605 = vunpack.c.l.bf16 %v7595
      %v7606 = vunpack.c.h.bf16 %v7591
      %v7607 = vunpack.c.h.bf16 %v7592
      %v7608 = vunpack.c.h.bf16 %v7593
      %v7609 = vunpack.c.h.bf16 %v7594
      %v7610 = vunpack.c.h.bf16 %v7595
      %v7611 = vunpack.c.l.bf16 %v7596
      %v7612 = vunpack.c.l.bf16 %v7597
      %v7613 = vunpack.c.l.bf16 %v7598
      %v7614 = vunpack.c.l.bf16 %v7599
      %v7615 = vunpack.c.l.bf16 %v7600
      %v7616 = vsub.f32 %v7576, %v7601
      %v7617 = vsub.f32 %v7577, %v7602
      %v7618 = vsub.f32 %v7578, %v7603
      %v7619 = vsub.f32 %v7579, %v7604
      %v7620 = vsub.f32 %v7580, %v7605
      %v7621 = vsub.f32 %v7581, %v7606
      %v7622 = vsub.f32 %v7582, %v7607
      %v7623 = vsub.f32 %v7583, %v7608
      %v7624 = vsub.f32 %v7584, %v7609
      %v7625 = vsub.f32 %v7585, %v7610
      %v7626 = vsub.f32 %v7586, %v7611
      %v7627 = vsub.f32 %v7587, %v7612
      %v7628 = vsub.f32 %v7588, %v7613
      %v7629 = vsub.f32 %v7589, %v7614
      %v7630 = vsub.f32 %v7590, %v7615
      %v7631 = vld [vmem:[%s6] sm:$0xff]
      %v7632 = vld [vmem:[%s6 + $0x8] sm:$0xff]
      %v7633 = vld [vmem:[%s6 + $0x10] sm:$0xff]
      %v7634 = vld [vmem:[%s6 + $0x18] sm:$0xff]
      %v7635 = vld [vmem:[%s6 + $0x20] sm:$0xff]
      %v7636 = vld [vmem:[%s6 + $0x28] sm:$0xff]
      %v7637 = vld [vmem:[%s6 + $0x30] sm:$0xff]
      %v7638 = vld [vmem:[%s6 + $0x38] sm:$0xff]
      %v7639 = vld [vmem:[%s6 + $0x40] sm:$0xff]
      %v7640 = vld [vmem:[%s6 + $0x48] sm:$0xff]
      %v7641 = vld [vmem:[%s6 + $0x50] sm:$0xff]
      %v7642 = vld [vmem:[%s6 + $0x58] sm:$0xff]
      %v7643 = vld [vmem:[%s6 + $0x60] sm:$0xff]
      %v7644 = vld [vmem:[%s6 + $0x68] sm:$0xff]
      %v7645 = vld [vmem:[%s6 + $0x70] sm:$0xff]
      %v7646 = vld [vmem:[%s6 + $0x78] sm:$0xff]
      %v7647 = vld [vmem:[%s6 + $0x80] sm:$0xff]
      %v7648 = vld [vmem:[%s6 + $0x88] sm:$0xff]
      %v7649 = vld [vmem:[%s6 + $0x90] sm:$0xff]
      %v7650 = vld [vmem:[%s6 + $0x98] sm:$0xff]
      %v7651 = vld [vmem:[%s6 + $0xa0] sm:$0xff]
      %v7652 = vld [vmem:[%s6 + $0xa8] sm:$0xff]
      %v7653 = vld [vmem:[%s6 + $0xb0] sm:$0xff]
      %v7654 = vld [vmem:[%s6 + $0xb8] sm:$0xff]
      %v7655 = vld [vmem:[%s6 + $0xc0] sm:$0xff]
      %v7656 = vld [vmem:[%s6 + $0xc8] sm:$0xff]
      %v7657 = vld [vmem:[%s6 + $0xd0] sm:$0xff]
      %v7658 = vld [vmem:[%s6 + $0xd8] sm:$0xff]
      %v7659 = vld [vmem:[%s6 + $0xe0] sm:$0xff]
      %v7660 = vld [vmem:[%s6 + $0xe8] sm:$0xff]
      %v7661 = vld [vmem:[%s6 + $0xf0] sm:$0xff]
      %v7662 = vld [vmem:[%s6 + $0xf8] sm:$0xff]
      %v7663 = vld [vmem:[%s6 + $0x100] sm:$0xff]
      %v7664 = vld [vmem:[%s6 + $0x108] sm:$0xff]
      %v7665 = vld [vmem:[%s6 + $0x110] sm:$0xff]
      %v7666 = vld [vmem:[%s6 + $0x118] sm:$0xff]
      %v7667 = vld [vmem:[%s6 + $0x120] sm:$0xff]
      %v7668 = vld [vmem:[%s6 + $0x128] sm:$0xff]
      %v7669 = vld [vmem:[%s6 + $0x130] sm:$0xff]
      %v7670 = vld [vmem:[%s6 + $0x138] sm:$0xff]
      %v7671 = vld [vmem:[%s6 + $0x140] sm:$0xff]
      %v7672 = vld [vmem:[%s6 + $0x148] sm:$0xff]
      %v7673 = vld [vmem:[%s6 + $0x150] sm:$0xff]
      %v7674 = vld [vmem:[%s6 + $0x158] sm:$0xff]
      %v7675 = vld [vmem:[%s6 + $0x160] sm:$0xff]
      %v7676 = vld [vmem:[%s6 + $0x168] sm:$0xff]
      %v7677 = vld [vmem:[%s6 + $0x170] sm:$0xff]
      %v7678 = vld [vmem:[%s6 + $0x178] sm:$0xff]
      %v7679 = vld [vmem:[%s6 + $0x180] sm:$0xff]
      %v7680 = vld [vmem:[%s6 + $0x188] sm:$0xff]
      %v7681 = vld [vmem:[%s6 + $0x190] sm:$0xff]
      %v7682 = vld [vmem:[%s6 + $0x198] sm:$0xff]
      %v7683 = vld [vmem:[%s6 + $0x1a0] sm:$0xff]
      %v7684 = vld [vmem:[%s6 + $0x1a8] sm:$0xff]
      %v7685 = vld [vmem:[%s6 + $0x1b0] sm:$0xff]
      %v7686 = vld [vmem:[%s6 + $0x1b8] sm:$0xff]
      %v7687 = vld [vmem:[%s6 + $0x1c0] sm:$0xff]
      %v7688 = vld [vmem:[%s6 + $0x1c8] sm:$0xff]
      %v7689 = vld [vmem:[%s6 + $0x1d0] sm:$0xff]
      %v7690 = vld [vmem:[%s6 + $0x1d8] sm:$0xff]
      %v7691 = vld [vmem:[%s6 + $0x1e0] sm:$0xff]
      %v7692 = vld [vmem:[%s6 + $0x1e8] sm:$0xff]
      %v7693 = vld [vmem:[%s6 + $0x1f0] sm:$0xff]
      %v7694 = vld [vmem:[%s6 + $0x1f8] sm:$0xff]
      %v7710 = vrot.slane %v7616, 5
      %v7711 = vrot.slane %v7621, 5
      %v7712 = vsel %vm1362, %v7710, %v7711
      %v7713 = vrot.slane %v7617, 5
      %v7714 = vrot.slane %v7622, 5
      %v7715 = vsel %vm1362, %v7713, %v7714
      %v7716 = vrot.slane %v7618, 5
      %v7717 = vrot.slane %v7623, 5
      %v7718 = vsel %vm1362, %v7716, %v7717
      %v7719 = vrot.slane %v7619, 5
      %v7720 = vrot.slane %v7624, 5
      %v7721 = vsel %vm1362, %v7719, %v7720
      %v7722 = vrot.slane %v7620, 5
      %v7723 = vrot.slane %v7625, 5
      %v7724 = vsel %vm1362, %v7722, %v7723
      %v7725 = vrot.slane %v7626, 5
      %v7726 = vsel %vm1362, %v7711, %v7725
      %v7727 = vrot.slane %v7627, 5
      %v7728 = vsel %vm1362, %v7714, %v7727
      %v7729 = vrot.slane %v7628, 5
      %v7730 = vsel %vm1362, %v7717, %v7729
      %v7731 = vrot.slane %v7629, 5
      %v7732 = vsel %vm1362, %v7720, %v7731
      %v7733 = vrot.slane %v7630, 5
      %v7734 = vsel %vm1362, %v7723, %v7733
      %7735 = vrot.lane.b32.xlu0 %v7712, 96
      %v7736 = vpop.permute.xlu0 %7735
      %7737 = vrot.lane.b32.xlu0 %v7715, 96
      %v7738 = vpop.permute.xlu0 %7737
      %7739 = vrot.lane.b32.xlu0 %v7718, 96
      %v7740 = vpop.permute.xlu0 %7739
      %7741 = vrot.lane.b32.xlu0 %v7721, 96
      %v7742 = vpop.permute.xlu0 %7741
      %7743 = vrot.lane.b32.xlu0 %v7724, 96
      %v7744 = vpop.permute.xlu0 %7743
      %7745 = vrot.lane.b32.xlu0 %v7726, 96
      %v7746 = vpop.permute.xlu0 %7745
      %7747 = vrot.lane.b32.xlu0 %v7728, 96
      %v7748 = vpop.permute.xlu0 %7747
      %7749 = vrot.lane.b32.xlu0 %v7730, 96
      %v7750 = vpop.permute.xlu0 %7749
      %7751 = vrot.lane.b32.xlu0 %v7732, 96
      %v7752 = vpop.permute.xlu0 %7751
      %7753 = vrot.lane.b32.xlu0 %v7734, 96
      %v7754 = vpop.permute.xlu0 %7753
      %v7755 = vsel %vm1645, %v7736, %v7738
      %v7756 = vsel %vm1645, %v7738, %v7740
      %v7757 = vsel %vm1645, %v7740, %v7742
      %v7758 = vsel %vm1645, %v7742, %v7744
      %v7759 = vsel %vm1645, %v7746, %v7748
      %v7760 = vsel %vm1645, %v7748, %v7750
      %v7761 = vsel %vm1645, %v7750, %v7752
      %v7762 = vsel %vm1645, %v7752, %v7754
      %7771 = vmatprep.subr.mxu0 0.0
      %7772 = vmatpush1.msra.mxu0 %v7646
      %7773 = vmatprep.subr.mxu0 0.0
      %7774 = vmatpush1.msra.mxu0 %v7645
      %7775 = vmatprep.subr.mxu0 0.0
      %7776 = vmatpush1.msra.mxu0 %v7644
      %7777 = vmatprep.subr.mxu0 0.0
      %7778 = vmatpush1.msra.mxu0 %v7643
      %7779 = vmatprep.subr.mxu0 0.0
      %7780 = vmatpush1.msra.mxu0 %v7642
      %7781 = vmatprep.subr.mxu0 0.0
      %7782 = vmatpush1.msra.mxu0 %v7641
      %7783 = vmatprep.subr.mxu0 0.0
      %7784 = vmatpush1.msra.mxu0 %v7640
      %7785 = vmatprep.subr.mxu0 0.0
      %7786 = vmatpush1.msra.mxu0 %v7639
      %7787 = vmatprep.subr.mxu0 0.0
      %7788 = vmatpush1.msra.mxu0 %v7638
      %7789 = vmatprep.subr.mxu0 0.0
      %7790 = vmatpush1.msra.mxu0 %v7637
      %7791 = vmatprep.subr.mxu0 0.0
      %7792 = vmatpush1.msra.mxu0 %v7636
      %7793 = vmatprep.subr.mxu0 0.0
      %7794 = vmatpush1.msra.mxu0 %v7635
      %7795 = vmatprep.subr.mxu0 0.0
      %7796 = vmatpush1.msra.mxu0 %v7634
      %7797 = vmatprep.subr.mxu0 0.0
      %7798 = vmatpush1.msra.mxu0 %v7633
      %7799 = vmatprep.subr.mxu0 0.0
      %7800 = vmatpush1.msra.mxu0 %v7632
      %7801 = vmatprep.subr.mxu0 0.0
      %7802 = vmatpush1.msra.mxu0 %v7631
      %7803 = vmatprep.subr.mxu0 0.0
      %7804 = vmatpush2.msra.mxu0 %v7662
      %7805 = vmatprep.subr.mxu0 0.0
      %7806 = vmatpush2.msra.mxu0 %v7661
      %7807 = vmatprep.subr.mxu0 0.0
      %7808 = vmatpush2.msra.mxu0 %v7660
      %7809 = vmatprep.subr.mxu0 0.0
      %7810 = vmatpush2.msra.mxu0 %v7659
      %7811 = vmatprep.subr.mxu0 0.0
      %7812 = vmatpush2.msra.mxu0 %v7658
      %7813 = vmatprep.subr.mxu0 0.0
      %7814 = vmatpush2.msra.mxu0 %v7657
      %7815 = vmatprep.subr.mxu0 0.0
      %7816 = vmatpush2.msra.mxu0 %v7656
      %7817 = vmatprep.subr.mxu0 0.0
      %7818 = vmatpush2.msra.mxu0 %v7655
      %7819 = vmatprep.subr.mxu0 0.0
      %7820 = vmatpush2.msra.mxu0 %v7654
      %7821 = vmatprep.subr.mxu0 0.0
      %7822 = vmatpush2.msra.mxu0 %v7653
      %7823 = vmatprep.subr.mxu0 0.0
      %7824 = vmatpush2.msra.mxu0 %v7652
      %7825 = vmatprep.subr.mxu0 0.0
      %7826 = vmatpush2.msra.mxu0 %v7651
      %7827 = vmatprep.subr.mxu0 0.0
      %7828 = vmatpush2.msra.mxu0 %v7650
      %7829 = vmatprep.subr.mxu0 0.0
      %7830 = vmatpush2.msra.mxu0 %v7649
      %7831 = vmatprep.subr.mxu0 0.0
      %7832 = vmatpush2.msra.mxu0 %v7648
      %7833 = vmatprep.subr.mxu0 0.0
      %7834 = vmatpush2.msra.mxu0 %v7647
      %7835 = vmatprep.mubr.f32.mxu0 %v7756
      %7836 = vmatmul.mubr.f32.gmra.mxu0 %v7755
      %v7837 = vpop.f32.mrf.mxu0
      %v7838 = vadd.f32 0.0, %v7837
      %v7839 = vpop.f32.mrf.mxu0
      %7840 = vmatprep.mubr.f32.mxu0 %v7760
      %7841 = vmatmul.mubr.f32.gmra.mxu0 %v7759
      %v7842 = vpop.f32.mrf.mxu0
      %v7843 = vadd.f32 0.0, %v7842
      %v7844 = vpop.f32.mrf.mxu0
      %7845 = vdwg.mxu0
      %7846 = vmatprep.subr.mxu0 0.0
      %7847 = vmatpush1.msra.mxu0 %v7678
      %7848 = vmatprep.subr.mxu0 0.0
      %7849 = vmatpush1.msra.mxu0 %v7677
      %7850 = vmatprep.subr.mxu0 0.0
      %7851 = vmatpush1.msra.mxu0 %v7676
      %7852 = vmatprep.subr.mxu0 0.0
      %7853 = vmatpush1.msra.mxu0 %v7675
      %7854 = vmatprep.subr.mxu0 0.0
      %7855 = vmatpush1.msra.mxu0 %v7674
      %7856 = vmatprep.subr.mxu0 0.0
      %7857 = vmatpush1.msra.mxu0 %v7673
      %7858 = vmatprep.subr.mxu0 0.0
      %7859 = vmatpush1.msra.mxu0 %v7672
      %7860 = vmatprep.subr.mxu0 0.0
      %7861 = vmatpush1.msra.mxu0 %v7671
      %7862 = vmatprep.subr.mxu0 0.0
      %7863 = vmatpush1.msra.mxu0 %v7670
      %7864 = vmatprep.subr.mxu0 0.0
      %7865 = vmatpush1.msra.mxu0 %v7669
      %7866 = vmatprep.subr.mxu0 0.0
      %7867 = vmatpush1.msra.mxu0 %v7668
      %7868 = vmatprep.subr.mxu0 0.0
      %7869 = vmatpush1.msra.mxu0 %v7667
      %7870 = vmatprep.subr.mxu0 0.0
      %7871 = vmatpush1.msra.mxu0 %v7666
      %7872 = vmatprep.subr.mxu0 0.0
      %7873 = vmatpush1.msra.mxu0 %v7665
      %7874 = vmatprep.subr.mxu0 0.0
      %7875 = vmatpush1.msra.mxu0 %v7664
      %7876 = vmatprep.subr.mxu0 0.0
      %7877 = vmatpush1.msra.mxu0 %v7663
      %7878 = vmatprep.subr.mxu0 0.0
      %7879 = vmatpush2.msra.mxu0 %v7694
      %7880 = vmatprep.subr.mxu0 0.0
      %7881 = vmatpush2.msra.mxu0 %v7693
      %7882 = vmatprep.subr.mxu0 0.0
      %7883 = vmatpush2.msra.mxu0 %v7692
      %7884 = vmatprep.subr.mxu0 0.0
      %7885 = vmatpush2.msra.mxu0 %v7691
      %7886 = vmatprep.subr.mxu0 0.0
      %7887 = vmatpush2.msra.mxu0 %v7690
      %7888 = vmatprep.subr.mxu0 0.0
      %7889 = vmatpush2.msra.mxu0 %v7689
      %7890 = vmatprep.subr.mxu0 0.0
      %7891 = vmatpush2.msra.mxu0 %v7688
      %7892 = vmatprep.subr.mxu0 0.0
      %7893 = vmatpush2.msra.mxu0 %v7687
      %7894 = vmatprep.subr.mxu0 0.0
      %7895 = vmatpush2.msra.mxu0 %v7686
      %7896 = vmatprep.subr.mxu0 0.0
      %7897 = vmatpush2.msra.mxu0 %v7685
      %7898 = vmatprep.subr.mxu0 0.0
      %7899 = vmatpush2.msra.mxu0 %v7684
      %7900 = vmatprep.subr.mxu0 0.0
      %7901 = vmatpush2.msra.mxu0 %v7683
      %7902 = vmatprep.subr.mxu0 0.0
      %7903 = vmatpush2.msra.mxu0 %v7682
      %7904 = vmatprep.subr.mxu0 0.0
      %7905 = vmatpush2.msra.mxu0 %v7681
      %7906 = vmatprep.subr.mxu0 0.0
      %7907 = vmatpush2.msra.mxu0 %v7680
      %7908 = vmatprep.subr.mxu0 0.0
      %7909 = vmatpush2.msra.mxu0 %v7679
      %7910 = vmatprep.mubr.f32.mxu0 %v7758
      %7911 = vmatmul.mubr.f32.gmra.mxu0 %v7757
      %v7912 = vpop.f32.mrf.mxu0
      %v7913 = vadd.f32 %v7838, %v7912
      %v7914 = vpop.f32.mrf.mxu0
      %7915 = vmatprep.mubr.f32.mxu0 %v7762
      %7916 = vmatmul.mubr.f32.gmra.mxu0 %v7761
      %v7917 = vpop.f32.mrf.mxu0
      %v7918 = vadd.f32 %v7843, %v7917
      %v7919 = vpop.f32.mrf.mxu0
      %7920 = vdwg.mxu0
      %v7936 = vrot.slane %v7601, 5
      %v7937 = vrot.slane %v7606, 5
      %v7938 = vsel %vm1362, %v7936, %v7937
      %v7939 = vrot.slane %v7602, 5
      %v7940 = vrot.slane %v7607, 5
      %v7941 = vsel %vm1362, %v7939, %v7940
      %v7942 = vrot.slane %v7603, 5
      %v7943 = vrot.slane %v7608, 5
      %v7944 = vsel %vm1362, %v7942, %v7943
      %v7945 = vrot.slane %v7604, 5
      %v7946 = vrot.slane %v7609, 5
      %v7947 = vsel %vm1362, %v7945, %v7946
      %v7948 = vrot.slane %v7605, 5
      %v7949 = vrot.slane %v7610, 5
      %v7950 = vsel %vm1362, %v7948, %v7949
      %v7951 = vrot.slane %v7611, 5
      %v7952 = vsel %vm1362, %v7937, %v7951
      %v7953 = vrot.slane %v7612, 5
      %v7954 = vsel %vm1362, %v7940, %v7953
      %v7955 = vrot.slane %v7613, 5
      %v7956 = vsel %vm1362, %v7943, %v7955
      %v7957 = vrot.slane %v7614, 5
      %v7958 = vsel %vm1362, %v7946, %v7957
      %v7959 = vrot.slane %v7615, 5
      %v7960 = vsel %vm1362, %v7949, %v7959
      %7961 = vrot.lane.b32.xlu0 %v7938, 96
      %v7962 = vpop.permute.xlu0 %7961
      %7963 = vrot.lane.b32.xlu0 %v7941, 96
      %v7964 = vpop.permute.xlu0 %7963
      %7965 = vrot.lane.b32.xlu0 %v7944, 96
      %v7966 = vpop.permute.xlu0 %7965
      %7967 = vrot.lane.b32.xlu0 %v7947, 96
      %v7968 = vpop.permute.xlu0 %7967
      %7969 = vrot.lane.b32.xlu0 %v7950, 96
      %v7970 = vpop.permute.xlu0 %7969
      %7971 = vrot.lane.b32.xlu0 %v7952, 96
      %v7972 = vpop.permute.xlu0 %7971
      %7973 = vrot.lane.b32.xlu0 %v7954, 96
      %v7974 = vpop.permute.xlu0 %7973
      %7975 = vrot.lane.b32.xlu0 %v7956, 96
      %v7976 = vpop.permute.xlu0 %7975
      %7977 = vrot.lane.b32.xlu0 %v7958, 96
      %v7978 = vpop.permute.xlu0 %7977
      %7979 = vrot.lane.b32.xlu0 %v7960, 96
      %v7980 = vpop.permute.xlu0 %7979
      %v7981 = vsel %vm1645, %v7962, %v7964
      %v7982 = vsel %vm1645, %v7964, %v7966
      %v7983 = vsel %vm1645, %v7966, %v7968
      %v7984 = vsel %vm1645, %v7968, %v7970
      %v7985 = vsel %vm1645, %v7972, %v7974
      %v7986 = vsel %vm1645, %v7974, %v7976
      %v7987 = vsel %vm1645, %v7976, %v7978
      %v7988 = vsel %vm1645, %v7978, %v7980
      %7997 = vmatprep.subr.mxu0 0.0
      %7998 = vmatpush1.msra.mxu0 %v7646
      %7999 = vmatprep.subr.mxu0 0.0
      %8000 = vmatpush1.msra.mxu0 %v7645
      %8001 = vmatprep.subr.mxu0 0.0
      %8002 = vmatpush1.msra.mxu0 %v7644
      %8003 = vmatprep.subr.mxu0 0.0
      %8004 = vmatpush1.msra.mxu0 %v7643
      %8005 = vmatprep.subr.mxu0 0.0
      %8006 = vmatpush1.msra.mxu0 %v7642
      %8007 = vmatprep.subr.mxu0 0.0
      %8008 = vmatpush1.msra.mxu0 %v7641
      %8009 = vmatprep.subr.mxu0 0.0
      %8010 = vmatpush1.msra.mxu0 %v7640
      %8011 = vmatprep.subr.mxu0 0.0
      %8012 = vmatpush1.msra.mxu0 %v7639
      %8013 = vmatprep.subr.mxu0 0.0
      %8014 = vmatpush1.msra.mxu0 %v7638
      %8015 = vmatprep.subr.mxu0 0.0
      %8016 = vmatpush1.msra.mxu0 %v7637
      %8017 = vmatprep.subr.mxu0 0.0
      %8018 = vmatpush1.msra.mxu0 %v7636
      %8019 = vmatprep.subr.mxu0 0.0
      %8020 = vmatpush1.msra.mxu0 %v7635
      %8021 = vmatprep.subr.mxu0 0.0
      %8022 = vmatpush1.msra.mxu0 %v7634
      %8023 = vmatprep.subr.mxu0 0.0
      %8024 = vmatpush1.msra.mxu0 %v7633
      %8025 = vmatprep.subr.mxu0 0.0
      %8026 = vmatpush1.msra.mxu0 %v7632
      %8027 = vmatprep.subr.mxu0 0.0
      %8028 = vmatpush1.msra.mxu0 %v7631
      %8029 = vmatprep.subr.mxu0 0.0
      %8030 = vmatpush2.msra.mxu0 %v7662
      %8031 = vmatprep.subr.mxu0 0.0
      %8032 = vmatpush2.msra.mxu0 %v7661
      %8033 = vmatprep.subr.mxu0 0.0
      %8034 = vmatpush2.msra.mxu0 %v7660
      %8035 = vmatprep.subr.mxu0 0.0
      %8036 = vmatpush2.msra.mxu0 %v7659
      %8037 = vmatprep.subr.mxu0 0.0
      %8038 = vmatpush2.msra.mxu0 %v7658
      %8039 = vmatprep.subr.mxu0 0.0
      %8040 = vmatpush2.msra.mxu0 %v7657
      %8041 = vmatprep.subr.mxu0 0.0
      %8042 = vmatpush2.msra.mxu0 %v7656
      %8043 = vmatprep.subr.mxu0 0.0
      %8044 = vmatpush2.msra.mxu0 %v7655
      %8045 = vmatprep.subr.mxu0 0.0
      %8046 = vmatpush2.msra.mxu0 %v7654
      %8047 = vmatprep.subr.mxu0 0.0
      %8048 = vmatpush2.msra.mxu0 %v7653
      %8049 = vmatprep.subr.mxu0 0.0
      %8050 = vmatpush2.msra.mxu0 %v7652
      %8051 = vmatprep.subr.mxu0 0.0
      %8052 = vmatpush2.msra.mxu0 %v7651
      %8053 = vmatprep.subr.mxu0 0.0
      %8054 = vmatpush2.msra.mxu0 %v7650
      %8055 = vmatprep.subr.mxu0 0.0
      %8056 = vmatpush2.msra.mxu0 %v7649
      %8057 = vmatprep.subr.mxu0 0.0
      %8058 = vmatpush2.msra.mxu0 %v7648
      %8059 = vmatprep.subr.mxu0 0.0
      %8060 = vmatpush2.msra.mxu0 %v7647
      %8061 = vmatprep.mubr.f32.mxu0 %v7982
      %8062 = vmatmul.mubr.f32.gmra.mxu0 %v7981
      %v8063 = vpop.f32.mrf.mxu0
      %v8064 = vadd.f32 %v7913, %v8063
      %v8065 = vpop.f32.mrf.mxu0
      %8066 = vmatprep.mubr.f32.mxu0 %v7986
      %8067 = vmatmul.mubr.f32.gmra.mxu0 %v7985
      %v8068 = vpop.f32.mrf.mxu0
      %v8069 = vadd.f32 %v7918, %v8068
      %v8070 = vpop.f32.mrf.mxu0
      %8071 = vdwg.mxu0
      %8072 = vmatprep.subr.mxu0 0.0
      %8073 = vmatpush1.msra.mxu0 %v7678
      %8074 = vmatprep.subr.mxu0 0.0
      %8075 = vmatpush1.msra.mxu0 %v7677
      %8076 = vmatprep.subr.mxu0 0.0
      %8077 = vmatpush1.msra.mxu0 %v7676
      %8078 = vmatprep.subr.mxu0 0.0
      %8079 = vmatpush1.msra.mxu0 %v7675
      %8080 = vmatprep.subr.mxu0 0.0
      %8081 = vmatpush1.msra.mxu0 %v7674
      %8082 = vmatprep.subr.mxu0 0.0
      %8083 = vmatpush1.msra.mxu0 %v7673
      %8084 = vmatprep.subr.mxu0 0.0
      %8085 = vmatpush1.msra.mxu0 %v7672
      %8086 = vmatprep.subr.mxu0 0.0
      %8087 = vmatpush1.msra.mxu0 %v7671
      %8088 = vmatprep.subr.mxu0 0.0
      %8089 = vmatpush1.msra.mxu0 %v7670
      %8090 = vmatprep.subr.mxu0 0.0
      %8091 = vmatpush1.msra.mxu0 %v7669
      %8092 = vmatprep.subr.mxu0 0.0
      %8093 = vmatpush1.msra.mxu0 %v7668
      %8094 = vmatprep.subr.mxu0 0.0
      %8095 = vmatpush1.msra.mxu0 %v7667
      %8096 = vmatprep.subr.mxu0 0.0
      %8097 = vmatpush1.msra.mxu0 %v7666
      %8098 = vmatprep.subr.mxu0 0.0
      %8099 = vmatpush1.msra.mxu0 %v7665
      %8100 = vmatprep.subr.mxu0 0.0
      %8101 = vmatpush1.msra.mxu0 %v7664
      %8102 = vmatprep.subr.mxu0 0.0
      %8103 = vmatpush1.msra.mxu0 %v7663
      %8104 = vmatprep.subr.mxu0 0.0
      %8105 = vmatpush2.msra.mxu0 %v7694
      %8106 = vmatprep.subr.mxu0 0.0
      %8107 = vmatpush2.msra.mxu0 %v7693
      %8108 = vmatprep.subr.mxu0 0.0
      %8109 = vmatpush2.msra.mxu0 %v7692
      %8110 = vmatprep.subr.mxu0 0.0
      %8111 = vmatpush2.msra.mxu0 %v7691
      %8112 = vmatprep.subr.mxu0 0.0
      %8113 = vmatpush2.msra.mxu0 %v7690
      %8114 = vmatprep.subr.mxu0 0.0
      %8115 = vmatpush2.msra.mxu0 %v7689
      %8116 = vmatprep.subr.mxu0 0.0
      %8117 = vmatpush2.msra.mxu0 %v7688
      %8118 = vmatprep.subr.mxu0 0.0
      %8119 = vmatpush2.msra.mxu0 %v7687
      %8120 = vmatprep.subr.mxu0 0.0
      %8121 = vmatpush2.msra.mxu0 %v7686
      %8122 = vmatprep.subr.mxu0 0.0
      %8123 = vmatpush2.msra.mxu0 %v7685
      %8124 = vmatprep.subr.mxu0 0.0
      %8125 = vmatpush2.msra.mxu0 %v7684
      %8126 = vmatprep.subr.mxu0 0.0
      %8127 = vmatpush2.msra.mxu0 %v7683
      %8128 = vmatprep.subr.mxu0 0.0
      %8129 = vmatpush2.msra.mxu0 %v7682
      %8130 = vmatprep.subr.mxu0 0.0
      %8131 = vmatpush2.msra.mxu0 %v7681
      %8132 = vmatprep.subr.mxu0 0.0
      %8133 = vmatpush2.msra.mxu0 %v7680
      %8134 = vmatprep.subr.mxu0 0.0
      %8135 = vmatpush2.msra.mxu0 %v7679
      %8136 = vmatprep.mubr.f32.mxu0 %v7984
      %8137 = vmatmul.mubr.f32.gmra.mxu0 %v7983
      %v8138 = vpop.f32.mrf.mxu0
      %v8139 = vadd.f32 %v8064, %v8138
      %v8140 = vpop.f32.mrf.mxu0
      %8141 = vmatprep.mubr.f32.mxu0 %v7988
      %8142 = vmatmul.mubr.f32.gmra.mxu0 %v7987
      %v8143 = vpop.f32.mrf.mxu0
      %v8144 = vadd.f32 %v8069, %v8143
      %v8145 = vpop.f32.mrf.mxu0
      %8146 = vdwg.mxu0
      %v8147 = vpack.c.bf16 %v8144, %v8139
      %v8148 = vunpack.c.l.bf16 %v8147
      %v8149 = vunpack.c.h.bf16 %v8147
      %v8150 = vsub.f32 %v8139, %v8148
      %v8151 = vsub.f32 %v8144, %v8149
      %v8152 = vld [vmem:[%s7] sm:$0xff]
      %v8153 = vld [vmem:[%s7 + $0x8] sm:$0xff]
      %v8154 = vld [vmem:[%s7 + $0x10] sm:$0xff]
      %v8155 = vld [vmem:[%s7 + $0x18] sm:$0xff]
      %v8156 = vld [vmem:[%s7 + $0x20] sm:$0xff]
      %v8157 = vld [vmem:[%s7 + $0x28] sm:$0xff]
      %v8158 = vld [vmem:[%s7 + $0x30] sm:$0xff]
      %v8159 = vld [vmem:[%s7 + $0x38] sm:$0xff]
      %vm8160 = vcmask 130048
      %v8162 = vsel %vm8160, %v8150, 0
      %v8165 = vsel %vm8160, %v8151, 0
      %8167 = vmatprep.subr.mxu0 0.0
      %8168 = vmatpush1.msra.mxu0 0.0
      %8169 = vmatprep.subr.mxu0 0.0
      %8170 = vmatpush1.msra.mxu0 0.0
      %8171 = vmatprep.subr.mxu0 0.0
      %8172 = vmatpush1.msra.mxu0 0.0
      %8173 = vmatprep.subr.mxu0 0.0
      %8174 = vmatpush1.msra.mxu0 0.0
      %8175 = vmatprep.subr.mxu0 0.0
      %8176 = vmatpush1.msra.mxu0 0.0
      %8177 = vmatprep.subr.mxu0 0.0
      %8178 = vmatpush1.msra.mxu0 0.0
      %8179 = vmatprep.subr.mxu0 0.0
      %8180 = vmatpush1.msra.mxu0 0.0
      %8181 = vmatprep.subr.mxu0 0.0
      %8182 = vmatpush1.msra.mxu0 0.0
      %8183 = vmatprep.subr.mxu0 0.0
      %8184 = vmatpush1.msra.mxu0 0.0
      %8185 = vmatprep.subr.mxu0 0.0
      %8186 = vmatpush1.msra.mxu0 0.0
      %8187 = vmatprep.subr.mxu0 0.0
      %8188 = vmatpush1.msra.mxu0 0.0
      %8189 = vmatprep.subr.mxu0 0.0
      %8190 = vmatpush1.msra.mxu0 0.0
      %8191 = vmatprep.subr.mxu0 0.0
      %8192 = vmatpush1.msra.mxu0 0.0
      %8193 = vmatprep.subr.mxu0 0.0
      %8194 = vmatpush1.msra.mxu0 0.0
      %8195 = vmatprep.subr.mxu0 %v8157
      %8196 = vmatpush1.msra.mxu0 %v8156
      %8197 = vmatprep.subr.mxu0 %v8153
      %8198 = vmatpush1.msra.mxu0 %v8152
      %8199 = vmatprep.subr.mxu0 0.0
      %8200 = vmatpush2.msra.mxu0 0.0
      %8201 = vmatprep.subr.mxu0 0.0
      %8202 = vmatpush2.msra.mxu0 0.0
      %8203 = vmatprep.subr.mxu0 0.0
      %8204 = vmatpush2.msra.mxu0 0.0
      %8205 = vmatprep.subr.mxu0 0.0
      %8206 = vmatpush2.msra.mxu0 0.0
      %8207 = vmatprep.subr.mxu0 0.0
      %8208 = vmatpush2.msra.mxu0 0.0
      %8209 = vmatprep.subr.mxu0 0.0
      %8210 = vmatpush2.msra.mxu0 0.0
      %8211 = vmatprep.subr.mxu0 0.0
      %8212 = vmatpush2.msra.mxu0 0.0
      %8213 = vmatprep.subr.mxu0 0.0
      %8214 = vmatpush2.msra.mxu0 0.0
      %8215 = vmatprep.subr.mxu0 0.0
      %8216 = vmatpush2.msra.mxu0 0.0
      %8217 = vmatprep.subr.mxu0 0.0
      %8218 = vmatpush2.msra.mxu0 0.0
      %8219 = vmatprep.subr.mxu0 0.0
      %8220 = vmatpush2.msra.mxu0 0.0
      %8221 = vmatprep.subr.mxu0 0.0
      %8222 = vmatpush2.msra.mxu0 0.0
      %8223 = vmatprep.subr.mxu0 0.0
      %8224 = vmatpush2.msra.mxu0 0.0
      %8225 = vmatprep.subr.mxu0 0.0
      %8226 = vmatpush2.msra.mxu0 0.0
      %8227 = vmatprep.subr.mxu0 0.0
      %8228 = vmatpush2.msra.mxu0 0.0
      %8229 = vmatprep.subr.mxu0 0.0
      %8230 = vmatpush2.msra.mxu0 0.0
      %8231 = vmatprep.mubr.f32.mxu0 0.0
      %8232 = vmatmul.mubr.f32.gmra.mxu0 %v8162
      %v8233 = vpop.f32.mrf.mxu0
      %v8234 = vadd.f32 0.0, %v8233
      %v8235 = vpop.f32.mrf.mxu0
      %v8236 = vadd.f32 0.0, %v8235
      %8237 = vmatprep.mubr.f32.mxu0 0.0
      %8238 = vmatmul.mubr.f32.gmra.mxu0 %v8165
      %v8239 = vpop.f32.mrf.mxu0
      %v8240 = vadd.f32 0.0, %v8239
      %v8241 = vpop.f32.mrf.mxu0
      %v8242 = vadd.f32 0.0, %v8241
      %8243 = vdwg.mxu0
      %8244 = vmatprep.subr.mxu0 0.0
      %8245 = vmatpush1.msra.mxu0 0.0
      %8246 = vmatprep.subr.mxu0 0.0
      %8247 = vmatpush1.msra.mxu0 0.0
      %8248 = vmatprep.subr.mxu0 0.0
      %8249 = vmatpush1.msra.mxu0 0.0
      %8250 = vmatprep.subr.mxu0 0.0
      %8251 = vmatpush1.msra.mxu0 0.0
      %8252 = vmatprep.subr.mxu0 0.0
      %8253 = vmatpush1.msra.mxu0 0.0
      %8254 = vmatprep.subr.mxu0 0.0
      %8255 = vmatpush1.msra.mxu0 0.0
      %8256 = vmatprep.subr.mxu0 0.0
      %8257 = vmatpush1.msra.mxu0 0.0
      %8258 = vmatprep.subr.mxu0 0.0
      %8259 = vmatpush1.msra.mxu0 0.0
      %8260 = vmatprep.subr.mxu0 0.0
      %8261 = vmatpush1.msra.mxu0 0.0
      %8262 = vmatprep.subr.mxu0 0.0
      %8263 = vmatpush1.msra.mxu0 0.0
      %8264 = vmatprep.subr.mxu0 0.0
      %8265 = vmatpush1.msra.mxu0 0.0
      %8266 = vmatprep.subr.mxu0 0.0
      %8267 = vmatpush1.msra.mxu0 0.0
      %8268 = vmatprep.subr.mxu0 0.0
      %8269 = vmatpush1.msra.mxu0 0.0
      %8270 = vmatprep.subr.mxu0 0.0
      %8271 = vmatpush1.msra.mxu0 0.0
      %8272 = vmatprep.subr.mxu0 %v8159
      %8273 = vmatpush1.msra.mxu0 %v8158
      %8274 = vmatprep.subr.mxu0 %v8155
      %8275 = vmatpush1.msra.mxu0 %v8154
      %8276 = vmatprep.subr.mxu0 0.0
      %8277 = vmatpush2.msra.mxu0 0.0
      %8278 = vmatprep.subr.mxu0 0.0
      %8279 = vmatpush2.msra.mxu0 0.0
      %8280 = vmatprep.subr.mxu0 0.0
      %8281 = vmatpush2.msra.mxu0 0.0
      %8282 = vmatprep.subr.mxu0 0.0
      %8283 = vmatpush2.msra.mxu0 0.0
      %8284 = vmatprep.subr.mxu0 0.0
      %8285 = vmatpush2.msra.mxu0 0.0
      %8286 = vmatprep.subr.mxu0 0.0
      %8287 = vmatpush2.msra.mxu0 0.0
      %8288 = vmatprep.subr.mxu0 0.0
      %8289 = vmatpush2.msra.mxu0 0.0
      %8290 = vmatprep.subr.mxu0 0.0
      %8291 = vmatpush2.msra.mxu0 0.0
      %8292 = vmatprep.subr.mxu0 0.0
      %8293 = vmatpush2.msra.mxu0 0.0
      %8294 = vmatprep.subr.mxu0 0.0
      %8295 = vmatpush2.msra.mxu0 0.0
      %8296 = vmatprep.subr.mxu0 0.0
      %8297 = vmatpush2.msra.mxu0 0.0
      %8298 = vmatprep.subr.mxu0 0.0
      %8299 = vmatpush2.msra.mxu0 0.0
      %8300 = vmatprep.subr.mxu0 0.0
      %8301 = vmatpush2.msra.mxu0 0.0
      %8302 = vmatprep.subr.mxu0 0.0
      %8303 = vmatpush2.msra.mxu0 0.0
      %8304 = vmatprep.subr.mxu0 0.0
      %8305 = vmatpush2.msra.mxu0 0.0
      %8306 = vmatprep.subr.mxu0 0.0
      %8307 = vmatpush2.msra.mxu0 0.0
      %8308 = vmatprep.mubr.f32.mxu0 0.0
      %8309 = vmatmul.mubr.f32.gmra.mxu0 %v8162
      %v8310 = vpop.f32.mrf.mxu0
      %v8311 = vadd.f32 0.0, %v8310
      %v8312 = vpop.f32.mrf.mxu0
      %v8313 = vadd.f32 0.0, %v8312
      %8314 = vmatprep.mubr.f32.mxu0 0.0
      %8315 = vmatmul.mubr.f32.gmra.mxu0 %v8165
      %v8316 = vpop.f32.mrf.mxu0
      %v8317 = vadd.f32 0.0, %v8316
      %v8318 = vpop.f32.mrf.mxu0
      %v8319 = vadd.f32 0.0, %v8318
      %8320 = vdwg.mxu0
      %v8322 = vsel %vm8160, %v8148, 0
      %v8325 = vsel %vm8160, %v8149, 0
      %8327 = vmatprep.subr.mxu0 0.0
      %8328 = vmatpush1.msra.mxu0 0.0
      %8329 = vmatprep.subr.mxu0 0.0
      %8330 = vmatpush1.msra.mxu0 0.0
      %8331 = vmatprep.subr.mxu0 0.0
      %8332 = vmatpush1.msra.mxu0 0.0
      %8333 = vmatprep.subr.mxu0 0.0
      %8334 = vmatpush1.msra.mxu0 0.0
      %8335 = vmatprep.subr.mxu0 0.0
      %8336 = vmatpush1.msra.mxu0 0.0
      %8337 = vmatprep.subr.mxu0 0.0
      %8338 = vmatpush1.msra.mxu0 0.0
      %8339 = vmatprep.subr.mxu0 0.0
      %8340 = vmatpush1.msra.mxu0 0.0
      %8341 = vmatprep.subr.mxu0 0.0
      %8342 = vmatpush1.msra.mxu0 0.0
      %8343 = vmatprep.subr.mxu0 0.0
      %8344 = vmatpush1.msra.mxu0 0.0
      %8345 = vmatprep.subr.mxu0 0.0
      %8346 = vmatpush1.msra.mxu0 0.0
      %8347 = vmatprep.subr.mxu0 0.0
      %8348 = vmatpush1.msra.mxu0 0.0
      %8349 = vmatprep.subr.mxu0 0.0
      %8350 = vmatpush1.msra.mxu0 0.0
      %8351 = vmatprep.subr.mxu0 0.0
      %8352 = vmatpush1.msra.mxu0 0.0
      %8353 = vmatprep.subr.mxu0 0.0
      %8354 = vmatpush1.msra.mxu0 0.0
      %8355 = vmatprep.subr.mxu0 %v8157
      %8356 = vmatpush1.msra.mxu0 %v8156
      %8357 = vmatprep.subr.mxu0 %v8153
      %8358 = vmatpush1.msra.mxu0 %v8152
      %8359 = vmatprep.subr.mxu0 0.0
      %8360 = vmatpush2.msra.mxu0 0.0
      %8361 = vmatprep.subr.mxu0 0.0
      %8362 = vmatpush2.msra.mxu0 0.0
      %8363 = vmatprep.subr.mxu0 0.0
      %8364 = vmatpush2.msra.mxu0 0.0
      %8365 = vmatprep.subr.mxu0 0.0
      %8366 = vmatpush2.msra.mxu0 0.0
      %8367 = vmatprep.subr.mxu0 0.0
      %8368 = vmatpush2.msra.mxu0 0.0
      %8369 = vmatprep.subr.mxu0 0.0
      %8370 = vmatpush2.msra.mxu0 0.0
      %8371 = vmatprep.subr.mxu0 0.0
      %8372 = vmatpush2.msra.mxu0 0.0
      %8373 = vmatprep.subr.mxu0 0.0
      %8374 = vmatpush2.msra.mxu0 0.0
      %8375 = vmatprep.subr.mxu0 0.0
      %8376 = vmatpush2.msra.mxu0 0.0
      %8377 = vmatprep.subr.mxu0 0.0
      %8378 = vmatpush2.msra.mxu0 0.0
      %8379 = vmatprep.subr.mxu0 0.0
      %8380 = vmatpush2.msra.mxu0 0.0
      %8381 = vmatprep.subr.mxu0 0.0
      %8382 = vmatpush2.msra.mxu0 0.0
      %8383 = vmatprep.subr.mxu0 0.0
      %8384 = vmatpush2.msra.mxu0 0.0
      %8385 = vmatprep.subr.mxu0 0.0
      %8386 = vmatpush2.msra.mxu0 0.0
      %8387 = vmatprep.subr.mxu0 0.0
      %8388 = vmatpush2.msra.mxu0 0.0
      %8389 = vmatprep.subr.mxu0 0.0
      %8390 = vmatpush2.msra.mxu0 0.0
      %8391 = vmatprep.mubr.f32.mxu0 0.0
      %8392 = vmatmul.mubr.f32.gmra.mxu0 %v8322
      %v8393 = vpop.f32.mrf.mxu0
      %v8394 = vadd.f32 %v8234, %v8393
      %v8395 = vpop.f32.mrf.mxu0
      %v8396 = vadd.f32 %v8236, %v8395
      %8397 = vmatprep.mubr.f32.mxu0 0.0
      %8398 = vmatmul.mubr.f32.gmra.mxu0 %v8325
      %v8399 = vpop.f32.mrf.mxu0
      %v8400 = vadd.f32 %v8240, %v8399
      %v8401 = vpop.f32.mrf.mxu0
      %v8402 = vadd.f32 %v8242, %v8401
      %8403 = vdwg.mxu0
      %8404 = vmatprep.subr.mxu0 0.0
      %8405 = vmatpush1.msra.mxu0 0.0
      %8406 = vmatprep.subr.mxu0 0.0
      %8407 = vmatpush1.msra.mxu0 0.0
      %8408 = vmatprep.subr.mxu0 0.0
      %8409 = vmatpush1.msra.mxu0 0.0
      %8410 = vmatprep.subr.mxu0 0.0
      %8411 = vmatpush1.msra.mxu0 0.0
      %8412 = vmatprep.subr.mxu0 0.0
      %8413 = vmatpush1.msra.mxu0 0.0
      %8414 = vmatprep.subr.mxu0 0.0
      %8415 = vmatpush1.msra.mxu0 0.0
      %8416 = vmatprep.subr.mxu0 0.0
      %8417 = vmatpush1.msra.mxu0 0.0
      %8418 = vmatprep.subr.mxu0 0.0
      %8419 = vmatpush1.msra.mxu0 0.0
      %8420 = vmatprep.subr.mxu0 0.0
      %8421 = vmatpush1.msra.mxu0 0.0
      %8422 = vmatprep.subr.mxu0 0.0
      %8423 = vmatpush1.msra.mxu0 0.0
      %8424 = vmatprep.subr.mxu0 0.0
      %8425 = vmatpush1.msra.mxu0 0.0
      %8426 = vmatprep.subr.mxu0 0.0
      %8427 = vmatpush1.msra.mxu0 0.0
      %8428 = vmatprep.subr.mxu0 0.0
      %8429 = vmatpush1.msra.mxu0 0.0
      %8430 = vmatprep.subr.mxu0 0.0
      %8431 = vmatpush1.msra.mxu0 0.0
      %8432 = vmatprep.subr.mxu0 %v8159
      %8433 = vmatpush1.msra.mxu0 %v8158
      %8434 = vmatprep.subr.mxu0 %v8155
      %8435 = vmatpush1.msra.mxu0 %v8154
      %8436 = vmatprep.subr.mxu0 0.0
      %8437 = vmatpush2.msra.mxu0 0.0
      %8438 = vmatprep.subr.mxu0 0.0
      %8439 = vmatpush2.msra.mxu0 0.0
      %8440 = vmatprep.subr.mxu0 0.0
      %8441 = vmatpush2.msra.mxu0 0.0
      %8442 = vmatprep.subr.mxu0 0.0
      %8443 = vmatpush2.msra.mxu0 0.0
      %8444 = vmatprep.subr.mxu0 0.0
      %8445 = vmatpush2.msra.mxu0 0.0
      %8446 = vmatprep.subr.mxu0 0.0
      %8447 = vmatpush2.msra.mxu0 0.0
      %8448 = vmatprep.subr.mxu0 0.0
      %8449 = vmatpush2.msra.mxu0 0.0
      %8450 = vmatprep.subr.mxu0 0.0
      %8451 = vmatpush2.msra.mxu0 0.0
      %8452 = vmatprep.subr.mxu0 0.0
      %8453 = vmatpush2.msra.mxu0 0.0
      %8454 = vmatprep.subr.mxu0 0.0
      %8455 = vmatpush2.msra.mxu0 0.0
      %8456 = vmatprep.subr.mxu0 0.0
      %8457 = vmatpush2.msra.mxu0 0.0
      %8458 = vmatprep.subr.mxu0 0.0
      %8459 = vmatpush2.msra.mxu0 0.0
      %8460 = vmatprep.subr.mxu0 0.0
      %8461 = vmatpush2.msra.mxu0 0.0
      %8462 = vmatprep.subr.mxu0 0.0
      %8463 = vmatpush2.msra.mxu0 0.0
      %8464 = vmatprep.subr.mxu0 0.0
      %8465 = vmatpush2.msra.mxu0 0.0
      %8466 = vmatprep.subr.mxu0 0.0
      %8467 = vmatpush2.msra.mxu0 0.0
      %8468 = vmatprep.mubr.f32.mxu0 0.0
      %8469 = vmatmul.mubr.f32.gmra.mxu0 %v8322
      %v8470 = vpop.f32.mrf.mxu0
      %v8471 = vadd.f32 %v8311, %v8470
      %v8472 = vpop.f32.mrf.mxu0
      %v8473 = vadd.f32 %v8313, %v8472
      %8474 = vmatprep.mubr.f32.mxu0 0.0
      %8475 = vmatmul.mubr.f32.gmra.mxu0 %v8325
      %v8476 = vpop.f32.mrf.mxu0
      %v8477 = vadd.f32 %v8317, %v8476
      %v8478 = vpop.f32.mrf.mxu0
      %v8479 = vadd.f32 %v8319, %v8478
      %8480 = vdwg.mxu0
      %v8481 = vld [vmem:[%s737 + $0x38] sm:$0xff]
      %v8482 = vld [vmem:[%s737 + $0x40] sm:$0xff]
      %v8483 = vld [vmem:[%s737 + $0x48] sm:$0xff]
      %v8484 = vld [vmem:[%s737 + $0x50] sm:$0xff]
      %v8485 = vld [vmem:[%s737 + $0x68] sm:$0xff]
      %v8486 = vld [vmem:[%s737 + $0x70] sm:$0xff]
      %v8487 = vld [vmem:[%s737 + $0x78] sm:$0xff]
      %v8488 = vld [vmem:[%s737 + $0x80] sm:$0xff]
      %s8489 = smul.u32 %s730, 16
      %v8490 = vmax.f32 %v8394, -60.0
      %v8491 = vmax.f32 %v8396, -60.0
      %v8492 = vmax.f32 %v8471, -60.0
      %v8493 = vmax.f32 %v8473, -60.0
      %v8494 = vmax.f32 %v8400, -60.0
      %v8495 = vmax.f32 %v8402, -60.0
      %v8496 = vmax.f32 %v8477, -60.0
      %v8497 = vmax.f32 %v8479, -60.0
      %v8498 = vsub.f32 0.0, %v8490
      %v8499 = vsub.f32 0.0, %v8491
      %v8500 = vsub.f32 0.0, %v8492
      %v8501 = vsub.f32 0.0, %v8493
      %v8502 = vsub.f32 0.0, %v8494
      %v8503 = vsub.f32 0.0, %v8495
      %v8504 = vsub.f32 0.0, %v8496
      %v8505 = vsub.f32 0.0, %v8497
      %v8506 = vmul.f32 %v8498, 1.442695
      %v8507 = vpow.pop %v8506
      %v8508 = vmul.f32 %v8499, 1.442695
      %v8509 = vpow.pop %v8508
      %v8510 = vmul.f32 %v8500, 1.442695
      %v8511 = vpow.pop %v8510
      %v8512 = vmul.f32 %v8501, 1.442695
      %v8513 = vpow.pop %v8512
      %v8514 = vmul.f32 %v8502, 1.442695
      %v8515 = vpow.pop %v8514
      %v8516 = vmul.f32 %v8503, 1.442695
      %v8517 = vpow.pop %v8516
      %v8518 = vmul.f32 %v8504, 1.442695
      %v8519 = vpow.pop %v8518
      %v8520 = vmul.f32 %v8505, 1.442695
      %v8521 = vpow.pop %v8520
      %v8522 = vadd.f32 %v8507, 1.0
      %v8523 = vadd.f32 %v8509, 1.0
      %v8524 = vadd.f32 %v8511, 1.0
      %v8525 = vadd.f32 %v8513, 1.0
      %v8526 = vadd.f32 %v8515, 1.0
      %v8527 = vadd.f32 %v8517, 1.0
      %v8528 = vadd.f32 %v8519, 1.0
      %v8529 = vadd.f32 %v8521, 1.0
      %v8530 = vrcp.pop %v8522
      %v8531 = vrcp.pop %v8523
      %v8532 = vrcp.pop %v8524
      %v8533 = vrcp.pop %v8525
      %v8534 = vrcp.pop %v8526
      %v8535 = vrcp.pop %v8527
      %v8536 = vrcp.pop %v8528
      %v8537 = vrcp.pop %v8529
      %v8538 = vmul.f32 %v8522, %v8530
      %v8539 = vmul.f32 %v8523, %v8531
      %v8540 = vmul.f32 %v8524, %v8532
      %v8541 = vmul.f32 %v8525, %v8533
      %v8542 = vmul.f32 %v8526, %v8534
      %v8543 = vmul.f32 %v8527, %v8535
      %v8544 = vmul.f32 %v8528, %v8536
      %v8545 = vmul.f32 %v8529, %v8537
      %v8546 = vsub.f32 2.0, %v8538
      %v8547 = vsub.f32 2.0, %v8539
      %v8548 = vsub.f32 2.0, %v8540
      %v8549 = vsub.f32 2.0, %v8541
      %v8550 = vsub.f32 2.0, %v8542
      %v8551 = vsub.f32 2.0, %v8543
      %v8552 = vsub.f32 2.0, %v8544
      %v8553 = vsub.f32 2.0, %v8545
      %v8554 = vmul.f32 %v8530, %v8546
      %v8555 = vmul.f32 %v8531, %v8547
      %v8556 = vmul.f32 %v8532, %v8548
      %v8557 = vmul.f32 %v8533, %v8549
      %v8558 = vmul.f32 %v8534, %v8550
      %v8559 = vmul.f32 %v8535, %v8551
      %v8560 = vmul.f32 %v8536, %v8552
      %v8561 = vmul.f32 %v8537, %v8553
      %v8562 = vmul.f32 %v8554, %v8481
      %v8563 = vmul.f32 %v8555, %v8482
      %v8564 = vmul.f32 %v8556, %v8483
      %v8565 = vmul.f32 %v8557, %v8484
      %v8566 = vmul.f32 %v8558, %v8485
      %v8567 = vmul.f32 %v8559, %v8486
      %v8568 = vmul.f32 %v8560, %v8487
      %v8569 = vmul.f32 %v8561, %v8488
      %s8570 = sshra.s32 %s8489, 3
      %s8571 = sand.u32 %s8489, 7
      %s8572 = smul.u32 %s8570, 4
      %s8573 = smul.addr %s8572, 8
      %s8574 = scalar_lea.vmem [#allocation3], %s8573
      %8575 = vst [vmem:[%s8574] sm:$0xff] %v8562
      %8576 = vst [vmem:[%s8574 + $0x8] sm:$0xff] %v8563
      %8577 = vst [vmem:[%s8574 + $0x10] sm:$0xff] %v8564
      %8578 = vst [vmem:[%s8574 + $0x18] sm:$0xff] %v8565
      %8579 = vst [vmem:[%s8574 + $0x20] sm:$0xff] %v8566
      %8580 = vst [vmem:[%s8574 + $0x28] sm:$0xff] %v8567
      %8581 = vst [vmem:[%s8574 + $0x30] sm:$0xff] %v8568
      %8582 = vst [vmem:[%s8574 + $0x38] sm:$0xff] %v8569
    $region38: #{tpu_custom_call.1} parent=1 // loop_footer
      %s734 = sadd.s32 1, %s730
    $region39: #{tpu_custom_call.1} parent=1 // loop_footer_branch
      %729 = sbr.rel target = $region35
    $region40: #{tpu_custom_call.1} parent=1 // loop_exit
      _
    // Predicated region
    $region41: #{tpu_custom_call.1} parent=1 // pred_check
      _
    $region42: #{tpu_custom_call.1} parent=1 // pred_check_branch
      %8584 = sbr.rel (0) target = $region44
    $region43: #{tpu_custom_call.1} parent=1 // pred_region
      %s8586 = ssub.s32 2048, 2048
      %8587 = vsyncadd [#allocation4], %s8586
      %s8588 = sshll.u32 [#allocation3], 4
      %s8589 = int_to_ptr.vmem [resolvable:$true] %s8588
      %8594 = dma.vmem_to_hbm [thread:$0]  %s8589, 2048, %s8, [#allocation4], 512, 512, 32
    $region44: #{tpu_custom_call.1} parent=1 // pred_fallthru
      _
    // Predicated region
    $region45: #{tpu_custom_call.1} parent=1 // pred_check
      _
    $region46: #{tpu_custom_call.1} parent=1 // pred_check_branch
      %8596 = sbr.rel (0) target = $region48
    $region47: #{tpu_custom_call.1} parent=1 // pred_region
      %8597 = dma.done [#allocation4], 2048
    $region48: #{tpu_custom_call.1} parent=1 // pred_fallthru
      _
    %8598 = vsyncpa [#allocation4], 1

</llo_original>
